<compile_context>
chip_gen: v7x
topology: tpu7x:2x2x1
jax: 0.10.0
libtpu: 0.0.40
codegen_flags: <defaults>
</compile_context>

<pallas_src>
import functools

import jax
import jax.numpy as jnp
from jax import lax
from jax.experimental import pallas as pl
from jax.experimental.pallas import tpu as pltpu


LANE = 128
NEG_INF = -1e9


# ----------------------------------------------------------------------------
# Parameter padding: hidden -> multiple of 128, symbol vocab -> multiple of 128.
# Zero padding of weights/biases keeps padded hidden dims identically zero through
# the GRU recurrences; padded vocab columns get a -1e9 bias.
# ----------------------------------------------------------------------------
def _round_up(x, m):
    return ((x + m - 1) // m) * m


def _pad_to(x, axis, n):
    pad = [(0, 0)] * x.ndim
    pad[axis] = (0, n - x.shape[axis])
    return jnp.pad(x, pad)


def _pad_gates(w, h, hp):
    # [..., 3*h] -> [..., 3*hp], padding each r|z|n gate block separately so the
    # in-kernel slices gi[:, :hp] / [hp:2hp] / [2hp:] stay lane-tile aligned.
    lead = w.shape[:-1]
    w3 = w.reshape(*lead, 3, h)
    w3 = _pad_to(w3, -1, hp)
    return w3.reshape(*lead, 3 * hp)


def pad_params(p):
    H = p['w_hh_e'].shape[0]
    V = p['w_out'].shape[1]
    HP = _round_up(H, LANE)
    VP = _round_up(V, LANE)
    out = dict(p)
    # encoder GRU
    out['w_ih_e'] = _pad_gates(p['w_ih_e'], H, HP)
    out['w_hh_e'] = _pad_to(_pad_gates(p['w_hh_e'], H, HP), 0, HP)
    out['b_ih_e'] = _pad_gates(p['b_ih_e'], H, HP)
    out['b_hh_e'] = _pad_gates(p['b_hh_e'], H, HP)
    # decoder attention
    out['w_q'] = _pad_to(_pad_to(p['w_q'], 0, HP), 1, HP)
    out['w_k'] = _pad_to(_pad_to(p['w_k'], 0, HP), 1, HP)
    out['v_att'] = _pad_to(p['v_att'], 1, HP)
    # decoder GRU cell
    out['w_x'] = _pad_gates(p['w_x'], H, HP)
    out['w_c'] = _pad_to(_pad_gates(p['w_c'], H, HP), 0, HP)
    out['w_hh_d'] = _pad_to(_pad_gates(p['w_hh_d'], H, HP), 0, HP)
    out['b_ih_d'] = _pad_gates(p['b_ih_d'], H, HP)
    out['b_hh_d'] = _pad_gates(p['b_hh_d'], H, HP)
    # output projection: padded vocab columns get -1e9 bias -> log_softmax ignores them
    out['w_out'] = _pad_to(_pad_to(p['w_out'], 0, HP), 1, VP)
    b_out = _pad_to(p['b_out'], 1, VP)
    vmask = jnp.arange(VP)[None, :] < V
    out['b_out'] = jnp.where(vmask, b_out, NEG_INF)
    return out


# ----------------------------------------------------------------------------
# Kernel 1: word-level GRU encoder (PyTorch GRU gate semantics, gate order r|z|n)
# ----------------------------------------------------------------------------
def gru_encoder_kernel(emb_ref, mask_ref, wih_ref, whh_ref, bih_ref, bhh_ref,
                       out_ref, hlast_ref, gi_scr):
    T = emb_ref.shape[0]
    R = emb_ref.shape[1]
    HP = whh_ref.shape[0]

    # Hoisted input-to-hidden projection: one big MXU matmul for all timesteps.
    gi_scr[...] = (jnp.einsum('tre,eg->trg',
                              emb_ref[...].astype(jnp.bfloat16),
                              wih_ref[...].astype(jnp.bfloat16),
                              preferred_element_type=jnp.float32)
                   + bih_ref[...])

    whh = whh_ref[...]
    bhh = bhh_ref[...]

    def step(t, h):
        gi = gi_scr[t]                       # [R, 3*HP]
        m = mask_ref[t][:, None]             # [R, 1]
        gh = jnp.dot(h, whh, preferred_element_type=jnp.float32) + bhh
        r = jax.nn.sigmoid(gi[:, :HP] + gh[:, :HP])
        z = jax.nn.sigmoid(gi[:, HP:2 * HP] + gh[:, HP:2 * HP])
        n = jnp.tanh(gi[:, 2 * HP:] + r * gh[:, 2 * HP:])
        h_new = (1.0 - z) * n + z * h
        h_new = m * h_new + (1.0 - m) * h    # freeze padded positions
        out_ref[t] = h_new * m               # lane-dense (HP = multiple of 128)
        return h_new

    h_final = lax.fori_loop(0, T, step, jnp.zeros((R, HP), jnp.float32),
                            unroll=True)
    hlast_ref[...] = h_final


def gru_encoder(emb_tm, mask_tm, wih, whh, bih, bhh):
    T, R, _ = emb_tm.shape
    HP = whh.shape[0]
    vmem = pl.BlockSpec(memory_space=pltpu.MemorySpace.VMEM)
    return pl.pallas_call(
        gru_encoder_kernel,
        out_shape=(jax.ShapeDtypeStruct((T, R, HP), jnp.float32),
                   jax.ShapeDtypeStruct((R, HP), jnp.float32)),
        in_specs=[vmem] * 6,
        out_specs=(vmem, vmem),
        scratch_shapes=[pltpu.VMEM((T, R, 3 * HP), jnp.float32)],
        compiler_params=pltpu.CompilerParams(vmem_limit_bytes=32 * 1024 * 1024),
    )(emb_tm, mask_tm, wih, whh, bih, bhh)


# ----------------------------------------------------------------------------
# Kernel 2: recurrent attention decoder. Additive attention + GRU cell per step;
# output projection + log_softmax batched over all steps after the recurrence.
# ----------------------------------------------------------------------------
def decoder_kernel(tgt_ref, enc_ref, encmask_ref, h0_ref,
                   wq_ref, wk_ref, v_ref,
                   wx_ref, wc_ref, whh_ref, bih_ref, bhh_ref,
                   wout_ref, bout_ref, out_ref,
                   gi_scr, h_scr):
    Td = tgt_ref.shape[0]
    B, L, HP = enc_ref.shape

    enc_bf = enc_ref[...].astype(jnp.bfloat16)                          # [B, L, HP]
    K = jnp.einsum('blh,hg->blg', enc_bf, wk_ref[...].astype(jnp.bfloat16),
                   preferred_element_type=jnp.float32)                  # [B, L, HP]
    neg = (1.0 - encmask_ref[...]) * NEG_INF                            # [B, L]
    v = v_ref[...][:, None, :]                                          # [1, 1, HP]

    # Hoisted input-to-hidden projection for every decode step (one MXU matmul).
    gi_scr[...] = (jnp.einsum('tbe,eg->tbg',
                              tgt_ref[...].astype(jnp.bfloat16),
                              wx_ref[...].astype(jnp.bfloat16),
                              preferred_element_type=jnp.float32)
                   + bih_ref[...])

    wq = wq_ref[...]
    wc = wc_ref[...]
    whh = whh_ref[...]
    bhh = bhh_ref[...]

    def step(t, h):
        # --- additive attention over all word-level encoder outputs ---
        q = jnp.dot(h, wq, preferred_element_type=jnp.float32)          # [B, HP]
        e = jnp.tanh(q[:, None, :] + K)                                 # [B, L, HP]
        scores = jnp.sum(e * v, axis=-1) + neg                          # [B, L]
        scores = scores - jnp.max(scores, axis=-1, keepdims=True)
        w = jnp.exp(scores)
        w = w * pl.reciprocal(jnp.sum(w, axis=-1, keepdims=True), approx=True)
        # context as a batched MXU matmul instead of broadcast-multiply + reduce
        ctx = jnp.einsum('bqk,bkh->bqh',
                         w[:, None, :].astype(jnp.bfloat16), enc_bf,
                         preferred_element_type=jnp.float32)[:, 0, :]   # [B, HP]
        # --- GRU cell on [embedding ; context] ---
        gi = gi_scr[t] + jnp.dot(ctx, wc, preferred_element_type=jnp.float32)
        gh = jnp.dot(h, whh, preferred_element_type=jnp.float32) + bhh
        r = jax.nn.sigmoid(gi[:, :HP] + gh[:, :HP])
        z = jax.nn.sigmoid(gi[:, HP:2 * HP] + gh[:, HP:2 * HP])
        n = jnp.tanh(gi[:, 2 * HP:] + r * gh[:, 2 * HP:])
        h_new = (1.0 - z) * n + z * h
        h_scr[t] = h_new
        return h_new

    lax.fori_loop(0, Td, step, h0_ref[...], unroll=True)

    # --- batched output projection + log_softmax (outside the serial recurrence) ---
    logits = (jnp.einsum('tbh,hv->tbv',
                         h_scr[...].astype(jnp.bfloat16),
                         wout_ref[...].astype(jnp.bfloat16),
                         preferred_element_type=jnp.float32)
              + bout_ref[...])                                          # [Td, B, VP]
    mx = jnp.max(logits, axis=-1, keepdims=True)
    lse = mx + jnp.log(jnp.sum(jnp.exp(logits - mx), axis=-1, keepdims=True))
    out_ref[...] = logits - lse


def attention_decoder(tgt_tm, enc, enc_mask, h0, pp):
    Td, B, _ = tgt_tm.shape
    HP = enc.shape[2]
    VP = pp['w_out'].shape[1]
    vmem = pl.BlockSpec(memory_space=pltpu.MemorySpace.VMEM)
    return pl.pallas_call(
        decoder_kernel,
        out_shape=jax.ShapeDtypeStruct((Td, B, VP), jnp.float32),
        in_specs=[vmem] * 14,
        out_specs=vmem,
        scratch_shapes=[pltpu.VMEM((Td, B, 3 * HP), jnp.float32),
                        pltpu.VMEM((Td, B, HP), jnp.float32)],
        compiler_params=pltpu.CompilerParams(vmem_limit_bytes=32 * 1024 * 1024),
    )(tgt_tm, enc, enc_mask, h0,
      pp['w_q'], pp['w_k'], pp['v_att'],
      pp['w_x'], pp['w_c'], pp['w_hh_d'],
      pp['b_ih_d'], pp['b_hh_d'],
      pp['w_out'], pp['b_out'])


# ----------------------------------------------------------------------------
# HMS forward (glue: embedding lookup, span pooling, layout plumbing)
# ----------------------------------------------------------------------------
def hms_forward(params, input_variable, input_lengths, span_length, target_variable):
    """input_variable: [B, S, T] int32 token ids (S = span_size)
       input_lengths:  [B, S] int32
       span_length:    [B] int32
       target_variable:[B, Td] int32 symbol ids (shared-vocab embedding)
       returns: (decoder_log_probs [Td, B, symbol_size], encoder_hidden [B, H])"""
    B, S, T = input_variable.shape
    E = params['embedding'].shape[1]
    H = params['w_hh_e'].shape[0]
    V = params['w_out'].shape[1]
    R = B * S

    pp = pad_params(params)          # lane-padded weights (constant-folded under jit)
    HP = pp['w_hh_e'].shape[0]

    # ---- encoder: word-level GRU per span ----
    emb = jnp.take(params['embedding'], input_variable, axis=0)        # [B,S,T,E]
    emb_tm = jnp.transpose(emb.reshape(R, T, E), (1, 0, 2))            # [T,R,E]
    word_mask = (jnp.arange(T)[None, :]
                 < input_lengths.reshape(R)[:, None]).astype(jnp.float32)   # [R,T]
    mask_tm = word_mask.T                                              # [T,R]

    word_outs, h_last = gru_encoder(emb_tm, mask_tm,
                                    pp['w_ih_e'], pp['w_hh_e'],
                                    pp['b_ih_e'], pp['b_hh_e'])        # [T,R,HP],[R,HP]

    # span-level pooling -> initial decoder hidden
    span_hidden = h_last.reshape(B, S, HP)
    span_mask = (jnp.arange(S)[None, :] < span_length[:, None]).astype(jnp.float32)
    denom = jnp.maximum(jnp.sum(span_mask, axis=1, keepdims=True), 1.0)
    enc_hidden_pad = jnp.sum(span_hidden * span_mask[:, :, None], axis=1) / denom  # [B,HP]

    # word-level encoder outputs for attention: [B, S*T, HP]
    # TODO(synk): spans beyond span_length remain attendable if their token lengths
    #             are nonzero; matches the masking used here, may differ from HMS.
    enc = jnp.transpose(word_outs, (1, 0, 2)).reshape(B, S * T, HP)
    enc_mask = word_mask.reshape(B, S * T)

    # ---- decoder: teacher-forced attention GRU ----
    tgt_emb = jnp.take(params['embedding'], target_variable, axis=0)   # [B,Td,E]
    tgt_tm = jnp.transpose(tgt_emb, (1, 0, 2))                         # [Td,B,E]
    log_probs_pad = attention_decoder(tgt_tm, enc, enc_mask, enc_hidden_pad, pp)

    return log_probs_pad[..., :V], enc_hidden_pad[:, :H]


# ----------------------------------------------------------------------------
# Deterministic parameter init (synthetic; shapes implied by HMS.__init__)
# ----------------------------------------------------------------------------
def init_params(key, vocab_size, symbol_size, embedding_size, hidden_size):
    ks = jax.random.split(key, 16)
    s = 0.1
    E, H = embedding_size, hidden_size
    return {
        'embedding': s * jax.random.normal(ks[0], (vocab_size, E), jnp.float32),
        # encoder GRU
        'w_ih_e': s * jax.random.normal(ks[1], (E, 3 * H), jnp.float32),
        'w_hh_e': s * jax.random.normal(ks[2], (H, 3 * H), jnp.float32),
        'b_ih_e': s * jax.random.normal(ks[3], (1, 3 * H), jnp.float32),
        'b_hh_e': s * jax.random.normal(ks[4], (1, 3 * H), jnp.float32),
        # decoder attention
        'w_q': s * jax.random.normal(ks[5], (H, H), jnp.float32),
        'w_k': s * jax.random.normal(ks[6], (H, H), jnp.float32),
        'v_att': s * jax.random.normal(ks[7], (1, H), jnp.float32),
        # decoder GRU cell (input = [embedding ; context])
        'w_x': s * jax.random.normal(ks[8], (E, 3 * H), jnp.float32),
        'w_c': s * jax.random.normal(ks[9], (H, 3 * H), jnp.float32),
        'w_hh_d': s * jax.random.normal(ks[10], (H, 3 * H), jnp.float32),
        'b_ih_d': s * jax.random.normal(ks[11], (1, 3 * H), jnp.float32),
        'b_hh_d': s * jax.random.normal(ks[12], (1, 3 * H), jnp.float32),
        # output projection to symbol vocab
        'w_out': s * jax.random.normal(ks[13], (H, symbol_size), jnp.float32),
        'b_out': s * jax.random.normal(ks[14], (1, symbol_size), jnp.float32),
    }


if __name__ == "__main__":
    # small shapes consistent with the module's forward
    B, S, T = 2, 2, 8            # batch, span_size, seq_len per span
    E, H = 32, 32                # embedding_size, hidden_size
    VOCAB, SYM = 64, 16          # input vocab, output symbol vocab
    TD = 6                       # target equation length

    key = jax.random.PRNGKey(0)
    k_par, k_in, k_len, k_tgt, k_span = jax.random.split(key, 5)

    params = init_params(k_par, VOCAB, SYM, E, H)

    input_variable = jax.random.randint(k_in, (B, S, T), 1, VOCAB, dtype=jnp.int32)
    input_lengths = jax.random.randint(k_len, (B, S), 3, T + 1, dtype=jnp.int32)
    span_length = jax.random.randint(k_span, (B,), 1, S + 1, dtype=jnp.int32)
    target_variable = jax.random.randint(k_tgt, (B, TD), 0, VOCAB, dtype=jnp.int32)

    fwd = jax.jit(functools.partial(hms_forward, params))
    log_probs, enc_hidden = fwd(input_variable, input_lengths, span_length, target_variable)
    jax.block_until_ready((log_probs, enc_hidden))

    assert log_probs.shape == (TD, B, SYM)
    assert enc_hidden.shape == (B, H)
    assert bool(jnp.all(jnp.isfinite(log_probs)))
    # per-step outputs are log_softmax -> rows sum to 1 in prob space
    probs_sum = jnp.sum(jnp.exp(log_probs), axis=-1)
    assert bool(jnp.all(jnp.abs(probs_sum - 1.0) < 1e-4))

    print("KERNEL_OK")
</pallas_src>

<mosaic_0001>
module attributes {stable_mosaic.version = 11 : i64} {
  func.func @gru_encoder_kernel(%arg0: memref<8x4x32xf32, #tpu.memory_space<vmem>>, %arg1: memref<8x4xf32, #tpu.memory_space<vmem>>, %arg2: memref<32x384xf32, #tpu.memory_space<vmem>>, %arg3: memref<128x384xf32, #tpu.memory_space<vmem>>, %arg4: memref<1x384xf32, #tpu.memory_space<vmem>>, %arg5: memref<1x384xf32, #tpu.memory_space<vmem>>, %arg6: memref<8x4x128xf32, #tpu.memory_space<vmem>>, %arg7: memref<4x128xf32, #tpu.memory_space<vmem>>, %arg8: memref<8x4x384xf32, #tpu.memory_space<vmem>>) attributes {dimension_semantics = [], scalar_prefetch = 0 : i64, scratch_operands = 1 : i64, tpu.core_type = #tpu.core_type<tc>} {
    %c0 = arith.constant 0 : index
    %c0_0 = arith.constant 0 : index
    %c0_1 = arith.constant 0 : index
    %0 = vector.load %arg0[%c0, %c0_0, %c0_1] : memref<8x4x32xf32, #tpu.memory_space<vmem>>, vector<8x4x32xf32>
    %1 = arith.truncf %0 : vector<8x4x32xf32> to vector<8x4x32xbf16>
    %c0_2 = arith.constant 0 : index
    %c0_3 = arith.constant 0 : index
    %2 = vector.load %arg2[%c0_2, %c0_3] : memref<32x384xf32, #tpu.memory_space<vmem>>, vector<32x384xf32>
    %3 = arith.truncf %2 : vector<32x384xf32> to vector<32x384xbf16>
    "tpu.trace_start"() <{level = 10 : i32, message = "tre,eg->trg"}> : () -> ()
    %cst = arith.constant dense<0.000000e+00> : vector<8x4x384xf32>
    %4 = tpu.matmul %1, %3, %cst {dimension_numbers = #tpu.dot_dimension_numbers<[2], [0], [0, 1], [1], [0, 0, 0, 1, 1, 1], [], []>} : vector<8x4x32xbf16>, vector<32x384xbf16>, vector<8x4x384xf32> -> vector<8x4x384xf32>
    "tpu.trace_stop"() : () -> ()
    %c0_4 = arith.constant 0 : index
    %c0_5 = arith.constant 0 : index
    %5 = vector.load %arg4[%c0_4, %c0_5] : memref<1x384xf32, #tpu.memory_space<vmem>>, vector<1x384xf32>
    %6 = vector.shape_cast %5 : vector<1x384xf32> to vector<1x1x384xf32>
    %7 = vector.broadcast %6 : vector<1x1x384xf32> to vector<8x4x384xf32>
    %8 = arith.addf %4, %7 : vector<8x4x384xf32>
    %c0_6 = arith.constant 0 : index
    %c0_7 = arith.constant 0 : index
    %c0_8 = arith.constant 0 : index
    %9 = vector.load %arg8[%c0_6, %c0_7, %c0_8] : memref<8x4x384xf32, #tpu.memory_space<vmem>>, vector<8x4x384xf32>
    tpu.vector_store %arg8[%c0_6, %c0_7, %c0_8], %8 {strides = array<i32>} : memref<8x4x384xf32, #tpu.memory_space<vmem>>, vector<8x4x384xf32>,
    %c0_9 = arith.constant 0 : index
    %c0_10 = arith.constant 0 : index
    %10 = vector.load %arg3[%c0_9, %c0_10] : memref<128x384xf32, #tpu.memory_space<vmem>>, vector<128x384xf32>
    %c0_11 = arith.constant 0 : index
    %c0_12 = arith.constant 0 : index
    %11 = vector.load %arg5[%c0_11, %c0_12] : memref<1x384xf32, #tpu.memory_space<vmem>>, vector<1x384xf32>
    %cst_13 = arith.constant 0.000000e+00 : f32
    %12 = vector.broadcast %cst_13 : f32 to vector<4x128xf32>
    %c0_i32 = arith.constant 0 : i32
    %13 = arith.index_cast %c0_i32 : i32 to index
    %c0_14 = arith.constant 0 : index
    %c0_15 = arith.constant 0 : index
    %14 = vector.load %arg8[%13, %c0_14, %c0_15] : memref<8x4x384xf32, #tpu.memory_space<vmem>>, vector<1x4x384xf32>
    %15 = vector.shape_cast %14 : vector<1x4x384xf32> to vector<4x384xf32>
    %16 = arith.index_cast %c0_i32 : i32 to index
    %c0_16 = arith.constant 0 : index
    %17 = vector.load %arg1[%16, %c0_16] : memref<8x4xf32, #tpu.memory_space<vmem>>, vector<1x4xf32>
    %18 = vector.shape_cast %17 : vector<1x4xf32> to vector<4xf32>
    %19 = vector.shape_cast %18 : vector<4xf32> to vector<4x1xf32>
    %cst_17 = arith.constant dense<0.000000e+00> : vector<4x384xf32>
    %20 = tpu.matmul %12, %10, %cst_17 {dimension_numbers = #tpu.dot_dimension_numbers<[1], [0], [0], [1], [0, 0, 1, 1], [], []>} : vector<4x128xf32>, vector<128x384xf32>, vector<4x384xf32> -> vector<4x384xf32>
    %21 = vector.broadcast %11 : vector<1x384xf32> to vector<4x384xf32>
    %22 = arith.addf %20, %21 : vector<4x384xf32>
    %23 = vector.extract_strided_slice %15 {offsets = [0, 0], sizes = [4, 128], strides = [1, 1]} : vector<4x384xf32> to vector<4x128xf32>
    %24 = vector.extract_strided_slice %22 {offsets = [0, 0], sizes = [4, 128], strides = [1, 1]} : vector<4x384xf32> to vector<4x128xf32>
    %25 = arith.addf %23, %24 : vector<4x128xf32>
    %26 = arith.negf %25 : vector<4x128xf32>
    %27 = math.exp %26 : vector<4x128xf32>
    %cst_18 = arith.constant 1.000000e+00 : f32
    %28 = vector.broadcast %cst_18 : f32 to vector<4x128xf32>
    %29 = arith.addf %28, %27 : vector<4x128xf32>
    %30 = arith.divf %28, %29 : vector<4x128xf32>
    %31 = vector.extract_strided_slice %15 {offsets = [0, 128], sizes = [4, 128], strides = [1, 1]} : vector<4x384xf32> to vector<4x128xf32>
    %32 = vector.extract_strided_slice %22 {offsets = [0, 128], sizes = [4, 128], strides = [1, 1]} : vector<4x384xf32> to vector<4x128xf32>
    %33 = arith.addf %31, %32 : vector<4x128xf32>
    %34 = arith.negf %33 : vector<4x128xf32>
    %35 = math.exp %34 : vector<4x128xf32>
    %cst_19 = arith.constant 1.000000e+00 : f32
    %36 = vector.broadcast %cst_19 : f32 to vector<4x128xf32>
    %37 = arith.addf %36, %35 : vector<4x128xf32>
    %38 = arith.divf %36, %37 : vector<4x128xf32>
    %39 = vector.extract_strided_slice %15 {offsets = [0, 256], sizes = [4, 128], strides = [1, 1]} : vector<4x384xf32> to vector<4x128xf32>
    %40 = vector.extract_strided_slice %22 {offsets = [0, 256], sizes = [4, 128], strides = [1, 1]} : vector<4x384xf32> to vector<4x128xf32>
    %41 = arith.mulf %30, %40 : vector<4x128xf32>
    %42 = arith.addf %39, %41 : vector<4x128xf32>
    %43 = math.tanh %42 : vector<4x128xf32>
    %cst_20 = arith.constant 1.000000e+00 : f32
    %44 = vector.broadcast %cst_20 : f32 to vector<4x128xf32>
    %45 = arith.subf %44, %38 : vector<4x128xf32>
    %46 = arith.mulf %45, %43 : vector<4x128xf32>
    %47 = arith.mulf %38, %12 : vector<4x128xf32>
    %48 = arith.addf %46, %47 : vector<4x128xf32>
    %49 = vector.broadcast %19 : vector<4x1xf32> to vector<4x128xf32>
    %50 = arith.mulf %49, %48 : vector<4x128xf32>
    %cst_21 = arith.constant 1.000000e+00 : f32
    %51 = vector.broadcast %cst_21 : f32 to vector<4x1xf32>
    %52 = arith.subf %51, %19 : vector<4x1xf32>
    %53 = vector.broadcast %52 : vector<4x1xf32> to vector<4x128xf32>
    %54 = arith.mulf %53, %12 : vector<4x128xf32>
    %55 = arith.addf %50, %54 : vector<4x128xf32>
    %56 = vector.broadcast %19 : vector<4x1xf32> to vector<4x128xf32>
    %57 = arith.mulf %55, %56 : vector<4x128xf32>
    %58 = arith.index_cast %c0_i32 : i32 to index
    %c0_22 = arith.constant 0 : index
    %c0_23 = arith.constant 0 : index
    %59 = vector.load %arg6[%58, %c0_22, %c0_23] : memref<8x4x128xf32, #tpu.memory_space<vmem>>, vector<1x4x128xf32>
    %60 = vector.shape_cast %59 : vector<1x4x128xf32> to vector<4x128xf32>
    %61 = vector.shape_cast %57 : vector<4x128xf32> to vector<1x4x128xf32>
    tpu.vector_store %arg6[%58, %c0_22, %c0_23], %61 {strides = array<i32>} : memref<8x4x128xf32, #tpu.memory_space<vmem>>, vector<1x4x128xf32>,
    %c1_i32 = arith.constant 1 : i32
    %62 = arith.index_cast %c1_i32 : i32 to index
    %c0_24 = arith.constant 0 : index
    %c0_25 = arith.constant 0 : index
    %63 = vector.load %arg8[%62, %c0_24, %c0_25] : memref<8x4x384xf32, #tpu.memory_space<vmem>>, vector<1x4x384xf32>
    %64 = vector.shape_cast %63 : vector<1x4x384xf32> to vector<4x384xf32>
    %65 = arith.index_cast %c1_i32 : i32 to index
    %c0_26 = arith.constant 0 : index
    %66 = vector.load %arg1[%65, %c0_26] : memref<8x4xf32, #tpu.memory_space<vmem>>, vector<1x4xf32>
    %67 = vector.shape_cast %66 : vector<1x4xf32> to vector<4xf32>
    %68 = vector.shape_cast %67 : vector<4xf32> to vector<4x1xf32>
    %cst_27 = arith.constant dense<0.000000e+00> : vector<4x384xf32>
    %69 = tpu.matmul %55, %10, %cst_27 {dimension_numbers = #tpu.dot_dimension_numbers<[1], [0], [0], [1], [0, 0, 1, 1], [], []>} : vector<4x128xf32>, vector<128x384xf32>, vector<4x384xf32> -> vector<4x384xf32>
    %70 = vector.broadcast %11 : vector<1x384xf32> to vector<4x384xf32>
    %71 = arith.addf %69, %70 : vector<4x384xf32>
    %72 = vector.extract_strided_slice %64 {offsets = [0, 0], sizes = [4, 128], strides = [1, 1]} : vector<4x384xf32> to vector<4x128xf32>
    %73 = vector.extract_strided_slice %71 {offsets = [0, 0], sizes = [4, 128], strides = [1, 1]} : vector<4x384xf32> to vector<4x128xf32>
    %74 = arith.addf %72, %73 : vector<4x128xf32>
    %75 = arith.negf %74 : vector<4x128xf32>
    %76 = math.exp %75 : vector<4x128xf32>
    %cst_28 = arith.constant 1.000000e+00 : f32
    %77 = vector.broadcast %cst_28 : f32 to vector<4x128xf32>
    %78 = arith.addf %77, %76 : vector<4x128xf32>
    %79 = arith.divf %77, %78 : vector<4x128xf32>
    %80 = vector.extract_strided_slice %64 {offsets = [0, 128], sizes = [4, 128], strides = [1, 1]} : vector<4x384xf32> to vector<4x128xf32>
    %81 = vector.extract_strided_slice %71 {offsets = [0, 128], sizes = [4, 128], strides = [1, 1]} : vector<4x384xf32> to vector<4x128xf32>
    %82 = arith.addf %80, %81 : vector<4x128xf32>
    %83 = arith.negf %82 : vector<4x128xf32>
    %84 = math.exp %83 : vector<4x128xf32>
    %cst_29 = arith.constant 1.000000e+00 : f32
    %85 = vector.broadcast %cst_29 : f32 to vector<4x128xf32>
    %86 = arith.addf %85, %84 : vector<4x128xf32>
    %87 = arith.divf %85, %86 : vector<4x128xf32>
    %88 = vector.extract_strided_slice %64 {offsets = [0, 256], sizes = [4, 128], strides = [1, 1]} : vector<4x384xf32> to vector<4x128xf32>
    %89 = vector.extract_strided_slice %71 {offsets = [0, 256], sizes = [4, 128], strides = [1, 1]} : vector<4x384xf32> to vector<4x128xf32>
    %90 = arith.mulf %79, %89 : vector<4x128xf32>
    %91 = arith.addf %88, %90 : vector<4x128xf32>
    %92 = math.tanh %91 : vector<4x128xf32>
    %cst_30 = arith.constant 1.000000e+00 : f32
    %93 = vector.broadcast %cst_30 : f32 to vector<4x128xf32>
    %94 = arith.subf %93, %87 : vector<4x128xf32>
    %95 = arith.mulf %94, %92 : vector<4x128xf32>
    %96 = arith.mulf %87, %55 : vector<4x128xf32>
    %97 = arith.addf %95, %96 : vector<4x128xf32>
    %98 = vector.broadcast %68 : vector<4x1xf32> to vector<4x128xf32>
    %99 = arith.mulf %98, %97 : vector<4x128xf32>
    %cst_31 = arith.constant 1.000000e+00 : f32
    %100 = vector.broadcast %cst_31 : f32 to vector<4x1xf32>
    %101 = arith.subf %100, %68 : vector<4x1xf32>
    %102 = vector.broadcast %101 : vector<4x1xf32> to vector<4x128xf32>
    %103 = arith.mulf %102, %55 : vector<4x128xf32>
    %104 = arith.addf %99, %103 : vector<4x128xf32>
    %105 = vector.broadcast %68 : vector<4x1xf32> to vector<4x128xf32>
    %106 = arith.mulf %104, %105 : vector<4x128xf32>
    %107 = arith.index_cast %c1_i32 : i32 to index
    %c0_32 = arith.constant 0 : index
    %c0_33 = arith.constant 0 : index
    %108 = vector.load %arg6[%107, %c0_32, %c0_33] : memref<8x4x128xf32, #tpu.memory_space<vmem>>, vector<1x4x128xf32>
    %109 = vector.shape_cast %108 : vector<1x4x128xf32> to vector<4x128xf32>
    %110 = vector.shape_cast %106 : vector<4x128xf32> to vector<1x4x128xf32>
    tpu.vector_store %arg6[%107, %c0_32, %c0_33], %110 {strides = array<i32>} : memref<8x4x128xf32, #tpu.memory_space<vmem>>, vector<1x4x128xf32>,
    %c2_i32 = arith.constant 2 : i32
    %111 = arith.index_cast %c2_i32 : i32 to index
    %c0_34 = arith.constant 0 : index
    %c0_35 = arith.constant 0 : index
    %112 = vector.load %arg8[%111, %c0_34, %c0_35] : memref<8x4x384xf32, #tpu.memory_space<vmem>>, vector<1x4x384xf32>
    %113 = vector.shape_cast %112 : vector<1x4x384xf32> to vector<4x384xf32>
    %114 = arith.index_cast %c2_i32 : i32 to index
    %c0_36 = arith.constant 0 : index
    %115 = vector.load %arg1[%114, %c0_36] : memref<8x4xf32, #tpu.memory_space<vmem>>, vector<1x4xf32>
    %116 = vector.shape_cast %115 : vector<1x4xf32> to vector<4xf32>
    %117 = vector.shape_cast %116 : vector<4xf32> to vector<4x1xf32>
    %cst_37 = arith.constant dense<0.000000e+00> : vector<4x384xf32>
    %118 = tpu.matmul %104, %10, %cst_37 {dimension_numbers = #tpu.dot_dimension_numbers<[1], [0], [0], [1], [0, 0, 1, 1], [], []>} : vector<4x128xf32>, vector<128x384xf32>, vector<4x384xf32> -> vector<4x384xf32>
    %119 = vector.broadcast %11 : vector<1x384xf32> to vector<4x384xf32>
    %120 = arith.addf %118, %119 : vector<4x384xf32>
    %121 = vector.extract_strided_slice %113 {offsets = [0, 0], sizes = [4, 128], strides = [1, 1]} : vector<4x384xf32> to vector<4x128xf32>
    %122 = vector.extract_strided_slice %120 {offsets = [0, 0], sizes = [4, 128], strides = [1, 1]} : vector<4x384xf32> to vector<4x128xf32>
    %123 = arith.addf %121, %122 : vector<4x128xf32>
    %124 = arith.negf %123 : vector<4x128xf32>
    %125 = math.exp %124 : vector<4x128xf32>
    %cst_38 = arith.constant 1.000000e+00 : f32
    %126 = vector.broadcast %cst_38 : f32 to vector<4x128xf32>
    %127 = arith.addf %126, %125 : vector<4x128xf32>
    %128 = arith.divf %126, %127 : vector<4x128xf32>
    %129 = vector.extract_strided_slice %113 {offsets = [0, 128], sizes = [4, 128], strides = [1, 1]} : vector<4x384xf32> to vector<4x128xf32>
    %130 = vector.extract_strided_slice %120 {offsets = [0, 128], sizes = [4, 128], strides = [1, 1]} : vector<4x384xf32> to vector<4x128xf32>
    %131 = arith.addf %129, %130 : vector<4x128xf32>
    %132 = arith.negf %131 : vector<4x128xf32>
    %133 = math.exp %132 : vector<4x128xf32>
    %cst_39 = arith.constant 1.000000e+00 : f32
    %134 = vector.broadcast %cst_39 : f32 to vector<4x128xf32>
    %135 = arith.addf %134, %133 : vector<4x128xf32>
    %136 = arith.divf %134, %135 : vector<4x128xf32>
    %137 = vector.extract_strided_slice %113 {offsets = [0, 256], sizes = [4, 128], strides = [1, 1]} : vector<4x384xf32> to vector<4x128xf32>
    %138 = vector.extract_strided_slice %120 {offsets = [0, 256], sizes = [4, 128], strides = [1, 1]} : vector<4x384xf32> to vector<4x128xf32>
    %139 = arith.mulf %128, %138 : vector<4x128xf32>
    %140 = arith.addf %137, %139 : vector<4x128xf32>
    %141 = math.tanh %140 : vector<4x128xf32>
    %cst_40 = arith.constant 1.000000e+00 : f32
    %142 = vector.broadcast %cst_40 : f32 to vector<4x128xf32>
    %143 = arith.subf %142, %136 : vector<4x128xf32>
    %144 = arith.mulf %143, %141 : vector<4x128xf32>
    %145 = arith.mulf %136, %104 : vector<4x128xf32>
    %146 = arith.addf %144, %145 : vector<4x128xf32>
    %147 = vector.broadcast %117 : vector<4x1xf32> to vector<4x128xf32>
    %148 = arith.mulf %147, %146 : vector<4x128xf32>
    %cst_41 = arith.constant 1.000000e+00 : f32
    %149 = vector.broadcast %cst_41 : f32 to vector<4x1xf32>
    %150 = arith.subf %149, %117 : vector<4x1xf32>
    %151 = vector.broadcast %150 : vector<4x1xf32> to vector<4x128xf32>
    %152 = arith.mulf %151, %104 : vector<4x128xf32>
    %153 = arith.addf %148, %152 : vector<4x128xf32>
    %154 = vector.broadcast %117 : vector<4x1xf32> to vector<4x128xf32>
    %155 = arith.mulf %153, %154 : vector<4x128xf32>
    %156 = arith.index_cast %c2_i32 : i32 to index
    %c0_42 = arith.constant 0 : index
    %c0_43 = arith.constant 0 : index
    %157 = vector.load %arg6[%156, %c0_42, %c0_43] : memref<8x4x128xf32, #tpu.memory_space<vmem>>, vector<1x4x128xf32>
    %158 = vector.shape_cast %157 : vector<1x4x128xf32> to vector<4x128xf32>
    %159 = vector.shape_cast %155 : vector<4x128xf32> to vector<1x4x128xf32>
    tpu.vector_store %arg6[%156, %c0_42, %c0_43], %159 {strides = array<i32>} : memref<8x4x128xf32, #tpu.memory_space<vmem>>, vector<1x4x128xf32>,
    %c3_i32 = arith.constant 3 : i32
    %160 = arith.index_cast %c3_i32 : i32 to index
    %c0_44 = arith.constant 0 : index
    %c0_45 = arith.constant 0 : index
    %161 = vector.load %arg8[%160, %c0_44, %c0_45] : memref<8x4x384xf32, #tpu.memory_space<vmem>>, vector<1x4x384xf32>
    %162 = vector.shape_cast %161 : vector<1x4x384xf32> to vector<4x384xf32>
    %163 = arith.index_cast %c3_i32 : i32 to index
    %c0_46 = arith.constant 0 : index
    %164 = vector.load %arg1[%163, %c0_46] : memref<8x4xf32, #tpu.memory_space<vmem>>, vector<1x4xf32>
    %165 = vector.shape_cast %164 : vector<1x4xf32> to vector<4xf32>
    %166 = vector.shape_cast %165 : vector<4xf32> to vector<4x1xf32>
    %cst_47 = arith.constant dense<0.000000e+00> : vector<4x384xf32>
    %167 = tpu.matmul %153, %10, %cst_47 {dimension_numbers = #tpu.dot_dimension_numbers<[1], [0], [0], [1], [0, 0, 1, 1], [], []>} : vector<4x128xf32>, vector<128x384xf32>, vector<4x384xf32> -> vector<4x384xf32>
    %168 = vector.broadcast %11 : vector<1x384xf32> to vector<4x384xf32>
    %169 = arith.addf %167, %168 : vector<4x384xf32>
    %170 = vector.extract_strided_slice %162 {offsets = [0, 0], sizes = [4, 128], strides = [1, 1]} : vector<4x384xf32> to vector<4x128xf32>
    %171 = vector.extract_strided_slice %169 {offsets = [0, 0], sizes = [4, 128], strides = [1, 1]} : vector<4x384xf32> to vector<4x128xf32>
    %172 = arith.addf %170, %171 : vector<4x128xf32>
    %173 = arith.negf %172 : vector<4x128xf32>
    %174 = math.exp %173 : vector<4x128xf32>
    %cst_48 = arith.constant 1.000000e+00 : f32
    %175 = vector.broadcast %cst_48 : f32 to vector<4x128xf32>
    %176 = arith.addf %175, %174 : vector<4x128xf32>
    %177 = arith.divf %175, %176 : vector<4x128xf32>
    %178 = vector.extract_strided_slice %162 {offsets = [0, 128], sizes = [4, 128], strides = [1, 1]} : vector<4x384xf32> to vector<4x128xf32>
    %179 = vector.extract_strided_slice %169 {offsets = [0, 128], sizes = [4, 128], strides = [1, 1]} : vector<4x384xf32> to vector<4x128xf32>
    %180 = arith.addf %178, %179 : vector<4x128xf32>
    %181 = arith.negf %180 : vector<4x128xf32>
    %182 = math.exp %181 : vector<4x128xf32>
    %cst_49 = arith.constant 1.000000e+00 : f32
    %183 = vector.broadcast %cst_49 : f32 to vector<4x128xf32>
    %184 = arith.addf %183, %182 : vector<4x128xf32>
    %185 = arith.divf %183, %184 : vector<4x128xf32>
    %186 = vector.extract_strided_slice %162 {offsets = [0, 256], sizes = [4, 128], strides = [1, 1]} : vector<4x384xf32> to vector<4x128xf32>
    %187 = vector.extract_strided_slice %169 {offsets = [0, 256], sizes = [4, 128], strides = [1, 1]} : vector<4x384xf32> to vector<4x128xf32>
    %188 = arith.mulf %177, %187 : vector<4x128xf32>
    %189 = arith.addf %186, %188 : vector<4x128xf32>
    %190 = math.tanh %189 : vector<4x128xf32>
    %cst_50 = arith.constant 1.000000e+00 : f32
    %191 = vector.broadcast %cst_50 : f32 to vector<4x128xf32>
    %192 = arith.subf %191, %185 : vector<4x128xf32>
    %193 = arith.mulf %192, %190 : vector<4x128xf32>
    %194 = arith.mulf %185, %153 : vector<4x128xf32>
    %195 = arith.addf %193, %194 : vector<4x128xf32>
    %196 = vector.broadcast %166 : vector<4x1xf32> to vector<4x128xf32>
    %197 = arith.mulf %196, %195 : vector<4x128xf32>
    %cst_51 = arith.constant 1.000000e+00 : f32
    %198 = vector.broadcast %cst_51 : f32 to vector<4x1xf32>
    %199 = arith.subf %198, %166 : vector<4x1xf32>
    %200 = vector.broadcast %199 : vector<4x1xf32> to vector<4x128xf32>
    %201 = arith.mulf %200, %153 : vector<4x128xf32>
    %202 = arith.addf %197, %201 : vector<4x128xf32>
    %203 = vector.broadcast %166 : vector<4x1xf32> to vector<4x128xf32>
    %204 = arith.mulf %202, %203 : vector<4x128xf32>
    %205 = arith.index_cast %c3_i32 : i32 to index
    %c0_52 = arith.constant 0 : index
    %c0_53 = arith.constant 0 : index
    %206 = vector.load %arg6[%205, %c0_52, %c0_53] : memref<8x4x128xf32, #tpu.memory_space<vmem>>, vector<1x4x128xf32>
    %207 = vector.shape_cast %206 : vector<1x4x128xf32> to vector<4x128xf32>
    %208 = vector.shape_cast %204 : vector<4x128xf32> to vector<1x4x128xf32>
    tpu.vector_store %arg6[%205, %c0_52, %c0_53], %208 {strides = array<i32>} : memref<8x4x128xf32, #tpu.memory_space<vmem>>, vector<1x4x128xf32>,
    %c4_i32 = arith.constant 4 : i32
    %209 = arith.index_cast %c4_i32 : i32 to index
    %c0_54 = arith.constant 0 : index
    %c0_55 = arith.constant 0 : index
    %210 = vector.load %arg8[%209, %c0_54, %c0_55] : memref<8x4x384xf32, #tpu.memory_space<vmem>>, vector<1x4x384xf32>
    %211 = vector.shape_cast %210 : vector<1x4x384xf32> to vector<4x384xf32>
    %212 = arith.index_cast %c4_i32 : i32 to index
    %c0_56 = arith.constant 0 : index
    %213 = vector.load %arg1[%212, %c0_56] : memref<8x4xf32, #tpu.memory_space<vmem>>, vector<1x4xf32>
    %214 = vector.shape_cast %213 : vector<1x4xf32> to vector<4xf32>
    %215 = vector.shape_cast %214 : vector<4xf32> to vector<4x1xf32>
    %cst_57 = arith.constant dense<0.000000e+00> : vector<4x384xf32>
    %216 = tpu.matmul %202, %10, %cst_57 {dimension_numbers = #tpu.dot_dimension_numbers<[1], [0], [0], [1], [0, 0, 1, 1], [], []>} : vector<4x128xf32>, vector<128x384xf32>, vector<4x384xf32> -> vector<4x384xf32>
    %217 = vector.broadcast %11 : vector<1x384xf32> to vector<4x384xf32>
    %218 = arith.addf %216, %217 : vector<4x384xf32>
    %219 = vector.extract_strided_slice %211 {offsets = [0, 0], sizes = [4, 128], strides = [1, 1]} : vector<4x384xf32> to vector<4x128xf32>
    %220 = vector.extract_strided_slice %218 {offsets = [0, 0], sizes = [4, 128], strides = [1, 1]} : vector<4x384xf32> to vector<4x128xf32>
    %221 = arith.addf %219, %220 : vector<4x128xf32>
    %222 = arith.negf %221 : vector<4x128xf32>
    %223 = math.exp %222 : vector<4x128xf32>
    %cst_58 = arith.constant 1.000000e+00 : f32
    %224 = vector.broadcast %cst_58 : f32 to vector<4x128xf32>
    %225 = arith.addf %224, %223 : vector<4x128xf32>
    %226 = arith.divf %224, %225 : vector<4x128xf32>
    %227 = vector.extract_strided_slice %211 {offsets = [0, 128], sizes = [4, 128], strides = [1, 1]} : vector<4x384xf32> to vector<4x128xf32>
    %228 = vector.extract_strided_slice %218 {offsets = [0, 128], sizes = [4, 128], strides = [1, 1]} : vector<4x384xf32> to vector<4x128xf32>
    %229 = arith.addf %227, %228 : vector<4x128xf32>
    %230 = arith.negf %229 : vector<4x128xf32>
    %231 = math.exp %230 : vector<4x128xf32>
    %cst_59 = arith.constant 1.000000e+00 : f32
    %232 = vector.broadcast %cst_59 : f32 to vector<4x128xf32>
    %233 = arith.addf %232, %231 : vector<4x128xf32>
    %234 = arith.divf %232, %233 : vector<4x128xf32>
    %235 = vector.extract_strided_slice %211 {offsets = [0, 256], sizes = [4, 128], strides = [1, 1]} : vector<4x384xf32> to vector<4x128xf32>
    %236 = vector.extract_strided_slice %218 {offsets = [0, 256], sizes = [4, 128], strides = [1, 1]} : vector<4x384xf32> to vector<4x128xf32>
    %237 = arith.mulf %226, %236 : vector<4x128xf32>
    %238 = arith.addf %235, %237 : vector<4x128xf32>
    %239 = math.tanh %238 : vector<4x128xf32>
    %cst_60 = arith.constant 1.000000e+00 : f32
    %240 = vector.broadcast %cst_60 : f32 to vector<4x128xf32>
    %241 = arith.subf %240, %234 : vector<4x128xf32>
    %242 = arith.mulf %241, %239 : vector<4x128xf32>
    %243 = arith.mulf %234, %202 : vector<4x128xf32>
    %244 = arith.addf %242, %243 : vector<4x128xf32>
    %245 = vector.broadcast %215 : vector<4x1xf32> to vector<4x128xf32>
    %246 = arith.mulf %245, %244 : vector<4x128xf32>
    %cst_61 = arith.constant 1.000000e+00 : f32
    %247 = vector.broadcast %cst_61 : f32 to vector<4x1xf32>
    %248 = arith.subf %247, %215 : vector<4x1xf32>
    %249 = vector.broadcast %248 : vector<4x1xf32> to vector<4x128xf32>
    %250 = arith.mulf %249, %202 : vector<4x128xf32>
    %251 = arith.addf %246, %250 : vector<4x128xf32>
    %252 = vector.broadcast %215 : vector<4x1xf32> to vector<4x128xf32>
    %253 = arith.mulf %251, %252 : vector<4x128xf32>
    %254 = arith.index_cast %c4_i32 : i32 to index
    %c0_62 = arith.constant 0 : index
    %c0_63 = arith.constant 0 : index
    %255 = vector.load %arg6[%254, %c0_62, %c0_63] : memref<8x4x128xf32, #tpu.memory_space<vmem>>, vector<1x4x128xf32>
    %256 = vector.shape_cast %255 : vector<1x4x128xf32> to vector<4x128xf32>
    %257 = vector.shape_cast %253 : vector<4x128xf32> to vector<1x4x128xf32>
    tpu.vector_store %arg6[%254, %c0_62, %c0_63], %257 {strides = array<i32>} : memref<8x4x128xf32, #tpu.memory_space<vmem>>, vector<1x4x128xf32>,
    %c5_i32 = arith.constant 5 : i32
    %258 = arith.index_cast %c5_i32 : i32 to index
    %c0_64 = arith.constant 0 : index
    %c0_65 = arith.constant 0 : index
    %259 = vector.load %arg8[%258, %c0_64, %c0_65] : memref<8x4x384xf32, #tpu.memory_space<vmem>>, vector<1x4x384xf32>
    %260 = vector.shape_cast %259 : vector<1x4x384xf32> to vector<4x384xf32>
    %261 = arith.index_cast %c5_i32 : i32 to index
    %c0_66 = arith.constant 0 : index
    %262 = vector.load %arg1[%261, %c0_66] : memref<8x4xf32, #tpu.memory_space<vmem>>, vector<1x4xf32>
    %263 = vector.shape_cast %262 : vector<1x4xf32> to vector<4xf32>
    %264 = vector.shape_cast %263 : vector<4xf32> to vector<4x1xf32>
    %cst_67 = arith.constant dense<0.000000e+00> : vector<4x384xf32>
    %265 = tpu.matmul %251, %10, %cst_67 {dimension_numbers = #tpu.dot_dimension_numbers<[1], [0], [0], [1], [0, 0, 1, 1], [], []>} : vector<4x128xf32>, vector<128x384xf32>, vector<4x384xf32> -> vector<4x384xf32>
    %266 = vector.broadcast %11 : vector<1x384xf32> to vector<4x384xf32>
    %267 = arith.addf %265, %266 : vector<4x384xf32>
    %268 = vector.extract_strided_slice %260 {offsets = [0, 0], sizes = [4, 128], strides = [1, 1]} : vector<4x384xf32> to vector<4x128xf32>
    %269 = vector.extract_strided_slice %267 {offsets = [0, 0], sizes = [4, 128], strides = [1, 1]} : vector<4x384xf32> to vector<4x128xf32>
    %270 = arith.addf %268, %269 : vector<4x128xf32>
    %271 = arith.negf %270 : vector<4x128xf32>
    %272 = math.exp %271 : vector<4x128xf32>
    %cst_68 = arith.constant 1.000000e+00 : f32
    %273 = vector.broadcast %cst_68 : f32 to vector<4x128xf32>
    %274 = arith.addf %273, %272 : vector<4x128xf32>
    %275 = arith.divf %273, %274 : vector<4x128xf32>
    %276 = vector.extract_strided_slice %260 {offsets = [0, 128], sizes = [4, 128], strides = [1, 1]} : vector<4x384xf32> to vector<4x128xf32>
    %277 = vector.extract_strided_slice %267 {offsets = [0, 128], sizes = [4, 128], strides = [1, 1]} : vector<4x384xf32> to vector<4x128xf32>
    %278 = arith.addf %276, %277 : vector<4x128xf32>
    %279 = arith.negf %278 : vector<4x128xf32>
    %280 = math.exp %279 : vector<4x128xf32>
    %cst_69 = arith.constant 1.000000e+00 : f32
    %281 = vector.broadcast %cst_69 : f32 to vector<4x128xf32>
    %282 = arith.addf %281, %280 : vector<4x128xf32>
    %283 = arith.divf %281, %282 : vector<4x128xf32>
    %284 = vector.extract_strided_slice %260 {offsets = [0, 256], sizes = [4, 128], strides = [1, 1]} : vector<4x384xf32> to vector<4x128xf32>
    %285 = vector.extract_strided_slice %267 {offsets = [0, 256], sizes = [4, 128], strides = [1, 1]} : vector<4x384xf32> to vector<4x128xf32>
    %286 = arith.mulf %275, %285 : vector<4x128xf32>
    %287 = arith.addf %284, %286 : vector<4x128xf32>
    %288 = math.tanh %287 : vector<4x128xf32>
    %cst_70 = arith.constant 1.000000e+00 : f32
    %289 = vector.broadcast %cst_70 : f32 to vector<4x128xf32>
    %290 = arith.subf %289, %283 : vector<4x128xf32>
    %291 = arith.mulf %290, %288 : vector<4x128xf32>
    %292 = arith.mulf %283, %251 : vector<4x128xf32>
    %293 = arith.addf %291, %292 : vector<4x128xf32>
    %294 = vector.broadcast %264 : vector<4x1xf32> to vector<4x128xf32>
    %295 = arith.mulf %294, %293 : vector<4x128xf32>
    %cst_71 = arith.constant 1.000000e+00 : f32
    %296 = vector.broadcast %cst_71 : f32 to vector<4x1xf32>
    %297 = arith.subf %296, %264 : vector<4x1xf32>
    %298 = vector.broadcast %297 : vector<4x1xf32> to vector<4x128xf32>
    %299 = arith.mulf %298, %251 : vector<4x128xf32>
    %300 = arith.addf %295, %299 : vector<4x128xf32>
    %301 = vector.broadcast %264 : vector<4x1xf32> to vector<4x128xf32>
    %302 = arith.mulf %300, %301 : vector<4x128xf32>
    %303 = arith.index_cast %c5_i32 : i32 to index
    %c0_72 = arith.constant 0 : index
    %c0_73 = arith.constant 0 : index
    %304 = vector.load %arg6[%303, %c0_72, %c0_73] : memref<8x4x128xf32, #tpu.memory_space<vmem>>, vector<1x4x128xf32>
    %305 = vector.shape_cast %304 : vector<1x4x128xf32> to vector<4x128xf32>
    %306 = vector.shape_cast %302 : vector<4x128xf32> to vector<1x4x128xf32>
    tpu.vector_store %arg6[%303, %c0_72, %c0_73], %306 {strides = array<i32>} : memref<8x4x128xf32, #tpu.memory_space<vmem>>, vector<1x4x128xf32>,
    %c6_i32 = arith.constant 6 : i32
    %307 = arith.index_cast %c6_i32 : i32 to index
    %c0_74 = arith.constant 0 : index
    %c0_75 = arith.constant 0 : index
    %308 = vector.load %arg8[%307, %c0_74, %c0_75] : memref<8x4x384xf32, #tpu.memory_space<vmem>>, vector<1x4x384xf32>
    %309 = vector.shape_cast %308 : vector<1x4x384xf32> to vector<4x384xf32>
    %310 = arith.index_cast %c6_i32 : i32 to index
    %c0_76 = arith.constant 0 : index
    %311 = vector.load %arg1[%310, %c0_76] : memref<8x4xf32, #tpu.memory_space<vmem>>, vector<1x4xf32>
    %312 = vector.shape_cast %311 : vector<1x4xf32> to vector<4xf32>
    %313 = vector.shape_cast %312 : vector<4xf32> to vector<4x1xf32>
    %cst_77 = arith.constant dense<0.000000e+00> : vector<4x384xf32>
    %314 = tpu.matmul %300, %10, %cst_77 {dimension_numbers = #tpu.dot_dimension_numbers<[1], [0], [0], [1], [0, 0, 1, 1], [], []>} : vector<4x128xf32>, vector<128x384xf32>, vector<4x384xf32> -> vector<4x384xf32>
    %315 = vector.broadcast %11 : vector<1x384xf32> to vector<4x384xf32>
    %316 = arith.addf %314, %315 : vector<4x384xf32>
    %317 = vector.extract_strided_slice %309 {offsets = [0, 0], sizes = [4, 128], strides = [1, 1]} : vector<4x384xf32> to vector<4x128xf32>
    %318 = vector.extract_strided_slice %316 {offsets = [0, 0], sizes = [4, 128], strides = [1, 1]} : vector<4x384xf32> to vector<4x128xf32>
    %319 = arith.addf %317, %318 : vector<4x128xf32>
    %320 = arith.negf %319 : vector<4x128xf32>
    %321 = math.exp %320 : vector<4x128xf32>
    %cst_78 = arith.constant 1.000000e+00 : f32
    %322 = vector.broadcast %cst_78 : f32 to vector<4x128xf32>
    %323 = arith.addf %322, %321 : vector<4x128xf32>
    %324 = arith.divf %322, %323 : vector<4x128xf32>
    %325 = vector.extract_strided_slice %309 {offsets = [0, 128], sizes = [4, 128], strides = [1, 1]} : vector<4x384xf32> to vector<4x128xf32>
    %326 = vector.extract_strided_slice %316 {offsets = [0, 128], sizes = [4, 128], strides = [1, 1]} : vector<4x384xf32> to vector<4x128xf32>
    %327 = arith.addf %325, %326 : vector<4x128xf32>
    %328 = arith.negf %327 : vector<4x128xf32>
    %329 = math.exp %328 : vector<4x128xf32>
    %cst_79 = arith.constant 1.000000e+00 : f32
    %330 = vector.broadcast %cst_79 : f32 to vector<4x128xf32>
    %331 = arith.addf %330, %329 : vector<4x128xf32>
    %332 = arith.divf %330, %331 : vector<4x128xf32>
    %333 = vector.extract_strided_slice %309 {offsets = [0, 256], sizes = [4, 128], strides = [1, 1]} : vector<4x384xf32> to vector<4x128xf32>
    %334 = vector.extract_strided_slice %316 {offsets = [0, 256], sizes = [4, 128], strides = [1, 1]} : vector<4x384xf32> to vector<4x128xf32>
    %335 = arith.mulf %324, %334 : vector<4x128xf32>
    %336 = arith.addf %333, %335 : vector<4x128xf32>
    %337 = math.tanh %336 : vector<4x128xf32>
    %cst_80 = arith.constant 1.000000e+00 : f32
    %338 = vector.broadcast %cst_80 : f32 to vector<4x128xf32>
    %339 = arith.subf %338, %332 : vector<4x128xf32>
    %340 = arith.mulf %339, %337 : vector<4x128xf32>
    %341 = arith.mulf %332, %300 : vector<4x128xf32>
    %342 = arith.addf %340, %341 : vector<4x128xf32>
    %343 = vector.broadcast %313 : vector<4x1xf32> to vector<4x128xf32>
    %344 = arith.mulf %343, %342 : vector<4x128xf32>
    %cst_81 = arith.constant 1.000000e+00 : f32
    %345 = vector.broadcast %cst_81 : f32 to vector<4x1xf32>
    %346 = arith.subf %345, %313 : vector<4x1xf32>
    %347 = vector.broadcast %346 : vector<4x1xf32> to vector<4x128xf32>
    %348 = arith.mulf %347, %300 : vector<4x128xf32>
    %349 = arith.addf %344, %348 : vector<4x128xf32>
    %350 = vector.broadcast %313 : vector<4x1xf32> to vector<4x128xf32>
    %351 = arith.mulf %349, %350 : vector<4x128xf32>
    %352 = arith.index_cast %c6_i32 : i32 to index
    %c0_82 = arith.constant 0 : index
    %c0_83 = arith.constant 0 : index
    %353 = vector.load %arg6[%352, %c0_82, %c0_83] : memref<8x4x128xf32, #tpu.memory_space<vmem>>, vector<1x4x128xf32>
    %354 = vector.shape_cast %353 : vector<1x4x128xf32> to vector<4x128xf32>
    %355 = vector.shape_cast %351 : vector<4x128xf32> to vector<1x4x128xf32>
    tpu.vector_store %arg6[%352, %c0_82, %c0_83], %355 {strides = array<i32>} : memref<8x4x128xf32, #tpu.memory_space<vmem>>, vector<1x4x128xf32>,
    %c7_i32 = arith.constant 7 : i32
    %356 = arith.index_cast %c7_i32 : i32 to index
    %c0_84 = arith.constant 0 : index
    %c0_85 = arith.constant 0 : index
    %357 = vector.load %arg8[%356, %c0_84, %c0_85] : memref<8x4x384xf32, #tpu.memory_space<vmem>>, vector<1x4x384xf32>
    %358 = vector.shape_cast %357 : vector<1x4x384xf32> to vector<4x384xf32>
    %359 = arith.index_cast %c7_i32 : i32 to index
    %c0_86 = arith.constant 0 : index
    %360 = vector.load %arg1[%359, %c0_86] : memref<8x4xf32, #tpu.memory_space<vmem>>, vector<1x4xf32>
    %361 = vector.shape_cast %360 : vector<1x4xf32> to vector<4xf32>
    %362 = vector.shape_cast %361 : vector<4xf32> to vector<4x1xf32>
    %cst_87 = arith.constant dense<0.000000e+00> : vector<4x384xf32>
    %363 = tpu.matmul %349, %10, %cst_87 {dimension_numbers = #tpu.dot_dimension_numbers<[1], [0], [0], [1], [0, 0, 1, 1], [], []>} : vector<4x128xf32>, vector<128x384xf32>, vector<4x384xf32> -> vector<4x384xf32>
    %364 = vector.broadcast %11 : vector<1x384xf32> to vector<4x384xf32>
    %365 = arith.addf %363, %364 : vector<4x384xf32>
    %366 = vector.extract_strided_slice %358 {offsets = [0, 0], sizes = [4, 128], strides = [1, 1]} : vector<4x384xf32> to vector<4x128xf32>
    %367 = vector.extract_strided_slice %365 {offsets = [0, 0], sizes = [4, 128], strides = [1, 1]} : vector<4x384xf32> to vector<4x128xf32>
    %368 = arith.addf %366, %367 : vector<4x128xf32>
    %369 = arith.negf %368 : vector<4x128xf32>
    %370 = math.exp %369 : vector<4x128xf32>
    %cst_88 = arith.constant 1.000000e+00 : f32
    %371 = vector.broadcast %cst_88 : f32 to vector<4x128xf32>
    %372 = arith.addf %371, %370 : vector<4x128xf32>
    %373 = arith.divf %371, %372 : vector<4x128xf32>
    %374 = vector.extract_strided_slice %358 {offsets = [0, 128], sizes = [4, 128], strides = [1, 1]} : vector<4x384xf32> to vector<4x128xf32>
    %375 = vector.extract_strided_slice %365 {offsets = [0, 128], sizes = [4, 128], strides = [1, 1]} : vector<4x384xf32> to vector<4x128xf32>
    %376 = arith.addf %374, %375 : vector<4x128xf32>
    %377 = arith.negf %376 : vector<4x128xf32>
    %378 = math.exp %377 : vector<4x128xf32>
    %cst_89 = arith.constant 1.000000e+00 : f32
    %379 = vector.broadcast %cst_89 : f32 to vector<4x128xf32>
    %380 = arith.addf %379, %378 : vector<4x128xf32>
    %381 = arith.divf %379, %380 : vector<4x128xf32>
    %382 = vector.extract_strided_slice %358 {offsets = [0, 256], sizes = [4, 128], strides = [1, 1]} : vector<4x384xf32> to vector<4x128xf32>
    %383 = vector.extract_strided_slice %365 {offsets = [0, 256], sizes = [4, 128], strides = [1, 1]} : vector<4x384xf32> to vector<4x128xf32>
    %384 = arith.mulf %373, %383 : vector<4x128xf32>
    %385 = arith.addf %382, %384 : vector<4x128xf32>
    %386 = math.tanh %385 : vector<4x128xf32>
    %cst_90 = arith.constant 1.000000e+00 : f32
    %387 = vector.broadcast %cst_90 : f32 to vector<4x128xf32>
    %388 = arith.subf %387, %381 : vector<4x128xf32>
    %389 = arith.mulf %388, %386 : vector<4x128xf32>
    %390 = arith.mulf %381, %349 : vector<4x128xf32>
    %391 = arith.addf %389, %390 : vector<4x128xf32>
    %392 = vector.broadcast %362 : vector<4x1xf32> to vector<4x128xf32>
    %393 = arith.mulf %392, %391 : vector<4x128xf32>
    %cst_91 = arith.constant 1.000000e+00 : f32
    %394 = vector.broadcast %cst_91 : f32 to vector<4x1xf32>
    %395 = arith.subf %394, %362 : vector<4x1xf32>
    %396 = vector.broadcast %395 : vector<4x1xf32> to vector<4x128xf32>
    %397 = arith.mulf %396, %349 : vector<4x128xf32>
    %398 = arith.addf %393, %397 : vector<4x128xf32>
    %399 = vector.broadcast %362 : vector<4x1xf32> to vector<4x128xf32>
    %400 = arith.mulf %398, %399 : vector<4x128xf32>
    %401 = arith.index_cast %c7_i32 : i32 to index
    %c0_92 = arith.constant 0 : index
    %c0_93 = arith.constant 0 : index
    %402 = vector.load %arg6[%401, %c0_92, %c0_93] : memref<8x4x128xf32, #tpu.memory_space<vmem>>, vector<1x4x128xf32>
    %403 = vector.shape_cast %402 : vector<1x4x128xf32> to vector<4x128xf32>
    %404 = vector.shape_cast %400 : vector<4x128xf32> to vector<1x4x128xf32>
    tpu.vector_store %arg6[%401, %c0_92, %c0_93], %404 {strides = array<i32>} : memref<8x4x128xf32, #tpu.memory_space<vmem>>, vector<1x4x128xf32>,
    %c8_i32 = arith.constant 8 : i32
    %c0_94 = arith.constant 0 : index
    %c0_95 = arith.constant 0 : index
    %405 = vector.load %arg7[%c0_94, %c0_95] : memref<4x128xf32, #tpu.memory_space<vmem>>, vector<4x128xf32>
    tpu.vector_store %arg7[%c0_94, %c0_95], %398 {strides = array<i32>} : memref<4x128xf32, #tpu.memory_space<vmem>>, vector<4x128xf32>,
    return
  }
}

module attributes {stable_mosaic.version = 11 : i64} {
  func.func @decoder_kernel(%arg0: memref<6x2x32xf32, #tpu.memory_space<vmem>>, %arg1: memref<2x16x128xf32, #tpu.memory_space<vmem>>, %arg2: memref<2x16xf32, #tpu.memory_space<vmem>>, %arg3: memref<2x128xf32, #tpu.memory_space<vmem>>, %arg4: memref<128x128xf32, #tpu.memory_space<vmem>>, %arg5: memref<128x128xf32, #tpu.memory_space<vmem>>, %arg6: memref<1x128xf32, #tpu.memory_space<vmem>>, %arg7: memref<32x384xf32, #tpu.memory_space<vmem>>, %arg8: memref<128x384xf32, #tpu.memory_space<vmem>>, %arg9: memref<128x384xf32, #tpu.memory_space<vmem>>, %arg10: memref<1x384xf32, #tpu.memory_space<vmem>>, %arg11: memref<1x384xf32, #tpu.memory_space<vmem>>, %arg12: memref<128x128xf32, #tpu.memory_space<vmem>>, %arg13: memref<1x128xf32, #tpu.memory_space<vmem>>, %arg14: memref<6x2x128xf32, #tpu.memory_space<vmem>>, %arg15: memref<6x2x384xf32, #tpu.memory_space<vmem>>, %arg16: memref<6x2x128xf32, #tpu.memory_space<vmem>>) attributes {dimension_semantics = [], scalar_prefetch = 0 : i64, scratch_operands = 2 : i64, tpu.core_type = #tpu.core_type<tc>} {
    %c0 = arith.constant 0 : index
    %c0_0 = arith.constant 0 : index
    %c0_1 = arith.constant 0 : index
    %0 = vector.load %arg1[%c0, %c0_0, %c0_1] : memref<2x16x128xf32, #tpu.memory_space<vmem>>, vector<2x16x128xf32>
    %1 = arith.truncf %0 : vector<2x16x128xf32> to vector<2x16x128xbf16>
    %c0_2 = arith.constant 0 : index
    %c0_3 = arith.constant 0 : index
    %2 = vector.load %arg5[%c0_2, %c0_3] : memref<128x128xf32, #tpu.memory_space<vmem>>, vector<128x128xf32>
    %3 = arith.truncf %2 : vector<128x128xf32> to vector<128x128xbf16>
    "tpu.trace_start"() <{level = 10 : i32, message = "blh,hg->blg"}> : () -> ()
    %cst = arith.constant dense<0.000000e+00> : vector<2x16x128xf32>
    %4 = tpu.matmul %1, %3, %cst {dimension_numbers = #tpu.dot_dimension_numbers<[2], [0], [0, 1], [1], [0, 0, 0, 1, 1, 1], [], []>} : vector<2x16x128xbf16>, vector<128x128xbf16>, vector<2x16x128xf32> -> vector<2x16x128xf32>
    "tpu.trace_stop"() : () -> ()
    %c0_4 = arith.constant 0 : index
    %c0_5 = arith.constant 0 : index
    %5 = vector.load %arg2[%c0_4, %c0_5] : memref<2x16xf32, #tpu.memory_space<vmem>>, vector<2x16xf32>
    %cst_6 = arith.constant 1.000000e+00 : f32
    %6 = vector.broadcast %cst_6 : f32 to vector<2x16xf32>
    %7 = arith.subf %6, %5 : vector<2x16xf32>
    %cst_7 = arith.constant -1.000000e+09 : f32
    %8 = vector.broadcast %cst_7 : f32 to vector<2x16xf32>
    %9 = arith.mulf %7, %8 : vector<2x16xf32>
    %c0_8 = arith.constant 0 : index
    %c0_9 = arith.constant 0 : index
    %10 = vector.load %arg6[%c0_8, %c0_9] : memref<1x128xf32, #tpu.memory_space<vmem>>, vector<1x128xf32>
    %11 = vector.shape_cast %10 : vector<1x128xf32> to vector<1x1x128xf32>
    %c0_10 = arith.constant 0 : index
    %c0_11 = arith.constant 0 : index
    %c0_12 = arith.constant 0 : index
    %12 = vector.load %arg0[%c0_10, %c0_11, %c0_12] : memref<6x2x32xf32, #tpu.memory_space<vmem>>, vector<6x2x32xf32>
    %13 = arith.truncf %12 : vector<6x2x32xf32> to vector<6x2x32xbf16>
    %c0_13 = arith.constant 0 : index
    %c0_14 = arith.constant 0 : index
    %14 = vector.load %arg7[%c0_13, %c0_14] : memref<32x384xf32, #tpu.memory_space<vmem>>, vector<32x384xf32>
    %15 = arith.truncf %14 : vector<32x384xf32> to vector<32x384xbf16>
    "tpu.trace_start"() <{level = 10 : i32, message = "tbe,eg->tbg"}> : () -> ()
    %cst_15 = arith.constant dense<0.000000e+00> : vector<6x2x384xf32>
    %16 = tpu.matmul %13, %15, %cst_15 {dimension_numbers = #tpu.dot_dimension_numbers<[2], [0], [0, 1], [1], [0, 0, 0, 1, 1, 1], [], []>} : vector<6x2x32xbf16>, vector<32x384xbf16>, vector<6x2x384xf32> -> vector<6x2x384xf32>
    "tpu.trace_stop"() : () -> ()
    %c0_16 = arith.constant 0 : index
    %c0_17 = arith.constant 0 : index
    %17 = vector.load %arg10[%c0_16, %c0_17] : memref<1x384xf32, #tpu.memory_space<vmem>>, vector<1x384xf32>
    %18 = vector.shape_cast %17 : vector<1x384xf32> to vector<1x1x384xf32>
    %19 = vector.broadcast %18 : vector<1x1x384xf32> to vector<6x2x384xf32>
    %20 = arith.addf %16, %19 : vector<6x2x384xf32>
    %c0_18 = arith.constant 0 : index
    %c0_19 = arith.constant 0 : index
    %c0_20 = arith.constant 0 : index
    %21 = vector.load %arg15[%c0_18, %c0_19, %c0_20] : memref<6x2x384xf32, #tpu.memory_space<vmem>>, vector<6x2x384xf32>
    tpu.vector_store %arg15[%c0_18, %c0_19, %c0_20], %20 {strides = array<i32>} : memref<6x2x384xf32, #tpu.memory_space<vmem>>, vector<6x2x384xf32>,
    %c0_21 = arith.constant 0 : index
    %c0_22 = arith.constant 0 : index
    %22 = vector.load %arg4[%c0_21, %c0_22] : memref<128x128xf32, #tpu.memory_space<vmem>>, vector<128x128xf32>
    %c0_23 = arith.constant 0 : index
    %c0_24 = arith.constant 0 : index
    %23 = vector.load %arg8[%c0_23, %c0_24] : memref<128x384xf32, #tpu.memory_space<vmem>>, vector<128x384xf32>
    %c0_25 = arith.constant 0 : index
    %c0_26 = arith.constant 0 : index
    %24 = vector.load %arg9[%c0_25, %c0_26] : memref<128x384xf32, #tpu.memory_space<vmem>>, vector<128x384xf32>
    %c0_27 = arith.constant 0 : index
    %c0_28 = arith.constant 0 : index
    %25 = vector.load %arg11[%c0_27, %c0_28] : memref<1x384xf32, #tpu.memory_space<vmem>>, vector<1x384xf32>
    %c0_29 = arith.constant 0 : index
    %c0_30 = arith.constant 0 : index
    %26 = vector.load %arg3[%c0_29, %c0_30] : memref<2x128xf32, #tpu.memory_space<vmem>>, vector<2x128xf32>
    %c0_i32 = arith.constant 0 : i32
    %cst_31 = arith.constant dense<0.000000e+00> : vector<2x128xf32>
    %27 = tpu.matmul %26, %22, %cst_31 {dimension_numbers = #tpu.dot_dimension_numbers<[1], [0], [0], [1], [0, 0, 1, 1], [], []>} : vector<2x128xf32>, vector<128x128xf32>, vector<2x128xf32> -> vector<2x128xf32>
    %28 = vector.shape_cast %27 : vector<2x128xf32> to vector<2x1x128xf32>
    %29 = vector.broadcast %28 : vector<2x1x128xf32> to vector<2x16x128xf32>
    %30 = arith.addf %29, %4 : vector<2x16x128xf32>
    %31 = math.tanh %30 : vector<2x16x128xf32>
    %32 = vector.broadcast %11 : vector<1x1x128xf32> to vector<2x16x128xf32>
    %33 = arith.mulf %31, %32 : vector<2x16x128xf32>
    %cst_32 = arith.constant dense<0.000000e+00> : vector<2x16xf32>
    %34 = vector.multi_reduction <add>, %33, %cst_32 [2] : vector<2x16x128xf32> to vector<2x16xf32>
    %35 = arith.addf %34, %9 : vector<2x16xf32>
    %cst_33 = arith.constant dense<0xFF800000> : vector<2xf32>
    %36 = vector.multi_reduction <maximumf>, %35, %cst_33 [1] : vector<2x16xf32> to vector<2xf32>
    %37 = vector.shape_cast %36 : vector<2xf32> to vector<2x1xf32>
    %38 = vector.broadcast %37 : vector<2x1xf32> to vector<2x16xf32>
    %39 = arith.subf %35, %38 : vector<2x16xf32>
    %40 = math.exp %39 : vector<2x16xf32>
    %cst_34 = arith.constant dense<0.000000e+00> : vector<2xf32>
    %41 = vector.multi_reduction <add>, %40, %cst_34 [1] : vector<2x16xf32> to vector<2xf32>
    %42 = vector.shape_cast %41 : vector<2xf32> to vector<2x1xf32>
    %43 = tpu.reciprocal %42 {approx = true} : vector<2x1xf32> -> vector<2x1xf32>
    %44 = vector.broadcast %43 : vector<2x1xf32> to vector<2x16xf32>
    %45 = arith.mulf %40, %44 : vector<2x16xf32>
    %46 = vector.shape_cast %45 : vector<2x16xf32> to vector<2x1x16xf32>
    %47 = arith.truncf %46 : vector<2x1x16xf32> to vector<2x1x16xbf16>
    "tpu.trace_start"() <{level = 10 : i32, message = "bqk,bkh->bqh"}> : () -> ()
    %cst_35 = arith.constant dense<0.000000e+00> : vector<2x1x128xf32>
    %48 = tpu.matmul %47, %1, %cst_35 {dimension_numbers = #tpu.dot_dimension_numbers<[2], [1], [1], [2], [0, 0, 0, 1, 1, 2], [0], [0]>} : vector<2x1x16xbf16>, vector<2x16x128xbf16>, vector<2x1x128xf32> -> vector<2x1x128xf32>
    "tpu.trace_stop"() : () -> ()
    %49 = vector.shape_cast %48 : vector<2x1x128xf32> to vector<2x128xf32>
    %50 = arith.index_cast %c0_i32 : i32 to index
    %c0_36 = arith.constant 0 : index
    %c0_37 = arith.constant 0 : index
    %51 = vector.load %arg15[%50, %c0_36, %c0_37] : memref<6x2x384xf32, #tpu.memory_space<vmem>>, vector<1x2x384xf32>
    %52 = vector.shape_cast %51 : vector<1x2x384xf32> to vector<2x384xf32>
    %cst_38 = arith.constant dense<0.000000e+00> : vector<2x384xf32>
    %53 = tpu.matmul %49, %23, %cst_38 {dimension_numbers = #tpu.dot_dimension_numbers<[1], [0], [0], [1], [0, 0, 1, 1], [], []>} : vector<2x128xf32>, vector<128x384xf32>, vector<2x384xf32> -> vector<2x384xf32>
    %54 = arith.addf %52, %53 : vector<2x384xf32>
    %cst_39 = arith.constant dense<0.000000e+00> : vector<2x384xf32>
    %55 = tpu.matmul %26, %24, %cst_39 {dimension_numbers = #tpu.dot_dimension_numbers<[1], [0], [0], [1], [0, 0, 1, 1], [], []>} : vector<2x128xf32>, vector<128x384xf32>, vector<2x384xf32> -> vector<2x384xf32>
    %56 = vector.broadcast %25 : vector<1x384xf32> to vector<2x384xf32>
    %57 = arith.addf %55, %56 : vector<2x384xf32>
    %58 = vector.extract_strided_slice %54 {offsets = [0, 0], sizes = [2, 128], strides = [1, 1]} : vector<2x384xf32> to vector<2x128xf32>
    %59 = vector.extract_strided_slice %57 {offsets = [0, 0], sizes = [2, 128], strides = [1, 1]} : vector<2x384xf32> to vector<2x128xf32>
    %60 = arith.addf %58, %59 : vector<2x128xf32>
    %61 = arith.negf %60 : vector<2x128xf32>
    %62 = math.exp %61 : vector<2x128xf32>
    %cst_40 = arith.constant 1.000000e+00 : f32
    %63 = vector.broadcast %cst_40 : f32 to vector<2x128xf32>
    %64 = arith.addf %63, %62 : vector<2x128xf32>
    %65 = arith.divf %63, %64 : vector<2x128xf32>
    %66 = vector.extract_strided_slice %54 {offsets = [0, 128], sizes = [2, 128], strides = [1, 1]} : vector<2x384xf32> to vector<2x128xf32>
    %67 = vector.extract_strided_slice %57 {offsets = [0, 128], sizes = [2, 128], strides = [1, 1]} : vector<2x384xf32> to vector<2x128xf32>
    %68 = arith.addf %66, %67 : vector<2x128xf32>
    %69 = arith.negf %68 : vector<2x128xf32>
    %70 = math.exp %69 : vector<2x128xf32>
    %cst_41 = arith.constant 1.000000e+00 : f32
    %71 = vector.broadcast %cst_41 : f32 to vector<2x128xf32>
    %72 = arith.addf %71, %70 : vector<2x128xf32>
    %73 = arith.divf %71, %72 : vector<2x128xf32>
    %74 = vector.extract_strided_slice %54 {offsets = [0, 256], sizes = [2, 128], strides = [1, 1]} : vector<2x384xf32> to vector<2x128xf32>
    %75 = vector.extract_strided_slice %57 {offsets = [0, 256], sizes = [2, 128], strides = [1, 1]} : vector<2x384xf32> to vector<2x128xf32>
    %76 = arith.mulf %65, %75 : vector<2x128xf32>
    %77 = arith.addf %74, %76 : vector<2x128xf32>
    %78 = math.tanh %77 : vector<2x128xf32>
    %cst_42 = arith.constant 1.000000e+00 : f32
    %79 = vector.broadcast %cst_42 : f32 to vector<2x128xf32>
    %80 = arith.subf %79, %73 : vector<2x128xf32>
    %81 = arith.mulf %80, %78 : vector<2x128xf32>
    %82 = arith.mulf %73, %26 : vector<2x128xf32>
    %83 = arith.addf %81, %82 : vector<2x128xf32>
    %84 = arith.index_cast %c0_i32 : i32 to index
    %c0_43 = arith.constant 0 : index
    %c0_44 = arith.constant 0 : index
    %85 = vector.load %arg16[%84, %c0_43, %c0_44] : memref<6x2x128xf32, #tpu.memory_space<vmem>>, vector<1x2x128xf32>
    %86 = vector.shape_cast %85 : vector<1x2x128xf32> to vector<2x128xf32>
    %87 = vector.shape_cast %83 : vector<2x128xf32> to vector<1x2x128xf32>
    tpu.vector_store %arg16[%84, %c0_43, %c0_44], %87 {strides = array<i32>} : memref<6x2x128xf32, #tpu.memory_space<vmem>>, vector<1x2x128xf32>,
    %c1_i32 = arith.constant 1 : i32
    %cst_45 = arith.constant dense<0.000000e+00> : vector<2x128xf32>
    %88 = tpu.matmul %83, %22, %cst_45 {dimension_numbers = #tpu.dot_dimension_numbers<[1], [0], [0], [1], [0, 0, 1, 1], [], []>} : vector<2x128xf32>, vector<128x128xf32>, vector<2x128xf32> -> vector<2x128xf32>
    %89 = vector.shape_cast %88 : vector<2x128xf32> to vector<2x1x128xf32>
    %90 = vector.broadcast %89 : vector<2x1x128xf32> to vector<2x16x128xf32>
    %91 = arith.addf %90, %4 : vector<2x16x128xf32>
    %92 = math.tanh %91 : vector<2x16x128xf32>
    %93 = vector.broadcast %11 : vector<1x1x128xf32> to vector<2x16x128xf32>
    %94 = arith.mulf %92, %93 : vector<2x16x128xf32>
    %cst_46 = arith.constant dense<0.000000e+00> : vector<2x16xf32>
    %95 = vector.multi_reduction <add>, %94, %cst_46 [2] : vector<2x16x128xf32> to vector<2x16xf32>
    %96 = arith.addf %95, %9 : vector<2x16xf32>
    %cst_47 = arith.constant dense<0xFF800000> : vector<2xf32>
    %97 = vector.multi_reduction <maximumf>, %96, %cst_47 [1] : vector<2x16xf32> to vector<2xf32>
    %98 = vector.shape_cast %97 : vector<2xf32> to vector<2x1xf32>
    %99 = vector.broadcast %98 : vector<2x1xf32> to vector<2x16xf32>
    %100 = arith.subf %96, %99 : vector<2x16xf32>
    %101 = math.exp %100 : vector<2x16xf32>
    %cst_48 = arith.constant dense<0.000000e+00> : vector<2xf32>
    %102 = vector.multi_reduction <add>, %101, %cst_48 [1] : vector<2x16xf32> to vector<2xf32>
    %103 = vector.shape_cast %102 : vector<2xf32> to vector<2x1xf32>
    %104 = tpu.reciprocal %103 {approx = true} : vector<2x1xf32> -> vector<2x1xf32>
    %105 = vector.broadcast %104 : vector<2x1xf32> to vector<2x16xf32>
    %106 = arith.mulf %101, %105 : vector<2x16xf32>
    %107 = vector.shape_cast %106 : vector<2x16xf32> to vector<2x1x16xf32>
    %108 = arith.truncf %107 : vector<2x1x16xf32> to vector<2x1x16xbf16>
    "tpu.trace_start"() <{level = 10 : i32, message = "bqk,bkh->bqh"}> : () -> ()
    %cst_49 = arith.constant dense<0.000000e+00> : vector<2x1x128xf32>
    %109 = tpu.matmul %108, %1, %cst_49 {dimension_numbers = #tpu.dot_dimension_numbers<[2], [1], [1], [2], [0, 0, 0, 1, 1, 2], [0], [0]>} : vector<2x1x16xbf16>, vector<2x16x128xbf16>, vector<2x1x128xf32> -> vector<2x1x128xf32>
    "tpu.trace_stop"() : () -> ()
    %110 = vector.shape_cast %109 : vector<2x1x128xf32> to vector<2x128xf32>
    %111 = arith.index_cast %c1_i32 : i32 to index
    %c0_50 = arith.constant 0 : index
    %c0_51 = arith.constant 0 : index
    %112 = vector.load %arg15[%111, %c0_50, %c0_51] : memref<6x2x384xf32, #tpu.memory_space<vmem>>, vector<1x2x384xf32>
    %113 = vector.shape_cast %112 : vector<1x2x384xf32> to vector<2x384xf32>
    %cst_52 = arith.constant dense<0.000000e+00> : vector<2x384xf32>
    %114 = tpu.matmul %110, %23, %cst_52 {dimension_numbers = #tpu.dot_dimension_numbers<[1], [0], [0], [1], [0, 0, 1, 1], [], []>} : vector<2x128xf32>, vector<128x384xf32>, vector<2x384xf32> -> vector<2x384xf32>
    %115 = arith.addf %113, %114 : vector<2x384xf32>
    %cst_53 = arith.constant dense<0.000000e+00> : vector<2x384xf32>
    %116 = tpu.matmul %83, %24, %cst_53 {dimension_numbers = #tpu.dot_dimension_numbers<[1], [0], [0], [1], [0, 0, 1, 1], [], []>} : vector<2x128xf32>, vector<128x384xf32>, vector<2x384xf32> -> vector<2x384xf32>
    %117 = vector.broadcast %25 : vector<1x384xf32> to vector<2x384xf32>
    %118 = arith.addf %116, %117 : vector<2x384xf32>
    %119 = vector.extract_strided_slice %115 {offsets = [0, 0], sizes = [2, 128], strides = [1, 1]} : vector<2x384xf32> to vector<2x128xf32>
    %120 = vector.extract_strided_slice %118 {offsets = [0, 0], sizes = [2, 128], strides = [1, 1]} : vector<2x384xf32> to vector<2x128xf32>
    %121 = arith.addf %119, %120 : vector<2x128xf32>
    %122 = arith.negf %121 : vector<2x128xf32>
    %123 = math.exp %122 : vector<2x128xf32>
    %cst_54 = arith.constant 1.000000e+00 : f32
    %124 = vector.broadcast %cst_54 : f32 to vector<2x128xf32>
    %125 = arith.addf %124, %123 : vector<2x128xf32>
    %126 = arith.divf %124, %125 : vector<2x128xf32>
    %127 = vector.extract_strided_slice %115 {offsets = [0, 128], sizes = [2, 128], strides = [1, 1]} : vector<2x384xf32> to vector<2x128xf32>
    %128 = vector.extract_strided_slice %118 {offsets = [0, 128], sizes = [2, 128], strides = [1, 1]} : vector<2x384xf32> to vector<2x128xf32>
    %129 = arith.addf %127, %128 : vector<2x128xf32>
    %130 = arith.negf %129 : vector<2x128xf32>
    %131 = math.exp %130 : vector<2x128xf32>
    %cst_55 = arith.constant 1.000000e+00 : f32
    %132 = vector.broadcast %cst_55 : f32 to vector<2x128xf32>
    %133 = arith.addf %132, %131 : vector<2x128xf32>
    %134 = arith.divf %132, %133 : vector<2x128xf32>
    %135 = vector.extract_strided_slice %115 {offsets = [0, 256], sizes = [2, 128], strides = [1, 1]} : vector<2x384xf32> to vector<2x128xf32>
    %136 = vector.extract_strided_slice %118 {offsets = [0, 256], sizes = [2, 128], strides = [1, 1]} : vector<2x384xf32> to vector<2x128xf32>
    %137 = arith.mulf %126, %136 : vector<2x128xf32>
    %138 = arith.addf %135, %137 : vector<2x128xf32>
    %139 = math.tanh %138 : vector<2x128xf32>
    %cst_56 = arith.constant 1.000000e+00 : f32
    %140 = vector.broadcast %cst_56 : f32 to vector<2x128xf32>
    %141 = arith.subf %140, %134 : vector<2x128xf32>
    %142 = arith.mulf %141, %139 : vector<2x128xf32>
    %143 = arith.mulf %134, %83 : vector<2x128xf32>
    %144 = arith.addf %142, %143 : vector<2x128xf32>
    %145 = arith.index_cast %c1_i32 : i32 to index
    %c0_57 = arith.constant 0 : index
    %c0_58 = arith.constant 0 : index
    %146 = vector.load %arg16[%145, %c0_57, %c0_58] : memref<6x2x128xf32, #tpu.memory_space<vmem>>, vector<1x2x128xf32>
    %147 = vector.shape_cast %146 : vector<1x2x128xf32> to vector<2x128xf32>
    %148 = vector.shape_cast %144 : vector<2x128xf32> to vector<1x2x128xf32>
    tpu.vector_store %arg16[%145, %c0_57, %c0_58], %148 {strides = array<i32>} : memref<6x2x128xf32, #tpu.memory_space<vmem>>, vector<1x2x128xf32>,
    %c2_i32 = arith.constant 2 : i32
    %cst_59 = arith.constant dense<0.000000e+00> : vector<2x128xf32>
    %149 = tpu.matmul %144, %22, %cst_59 {dimension_numbers = #tpu.dot_dimension_numbers<[1], [0], [0], [1], [0, 0, 1, 1], [], []>} : vector<2x128xf32>, vector<128x128xf32>, vector<2x128xf32> -> vector<2x128xf32>
    %150 = vector.shape_cast %149 : vector<2x128xf32> to vector<2x1x128xf32>
    %151 = vector.broadcast %150 : vector<2x1x128xf32> to vector<2x16x128xf32>
    %152 = arith.addf %151, %4 : vector<2x16x128xf32>
    %153 = math.tanh %152 : vector<2x16x128xf32>
    %154 = vector.broadcast %11 : vector<1x1x128xf32> to vector<2x16x128xf32>
    %155 = arith.mulf %153, %154 : vector<2x16x128xf32>
    %cst_60 = arith.constant dense<0.000000e+00> : vector<2x16xf32>
    %156 = vector.multi_reduction <add>, %155, %cst_60 [2] : vector<2x16x128xf32> to vector<2x16xf32>
    %157 = arith.addf %156, %9 : vector<2x16xf32>
    %cst_61 = arith.constant dense<0xFF800000> : vector<2xf32>
    %158 = vector.multi_reduction <maximumf>, %157, %cst_61 [1] : vector<2x16xf32> to vector<2xf32>
    %159 = vector.shape_cast %158 : vector<2xf32> to vector<2x1xf32>
    %160 = vector.broadcast %159 : vector<2x1xf32> to vector<2x16xf32>
    %161 = arith.subf %157, %160 : vector<2x16xf32>
    %162 = math.exp %161 : vector<2x16xf32>
    %cst_62 = arith.constant dense<0.000000e+00> : vector<2xf32>
    %163 = vector.multi_reduction <add>, %162, %cst_62 [1] : vector<2x16xf32> to vector<2xf32>
    %164 = vector.shape_cast %163 : vector<2xf32> to vector<2x1xf32>
    %165 = tpu.reciprocal %164 {approx = true} : vector<2x1xf32> -> vector<2x1xf32>
    %166 = vector.broadcast %165 : vector<2x1xf32> to vector<2x16xf32>
    %167 = arith.mulf %162, %166 : vector<2x16xf32>
    %168 = vector.shape_cast %167 : vector<2x16xf32> to vector<2x1x16xf32>
    %169 = arith.truncf %168 : vector<2x1x16xf32> to vector<2x1x16xbf16>
    "tpu.trace_start"() <{level = 10 : i32, message = "bqk,bkh->bqh"}> : () -> ()
    %cst_63 = arith.constant dense<0.000000e+00> : vector<2x1x128xf32>
    %170 = tpu.matmul %169, %1, %cst_63 {dimension_numbers = #tpu.dot_dimension_numbers<[2], [1], [1], [2], [0, 0, 0, 1, 1, 2], [0], [0]>} : vector<2x1x16xbf16>, vector<2x16x128xbf16>, vector<2x1x128xf32> -> vector<2x1x128xf32>
    "tpu.trace_stop"() : () -> ()
    %171 = vector.shape_cast %170 : vector<2x1x128xf32> to vector<2x128xf32>
    %172 = arith.index_cast %c2_i32 : i32 to index
    %c0_64 = arith.constant 0 : index
    %c0_65 = arith.constant 0 : index
    %173 = vector.load %arg15[%172, %c0_64, %c0_65] : memref<6x2x384xf32, #tpu.memory_space<vmem>>, vector<1x2x384xf32>
    %174 = vector.shape_cast %173 : vector<1x2x384xf32> to vector<2x384xf32>
    %cst_66 = arith.constant dense<0.000000e+00> : vector<2x384xf32>
    %175 = tpu.matmul %171, %23, %cst_66 {dimension_numbers = #tpu.dot_dimension_numbers<[1], [0], [0], [1], [0, 0, 1, 1], [], []>} : vector<2x128xf32>, vector<128x384xf32>, vector<2x384xf32> -> vector<2x384xf32>
    %176 = arith.addf %174, %175 : vector<2x384xf32>
    %cst_67 = arith.constant dense<0.000000e+00> : vector<2x384xf32>
    %177 = tpu.matmul %144, %24, %cst_67 {dimension_numbers = #tpu.dot_dimension_numbers<[1], [0], [0], [1], [0, 0, 1, 1], [], []>} : vector<2x128xf32>, vector<128x384xf32>, vector<2x384xf32> -> vector<2x384xf32>
    %178 = vector.broadcast %25 : vector<1x384xf32> to vector<2x384xf32>
    %179 = arith.addf %177, %178 : vector<2x384xf32>
    %180 = vector.extract_strided_slice %176 {offsets = [0, 0], sizes = [2, 128], strides = [1, 1]} : vector<2x384xf32> to vector<2x128xf32>
    %181 = vector.extract_strided_slice %179 {offsets = [0, 0], sizes = [2, 128], strides = [1, 1]} : vector<2x384xf32> to vector<2x128xf32>
    %182 = arith.addf %180, %181 : vector<2x128xf32>
    %183 = arith.negf %182 : vector<2x128xf32>
    %184 = math.exp %183 : vector<2x128xf32>
    %cst_68 = arith.constant 1.000000e+00 : f32
    %185 = vector.broadcast %cst_68 : f32 to vector<2x128xf32>
    %186 = arith.addf %185, %184 : vector<2x128xf32>
    %187 = arith.divf %185, %186 : vector<2x128xf32>
    %188 = vector.extract_strided_slice %176 {offsets = [0, 128], sizes = [2, 128], strides = [1, 1]} : vector<2x384xf32> to vector<2x128xf32>
    %189 = vector.extract_strided_slice %179 {offsets = [0, 128], sizes = [2, 128], strides = [1, 1]} : vector<2x384xf32> to vector<2x128xf32>
    %190 = arith.addf %188, %189 : vector<2x128xf32>
    %191 = arith.negf %190 : vector<2x128xf32>
    %192 = math.exp %191 : vector<2x128xf32>
    %cst_69 = arith.constant 1.000000e+00 : f32
    %193 = vector.broadcast %cst_69 : f32 to vector<2x128xf32>
    %194 = arith.addf %193, %192 : vector<2x128xf32>
    %195 = arith.divf %193, %194 : vector<2x128xf32>
    %196 = vector.extract_strided_slice %176 {offsets = [0, 256], sizes = [2, 128], strides = [1, 1]} : vector<2x384xf32> to vector<2x128xf32>
    %197 = vector.extract_strided_slice %179 {offsets = [0, 256], sizes = [2, 128], strides = [1, 1]} : vector<2x384xf32> to vector<2x128xf32>
    %198 = arith.mulf %187, %197 : vector<2x128xf32>
    %199 = arith.addf %196, %198 : vector<2x128xf32>
    %200 = math.tanh %199 : vector<2x128xf32>
    %cst_70 = arith.constant 1.000000e+00 : f32
    %201 = vector.broadcast %cst_70 : f32 to vector<2x128xf32>
    %202 = arith.subf %201, %195 : vector<2x128xf32>
    %203 = arith.mulf %202, %200 : vector<2x128xf32>
    %204 = arith.mulf %195, %144 : vector<2x128xf32>
    %205 = arith.addf %203, %204 : vector<2x128xf32>
    %206 = arith.index_cast %c2_i32 : i32 to index
    %c0_71 = arith.constant 0 : index
    %c0_72 = arith.constant 0 : index
    %207 = vector.load %arg16[%206, %c0_71, %c0_72] : memref<6x2x128xf32, #tpu.memory_space<vmem>>, vector<1x2x128xf32>
    %208 = vector.shape_cast %207 : vector<1x2x128xf32> to vector<2x128xf32>
    %209 = vector.shape_cast %205 : vector<2x128xf32> to vector<1x2x128xf32>
    tpu.vector_store %arg16[%206, %c0_71, %c0_72], %209 {strides = array<i32>} : memref<6x2x128xf32, #tpu.memory_space<vmem>>, vector<1x2x128xf32>,
    %c3_i32 = arith.constant 3 : i32
    %cst_73 = arith.constant dense<0.000000e+00> : vector<2x128xf32>
    %210 = tpu.matmul %205, %22, %cst_73 {dimension_numbers = #tpu.dot_dimension_numbers<[1], [0], [0], [1], [0, 0, 1, 1], [], []>} : vector<2x128xf32>, vector<128x128xf32>, vector<2x128xf32> -> vector<2x128xf32>
    %211 = vector.shape_cast %210 : vector<2x128xf32> to vector<2x1x128xf32>
    %212 = vector.broadcast %211 : vector<2x1x128xf32> to vector<2x16x128xf32>
    %213 = arith.addf %212, %4 : vector<2x16x128xf32>
    %214 = math.tanh %213 : vector<2x16x128xf32>
    %215 = vector.broadcast %11 : vector<1x1x128xf32> to vector<2x16x128xf32>
    %216 = arith.mulf %214, %215 : vector<2x16x128xf32>
    %cst_74 = arith.constant dense<0.000000e+00> : vector<2x16xf32>
    %217 = vector.multi_reduction <add>, %216, %cst_74 [2] : vector<2x16x128xf32> to vector<2x16xf32>
    %218 = arith.addf %217, %9 : vector<2x16xf32>
    %cst_75 = arith.constant dense<0xFF800000> : vector<2xf32>
    %219 = vector.multi_reduction <maximumf>, %218, %cst_75 [1] : vector<2x16xf32> to vector<2xf32>
    %220 = vector.shape_cast %219 : vector<2xf32> to vector<2x1xf32>
    %221 = vector.broadcast %220 : vector<2x1xf32> to vector<2x16xf32>
    %222 = arith.subf %218, %221 : vector<2x16xf32>
    %223 = math.exp %222 : vector<2x16xf32>
    %cst_76 = arith.constant dense<0.000000e+00> : vector<2xf32>
    %224 = vector.multi_reduction <add>, %223, %cst_76 [1] : vector<2x16xf32> to vector<2xf32>
    %225 = vector.shape_cast %224 : vector<2xf32> to vector<2x1xf32>
    %226 = tpu.reciprocal %225 {approx = true} : vector<2x1xf32> -> vector<2x1xf32>
    %227 = vector.broadcast %226 : vector<2x1xf32> to vector<2x16xf32>
    %228 = arith.mulf %223, %227 : vector<2x16xf32>
    %229 = vector.shape_cast %228 : vector<2x16xf32> to vector<2x1x16xf32>
    %230 = arith.truncf %229 : vector<2x1x16xf32> to vector<2x1x16xbf16>
    "tpu.trace_start"() <{level = 10 : i32, message = "bqk,bkh->bqh"}> : () -> ()
    %cst_77 = arith.constant dense<0.000000e+00> : vector<2x1x128xf32>
    %231 = tpu.matmul %230, %1, %cst_77 {dimension_numbers = #tpu.dot_dimension_numbers<[2], [1], [1], [2], [0, 0, 0, 1, 1, 2], [0], [0]>} : vector<2x1x16xbf16>, vector<2x16x128xbf16>, vector<2x1x128xf32> -> vector<2x1x128xf32>
    "tpu.trace_stop"() : () -> ()
    %232 = vector.shape_cast %231 : vector<2x1x128xf32> to vector<2x128xf32>
    %233 = arith.index_cast %c3_i32 : i32 to index
    %c0_78 = arith.constant 0 : index
    %c0_79 = arith.constant 0 : index
    %234 = vector.load %arg15[%233, %c0_78, %c0_79] : memref<6x2x384xf32, #tpu.memory_space<vmem>>, vector<1x2x384xf32>
    %235 = vector.shape_cast %234 : vector<1x2x384xf32> to vector<2x384xf32>
    %cst_80 = arith.constant dense<0.000000e+00> : vector<2x384xf32>
    %236 = tpu.matmul %232, %23, %cst_80 {dimension_numbers = #tpu.dot_dimension_numbers<[1], [0], [0], [1], [0, 0, 1, 1], [], []>} : vector<2x128xf32>, vector<128x384xf32>, vector<2x384xf32> -> vector<2x384xf32>
    %237 = arith.addf %235, %236 : vector<2x384xf32>
    %cst_81 = arith.constant dense<0.000000e+00> : vector<2x384xf32>
    %238 = tpu.matmul %205, %24, %cst_81 {dimension_numbers = #tpu.dot_dimension_numbers<[1], [0], [0], [1], [0, 0, 1, 1], [], []>} : vector<2x128xf32>, vector<128x384xf32>, vector<2x384xf32> -> vector<2x384xf32>
    %239 = vector.broadcast %25 : vector<1x384xf32> to vector<2x384xf32>
    %240 = arith.addf %238, %239 : vector<2x384xf32>
    %241 = vector.extract_strided_slice %237 {offsets = [0, 0], sizes = [2, 128], strides = [1, 1]} : vector<2x384xf32> to vector<2x128xf32>
    %242 = vector.extract_strided_slice %240 {offsets = [0, 0], sizes = [2, 128], strides = [1, 1]} : vector<2x384xf32> to vector<2x128xf32>
    %243 = arith.addf %241, %242 : vector<2x128xf32>
    %244 = arith.negf %243 : vector<2x128xf32>
    %245 = math.exp %244 : vector<2x128xf32>
    %cst_82 = arith.constant 1.000000e+00 : f32
    %246 = vector.broadcast %cst_82 : f32 to vector<2x128xf32>
    %247 = arith.addf %246, %245 : vector<2x128xf32>
    %248 = arith.divf %246, %247 : vector<2x128xf32>
    %249 = vector.extract_strided_slice %237 {offsets = [0, 128], sizes = [2, 128], strides = [1, 1]} : vector<2x384xf32> to vector<2x128xf32>
    %250 = vector.extract_strided_slice %240 {offsets = [0, 128], sizes = [2, 128], strides = [1, 1]} : vector<2x384xf32> to vector<2x128xf32>
    %251 = arith.addf %249, %250 : vector<2x128xf32>
    %252 = arith.negf %251 : vector<2x128xf32>
    %253 = math.exp %252 : vector<2x128xf32>
    %cst_83 = arith.constant 1.000000e+00 : f32
    %254 = vector.broadcast %cst_83 : f32 to vector<2x128xf32>
    %255 = arith.addf %254, %253 : vector<2x128xf32>
    %256 = arith.divf %254, %255 : vector<2x128xf32>
    %257 = vector.extract_strided_slice %237 {offsets = [0, 256], sizes = [2, 128], strides = [1, 1]} : vector<2x384xf32> to vector<2x128xf32>
    %258 = vector.extract_strided_slice %240 {offsets = [0, 256], sizes = [2, 128], strides = [1, 1]} : vector<2x384xf32> to vector<2x128xf32>
    %259 = arith.mulf %248, %258 : vector<2x128xf32>
    %260 = arith.addf %257, %259 : vector<2x128xf32>
    %261 = math.tanh %260 : vector<2x128xf32>
    %cst_84 = arith.constant 1.000000e+00 : f32
    %262 = vector.broadcast %cst_84 : f32 to vector<2x128xf32>
    %263 = arith.subf %262, %256 : vector<2x128xf32>
    %264 = arith.mulf %263, %261 : vector<2x128xf32>
    %265 = arith.mulf %256, %205 : vector<2x128xf32>
    %266 = arith.addf %264, %265 : vector<2x128xf32>
    %267 = arith.index_cast %c3_i32 : i32 to index
    %c0_85 = arith.constant 0 : index
    %c0_86 = arith.constant 0 : index
    %268 = vector.load %arg16[%267, %c0_85, %c0_86] : memref<6x2x128xf32, #tpu.memory_space<vmem>>, vector<1x2x128xf32>
    %269 = vector.shape_cast %268 : vector<1x2x128xf32> to vector<2x128xf32>
    %270 = vector.shape_cast %266 : vector<2x128xf32> to vector<1x2x128xf32>
    tpu.vector_store %arg16[%267, %c0_85, %c0_86], %270 {strides = array<i32>} : memref<6x2x128xf32, #tpu.memory_space<vmem>>, vector<1x2x128xf32>,
    %c4_i32 = arith.constant 4 : i32
    %cst_87 = arith.constant dense<0.000000e+00> : vector<2x128xf32>
    %271 = tpu.matmul %266, %22, %cst_87 {dimension_numbers = #tpu.dot_dimension_numbers<[1], [0], [0], [1], [0, 0, 1, 1], [], []>} : vector<2x128xf32>, vector<128x128xf32>, vector<2x128xf32> -> vector<2x128xf32>
    %272 = vector.shape_cast %271 : vector<2x128xf32> to vector<2x1x128xf32>
    %273 = vector.broadcast %272 : vector<2x1x128xf32> to vector<2x16x128xf32>
    %274 = arith.addf %273, %4 : vector<2x16x128xf32>
    %275 = math.tanh %274 : vector<2x16x128xf32>
    %276 = vector.broadcast %11 : vector<1x1x128xf32> to vector<2x16x128xf32>
    %277 = arith.mulf %275, %276 : vector<2x16x128xf32>
    %cst_88 = arith.constant dense<0.000000e+00> : vector<2x16xf32>
    %278 = vector.multi_reduction <add>, %277, %cst_88 [2] : vector<2x16x128xf32> to vector<2x16xf32>
    %279 = arith.addf %278, %9 : vector<2x16xf32>
    %cst_89 = arith.constant dense<0xFF800000> : vector<2xf32>
    %280 = vector.multi_reduction <maximumf>, %279, %cst_89 [1] : vector<2x16xf32> to vector<2xf32>
    %281 = vector.shape_cast %280 : vector<2xf32> to vector<2x1xf32>
    %282 = vector.broadcast %281 : vector<2x1xf32> to vector<2x16xf32>
    %283 = arith.subf %279, %282 : vector<2x16xf32>
    %284 = math.exp %283 : vector<2x16xf32>
    %cst_90 = arith.constant dense<0.000000e+00> : vector<2xf32>
    %285 = vector.multi_reduction <add>, %284, %cst_90 [1] : vector<2x16xf32> to vector<2xf32>
    %286 = vector.shape_cast %285 : vector<2xf32> to vector<2x1xf32>
    %287 = tpu.reciprocal %286 {approx = true} : vector<2x1xf32> -> vector<2x1xf32>
    %288 = vector.broadcast %287 : vector<2x1xf32> to vector<2x16xf32>
    %289 = arith.mulf %284, %288 : vector<2x16xf32>
    %290 = vector.shape_cast %289 : vector<2x16xf32> to vector<2x1x16xf32>
    %291 = arith.truncf %290 : vector<2x1x16xf32> to vector<2x1x16xbf16>
    "tpu.trace_start"() <{level = 10 : i32, message = "bqk,bkh->bqh"}> : () -> ()
    %cst_91 = arith.constant dense<0.000000e+00> : vector<2x1x128xf32>
    %292 = tpu.matmul %291, %1, %cst_91 {dimension_numbers = #tpu.dot_dimension_numbers<[2], [1], [1], [2], [0, 0, 0, 1, 1, 2], [0], [0]>} : vector<2x1x16xbf16>, vector<2x16x128xbf16>, vector<2x1x128xf32> -> vector<2x1x128xf32>
    "tpu.trace_stop"() : () -> ()
    %293 = vector.shape_cast %292 : vector<2x1x128xf32> to vector<2x128xf32>
    %294 = arith.index_cast %c4_i32 : i32 to index
    %c0_92 = arith.constant 0 : index
    %c0_93 = arith.constant 0 : index
    %295 = vector.load %arg15[%294, %c0_92, %c0_93] : memref<6x2x384xf32, #tpu.memory_space<vmem>>, vector<1x2x384xf32>
    %296 = vector.shape_cast %295 : vector<1x2x384xf32> to vector<2x384xf32>
    %cst_94 = arith.constant dense<0.000000e+00> : vector<2x384xf32>
    %297 = tpu.matmul %293, %23, %cst_94 {dimension_numbers = #tpu.dot_dimension_numbers<[1], [0], [0], [1], [0, 0, 1, 1], [], []>} : vector<2x128xf32>, vector<128x384xf32>, vector<2x384xf32> -> vector<2x384xf32>
    %298 = arith.addf %296, %297 : vector<2x384xf32>
    %cst_95 = arith.constant dense<0.000000e+00> : vector<2x384xf32>
    %299 = tpu.matmul %266, %24, %cst_95 {dimension_numbers = #tpu.dot_dimension_numbers<[1], [0], [0], [1], [0, 0, 1, 1], [], []>} : vector<2x128xf32>, vector<128x384xf32>, vector<2x384xf32> -> vector<2x384xf32>
    %300 = vector.broadcast %25 : vector<1x384xf32> to vector<2x384xf32>
    %301 = arith.addf %299, %300 : vector<2x384xf32>
    %302 = vector.extract_strided_slice %298 {offsets = [0, 0], sizes = [2, 128], strides = [1, 1]} : vector<2x384xf32> to vector<2x128xf32>
    %303 = vector.extract_strided_slice %301 {offsets = [0, 0], sizes = [2, 128], strides = [1, 1]} : vector<2x384xf32> to vector<2x128xf32>
    %304 = arith.addf %302, %303 : vector<2x128xf32>
    %305 = arith.negf %304 : vector<2x128xf32>
    %306 = math.exp %305 : vector<2x128xf32>
    %cst_96 = arith.constant 1.000000e+00 : f32
    %307 = vector.broadcast %cst_96 : f32 to vector<2x128xf32>
    %308 = arith.addf %307, %306 : vector<2x128xf32>
    %309 = arith.divf %307, %308 : vector<2x128xf32>
    %310 = vector.extract_strided_slice %298 {offsets = [0, 128], sizes = [2, 128], strides = [1, 1]} : vector<2x384xf32> to vector<2x128xf32>
    %311 = vector.extract_strided_slice %301 {offsets = [0, 128], sizes = [2, 128], strides = [1, 1]} : vector<2x384xf32> to vector<2x128xf32>
    %312 = arith.addf %310, %311 : vector<2x128xf32>
    %313 = arith.negf %312 : vector<2x128xf32>
    %314 = math.exp %313 : vector<2x128xf32>
    %cst_97 = arith.constant 1.000000e+00 : f32
    %315 = vector.broadcast %cst_97 : f32 to vector<2x128xf32>
    %316 = arith.addf %315, %314 : vector<2x128xf32>
    %317 = arith.divf %315, %316 : vector<2x128xf32>
    %318 = vector.extract_strided_slice %298 {offsets = [0, 256], sizes = [2, 128], strides = [1, 1]} : vector<2x384xf32> to vector<2x128xf32>
    %319 = vector.extract_strided_slice %301 {offsets = [0, 256], sizes = [2, 128], strides = [1, 1]} : vector<2x384xf32> to vector<2x128xf32>
    %320 = arith.mulf %309, %319 : vector<2x128xf32>
    %321 = arith.addf %318, %320 : vector<2x128xf32>
    %322 = math.tanh %321 : vector<2x128xf32>
    %cst_98 = arith.constant 1.000000e+00 : f32
    %323 = vector.broadcast %cst_98 : f32 to vector<2x128xf32>
    %324 = arith.subf %323, %317 : vector<2x128xf32>
    %325 = arith.mulf %324, %322 : vector<2x128xf32>
    %326 = arith.mulf %317, %266 : vector<2x128xf32>
    %327 = arith.addf %325, %326 : vector<2x128xf32>
    %328 = arith.index_cast %c4_i32 : i32 to index
    %c0_99 = arith.constant 0 : index
    %c0_100 = arith.constant 0 : index
    %329 = vector.load %arg16[%328, %c0_99, %c0_100] : memref<6x2x128xf32, #tpu.memory_space<vmem>>, vector<1x2x128xf32>
    %330 = vector.shape_cast %329 : vector<1x2x128xf32> to vector<2x128xf32>
    %331 = vector.shape_cast %327 : vector<2x128xf32> to vector<1x2x128xf32>
    tpu.vector_store %arg16[%328, %c0_99, %c0_100], %331 {strides = array<i32>} : memref<6x2x128xf32, #tpu.memory_space<vmem>>, vector<1x2x128xf32>,
    %c5_i32 = arith.constant 5 : i32
    %cst_101 = arith.constant dense<0.000000e+00> : vector<2x128xf32>
    %332 = tpu.matmul %327, %22, %cst_101 {dimension_numbers = #tpu.dot_dimension_numbers<[1], [0], [0], [1], [0, 0, 1, 1], [], []>} : vector<2x128xf32>, vector<128x128xf32>, vector<2x128xf32> -> vector<2x128xf32>
    %333 = vector.shape_cast %332 : vector<2x128xf32> to vector<2x1x128xf32>
    %334 = vector.broadcast %333 : vector<2x1x128xf32> to vector<2x16x128xf32>
    %335 = arith.addf %334, %4 : vector<2x16x128xf32>
    %336 = math.tanh %335 : vector<2x16x128xf32>
    %337 = vector.broadcast %11 : vector<1x1x128xf32> to vector<2x16x128xf32>
    %338 = arith.mulf %336, %337 : vector<2x16x128xf32>
    %cst_102 = arith.constant dense<0.000000e+00> : vector<2x16xf32>
    %339 = vector.multi_reduction <add>, %338, %cst_102 [2] : vector<2x16x128xf32> to vector<2x16xf32>
    %340 = arith.addf %339, %9 : vector<2x16xf32>
    %cst_103 = arith.constant dense<0xFF800000> : vector<2xf32>
    %341 = vector.multi_reduction <maximumf>, %340, %cst_103 [1] : vector<2x16xf32> to vector<2xf32>
    %342 = vector.shape_cast %341 : vector<2xf32> to vector<2x1xf32>
    %343 = vector.broadcast %342 : vector<2x1xf32> to vector<2x16xf32>
    %344 = arith.subf %340, %343 : vector<2x16xf32>
    %345 = math.exp %344 : vector<2x16xf32>
    %cst_104 = arith.constant dense<0.000000e+00> : vector<2xf32>
    %346 = vector.multi_reduction <add>, %345, %cst_104 [1] : vector<2x16xf32> to vector<2xf32>
    %347 = vector.shape_cast %346 : vector<2xf32> to vector<2x1xf32>
    %348 = tpu.reciprocal %347 {approx = true} : vector<2x1xf32> -> vector<2x1xf32>
    %349 = vector.broadcast %348 : vector<2x1xf32> to vector<2x16xf32>
    %350 = arith.mulf %345, %349 : vector<2x16xf32>
    %351 = vector.shape_cast %350 : vector<2x16xf32> to vector<2x1x16xf32>
    %352 = arith.truncf %351 : vector<2x1x16xf32> to vector<2x1x16xbf16>
    "tpu.trace_start"() <{level = 10 : i32, message = "bqk,bkh->bqh"}> : () -> ()
    %cst_105 = arith.constant dense<0.000000e+00> : vector<2x1x128xf32>
    %353 = tpu.matmul %352, %1, %cst_105 {dimension_numbers = #tpu.dot_dimension_numbers<[2], [1], [1], [2], [0, 0, 0, 1, 1, 2], [0], [0]>} : vector<2x1x16xbf16>, vector<2x16x128xbf16>, vector<2x1x128xf32> -> vector<2x1x128xf32>
    "tpu.trace_stop"() : () -> ()
    %354 = vector.shape_cast %353 : vector<2x1x128xf32> to vector<2x128xf32>
    %355 = arith.index_cast %c5_i32 : i32 to index
    %c0_106 = arith.constant 0 : index
    %c0_107 = arith.constant 0 : index
    %356 = vector.load %arg15[%355, %c0_106, %c0_107] : memref<6x2x384xf32, #tpu.memory_space<vmem>>, vector<1x2x384xf32>
    %357 = vector.shape_cast %356 : vector<1x2x384xf32> to vector<2x384xf32>
    %cst_108 = arith.constant dense<0.000000e+00> : vector<2x384xf32>
    %358 = tpu.matmul %354, %23, %cst_108 {dimension_numbers = #tpu.dot_dimension_numbers<[1], [0], [0], [1], [0, 0, 1, 1], [], []>} : vector<2x128xf32>, vector<128x384xf32>, vector<2x384xf32> -> vector<2x384xf32>
    %359 = arith.addf %357, %358 : vector<2x384xf32>
    %cst_109 = arith.constant dense<0.000000e+00> : vector<2x384xf32>
    %360 = tpu.matmul %327, %24, %cst_109 {dimension_numbers = #tpu.dot_dimension_numbers<[1], [0], [0], [1], [0, 0, 1, 1], [], []>} : vector<2x128xf32>, vector<128x384xf32>, vector<2x384xf32> -> vector<2x384xf32>
    %361 = vector.broadcast %25 : vector<1x384xf32> to vector<2x384xf32>
    %362 = arith.addf %360, %361 : vector<2x384xf32>
    %363 = vector.extract_strided_slice %359 {offsets = [0, 0], sizes = [2, 128], strides = [1, 1]} : vector<2x384xf32> to vector<2x128xf32>
    %364 = vector.extract_strided_slice %362 {offsets = [0, 0], sizes = [2, 128], strides = [1, 1]} : vector<2x384xf32> to vector<2x128xf32>
    %365 = arith.addf %363, %364 : vector<2x128xf32>
    %366 = arith.negf %365 : vector<2x128xf32>
    %367 = math.exp %366 : vector<2x128xf32>
    %cst_110 = arith.constant 1.000000e+00 : f32
    %368 = vector.broadcast %cst_110 : f32 to vector<2x128xf32>
    %369 = arith.addf %368, %367 : vector<2x128xf32>
    %370 = arith.divf %368, %369 : vector<2x128xf32>
    %371 = vector.extract_strided_slice %359 {offsets = [0, 128], sizes = [2, 128], strides = [1, 1]} : vector<2x384xf32> to vector<2x128xf32>
    %372 = vector.extract_strided_slice %362 {offsets = [0, 128], sizes = [2, 128], strides = [1, 1]} : vector<2x384xf32> to vector<2x128xf32>
    %373 = arith.addf %371, %372 : vector<2x128xf32>
    %374 = arith.negf %373 : vector<2x128xf32>
    %375 = math.exp %374 : vector<2x128xf32>
    %cst_111 = arith.constant 1.000000e+00 : f32
    %376 = vector.broadcast %cst_111 : f32 to vector<2x128xf32>
    %377 = arith.addf %376, %375 : vector<2x128xf32>
    %378 = arith.divf %376, %377 : vector<2x128xf32>
    %379 = vector.extract_strided_slice %359 {offsets = [0, 256], sizes = [2, 128], strides = [1, 1]} : vector<2x384xf32> to vector<2x128xf32>
    %380 = vector.extract_strided_slice %362 {offsets = [0, 256], sizes = [2, 128], strides = [1, 1]} : vector<2x384xf32> to vector<2x128xf32>
    %381 = arith.mulf %370, %380 : vector<2x128xf32>
    %382 = arith.addf %379, %381 : vector<2x128xf32>
    %383 = math.tanh %382 : vector<2x128xf32>
    %cst_112 = arith.constant 1.000000e+00 : f32
    %384 = vector.broadcast %cst_112 : f32 to vector<2x128xf32>
    %385 = arith.subf %384, %378 : vector<2x128xf32>
    %386 = arith.mulf %385, %383 : vector<2x128xf32>
    %387 = arith.mulf %378, %327 : vector<2x128xf32>
    %388 = arith.addf %386, %387 : vector<2x128xf32>
    %389 = arith.index_cast %c5_i32 : i32 to index
    %c0_113 = arith.constant 0 : index
    %c0_114 = arith.constant 0 : index
    %390 = vector.load %arg16[%389, %c0_113, %c0_114] : memref<6x2x128xf32, #tpu.memory_space<vmem>>, vector<1x2x128xf32>
    %391 = vector.shape_cast %390 : vector<1x2x128xf32> to vector<2x128xf32>
    %392 = vector.shape_cast %388 : vector<2x128xf32> to vector<1x2x128xf32>
    tpu.vector_store %arg16[%389, %c0_113, %c0_114], %392 {strides = array<i32>} : memref<6x2x128xf32, #tpu.memory_space<vmem>>, vector<1x2x128xf32>,
    %c6_i32 = arith.constant 6 : i32
    %c0_115 = arith.constant 0 : index
    %c0_116 = arith.constant 0 : index
    %c0_117 = arith.constant 0 : index
    %393 = vector.load %arg16[%c0_115, %c0_116, %c0_117] : memref<6x2x128xf32, #tpu.memory_space<vmem>>, vector<6x2x128xf32>
    %394 = arith.truncf %393 : vector<6x2x128xf32> to vector<6x2x128xbf16>
    %c0_118 = arith.constant 0 : index
    %c0_119 = arith.constant 0 : index
    %395 = vector.load %arg12[%c0_118, %c0_119] : memref<128x128xf32, #tpu.memory_space<vmem>>, vector<128x128xf32>
    %396 = arith.truncf %395 : vector<128x128xf32> to vector<128x128xbf16>
    "tpu.trace_start"() <{level = 10 : i32, message = "tbh,hv->tbv"}> : () -> ()
    %cst_120 = arith.constant dense<0.000000e+00> : vector<6x2x128xf32>
    %397 = tpu.matmul %394, %396, %cst_120 {dimension_numbers = #tpu.dot_dimension_numbers<[2], [0], [0, 1], [1], [0, 0, 0, 1, 1, 1], [], []>} : vector<6x2x128xbf16>, vector<128x128xbf16>, vector<6x2x128xf32> -> vector<6x2x128xf32>
    "tpu.trace_stop"() : () -> ()
    %c0_121 = arith.constant 0 : index
    %c0_122 = arith.constant 0 : index
    %398 = vector.load %arg13[%c0_121, %c0_122] : memref<1x128xf32, #tpu.memory_space<vmem>>, vector<1x128xf32>
    %399 = vector.shape_cast %398 : vector<1x128xf32> to vector<1x1x128xf32>
    %400 = vector.broadcast %399 : vector<1x1x128xf32> to vector<6x2x128xf32>
    %401 = arith.addf %397, %400 : vector<6x2x128xf32>
    %cst_123 = arith.constant dense<0xFF800000> : vector<6x2xf32>
    %402 = vector.multi_reduction <maximumf>, %401, %cst_123 [2] : vector<6x2x128xf32> to vector<6x2xf32>
    %403 = vector.shape_cast %402 : vector<6x2xf32> to vector<6x2x1xf32>
    %404 = vector.broadcast %403 : vector<6x2x1xf32> to vector<6x2x128xf32>
    %405 = arith.subf %401, %404 : vector<6x2x128xf32>
    %406 = math.exp %405 : vector<6x2x128xf32>
    %cst_124 = arith.constant dense<0.000000e+00> : vector<6x2xf32>
    %407 = vector.multi_reduction <add>, %406, %cst_124 [2] : vector<6x2x128xf32> to vector<6x2xf32>
    %408 = vector.shape_cast %407 : vector<6x2xf32> to vector<6x2x1xf32>
    %409 = math.log %408 : vector<6x2x1xf32>
    %410 = arith.addf %403, %409 : vector<6x2x1xf32>
    %411 = vector.broadcast %410 : vector<6x2x1xf32> to vector<6x2x128xf32>
    %412 = arith.subf %401, %411 : vector<6x2x128xf32>
    %c0_125 = arith.constant 0 : index
    %c0_126 = arith.constant 0 : index
    %c0_127 = arith.constant 0 : index
    %413 = vector.load %arg14[%c0_125, %c0_126, %c0_127] : memref<6x2x128xf32, #tpu.memory_space<vmem>>, vector<6x2x128xf32>
    tpu.vector_store %arg14[%c0_125, %c0_126, %c0_127], %412 {strides = array<i32>} : memref<6x2x128xf32, #tpu.memory_space<vmem>>, vector<6x2x128xf32>,
    return
  }
}

</mosaic_0001>

<llo_original>
// kernel: lt.28
$region0: #{lt.28}
  %s0 = inlined_call_operand.vmem [shape: s32[2,2], index: 0, kind: input, shape index: {}]
  %s1 = inlined_call_operand.vmem [shape: s32[4], index: 1, kind: output, shape index: {}]
  $region1: #{lt.28} parent=0
    #allocation0 [shape = 'u8[4096]{0}', space=vmem, size = 0x1000, scoped, tag = 'scoped mem for output reshape']
    #allocation1 [shape = 'u8[4096]{0}', space=vmem, size = 0x1000, scoped, tag = 'scoped mem for input reshape']
    %s3 = sshllo.u32 0, 2
    %v4 = vld [vmem:[%s0] sm:%s3]
    %5 = vst [vmem:[#allocation1] sm:%s3] %v4
    %v6 = vld [vmem:[#allocation1] sm:$0x1]
    %vm7 = vcmask 15360
    %8 = vst.msk [vmem:[#allocation0] sm:$0x1] %vm7, %v6
    %s9 = scalar_lea.vmem [#allocation1], 1
    %v10 = vld [vmem:[%s9] sm:$0x1]
    %11 = vrot.lane.b32.xlu0 %v10, 2
    %v12 = vpop.permute.xlu0 %11
    %vm13 = vcmask 31760
    %14 = vst.msk [vmem:[#allocation0] sm:$0x1] %vm13, %v12
    %s16 = sshllo.u32 0, 1
    %v18 = vld [vmem:[#allocation0] sm:%s16]
    %s19 = sshllo.u32 0, 1
    %20 = vst [vmem:[%s1] sm:%s19] %v18

// kernel: hms_forward.2
$region0: #{hms_forward.2}
  #allocation0 [shape = 'u32[]', space=smem, size = 0x4, offset = 0x4, fixed_abs, tag = 'smem constant byte address 0x4 - core index']
  #allocation1 [shape = 'u32[144,128]{1,0:T(1,128)}', space=vmem, size = 0x12000, scoped, tag = 'internal scratch']
  #allocation2 [shape = 'f32[8,4,384]{2,1,0:T(4,128)}', space=vmem, size = 0xc000, scoped, tag = 'scratch operand']
  %s0 = inlined_call_operand.vmem [shape: f32[8,4,32], index: 0, kind: input, shape index: {}]
  %s1 = inlined_call_operand.vmem [shape: f32[8,4], index: 1, kind: input, shape index: {}]
  %s2 = inlined_call_operand.hbm [shape: f32[32,384], index: 2, kind: input, shape index: {}]
  %s3 = inlined_call_operand.vmem [shape: f32[128,384], index: 3, kind: input, shape index: {}]
  %s4 = inlined_call_operand.vmem [shape: f32[1,384], index: 4, kind: input, shape index: {}]
  %s5 = inlined_call_operand.vmem [shape: f32[1,384], index: 5, kind: input, shape index: {}]
  %s6 = inlined_call_operand.vmem [shape: f32[8,4,128], index: 6, kind: output, shape index: {0}]
  %s7 = inlined_call_operand.vmem [shape: f32[4,128], index: 7, kind: output, shape index: {1}]
  %8 = xla_tuple %s6, %s7
  %s9 = sld [smem:[#allocation0]]
  $region46: #{hms_forward.2} parent=0
    _
  %s11 = ssub.s32 1, %s9
  %s12 = scalar_select 0, %s11, %s9
  $region1: #{hms_forward.2} parent=0
    #allocation3 [shape = 'u8[49152]{0}', space=vmem, size = 0xc000, scoped, tag = 'input window, operand 2, single buffered']
    #allocation4 [shape = 's32[1]{0}', space=sflag, size = 0x4, scoped, tag = 'scoped memory for hms_forward.2']
    %13 = vsyncpa [#allocation4], 0
    // Predicated region
    $region2: #{hms_forward.2} parent=1 // pred_check
      _
    $region3: #{hms_forward.2} parent=1 // pred_check_branch
      %15 = sbr.rel (0) target = $region5
    $region4: #{hms_forward.2} parent=1 // pred_region
      _
    $region5: #{hms_forward.2} parent=1 // pred_fallthru
      _
    // Predicated region
    $region6: #{hms_forward.2} parent=1 // pred_check
      _
    $region7: #{hms_forward.2} parent=1 // pred_check_branch
      %17 = sbr.rel (0) target = $region9
    $region8: #{hms_forward.2} parent=1 // pred_region
      _
    $region9: #{hms_forward.2} parent=1 // pred_fallthru
      _
    // Predicated region
    $region10: #{hms_forward.2} parent=1 // pred_check
      _
    $region11: #{hms_forward.2} parent=1 // pred_check_branch
      %19 = sbr.rel (0) target = $region13
    $region12: #{hms_forward.2} parent=1 // pred_region
      %s21 = ssub.s32 1536, 1536
      %22 = vsyncadd [#allocation4], %s21
      %s23 = sshll.u32 [#allocation3], 4
      %s24 = int_to_ptr.vmem [resolvable:$true] %s23
      %29 = dma.hbm_to_vmem [thread:$0]  %s2, 1536, %s24, [#allocation4], 384, 384, 24
    $region13: #{hms_forward.2} parent=1 // pred_fallthru
      _
    // Predicated region
    $region14: #{hms_forward.2} parent=1 // pred_check
      _
    $region15: #{hms_forward.2} parent=1 // pred_check_branch
      %31 = sbr.rel (0) target = $region17
    $region16: #{hms_forward.2} parent=1 // pred_region
      _
    $region17: #{hms_forward.2} parent=1 // pred_fallthru
      _
    // Predicated region
    $region18: #{hms_forward.2} parent=1 // pred_check
      _
    $region19: #{hms_forward.2} parent=1 // pred_check_branch
      %33 = sbr.rel (0) target = $region21
    $region20: #{hms_forward.2} parent=1 // pred_region
      _
    $region21: #{hms_forward.2} parent=1 // pred_fallthru
      _
    // Predicated region
    $region22: #{hms_forward.2} parent=1 // pred_check
      _
    $region23: #{hms_forward.2} parent=1 // pred_check_branch
      %35 = sbr.rel (0) target = $region25
    $region24: #{hms_forward.2} parent=1 // pred_region
      _
    $region25: #{hms_forward.2} parent=1 // pred_fallthru
      _
    // Predicated region
    $region26: #{hms_forward.2} parent=1 // pred_check
      _
    $region27: #{hms_forward.2} parent=1 // pred_check_branch
      %37 = sbr.rel (0) target = $region29
    $region28: #{hms_forward.2} parent=1 // pred_region
      %38 = dma.done [#allocation4], 1536
    $region29: #{hms_forward.2} parent=1 // pred_fallthru
      _
    %v40 = vld [vmem:[%s0] sm:$0xf]
    %v41 = vld [vmem:[%s0 + $0x4] sm:$0xf]
    %v42 = vld [vmem:[%s0 + $0x8] sm:$0xf]
    %v43 = vld [vmem:[%s0 + $0xc] sm:$0xf]
    %v44 = vld [vmem:[%s0 + $0x10] sm:$0xf]
    %v45 = vld [vmem:[%s0 + $0x14] sm:$0xf]
    %v46 = vld [vmem:[%s0 + $0x18] sm:$0xf]
    %v47 = vld [vmem:[%s0 + $0x1c] sm:$0xf]
    %v48 = vpack.c.bf16 %v40, %v40
    %v49 = vpack.c.bf16 %v41, %v41
    %v50 = vpack.c.bf16 %v42, %v42
    %v51 = vpack.c.bf16 %v43, %v43
    %v52 = vpack.c.bf16 %v44, %v44
    %v53 = vpack.c.bf16 %v45, %v45
    %v54 = vpack.c.bf16 %v46, %v46
    %v55 = vpack.c.bf16 %v47, %v47
    %v56 = vld [vmem:[#allocation3] sm:$0xff]
    %v57 = vld [vmem:[#allocation3 + $0x8] sm:$0xff]
    %v58 = vld [vmem:[#allocation3 + $0x10] sm:$0xff]
    %v59 = vld [vmem:[#allocation3 + $0x18] sm:$0xff]
    %v60 = vld [vmem:[#allocation3 + $0x20] sm:$0xff]
    %v61 = vld [vmem:[#allocation3 + $0x28] sm:$0xff]
    %v62 = vld [vmem:[#allocation3 + $0x30] sm:$0xff]
    %v63 = vld [vmem:[#allocation3 + $0x38] sm:$0xff]
    %v64 = vld [vmem:[#allocation3 + $0x40] sm:$0xff]
    %v65 = vld [vmem:[#allocation3 + $0x48] sm:$0xff]
    %v66 = vld [vmem:[#allocation3 + $0x50] sm:$0xff]
    %v67 = vld [vmem:[#allocation3 + $0x58] sm:$0xff]
    %v68 = vpack.c.bf16 %v59, %v56
    %v69 = vpack.c.bf16 %v60, %v57
    %v70 = vpack.c.bf16 %v61, %v58
    %v71 = vpack.c.bf16 %v65, %v62
    %v72 = vpack.c.bf16 %v66, %v63
    %v73 = vpack.c.bf16 %v67, %v64
    %v74 = vld [vmem:[%s4] sm:$0x7]
    %v76 = vlaneseq
    %v77 = vshrl.u32 %v76, 7
    %v78 = vsub.s32 0, %v77
    %v79 = vrot.slane %v74, %v78
    %v80 = vlaneseq
    %v81 = vshrl.u32 %v80, 7
    %v82 = vsub.s32 1, %v81
    %v83 = vrot.slane %v74, %v82
    %v84 = vlaneseq
    %v85 = vshrl.u32 %v84, 7
    %v86 = vsub.s32 2, %v85
    %v87 = vrot.slane %v74, %v86
    %v88 = vcombine.low %v79, %v83
    %v97 = vcombine.low %v48, %v49
    %v98 = vcombine.low %v50, %v51
    %v100 = vunpack.c.l.s4 1983009808
    %v101 = vunpack.c.0.s8 %v100
    %v102 = vlaneseq
    %v103 = vshrl.u32 %v102, 7
    %v104 = vsub.s32 %v101, %v103
    %v105 = vrot.slane %v97, %v104
    %v107 = vunpack.c.l.s4 1983009808
    %v108 = vunpack.c.0.s8 %v107
    %v109 = vlaneseq
    %v110 = vshrl.u32 %v109, 7
    %v111 = vsub.s32 %v108, %v110
    %v112 = vrot.slane %v98, %v111
    %v113 = vcombine.low %v105, %v112
    %v114 = vcombine.low %v52, %v53
    %v115 = vcombine.low %v54, %v55
    %v117 = vunpack.c.l.s4 1983009808
    %v118 = vunpack.c.0.s8 %v117
    %v119 = vlaneseq
    %v120 = vshrl.u32 %v119, 7
    %v121 = vsub.s32 %v118, %v120
    %v122 = vrot.slane %v114, %v121
    %v124 = vunpack.c.l.s4 1983009808
    %v125 = vunpack.c.0.s8 %v124
    %v126 = vlaneseq
    %v127 = vshrl.u32 %v126, 7
    %v128 = vsub.s32 %v125, %v127
    %v129 = vrot.slane %v115, %v128
    %v130 = vcombine.low %v122, %v129
    %v131 = vcombine.low %v88, %v88
    %v132 = vcombine.high %v88, %v88
    %v133 = vcombine.low %v87, %v87
    %vm137 = vcmask 261120
    %v139 = vsel %vm137, %v113, 0
    %v142 = vsel %vm137, %v130, 0
    %144 = vmatprep.subr.bf16.mxu0 %v69
    %145 = vmatpush1.bf16.msra.mxu0 %v68
    %146 = vmatprep.subr.bf16.mxu0 %v72
    %147 = vmatpush1.bf16.msra.mxu0 %v71
    %148 = vmatprep.subr.bf16.mxu0 0
    %149 = vmatpush1.bf16.msra.mxu0 0
    %150 = vmatprep.subr.bf16.mxu0 0
    %151 = vmatpush1.bf16.msra.mxu0 0
    %152 = vmatprep.subr.bf16.mxu0 0
    %153 = vmatpush1.bf16.msra.mxu0 0
    %154 = vmatprep.subr.bf16.mxu0 0
    %155 = vmatpush1.bf16.msra.mxu0 0
    %156 = vmatprep.subr.bf16.mxu0 0
    %157 = vmatpush1.bf16.msra.mxu0 0
    %158 = vmatprep.subr.bf16.mxu0 0
    %159 = vmatpush1.bf16.msra.mxu0 0
    %160 = vmatprep.subr.bf16.mxu0 0
    %161 = vmatpush1.bf16.msra.mxu0 0
    %162 = vmatprep.subr.bf16.mxu0 0
    %163 = vmatpush1.bf16.msra.mxu0 0
    %164 = vmatprep.subr.bf16.mxu0 0
    %165 = vmatpush1.bf16.msra.mxu0 0
    %166 = vmatprep.subr.bf16.mxu0 0
    %167 = vmatpush1.bf16.msra.mxu0 0
    %168 = vmatprep.subr.bf16.mxu0 0
    %169 = vmatpush1.bf16.msra.mxu0 0
    %170 = vmatprep.subr.bf16.mxu0 0
    %171 = vmatpush1.bf16.msra.mxu0 0
    %172 = vmatprep.subr.bf16.mxu0 0
    %173 = vmatpush1.bf16.msra.mxu0 0
    %174 = vmatprep.subr.bf16.mxu0 0
    %175 = vmatpush1.bf16.msra.mxu0 0
    %176 = vmatprep.mubr.bf16.mxu0 0
    %177 = vmatmul.mubr.bf16.gmra.mrb[0].mxu0 %v139
    %v178 = vpop.f32.mrb[0].mxu0
    %v179 = vadd.f32 %v131, %v178
    %v180 = vpop.f32.mrb[0].mxu0
    %v181 = vadd.f32 %v132, %v180
    %v182 = vpop.f32.mrb[0].mxu0
    %v183 = vadd.f32 %v131, %v182
    %v184 = vpop.f32.mrb[0].mxu0
    %v185 = vadd.f32 %v132, %v184
    %186 = vmatprep.mubr.bf16.mxu0 0
    %187 = vmatmul.mubr.bf16.gmra.mrb[0].mxu0 %v142
    %v188 = vpop.f32.mrb[0].mxu0
    %v189 = vadd.f32 %v131, %v188
    %v190 = vpop.f32.mrb[0].mxu0
    %v191 = vadd.f32 %v132, %v190
    %v192 = vpop.f32.mrb[0].mxu0
    %v193 = vadd.f32 %v131, %v192
    %v194 = vpop.f32.mrb[0].mxu0
    %v195 = vadd.f32 %v132, %v194
    %196 = vdwg.mxu0
    %197 = vmatprep.subr.bf16.mxu0 0
    %198 = vmatpush1.bf16.msra.mxu0 %v70
    %199 = vmatprep.subr.bf16.mxu0 0
    %200 = vmatpush1.bf16.msra.mxu0 %v73
    %201 = vmatprep.subr.bf16.mxu0 0
    %202 = vmatpush1.bf16.msra.mxu0 0
    %203 = vmatprep.subr.bf16.mxu0 0
    %204 = vmatpush1.bf16.msra.mxu0 0
    %205 = vmatprep.subr.bf16.mxu0 0
    %206 = vmatpush1.bf16.msra.mxu0 0
    %207 = vmatprep.subr.bf16.mxu0 0
    %208 = vmatpush1.bf16.msra.mxu0 0
    %209 = vmatprep.subr.bf16.mxu0 0
    %210 = vmatpush1.bf16.msra.mxu0 0
    %211 = vmatprep.subr.bf16.mxu0 0
    %212 = vmatpush1.bf16.msra.mxu0 0
    %213 = vmatprep.subr.bf16.mxu0 0
    %214 = vmatpush1.bf16.msra.mxu0 0
    %215 = vmatprep.subr.bf16.mxu0 0
    %216 = vmatpush1.bf16.msra.mxu0 0
    %217 = vmatprep.subr.bf16.mxu0 0
    %218 = vmatpush1.bf16.msra.mxu0 0
    %219 = vmatprep.subr.bf16.mxu0 0
    %220 = vmatpush1.bf16.msra.mxu0 0
    %221 = vmatprep.subr.bf16.mxu0 0
    %222 = vmatpush1.bf16.msra.mxu0 0
    %223 = vmatprep.subr.bf16.mxu0 0
    %224 = vmatpush1.bf16.msra.mxu0 0
    %225 = vmatprep.subr.bf16.mxu0 0
    %226 = vmatpush1.bf16.msra.mxu0 0
    %227 = vmatprep.subr.bf16.mxu0 0
    %228 = vmatpush1.bf16.msra.mxu0 0
    %229 = vmatprep.mubr.bf16.mxu0 0
    %230 = vmatmul.mubr.bf16.gmra.mrb[0].mxu0 %v139
    %v231 = vpop.f32.mrb[0].mxu0
    %v232 = vadd.f32 %v133, %v231
    %v233 = vpop.f32.mrb[0].mxu0
    %v234 = vpop.f32.mrb[0].mxu0
    %v235 = vadd.f32 %v133, %v234
    %v236 = vpop.f32.mrb[0].mxu0
    %237 = vmatprep.mubr.bf16.mxu0 0
    %238 = vmatmul.mubr.bf16.gmra.mrb[0].mxu0 %v142
    %v239 = vpop.f32.mrb[0].mxu0
    %v240 = vadd.f32 %v133, %v239
    %v241 = vpop.f32.mrb[0].mxu0
    %v242 = vpop.f32.mrb[0].mxu0
    %v243 = vadd.f32 %v133, %v242
    %v244 = vpop.f32.mrb[0].mxu0
    %245 = vdwg.mxu0
    %v258 = vcombine.low %v179, %v181
    %v259 = vcombine.high %v179, %v181
    %v260 = vcombine.high %v232, %v232
    %v261 = vcombine.low %v183, %v185
    %v262 = vcombine.high %v183, %v185
    %v263 = vcombine.high %v235, %v235
    %v264 = vcombine.low %v189, %v191
    %v265 = vcombine.high %v189, %v191
    %v266 = vcombine.high %v240, %v240
    %v267 = vcombine.low %v193, %v195
    %v268 = vcombine.high %v193, %v195
    %v269 = vcombine.high %v243, %v243
    %282 = vst [vmem:[#allocation2] sm:$0xff] %v258
    %283 = vst [vmem:[#allocation2 + $0x8] sm:$0xf] %v232
    %284 = vst [vmem:[#allocation2 + $0xc] sm:$0xff] %v259
    %285 = vst [vmem:[#allocation2 + $0x14] sm:$0xf] %v260
    %286 = vst [vmem:[#allocation2 + $0x18] sm:$0xff] %v261
    %287 = vst [vmem:[#allocation2 + $0x20] sm:$0xf] %v235
    %288 = vst [vmem:[#allocation2 + $0x24] sm:$0xff] %v262
    %289 = vst [vmem:[#allocation2 + $0x2c] sm:$0xf] %v263
    %290 = vst [vmem:[#allocation2 + $0x30] sm:$0xff] %v264
    %291 = vst [vmem:[#allocation2 + $0x38] sm:$0xf] %v240
    %292 = vst [vmem:[#allocation2 + $0x3c] sm:$0xff] %v265
    %293 = vst [vmem:[#allocation2 + $0x44] sm:$0xf] %v266
    %294 = vst [vmem:[#allocation2 + $0x48] sm:$0xff] %v267
    %295 = vst [vmem:[#allocation2 + $0x50] sm:$0xf] %v243
    %296 = vst [vmem:[#allocation2 + $0x54] sm:$0xff] %v268
    %297 = vst [vmem:[#allocation2 + $0x5c] sm:$0xf] %v269
    %v298 = vld [vmem:[%s3] sm:$0xff]
    %v299 = vld [vmem:[%s3 + $0x8] sm:$0xff]
    %v300 = vld [vmem:[%s3 + $0x10] sm:$0xff]
    %v301 = vld [vmem:[%s3 + $0x18] sm:$0xff]
    %v302 = vld [vmem:[%s3 + $0x20] sm:$0xff]
    %v303 = vld [vmem:[%s3 + $0x28] sm:$0xff]
    %v304 = vld [vmem:[%s3 + $0x30] sm:$0xff]
    %v305 = vld [vmem:[%s3 + $0x38] sm:$0xff]
    %v306 = vld [vmem:[%s3 + $0x40] sm:$0xff]
    %v307 = vld [vmem:[%s3 + $0x48] sm:$0xff]
    %v308 = vld [vmem:[%s3 + $0x50] sm:$0xff]
    %v309 = vld [vmem:[%s3 + $0x58] sm:$0xff]
    %v310 = vld [vmem:[%s3 + $0x60] sm:$0xff]
    %v311 = vld [vmem:[%s3 + $0x68] sm:$0xff]
    %v312 = vld [vmem:[%s3 + $0x70] sm:$0xff]
    %v313 = vld [vmem:[%s3 + $0x78] sm:$0xff]
    %v314 = vld [vmem:[%s3 + $0x80] sm:$0xff]
    %v315 = vld [vmem:[%s3 + $0x88] sm:$0xff]
    %v316 = vld [vmem:[%s3 + $0x90] sm:$0xff]
    %v317 = vld [vmem:[%s3 + $0x98] sm:$0xff]
    %v318 = vld [vmem:[%s3 + $0xa0] sm:$0xff]
    %v319 = vld [vmem:[%s3 + $0xa8] sm:$0xff]
    %v320 = vld [vmem:[%s3 + $0xb0] sm:$0xff]
    %v321 = vld [vmem:[%s3 + $0xb8] sm:$0xff]
    %v322 = vld [vmem:[%s3 + $0xc0] sm:$0xff]
    %v323 = vld [vmem:[%s3 + $0xc8] sm:$0xff]
    %v324 = vld [vmem:[%s3 + $0xd0] sm:$0xff]
    %v325 = vld [vmem:[%s3 + $0xd8] sm:$0xff]
    %v326 = vld [vmem:[%s3 + $0xe0] sm:$0xff]
    %v327 = vld [vmem:[%s3 + $0xe8] sm:$0xff]
    %v328 = vld [vmem:[%s3 + $0xf0] sm:$0xff]
    %v329 = vld [vmem:[%s3 + $0xf8] sm:$0xff]
    %v330 = vld [vmem:[%s3 + $0x100] sm:$0xff]
    %v331 = vld [vmem:[%s3 + $0x108] sm:$0xff]
    %v332 = vld [vmem:[%s3 + $0x110] sm:$0xff]
    %v333 = vld [vmem:[%s3 + $0x118] sm:$0xff]
    %v334 = vld [vmem:[%s3 + $0x120] sm:$0xff]
    %v335 = vld [vmem:[%s3 + $0x128] sm:$0xff]
    %v336 = vld [vmem:[%s3 + $0x130] sm:$0xff]
    %v337 = vld [vmem:[%s3 + $0x138] sm:$0xff]
    %v338 = vld [vmem:[%s3 + $0x140] sm:$0xff]
    %v339 = vld [vmem:[%s3 + $0x148] sm:$0xff]
    %v340 = vld [vmem:[%s3 + $0x150] sm:$0xff]
    %v341 = vld [vmem:[%s3 + $0x158] sm:$0xff]
    %v342 = vld [vmem:[%s3 + $0x160] sm:$0xff]
    %v343 = vld [vmem:[%s3 + $0x168] sm:$0xff]
    %v344 = vld [vmem:[%s3 + $0x170] sm:$0xff]
    %v345 = vld [vmem:[%s3 + $0x178] sm:$0xff]
    %v346 = vld [vmem:[%s5] sm:$0x7]
    %v347 = vld [vmem:[#allocation2] sm:$0xff]
    %v348 = vld [vmem:[#allocation2 + $0x8] sm:$0xf]
    %v349 = vld [vmem:[%s1] sm:$0x1]
    %v350 = vlaneseq
    %v351 = vshrl.u32 %v350, 7
    %v352 = vsub.s32 0, %v351
    %v353 = vrot.slane %v349, %v352
    %355 = vbcast.lane.b32.xlu0 %v353, 256
    %v356 = vpop.permute.xlu0 %355
    %v358 = vlaneseq
    %v359 = vshrl.u32 %v358, 7
    %v360 = vsub.s32 0, %v359
    %v361 = vrot.slane %v346, %v360
    %v362 = vlaneseq
    %v363 = vshrl.u32 %v362, 7
    %v364 = vsub.s32 1, %v363
    %v365 = vrot.slane %v346, %v364
    %v366 = vlaneseq
    %v367 = vshrl.u32 %v366, 7
    %v368 = vsub.s32 2, %v367
    %v369 = vrot.slane %v346, %v368
    %373 = vmatprep.subr.mxu0 %v299
    %374 = vmatpush1.msra.mxu0 %v298
    %375 = vmatprep.subr.mxu0 %v302
    %376 = vmatpush1.msra.mxu0 %v301
    %377 = vmatprep.subr.mxu0 %v305
    %378 = vmatpush1.msra.mxu0 %v304
    %379 = vmatprep.subr.mxu0 %v308
    %380 = vmatpush1.msra.mxu0 %v307
    %381 = vmatprep.subr.mxu0 %v311
    %382 = vmatpush1.msra.mxu0 %v310
    %383 = vmatprep.subr.mxu0 %v314
    %384 = vmatpush1.msra.mxu0 %v313
    %385 = vmatprep.subr.mxu0 %v317
    %386 = vmatpush1.msra.mxu0 %v316
    %387 = vmatprep.subr.mxu0 %v320
    %388 = vmatpush1.msra.mxu0 %v319
    %389 = vmatprep.subr.mxu0 %v323
    %390 = vmatpush1.msra.mxu0 %v322
    %391 = vmatprep.subr.mxu0 %v326
    %392 = vmatpush1.msra.mxu0 %v325
    %393 = vmatprep.subr.mxu0 %v329
    %394 = vmatpush1.msra.mxu0 %v328
    %395 = vmatprep.subr.mxu0 %v332
    %396 = vmatpush1.msra.mxu0 %v331
    %397 = vmatprep.subr.mxu0 %v335
    %398 = vmatpush1.msra.mxu0 %v334
    %399 = vmatprep.subr.mxu0 %v338
    %400 = vmatpush1.msra.mxu0 %v337
    %401 = vmatprep.subr.mxu0 %v341
    %402 = vmatpush1.msra.mxu0 %v340
    %403 = vmatprep.subr.mxu0 %v344
    %404 = vmatpush1.msra.mxu0 %v343
    %405 = vmatprep.subr.mxu0 0.0
    %406 = vmatpush1.msra.mxu0 0.0
    %407 = vmatprep.subr.mxu0 0.0
    %408 = vmatpush1.msra.mxu0 0.0
    %409 = vmatprep.subr.mxu0 0.0
    %410 = vmatpush1.msra.mxu0 0.0
    %411 = vmatprep.subr.mxu0 0.0
    %412 = vmatpush1.msra.mxu0 0.0
    %413 = vmatprep.subr.mxu0 0.0
    %414 = vmatpush1.msra.mxu0 0.0
    %415 = vmatprep.subr.mxu0 0.0
    %416 = vmatpush1.msra.mxu0 0.0
    %417 = vmatprep.subr.mxu0 0.0
    %418 = vmatpush1.msra.mxu0 0.0
    %419 = vmatprep.subr.mxu0 0.0
    %420 = vmatpush1.msra.mxu0 0.0
    %421 = vmatprep.subr.mxu0 0.0
    %422 = vmatpush1.msra.mxu0 0.0
    %423 = vmatprep.subr.mxu0 0.0
    %424 = vmatpush1.msra.mxu0 0.0
    %425 = vmatprep.subr.mxu0 0.0
    %426 = vmatpush1.msra.mxu0 0.0
    %427 = vmatprep.subr.mxu0 0.0
    %428 = vmatpush1.msra.mxu0 0.0
    %429 = vmatprep.subr.mxu0 0.0
    %430 = vmatpush1.msra.mxu0 0.0
    %431 = vmatprep.subr.mxu0 0.0
    %432 = vmatpush1.msra.mxu0 0.0
    %433 = vmatprep.subr.mxu0 0.0
    %434 = vmatpush1.msra.mxu0 0.0
    %435 = vmatprep.subr.mxu0 0.0
    %436 = vmatpush1.msra.mxu0 0.0
    %437 = vmatprep.mubr.f32.mxu0 0.0
    %438 = vmatmul.mubr.f32.gmra.mrb[0].mxu0 0.0
    %v439 = vpop.f32.mrb[0].mxu0
    %v440 = vadd.f32 %v361, %v439
    %v441 = vpop.f32.mrb[0].mxu0
    %v442 = vadd.f32 %v365, %v441
    %443 = vdwg.mxu0
    %444 = vmatprep.subr.mxu0 0.0
    %445 = vmatpush1.msra.mxu0 %v300
    %446 = vmatprep.subr.mxu0 0.0
    %447 = vmatpush1.msra.mxu0 %v303
    %448 = vmatprep.subr.mxu0 0.0
    %449 = vmatpush1.msra.mxu0 %v306
    %450 = vmatprep.subr.mxu0 0.0
    %451 = vmatpush1.msra.mxu0 %v309
    %452 = vmatprep.subr.mxu0 0.0
    %453 = vmatpush1.msra.mxu0 %v312
    %454 = vmatprep.subr.mxu0 0.0
    %455 = vmatpush1.msra.mxu0 %v315
    %456 = vmatprep.subr.mxu0 0.0
    %457 = vmatpush1.msra.mxu0 %v318
    %458 = vmatprep.subr.mxu0 0.0
    %459 = vmatpush1.msra.mxu0 %v321
    %460 = vmatprep.subr.mxu0 0.0
    %461 = vmatpush1.msra.mxu0 %v324
    %462 = vmatprep.subr.mxu0 0.0
    %463 = vmatpush1.msra.mxu0 %v327
    %464 = vmatprep.subr.mxu0 0.0
    %465 = vmatpush1.msra.mxu0 %v330
    %466 = vmatprep.subr.mxu0 0.0
    %467 = vmatpush1.msra.mxu0 %v333
    %468 = vmatprep.subr.mxu0 0.0
    %469 = vmatpush1.msra.mxu0 %v336
    %470 = vmatprep.subr.mxu0 0.0
    %471 = vmatpush1.msra.mxu0 %v339
    %472 = vmatprep.subr.mxu0 0.0
    %473 = vmatpush1.msra.mxu0 %v342
    %474 = vmatprep.subr.mxu0 0.0
    %475 = vmatpush1.msra.mxu0 %v345
    %476 = vmatprep.subr.mxu0 0.0
    %477 = vmatpush1.msra.mxu0 0.0
    %478 = vmatprep.subr.mxu0 0.0
    %479 = vmatpush1.msra.mxu0 0.0
    %480 = vmatprep.subr.mxu0 0.0
    %481 = vmatpush1.msra.mxu0 0.0
    %482 = vmatprep.subr.mxu0 0.0
    %483 = vmatpush1.msra.mxu0 0.0
    %484 = vmatprep.subr.mxu0 0.0
    %485 = vmatpush1.msra.mxu0 0.0
    %486 = vmatprep.subr.mxu0 0.0
    %487 = vmatpush1.msra.mxu0 0.0
    %488 = vmatprep.subr.mxu0 0.0
    %489 = vmatpush1.msra.mxu0 0.0
    %490 = vmatprep.subr.mxu0 0.0
    %491 = vmatpush1.msra.mxu0 0.0
    %492 = vmatprep.subr.mxu0 0.0
    %493 = vmatpush1.msra.mxu0 0.0
    %494 = vmatprep.subr.mxu0 0.0
    %495 = vmatpush1.msra.mxu0 0.0
    %496 = vmatprep.subr.mxu0 0.0
    %497 = vmatpush1.msra.mxu0 0.0
    %498 = vmatprep.subr.mxu0 0.0
    %499 = vmatpush1.msra.mxu0 0.0
    %500 = vmatprep.subr.mxu0 0.0
    %501 = vmatpush1.msra.mxu0 0.0
    %502 = vmatprep.subr.mxu0 0.0
    %503 = vmatpush1.msra.mxu0 0.0
    %504 = vmatprep.subr.mxu0 0.0
    %505 = vmatpush1.msra.mxu0 0.0
    %506 = vmatprep.subr.mxu0 0.0
    %507 = vmatpush1.msra.mxu0 0.0
    %508 = vmatprep.mubr.f32.mxu0 0.0
    %509 = vmatmul.mubr.f32.gmra.mrb[0].mxu0 0.0
    %v510 = vpop.f32.mrb[0].mxu0
    %v511 = vadd.f32 %v369, %v510
    %v512 = vpop.f32.mrb[0].mxu0
    %513 = vdwg.mxu0
    %v514 = vadd.f32 %v347, %v440
    %v515 = vxor.u32 %v514, 2147483648
    %v516 = vmul.f32 %v515, 1.442695
    %v517 = vpow.pop %v516
    %v518 = vadd.f32 %v517, 1.0
    %v519 = vrcp.pop %v518
    %v520 = vmul.f32 1.0, %v519
    %v522 = vrot.slane %v347, 4
    %v524 = vadd.f32 %v522, %v442
    %v525 = vxor.u32 %v524, 2147483648
    %v526 = vmul.f32 %v525, 1.442695
    %v527 = vpow.pop %v526
    %v528 = vadd.f32 %v527, 1.0
    %v529 = vrcp.pop %v528
    %v530 = vmul.f32 1.0, %v529
    %v531 = vmul.f32 %v520, %v511
    %v532 = vadd.f32 %v348, %v531
    %v533 = vtanh.pop %v532
    %v534 = vsub.f32 1.0, %v530
    %v535 = vmul.f32 %v534, %v533
    %v536 = vmul.f32 %v530, 0.0
    %v537 = vadd.f32 %v535, %v536
    %v538 = vmul.f32 %v356, %v537
    %v539 = vsub.f32 1.0, %v356
    %v540 = vmul.f32 %v539, 0.0
    %v541 = vadd.f32 %v538, %v540
    %v542 = vmul.f32 %v541, %v356
    %543 = vst [vmem:[%s6] sm:$0xf] %v542
    %s544 = scalar_lea.vmem [#allocation2], 12
    %v545 = vld [vmem:[%s544] sm:$0xff]
    %v546 = vld [vmem:[%s544 + $0x8] sm:$0xf]
    %v547 = vld [vmem:[%s1 + $0x1] sm:$0x1]
    %v548 = vlaneseq
    %v549 = vshrl.u32 %v548, 7
    %v550 = vsub.s32 0, %v549
    %v551 = vrot.slane %v547, %v550
    %553 = vbcast.lane.b32.xlu0 %v551, 256
    %v554 = vpop.permute.xlu0 %553
    %555 = vmatprep.subr.mxu0 %v299
    %556 = vmatpush1.msra.mxu0 %v298
    %557 = vmatprep.subr.mxu0 %v302
    %558 = vmatpush1.msra.mxu0 %v301
    %559 = vmatprep.subr.mxu0 %v305
    %560 = vmatpush1.msra.mxu0 %v304
    %561 = vmatprep.subr.mxu0 %v308
    %562 = vmatpush1.msra.mxu0 %v307
    %563 = vmatprep.subr.mxu0 %v311
    %564 = vmatpush1.msra.mxu0 %v310
    %565 = vmatprep.subr.mxu0 %v314
    %566 = vmatpush1.msra.mxu0 %v313
    %567 = vmatprep.subr.mxu0 %v317
    %568 = vmatpush1.msra.mxu0 %v316
    %569 = vmatprep.subr.mxu0 %v320
    %570 = vmatpush1.msra.mxu0 %v319
    %571 = vmatprep.subr.mxu0 %v323
    %572 = vmatpush1.msra.mxu0 %v322
    %573 = vmatprep.subr.mxu0 %v326
    %574 = vmatpush1.msra.mxu0 %v325
    %575 = vmatprep.subr.mxu0 %v329
    %576 = vmatpush1.msra.mxu0 %v328
    %577 = vmatprep.subr.mxu0 %v332
    %578 = vmatpush1.msra.mxu0 %v331
    %579 = vmatprep.subr.mxu0 %v335
    %580 = vmatpush1.msra.mxu0 %v334
    %581 = vmatprep.subr.mxu0 %v338
    %582 = vmatpush1.msra.mxu0 %v337
    %583 = vmatprep.subr.mxu0 %v341
    %584 = vmatpush1.msra.mxu0 %v340
    %585 = vmatprep.subr.mxu0 %v344
    %586 = vmatpush1.msra.mxu0 %v343
    %587 = vmatprep.subr.mxu0 0.0
    %588 = vmatpush1.msra.mxu0 0.0
    %589 = vmatprep.subr.mxu0 0.0
    %590 = vmatpush1.msra.mxu0 0.0
    %591 = vmatprep.subr.mxu0 0.0
    %592 = vmatpush1.msra.mxu0 0.0
    %593 = vmatprep.subr.mxu0 0.0
    %594 = vmatpush1.msra.mxu0 0.0
    %595 = vmatprep.subr.mxu0 0.0
    %596 = vmatpush1.msra.mxu0 0.0
    %597 = vmatprep.subr.mxu0 0.0
    %598 = vmatpush1.msra.mxu0 0.0
    %599 = vmatprep.subr.mxu0 0.0
    %600 = vmatpush1.msra.mxu0 0.0
    %601 = vmatprep.subr.mxu0 0.0
    %602 = vmatpush1.msra.mxu0 0.0
    %603 = vmatprep.subr.mxu0 0.0
    %604 = vmatpush1.msra.mxu0 0.0
    %605 = vmatprep.subr.mxu0 0.0
    %606 = vmatpush1.msra.mxu0 0.0
    %607 = vmatprep.subr.mxu0 0.0
    %608 = vmatpush1.msra.mxu0 0.0
    %609 = vmatprep.subr.mxu0 0.0
    %610 = vmatpush1.msra.mxu0 0.0
    %611 = vmatprep.subr.mxu0 0.0
    %612 = vmatpush1.msra.mxu0 0.0
    %613 = vmatprep.subr.mxu0 0.0
    %614 = vmatpush1.msra.mxu0 0.0
    %615 = vmatprep.subr.mxu0 0.0
    %616 = vmatpush1.msra.mxu0 0.0
    %617 = vmatprep.subr.mxu0 0.0
    %618 = vmatpush1.msra.mxu0 0.0
    %619 = vmatprep.mubr.f32.mxu0 0.0
    %620 = vmatmul.mubr.f32.gmra.mrb[0].mxu0 %v541
    %v621 = vpop.f32.mrb[0].mxu0
    %v622 = vadd.f32 %v361, %v621
    %v623 = vpop.f32.mrb[0].mxu0
    %v624 = vadd.f32 %v365, %v623
    %625 = vdwg.mxu0
    %626 = vmatprep.subr.mxu0 0.0
    %627 = vmatpush1.msra.mxu0 %v300
    %628 = vmatprep.subr.mxu0 0.0
    %629 = vmatpush1.msra.mxu0 %v303
    %630 = vmatprep.subr.mxu0 0.0
    %631 = vmatpush1.msra.mxu0 %v306
    %632 = vmatprep.subr.mxu0 0.0
    %633 = vmatpush1.msra.mxu0 %v309
    %634 = vmatprep.subr.mxu0 0.0
    %635 = vmatpush1.msra.mxu0 %v312
    %636 = vmatprep.subr.mxu0 0.0
    %637 = vmatpush1.msra.mxu0 %v315
    %638 = vmatprep.subr.mxu0 0.0
    %639 = vmatpush1.msra.mxu0 %v318
    %640 = vmatprep.subr.mxu0 0.0
    %641 = vmatpush1.msra.mxu0 %v321
    %642 = vmatprep.subr.mxu0 0.0
    %643 = vmatpush1.msra.mxu0 %v324
    %644 = vmatprep.subr.mxu0 0.0
    %645 = vmatpush1.msra.mxu0 %v327
    %646 = vmatprep.subr.mxu0 0.0
    %647 = vmatpush1.msra.mxu0 %v330
    %648 = vmatprep.subr.mxu0 0.0
    %649 = vmatpush1.msra.mxu0 %v333
    %650 = vmatprep.subr.mxu0 0.0
    %651 = vmatpush1.msra.mxu0 %v336
    %652 = vmatprep.subr.mxu0 0.0
    %653 = vmatpush1.msra.mxu0 %v339
    %654 = vmatprep.subr.mxu0 0.0
    %655 = vmatpush1.msra.mxu0 %v342
    %656 = vmatprep.subr.mxu0 0.0
    %657 = vmatpush1.msra.mxu0 %v345
    %658 = vmatprep.subr.mxu0 0.0
    %659 = vmatpush1.msra.mxu0 0.0
    %660 = vmatprep.subr.mxu0 0.0
    %661 = vmatpush1.msra.mxu0 0.0
    %662 = vmatprep.subr.mxu0 0.0
    %663 = vmatpush1.msra.mxu0 0.0
    %664 = vmatprep.subr.mxu0 0.0
    %665 = vmatpush1.msra.mxu0 0.0
    %666 = vmatprep.subr.mxu0 0.0
    %667 = vmatpush1.msra.mxu0 0.0
    %668 = vmatprep.subr.mxu0 0.0
    %669 = vmatpush1.msra.mxu0 0.0
    %670 = vmatprep.subr.mxu0 0.0
    %671 = vmatpush1.msra.mxu0 0.0
    %672 = vmatprep.subr.mxu0 0.0
    %673 = vmatpush1.msra.mxu0 0.0
    %674 = vmatprep.subr.mxu0 0.0
    %675 = vmatpush1.msra.mxu0 0.0
    %676 = vmatprep.subr.mxu0 0.0
    %677 = vmatpush1.msra.mxu0 0.0
    %678 = vmatprep.subr.mxu0 0.0
    %679 = vmatpush1.msra.mxu0 0.0
    %680 = vmatprep.subr.mxu0 0.0
    %681 = vmatpush1.msra.mxu0 0.0
    %682 = vmatprep.subr.mxu0 0.0
    %683 = vmatpush1.msra.mxu0 0.0
    %684 = vmatprep.subr.mxu0 0.0
    %685 = vmatpush1.msra.mxu0 0.0
    %686 = vmatprep.subr.mxu0 0.0
    %687 = vmatpush1.msra.mxu0 0.0
    %688 = vmatprep.subr.mxu0 0.0
    %689 = vmatpush1.msra.mxu0 0.0
    %690 = vmatprep.mubr.f32.mxu0 0.0
    %691 = vmatmul.mubr.f32.gmra.mrb[0].mxu0 %v541
    %v692 = vpop.f32.mrb[0].mxu0
    %v693 = vadd.f32 %v369, %v692
    %v694 = vpop.f32.mrb[0].mxu0
    %695 = vdwg.mxu0
    %v696 = vadd.f32 %v545, %v622
    %v697 = vxor.u32 %v696, 2147483648
    %v698 = vmul.f32 %v697, 1.442695
    %v699 = vpow.pop %v698
    %v700 = vadd.f32 %v699, 1.0
    %v701 = vrcp.pop %v700
    %v702 = vmul.f32 1.0, %v701
    %v704 = vrot.slane %v545, 4
    %v706 = vadd.f32 %v704, %v624
    %v707 = vxor.u32 %v706, 2147483648
    %v708 = vmul.f32 %v707, 1.442695
    %v709 = vpow.pop %v708
    %v710 = vadd.f32 %v709, 1.0
    %v711 = vrcp.pop %v710
    %v712 = vmul.f32 1.0, %v711
    %v713 = vmul.f32 %v702, %v693
    %v714 = vadd.f32 %v546, %v713
    %v715 = vtanh.pop %v714
    %v716 = vsub.f32 1.0, %v712
    %v717 = vmul.f32 %v716, %v715
    %v718 = vmul.f32 %v712, %v541
    %v719 = vadd.f32 %v717, %v718
    %v720 = vmul.f32 %v554, %v719
    %v721 = vsub.f32 1.0, %v554
    %v722 = vmul.f32 %v721, %v541
    %v723 = vadd.f32 %v720, %v722
    %v724 = vmul.f32 %v723, %v554
    %s725 = scalar_lea.vmem %s6, 4
    %726 = vst [vmem:[%s725] sm:$0xf] %v724
    %s727 = scalar_lea.vmem [#allocation2], 24
    %v728 = vld [vmem:[%s727] sm:$0xff]
    %v729 = vld [vmem:[%s727 + $0x8] sm:$0xf]
    %v730 = vld [vmem:[%s1 + $0x2] sm:$0x1]
    %v731 = vlaneseq
    %v732 = vshrl.u32 %v731, 7
    %v733 = vsub.s32 0, %v732
    %v734 = vrot.slane %v730, %v733
    %736 = vbcast.lane.b32.xlu0 %v734, 256
    %v737 = vpop.permute.xlu0 %736
    %738 = vmatprep.subr.mxu0 %v299
    %739 = vmatpush1.msra.mxu0 %v298
    %740 = vmatprep.subr.mxu0 %v302
    %741 = vmatpush1.msra.mxu0 %v301
    %742 = vmatprep.subr.mxu0 %v305
    %743 = vmatpush1.msra.mxu0 %v304
    %744 = vmatprep.subr.mxu0 %v308
    %745 = vmatpush1.msra.mxu0 %v307
    %746 = vmatprep.subr.mxu0 %v311
    %747 = vmatpush1.msra.mxu0 %v310
    %748 = vmatprep.subr.mxu0 %v314
    %749 = vmatpush1.msra.mxu0 %v313
    %750 = vmatprep.subr.mxu0 %v317
    %751 = vmatpush1.msra.mxu0 %v316
    %752 = vmatprep.subr.mxu0 %v320
    %753 = vmatpush1.msra.mxu0 %v319
    %754 = vmatprep.subr.mxu0 %v323
    %755 = vmatpush1.msra.mxu0 %v322
    %756 = vmatprep.subr.mxu0 %v326
    %757 = vmatpush1.msra.mxu0 %v325
    %758 = vmatprep.subr.mxu0 %v329
    %759 = vmatpush1.msra.mxu0 %v328
    %760 = vmatprep.subr.mxu0 %v332
    %761 = vmatpush1.msra.mxu0 %v331
    %762 = vmatprep.subr.mxu0 %v335
    %763 = vmatpush1.msra.mxu0 %v334
    %764 = vmatprep.subr.mxu0 %v338
    %765 = vmatpush1.msra.mxu0 %v337
    %766 = vmatprep.subr.mxu0 %v341
    %767 = vmatpush1.msra.mxu0 %v340
    %768 = vmatprep.subr.mxu0 %v344
    %769 = vmatpush1.msra.mxu0 %v343
    %770 = vmatprep.subr.mxu0 0.0
    %771 = vmatpush1.msra.mxu0 0.0
    %772 = vmatprep.subr.mxu0 0.0
    %773 = vmatpush1.msra.mxu0 0.0
    %774 = vmatprep.subr.mxu0 0.0
    %775 = vmatpush1.msra.mxu0 0.0
    %776 = vmatprep.subr.mxu0 0.0
    %777 = vmatpush1.msra.mxu0 0.0
    %778 = vmatprep.subr.mxu0 0.0
    %779 = vmatpush1.msra.mxu0 0.0
    %780 = vmatprep.subr.mxu0 0.0
    %781 = vmatpush1.msra.mxu0 0.0
    %782 = vmatprep.subr.mxu0 0.0
    %783 = vmatpush1.msra.mxu0 0.0
    %784 = vmatprep.subr.mxu0 0.0
    %785 = vmatpush1.msra.mxu0 0.0
    %786 = vmatprep.subr.mxu0 0.0
    %787 = vmatpush1.msra.mxu0 0.0
    %788 = vmatprep.subr.mxu0 0.0
    %789 = vmatpush1.msra.mxu0 0.0
    %790 = vmatprep.subr.mxu0 0.0
    %791 = vmatpush1.msra.mxu0 0.0
    %792 = vmatprep.subr.mxu0 0.0
    %793 = vmatpush1.msra.mxu0 0.0
    %794 = vmatprep.subr.mxu0 0.0
    %795 = vmatpush1.msra.mxu0 0.0
    %796 = vmatprep.subr.mxu0 0.0
    %797 = vmatpush1.msra.mxu0 0.0
    %798 = vmatprep.subr.mxu0 0.0
    %799 = vmatpush1.msra.mxu0 0.0
    %800 = vmatprep.subr.mxu0 0.0
    %801 = vmatpush1.msra.mxu0 0.0
    %802 = vmatprep.mubr.f32.mxu0 0.0
    %803 = vmatmul.mubr.f32.gmra.mrb[0].mxu0 %v723
    %v804 = vpop.f32.mrb[0].mxu0
    %v805 = vadd.f32 %v361, %v804
    %v806 = vpop.f32.mrb[0].mxu0
    %v807 = vadd.f32 %v365, %v806
    %808 = vdwg.mxu0
    %809 = vmatprep.subr.mxu0 0.0
    %810 = vmatpush1.msra.mxu0 %v300
    %811 = vmatprep.subr.mxu0 0.0
    %812 = vmatpush1.msra.mxu0 %v303
    %813 = vmatprep.subr.mxu0 0.0
    %814 = vmatpush1.msra.mxu0 %v306
    %815 = vmatprep.subr.mxu0 0.0
    %816 = vmatpush1.msra.mxu0 %v309
    %817 = vmatprep.subr.mxu0 0.0
    %818 = vmatpush1.msra.mxu0 %v312
    %819 = vmatprep.subr.mxu0 0.0
    %820 = vmatpush1.msra.mxu0 %v315
    %821 = vmatprep.subr.mxu0 0.0
    %822 = vmatpush1.msra.mxu0 %v318
    %823 = vmatprep.subr.mxu0 0.0
    %824 = vmatpush1.msra.mxu0 %v321
    %825 = vmatprep.subr.mxu0 0.0
    %826 = vmatpush1.msra.mxu0 %v324
    %827 = vmatprep.subr.mxu0 0.0
    %828 = vmatpush1.msra.mxu0 %v327
    %829 = vmatprep.subr.mxu0 0.0
    %830 = vmatpush1.msra.mxu0 %v330
    %831 = vmatprep.subr.mxu0 0.0
    %832 = vmatpush1.msra.mxu0 %v333
    %833 = vmatprep.subr.mxu0 0.0
    %834 = vmatpush1.msra.mxu0 %v336
    %835 = vmatprep.subr.mxu0 0.0
    %836 = vmatpush1.msra.mxu0 %v339
    %837 = vmatprep.subr.mxu0 0.0
    %838 = vmatpush1.msra.mxu0 %v342
    %839 = vmatprep.subr.mxu0 0.0
    %840 = vmatpush1.msra.mxu0 %v345
    %841 = vmatprep.subr.mxu0 0.0
    %842 = vmatpush1.msra.mxu0 0.0
    %843 = vmatprep.subr.mxu0 0.0
    %844 = vmatpush1.msra.mxu0 0.0
    %845 = vmatprep.subr.mxu0 0.0
    %846 = vmatpush1.msra.mxu0 0.0
    %847 = vmatprep.subr.mxu0 0.0
    %848 = vmatpush1.msra.mxu0 0.0
    %849 = vmatprep.subr.mxu0 0.0
    %850 = vmatpush1.msra.mxu0 0.0
    %851 = vmatprep.subr.mxu0 0.0
    %852 = vmatpush1.msra.mxu0 0.0
    %853 = vmatprep.subr.mxu0 0.0
    %854 = vmatpush1.msra.mxu0 0.0
    %855 = vmatprep.subr.mxu0 0.0
    %856 = vmatpush1.msra.mxu0 0.0
    %857 = vmatprep.subr.mxu0 0.0
    %858 = vmatpush1.msra.mxu0 0.0
    %859 = vmatprep.subr.mxu0 0.0
    %860 = vmatpush1.msra.mxu0 0.0
    %861 = vmatprep.subr.mxu0 0.0
    %862 = vmatpush1.msra.mxu0 0.0
    %863 = vmatprep.subr.mxu0 0.0
    %864 = vmatpush1.msra.mxu0 0.0
    %865 = vmatprep.subr.mxu0 0.0
    %866 = vmatpush1.msra.mxu0 0.0
    %867 = vmatprep.subr.mxu0 0.0
    %868 = vmatpush1.msra.mxu0 0.0
    %869 = vmatprep.subr.mxu0 0.0
    %870 = vmatpush1.msra.mxu0 0.0
    %871 = vmatprep.subr.mxu0 0.0
    %872 = vmatpush1.msra.mxu0 0.0
    %873 = vmatprep.mubr.f32.mxu0 0.0
    %874 = vmatmul.mubr.f32.gmra.mrb[0].mxu0 %v723
    %v875 = vpop.f32.mrb[0].mxu0
    %v876 = vadd.f32 %v369, %v875
    %v877 = vpop.f32.mrb[0].mxu0
    %878 = vdwg.mxu0
    %v879 = vadd.f32 %v728, %v805
    %v880 = vxor.u32 %v879, 2147483648
    %v881 = vmul.f32 %v880, 1.442695
    %v882 = vpow.pop %v881
    %v883 = vadd.f32 %v882, 1.0
    %v884 = vrcp.pop %v883
    %v885 = vmul.f32 1.0, %v884
    %v887 = vrot.slane %v728, 4
    %v889 = vadd.f32 %v887, %v807
    %v890 = vxor.u32 %v889, 2147483648
    %v891 = vmul.f32 %v890, 1.442695
    %v892 = vpow.pop %v891
    %v893 = vadd.f32 %v892, 1.0
    %v894 = vrcp.pop %v893
    %v895 = vmul.f32 1.0, %v894
    %v896 = vmul.f32 %v885, %v876
    %v897 = vadd.f32 %v729, %v896
    %v898 = vtanh.pop %v897
    %v899 = vsub.f32 1.0, %v895
    %v900 = vmul.f32 %v899, %v898
    %v901 = vmul.f32 %v895, %v723
    %v902 = vadd.f32 %v900, %v901
    %v903 = vmul.f32 %v737, %v902
    %v904 = vsub.f32 1.0, %v737
    %v905 = vmul.f32 %v904, %v723
    %v906 = vadd.f32 %v903, %v905
    %v907 = vmul.f32 %v906, %v737
    %s908 = scalar_lea.vmem %s6, 8
    %909 = vst [vmem:[%s908] sm:$0xf] %v907
    %s910 = scalar_lea.vmem [#allocation2], 36
    %v911 = vld [vmem:[%s910] sm:$0xff]
    %v912 = vld [vmem:[%s910 + $0x8] sm:$0xf]
    %v913 = vld [vmem:[%s1 + $0x3] sm:$0x1]
    %v914 = vlaneseq
    %v915 = vshrl.u32 %v914, 7
    %v916 = vsub.s32 0, %v915
    %v917 = vrot.slane %v913, %v916
    %919 = vbcast.lane.b32.xlu0 %v917, 256
    %v920 = vpop.permute.xlu0 %919
    %921 = vmatprep.subr.mxu0 %v299
    %922 = vmatpush1.msra.mxu0 %v298
    %923 = vmatprep.subr.mxu0 %v302
    %924 = vmatpush1.msra.mxu0 %v301
    %925 = vmatprep.subr.mxu0 %v305
    %926 = vmatpush1.msra.mxu0 %v304
    %927 = vmatprep.subr.mxu0 %v308
    %928 = vmatpush1.msra.mxu0 %v307
    %929 = vmatprep.subr.mxu0 %v311
    %930 = vmatpush1.msra.mxu0 %v310
    %931 = vmatprep.subr.mxu0 %v314
    %932 = vmatpush1.msra.mxu0 %v313
    %933 = vmatprep.subr.mxu0 %v317
    %934 = vmatpush1.msra.mxu0 %v316
    %935 = vmatprep.subr.mxu0 %v320
    %936 = vmatpush1.msra.mxu0 %v319
    %937 = vmatprep.subr.mxu0 %v323
    %938 = vmatpush1.msra.mxu0 %v322
    %939 = vmatprep.subr.mxu0 %v326
    %940 = vmatpush1.msra.mxu0 %v325
    %941 = vmatprep.subr.mxu0 %v329
    %942 = vmatpush1.msra.mxu0 %v328
    %943 = vmatprep.subr.mxu0 %v332
    %944 = vmatpush1.msra.mxu0 %v331
    %945 = vmatprep.subr.mxu0 %v335
    %946 = vmatpush1.msra.mxu0 %v334
    %947 = vmatprep.subr.mxu0 %v338
    %948 = vmatpush1.msra.mxu0 %v337
    %949 = vmatprep.subr.mxu0 %v341
    %950 = vmatpush1.msra.mxu0 %v340
    %951 = vmatprep.subr.mxu0 %v344
    %952 = vmatpush1.msra.mxu0 %v343
    %953 = vmatprep.subr.mxu0 0.0
    %954 = vmatpush1.msra.mxu0 0.0
    %955 = vmatprep.subr.mxu0 0.0
    %956 = vmatpush1.msra.mxu0 0.0
    %957 = vmatprep.subr.mxu0 0.0
    %958 = vmatpush1.msra.mxu0 0.0
    %959 = vmatprep.subr.mxu0 0.0
    %960 = vmatpush1.msra.mxu0 0.0
    %961 = vmatprep.subr.mxu0 0.0
    %962 = vmatpush1.msra.mxu0 0.0
    %963 = vmatprep.subr.mxu0 0.0
    %964 = vmatpush1.msra.mxu0 0.0
    %965 = vmatprep.subr.mxu0 0.0
    %966 = vmatpush1.msra.mxu0 0.0
    %967 = vmatprep.subr.mxu0 0.0
    %968 = vmatpush1.msra.mxu0 0.0
    %969 = vmatprep.subr.mxu0 0.0
    %970 = vmatpush1.msra.mxu0 0.0
    %971 = vmatprep.subr.mxu0 0.0
    %972 = vmatpush1.msra.mxu0 0.0
    %973 = vmatprep.subr.mxu0 0.0
    %974 = vmatpush1.msra.mxu0 0.0
    %975 = vmatprep.subr.mxu0 0.0
    %976 = vmatpush1.msra.mxu0 0.0
    %977 = vmatprep.subr.mxu0 0.0
    %978 = vmatpush1.msra.mxu0 0.0
    %979 = vmatprep.subr.mxu0 0.0
    %980 = vmatpush1.msra.mxu0 0.0
    %981 = vmatprep.subr.mxu0 0.0
    %982 = vmatpush1.msra.mxu0 0.0
    %983 = vmatprep.subr.mxu0 0.0
    %984 = vmatpush1.msra.mxu0 0.0
    %985 = vmatprep.mubr.f32.mxu0 0.0
    %986 = vmatmul.mubr.f32.gmra.mrb[0].mxu0 %v906
    %v987 = vpop.f32.mrb[0].mxu0
    %v988 = vadd.f32 %v361, %v987
    %v989 = vpop.f32.mrb[0].mxu0
    %v990 = vadd.f32 %v365, %v989
    %991 = vdwg.mxu0
    %992 = vmatprep.subr.mxu0 0.0
    %993 = vmatpush1.msra.mxu0 %v300
    %994 = vmatprep.subr.mxu0 0.0
    %995 = vmatpush1.msra.mxu0 %v303
    %996 = vmatprep.subr.mxu0 0.0
    %997 = vmatpush1.msra.mxu0 %v306
    %998 = vmatprep.subr.mxu0 0.0
    %999 = vmatpush1.msra.mxu0 %v309
    %1000 = vmatprep.subr.mxu0 0.0
    %1001 = vmatpush1.msra.mxu0 %v312
    %1002 = vmatprep.subr.mxu0 0.0
    %1003 = vmatpush1.msra.mxu0 %v315
    %1004 = vmatprep.subr.mxu0 0.0
    %1005 = vmatpush1.msra.mxu0 %v318
    %1006 = vmatprep.subr.mxu0 0.0
    %1007 = vmatpush1.msra.mxu0 %v321
    %1008 = vmatprep.subr.mxu0 0.0
    %1009 = vmatpush1.msra.mxu0 %v324
    %1010 = vmatprep.subr.mxu0 0.0
    %1011 = vmatpush1.msra.mxu0 %v327
    %1012 = vmatprep.subr.mxu0 0.0
    %1013 = vmatpush1.msra.mxu0 %v330
    %1014 = vmatprep.subr.mxu0 0.0
    %1015 = vmatpush1.msra.mxu0 %v333
    %1016 = vmatprep.subr.mxu0 0.0
    %1017 = vmatpush1.msra.mxu0 %v336
    %1018 = vmatprep.subr.mxu0 0.0
    %1019 = vmatpush1.msra.mxu0 %v339
    %1020 = vmatprep.subr.mxu0 0.0
    %1021 = vmatpush1.msra.mxu0 %v342
    %1022 = vmatprep.subr.mxu0 0.0
    %1023 = vmatpush1.msra.mxu0 %v345
    %1024 = vmatprep.subr.mxu0 0.0
    %1025 = vmatpush1.msra.mxu0 0.0
    %1026 = vmatprep.subr.mxu0 0.0
    %1027 = vmatpush1.msra.mxu0 0.0
    %1028 = vmatprep.subr.mxu0 0.0
    %1029 = vmatpush1.msra.mxu0 0.0
    %1030 = vmatprep.subr.mxu0 0.0
    %1031 = vmatpush1.msra.mxu0 0.0
    %1032 = vmatprep.subr.mxu0 0.0
    %1033 = vmatpush1.msra.mxu0 0.0
    %1034 = vmatprep.subr.mxu0 0.0
    %1035 = vmatpush1.msra.mxu0 0.0
    %1036 = vmatprep.subr.mxu0 0.0
    %1037 = vmatpush1.msra.mxu0 0.0
    %1038 = vmatprep.subr.mxu0 0.0
    %1039 = vmatpush1.msra.mxu0 0.0
    %1040 = vmatprep.subr.mxu0 0.0
    %1041 = vmatpush1.msra.mxu0 0.0
    %1042 = vmatprep.subr.mxu0 0.0
    %1043 = vmatpush1.msra.mxu0 0.0
    %1044 = vmatprep.subr.mxu0 0.0
    %1045 = vmatpush1.msra.mxu0 0.0
    %1046 = vmatprep.subr.mxu0 0.0
    %1047 = vmatpush1.msra.mxu0 0.0
    %1048 = vmatprep.subr.mxu0 0.0
    %1049 = vmatpush1.msra.mxu0 0.0
    %1050 = vmatprep.subr.mxu0 0.0
    %1051 = vmatpush1.msra.mxu0 0.0
    %1052 = vmatprep.subr.mxu0 0.0
    %1053 = vmatpush1.msra.mxu0 0.0
    %1054 = vmatprep.subr.mxu0 0.0
    %1055 = vmatpush1.msra.mxu0 0.0
    %1056 = vmatprep.mubr.f32.mxu0 0.0
    %1057 = vmatmul.mubr.f32.gmra.mrb[0].mxu0 %v906
    %v1058 = vpop.f32.mrb[0].mxu0
    %v1059 = vadd.f32 %v369, %v1058
    %v1060 = vpop.f32.mrb[0].mxu0
    %1061 = vdwg.mxu0
    %v1062 = vadd.f32 %v911, %v988
    %v1063 = vxor.u32 %v1062, 2147483648
    %v1064 = vmul.f32 %v1063, 1.442695
    %v1065 = vpow.pop %v1064
    %v1066 = vadd.f32 %v1065, 1.0
    %v1067 = vrcp.pop %v1066
    %v1068 = vmul.f32 1.0, %v1067
    %v1070 = vrot.slane %v911, 4
    %v1072 = vadd.f32 %v1070, %v990
    %v1073 = vxor.u32 %v1072, 2147483648
    %v1074 = vmul.f32 %v1073, 1.442695
    %v1075 = vpow.pop %v1074
    %v1076 = vadd.f32 %v1075, 1.0
    %v1077 = vrcp.pop %v1076
    %v1078 = vmul.f32 1.0, %v1077
    %v1079 = vmul.f32 %v1068, %v1059
    %v1080 = vadd.f32 %v912, %v1079
    %v1081 = vtanh.pop %v1080
    %v1082 = vsub.f32 1.0, %v1078
    %v1083 = vmul.f32 %v1082, %v1081
    %v1084 = vmul.f32 %v1078, %v906
    %v1085 = vadd.f32 %v1083, %v1084
    %v1086 = vmul.f32 %v920, %v1085
    %v1087 = vsub.f32 1.0, %v920
    %v1088 = vmul.f32 %v1087, %v906
    %v1089 = vadd.f32 %v1086, %v1088
    %v1090 = vmul.f32 %v1089, %v920
    %s1091 = scalar_lea.vmem %s6, 12
    %1092 = vst [vmem:[%s1091] sm:$0xf] %v1090
    %s1093 = scalar_lea.vmem [#allocation2], 48
    %v1094 = vld [vmem:[%s1093] sm:$0xff]
    %v1095 = vld [vmem:[%s1093 + $0x8] sm:$0xf]
    %v1096 = vld [vmem:[%s1 + $0x4] sm:$0x1]
    %v1097 = vlaneseq
    %v1098 = vshrl.u32 %v1097, 7
    %v1099 = vsub.s32 0, %v1098
    %v1100 = vrot.slane %v1096, %v1099
    %1102 = vbcast.lane.b32.xlu0 %v1100, 256
    %v1103 = vpop.permute.xlu0 %1102
    %1104 = vmatprep.subr.mxu0 %v299
    %1105 = vmatpush1.msra.mxu0 %v298
    %1106 = vmatprep.subr.mxu0 %v302
    %1107 = vmatpush1.msra.mxu0 %v301
    %1108 = vmatprep.subr.mxu0 %v305
    %1109 = vmatpush1.msra.mxu0 %v304
    %1110 = vmatprep.subr.mxu0 %v308
    %1111 = vmatpush1.msra.mxu0 %v307
    %1112 = vmatprep.subr.mxu0 %v311
    %1113 = vmatpush1.msra.mxu0 %v310
    %1114 = vmatprep.subr.mxu0 %v314
    %1115 = vmatpush1.msra.mxu0 %v313
    %1116 = vmatprep.subr.mxu0 %v317
    %1117 = vmatpush1.msra.mxu0 %v316
    %1118 = vmatprep.subr.mxu0 %v320
    %1119 = vmatpush1.msra.mxu0 %v319
    %1120 = vmatprep.subr.mxu0 %v323
    %1121 = vmatpush1.msra.mxu0 %v322
    %1122 = vmatprep.subr.mxu0 %v326
    %1123 = vmatpush1.msra.mxu0 %v325
    %1124 = vmatprep.subr.mxu0 %v329
    %1125 = vmatpush1.msra.mxu0 %v328
    %1126 = vmatprep.subr.mxu0 %v332
    %1127 = vmatpush1.msra.mxu0 %v331
    %1128 = vmatprep.subr.mxu0 %v335
    %1129 = vmatpush1.msra.mxu0 %v334
    %1130 = vmatprep.subr.mxu0 %v338
    %1131 = vmatpush1.msra.mxu0 %v337
    %1132 = vmatprep.subr.mxu0 %v341
    %1133 = vmatpush1.msra.mxu0 %v340
    %1134 = vmatprep.subr.mxu0 %v344
    %1135 = vmatpush1.msra.mxu0 %v343
    %1136 = vmatprep.subr.mxu0 0.0
    %1137 = vmatpush1.msra.mxu0 0.0
    %1138 = vmatprep.subr.mxu0 0.0
    %1139 = vmatpush1.msra.mxu0 0.0
    %1140 = vmatprep.subr.mxu0 0.0
    %1141 = vmatpush1.msra.mxu0 0.0
    %1142 = vmatprep.subr.mxu0 0.0
    %1143 = vmatpush1.msra.mxu0 0.0
    %1144 = vmatprep.subr.mxu0 0.0
    %1145 = vmatpush1.msra.mxu0 0.0
    %1146 = vmatprep.subr.mxu0 0.0
    %1147 = vmatpush1.msra.mxu0 0.0
    %1148 = vmatprep.subr.mxu0 0.0
    %1149 = vmatpush1.msra.mxu0 0.0
    %1150 = vmatprep.subr.mxu0 0.0
    %1151 = vmatpush1.msra.mxu0 0.0
    %1152 = vmatprep.subr.mxu0 0.0
    %1153 = vmatpush1.msra.mxu0 0.0
    %1154 = vmatprep.subr.mxu0 0.0
    %1155 = vmatpush1.msra.mxu0 0.0
    %1156 = vmatprep.subr.mxu0 0.0
    %1157 = vmatpush1.msra.mxu0 0.0
    %1158 = vmatprep.subr.mxu0 0.0
    %1159 = vmatpush1.msra.mxu0 0.0
    %1160 = vmatprep.subr.mxu0 0.0
    %1161 = vmatpush1.msra.mxu0 0.0
    %1162 = vmatprep.subr.mxu0 0.0
    %1163 = vmatpush1.msra.mxu0 0.0
    %1164 = vmatprep.subr.mxu0 0.0
    %1165 = vmatpush1.msra.mxu0 0.0
    %1166 = vmatprep.subr.mxu0 0.0
    %1167 = vmatpush1.msra.mxu0 0.0
    %1168 = vmatprep.mubr.f32.mxu0 0.0
    %1169 = vmatmul.mubr.f32.gmra.mrb[0].mxu0 %v1089
    %v1170 = vpop.f32.mrb[0].mxu0
    %v1171 = vadd.f32 %v361, %v1170
    %v1172 = vpop.f32.mrb[0].mxu0
    %v1173 = vadd.f32 %v365, %v1172
    %1174 = vdwg.mxu0
    %1175 = vmatprep.subr.mxu0 0.0
    %1176 = vmatpush1.msra.mxu0 %v300
    %1177 = vmatprep.subr.mxu0 0.0
    %1178 = vmatpush1.msra.mxu0 %v303
    %1179 = vmatprep.subr.mxu0 0.0
    %1180 = vmatpush1.msra.mxu0 %v306
    %1181 = vmatprep.subr.mxu0 0.0
    %1182 = vmatpush1.msra.mxu0 %v309
    %1183 = vmatprep.subr.mxu0 0.0
    %1184 = vmatpush1.msra.mxu0 %v312
    %1185 = vmatprep.subr.mxu0 0.0
    %1186 = vmatpush1.msra.mxu0 %v315
    %1187 = vmatprep.subr.mxu0 0.0
    %1188 = vmatpush1.msra.mxu0 %v318
    %1189 = vmatprep.subr.mxu0 0.0
    %1190 = vmatpush1.msra.mxu0 %v321
    %1191 = vmatprep.subr.mxu0 0.0
    %1192 = vmatpush1.msra.mxu0 %v324
    %1193 = vmatprep.subr.mxu0 0.0
    %1194 = vmatpush1.msra.mxu0 %v327
    %1195 = vmatprep.subr.mxu0 0.0
    %1196 = vmatpush1.msra.mxu0 %v330
    %1197 = vmatprep.subr.mxu0 0.0
    %1198 = vmatpush1.msra.mxu0 %v333
    %1199 = vmatprep.subr.mxu0 0.0
    %1200 = vmatpush1.msra.mxu0 %v336
    %1201 = vmatprep.subr.mxu0 0.0
    %1202 = vmatpush1.msra.mxu0 %v339
    %1203 = vmatprep.subr.mxu0 0.0
    %1204 = vmatpush1.msra.mxu0 %v342
    %1205 = vmatprep.subr.mxu0 0.0
    %1206 = vmatpush1.msra.mxu0 %v345
    %1207 = vmatprep.subr.mxu0 0.0
    %1208 = vmatpush1.msra.mxu0 0.0
    %1209 = vmatprep.subr.mxu0 0.0
    %1210 = vmatpush1.msra.mxu0 0.0
    %1211 = vmatprep.subr.mxu0 0.0
    %1212 = vmatpush1.msra.mxu0 0.0
    %1213 = vmatprep.subr.mxu0 0.0
    %1214 = vmatpush1.msra.mxu0 0.0
    %1215 = vmatprep.subr.mxu0 0.0
    %1216 = vmatpush1.msra.mxu0 0.0
    %1217 = vmatprep.subr.mxu0 0.0
    %1218 = vmatpush1.msra.mxu0 0.0
    %1219 = vmatprep.subr.mxu0 0.0
    %1220 = vmatpush1.msra.mxu0 0.0
    %1221 = vmatprep.subr.mxu0 0.0
    %1222 = vmatpush1.msra.mxu0 0.0
    %1223 = vmatprep.subr.mxu0 0.0
    %1224 = vmatpush1.msra.mxu0 0.0
    %1225 = vmatprep.subr.mxu0 0.0
    %1226 = vmatpush1.msra.mxu0 0.0
    %1227 = vmatprep.subr.mxu0 0.0
    %1228 = vmatpush1.msra.mxu0 0.0
    %1229 = vmatprep.subr.mxu0 0.0
    %1230 = vmatpush1.msra.mxu0 0.0
    %1231 = vmatprep.subr.mxu0 0.0
    %1232 = vmatpush1.msra.mxu0 0.0
    %1233 = vmatprep.subr.mxu0 0.0
    %1234 = vmatpush1.msra.mxu0 0.0
    %1235 = vmatprep.subr.mxu0 0.0
    %1236 = vmatpush1.msra.mxu0 0.0
    %1237 = vmatprep.subr.mxu0 0.0
    %1238 = vmatpush1.msra.mxu0 0.0
    %1239 = vmatprep.mubr.f32.mxu0 0.0
    %1240 = vmatmul.mubr.f32.gmra.mrb[0].mxu0 %v1089
    %v1241 = vpop.f32.mrb[0].mxu0
    %v1242 = vadd.f32 %v369, %v1241
    %v1243 = vpop.f32.mrb[0].mxu0
    %1244 = vdwg.mxu0
    %v1245 = vadd.f32 %v1094, %v1171
    %v1246 = vxor.u32 %v1245, 2147483648
    %v1247 = vmul.f32 %v1246, 1.442695
    %v1248 = vpow.pop %v1247
    %v1249 = vadd.f32 %v1248, 1.0
    %v1250 = vrcp.pop %v1249
    %v1251 = vmul.f32 1.0, %v1250
    %v1253 = vrot.slane %v1094, 4
    %v1255 = vadd.f32 %v1253, %v1173
    %v1256 = vxor.u32 %v1255, 2147483648
    %v1257 = vmul.f32 %v1256, 1.442695
    %v1258 = vpow.pop %v1257
    %v1259 = vadd.f32 %v1258, 1.0
    %v1260 = vrcp.pop %v1259
    %v1261 = vmul.f32 1.0, %v1260
    %v1262 = vmul.f32 %v1251, %v1242
    %v1263 = vadd.f32 %v1095, %v1262
    %v1264 = vtanh.pop %v1263
    %v1265 = vsub.f32 1.0, %v1261
    %v1266 = vmul.f32 %v1265, %v1264
    %v1267 = vmul.f32 %v1261, %v1089
    %v1268 = vadd.f32 %v1266, %v1267
    %v1269 = vmul.f32 %v1103, %v1268
    %v1270 = vsub.f32 1.0, %v1103
    %v1271 = vmul.f32 %v1270, %v1089
    %v1272 = vadd.f32 %v1269, %v1271
    %v1273 = vmul.f32 %v1272, %v1103
    %s1274 = scalar_lea.vmem %s6, 16
    %1275 = vst [vmem:[%s1274] sm:$0xf] %v1273
    %s1276 = scalar_lea.vmem [#allocation2], 60
    %v1277 = vld [vmem:[%s1276] sm:$0xff]
    %v1278 = vld [vmem:[%s1276 + $0x8] sm:$0xf]
    %v1279 = vld [vmem:[%s1 + $0x5] sm:$0x1]
    %v1280 = vlaneseq
    %v1281 = vshrl.u32 %v1280, 7
    %v1282 = vsub.s32 0, %v1281
    %v1283 = vrot.slane %v1279, %v1282
    %1285 = vbcast.lane.b32.xlu0 %v1283, 256
    %v1286 = vpop.permute.xlu0 %1285
    %1287 = vmatprep.subr.mxu0 %v299
    %1288 = vmatpush1.msra.mxu0 %v298
    %1289 = vmatprep.subr.mxu0 %v302
    %1290 = vmatpush1.msra.mxu0 %v301
    %1291 = vmatprep.subr.mxu0 %v305
    %1292 = vmatpush1.msra.mxu0 %v304
    %1293 = vmatprep.subr.mxu0 %v308
    %1294 = vmatpush1.msra.mxu0 %v307
    %1295 = vmatprep.subr.mxu0 %v311
    %1296 = vmatpush1.msra.mxu0 %v310
    %1297 = vmatprep.subr.mxu0 %v314
    %1298 = vmatpush1.msra.mxu0 %v313
    %1299 = vmatprep.subr.mxu0 %v317
    %1300 = vmatpush1.msra.mxu0 %v316
    %1301 = vmatprep.subr.mxu0 %v320
    %1302 = vmatpush1.msra.mxu0 %v319
    %1303 = vmatprep.subr.mxu0 %v323
    %1304 = vmatpush1.msra.mxu0 %v322
    %1305 = vmatprep.subr.mxu0 %v326
    %1306 = vmatpush1.msra.mxu0 %v325
    %1307 = vmatprep.subr.mxu0 %v329
    %1308 = vmatpush1.msra.mxu0 %v328
    %1309 = vmatprep.subr.mxu0 %v332
    %1310 = vmatpush1.msra.mxu0 %v331
    %1311 = vmatprep.subr.mxu0 %v335
    %1312 = vmatpush1.msra.mxu0 %v334
    %1313 = vmatprep.subr.mxu0 %v338
    %1314 = vmatpush1.msra.mxu0 %v337
    %1315 = vmatprep.subr.mxu0 %v341
    %1316 = vmatpush1.msra.mxu0 %v340
    %1317 = vmatprep.subr.mxu0 %v344
    %1318 = vmatpush1.msra.mxu0 %v343
    %1319 = vmatprep.subr.mxu0 0.0
    %1320 = vmatpush1.msra.mxu0 0.0
    %1321 = vmatprep.subr.mxu0 0.0
    %1322 = vmatpush1.msra.mxu0 0.0
    %1323 = vmatprep.subr.mxu0 0.0
    %1324 = vmatpush1.msra.mxu0 0.0
    %1325 = vmatprep.subr.mxu0 0.0
    %1326 = vmatpush1.msra.mxu0 0.0
    %1327 = vmatprep.subr.mxu0 0.0
    %1328 = vmatpush1.msra.mxu0 0.0
    %1329 = vmatprep.subr.mxu0 0.0
    %1330 = vmatpush1.msra.mxu0 0.0
    %1331 = vmatprep.subr.mxu0 0.0
    %1332 = vmatpush1.msra.mxu0 0.0
    %1333 = vmatprep.subr.mxu0 0.0
    %1334 = vmatpush1.msra.mxu0 0.0
    %1335 = vmatprep.subr.mxu0 0.0
    %1336 = vmatpush1.msra.mxu0 0.0
    %1337 = vmatprep.subr.mxu0 0.0
    %1338 = vmatpush1.msra.mxu0 0.0
    %1339 = vmatprep.subr.mxu0 0.0
    %1340 = vmatpush1.msra.mxu0 0.0
    %1341 = vmatprep.subr.mxu0 0.0
    %1342 = vmatpush1.msra.mxu0 0.0
    %1343 = vmatprep.subr.mxu0 0.0
    %1344 = vmatpush1.msra.mxu0 0.0
    %1345 = vmatprep.subr.mxu0 0.0
    %1346 = vmatpush1.msra.mxu0 0.0
    %1347 = vmatprep.subr.mxu0 0.0
    %1348 = vmatpush1.msra.mxu0 0.0
    %1349 = vmatprep.subr.mxu0 0.0
    %1350 = vmatpush1.msra.mxu0 0.0
    %1351 = vmatprep.mubr.f32.mxu0 0.0
    %1352 = vmatmul.mubr.f32.gmra.mrb[0].mxu0 %v1272
    %v1353 = vpop.f32.mrb[0].mxu0
    %v1354 = vadd.f32 %v361, %v1353
    %v1355 = vpop.f32.mrb[0].mxu0
    %v1356 = vadd.f32 %v365, %v1355
    %1357 = vdwg.mxu0
    %1358 = vmatprep.subr.mxu0 0.0
    %1359 = vmatpush1.msra.mxu0 %v300
    %1360 = vmatprep.subr.mxu0 0.0
    %1361 = vmatpush1.msra.mxu0 %v303
    %1362 = vmatprep.subr.mxu0 0.0
    %1363 = vmatpush1.msra.mxu0 %v306
    %1364 = vmatprep.subr.mxu0 0.0
    %1365 = vmatpush1.msra.mxu0 %v309
    %1366 = vmatprep.subr.mxu0 0.0
    %1367 = vmatpush1.msra.mxu0 %v312
    %1368 = vmatprep.subr.mxu0 0.0
    %1369 = vmatpush1.msra.mxu0 %v315
    %1370 = vmatprep.subr.mxu0 0.0
    %1371 = vmatpush1.msra.mxu0 %v318
    %1372 = vmatprep.subr.mxu0 0.0
    %1373 = vmatpush1.msra.mxu0 %v321
    %1374 = vmatprep.subr.mxu0 0.0
    %1375 = vmatpush1.msra.mxu0 %v324
    %1376 = vmatprep.subr.mxu0 0.0
    %1377 = vmatpush1.msra.mxu0 %v327
    %1378 = vmatprep.subr.mxu0 0.0
    %1379 = vmatpush1.msra.mxu0 %v330
    %1380 = vmatprep.subr.mxu0 0.0
    %1381 = vmatpush1.msra.mxu0 %v333
    %1382 = vmatprep.subr.mxu0 0.0
    %1383 = vmatpush1.msra.mxu0 %v336
    %1384 = vmatprep.subr.mxu0 0.0
    %1385 = vmatpush1.msra.mxu0 %v339
    %1386 = vmatprep.subr.mxu0 0.0
    %1387 = vmatpush1.msra.mxu0 %v342
    %1388 = vmatprep.subr.mxu0 0.0
    %1389 = vmatpush1.msra.mxu0 %v345
    %1390 = vmatprep.subr.mxu0 0.0
    %1391 = vmatpush1.msra.mxu0 0.0
    %1392 = vmatprep.subr.mxu0 0.0
    %1393 = vmatpush1.msra.mxu0 0.0
    %1394 = vmatprep.subr.mxu0 0.0
    %1395 = vmatpush1.msra.mxu0 0.0
    %1396 = vmatprep.subr.mxu0 0.0
    %1397 = vmatpush1.msra.mxu0 0.0
    %1398 = vmatprep.subr.mxu0 0.0
    %1399 = vmatpush1.msra.mxu0 0.0
    %1400 = vmatprep.subr.mxu0 0.0
    %1401 = vmatpush1.msra.mxu0 0.0
    %1402 = vmatprep.subr.mxu0 0.0
    %1403 = vmatpush1.msra.mxu0 0.0
    %1404 = vmatprep.subr.mxu0 0.0
    %1405 = vmatpush1.msra.mxu0 0.0
    %1406 = vmatprep.subr.mxu0 0.0
    %1407 = vmatpush1.msra.mxu0 0.0
    %1408 = vmatprep.subr.mxu0 0.0
    %1409 = vmatpush1.msra.mxu0 0.0
    %1410 = vmatprep.subr.mxu0 0.0
    %1411 = vmatpush1.msra.mxu0 0.0
    %1412 = vmatprep.subr.mxu0 0.0
    %1413 = vmatpush1.msra.mxu0 0.0
    %1414 = vmatprep.subr.mxu0 0.0
    %1415 = vmatpush1.msra.mxu0 0.0
    %1416 = vmatprep.subr.mxu0 0.0
    %1417 = vmatpush1.msra.mxu0 0.0
    %1418 = vmatprep.subr.mxu0 0.0
    %1419 = vmatpush1.msra.mxu0 0.0
    %1420 = vmatprep.subr.mxu0 0.0
    %1421 = vmatpush1.msra.mxu0 0.0
    %1422 = vmatprep.mubr.f32.mxu0 0.0
    %1423 = vmatmul.mubr.f32.gmra.mrb[0].mxu0 %v1272
    %v1424 = vpop.f32.mrb[0].mxu0
    %v1425 = vadd.f32 %v369, %v1424
    %v1426 = vpop.f32.mrb[0].mxu0
    %1427 = vdwg.mxu0
    %v1428 = vadd.f32 %v1277, %v1354
    %v1429 = vxor.u32 %v1428, 2147483648
    %v1430 = vmul.f32 %v1429, 1.442695
    %v1431 = vpow.pop %v1430
    %v1432 = vadd.f32 %v1431, 1.0
    %v1433 = vrcp.pop %v1432
    %v1434 = vmul.f32 1.0, %v1433
    %v1436 = vrot.slane %v1277, 4
    %v1438 = vadd.f32 %v1436, %v1356
    %v1439 = vxor.u32 %v1438, 2147483648
    %v1440 = vmul.f32 %v1439, 1.442695
    %v1441 = vpow.pop %v1440
    %v1442 = vadd.f32 %v1441, 1.0
    %v1443 = vrcp.pop %v1442
    %v1444 = vmul.f32 1.0, %v1443
    %v1445 = vmul.f32 %v1434, %v1425
    %v1446 = vadd.f32 %v1278, %v1445
    %v1447 = vtanh.pop %v1446
    %v1448 = vsub.f32 1.0, %v1444
    %v1449 = vmul.f32 %v1448, %v1447
    %v1450 = vmul.f32 %v1444, %v1272
    %v1451 = vadd.f32 %v1449, %v1450
    %v1452 = vmul.f32 %v1286, %v1451
    %v1453 = vsub.f32 1.0, %v1286
    %v1454 = vmul.f32 %v1453, %v1272
    %v1455 = vadd.f32 %v1452, %v1454
    %v1456 = vmul.f32 %v1455, %v1286
    %s1457 = scalar_lea.vmem %s6, 20
    %1458 = vst [vmem:[%s1457] sm:$0xf] %v1456
    %s1459 = scalar_lea.vmem [#allocation2], 72
    %v1460 = vld [vmem:[%s1459] sm:$0xff]
    %v1461 = vld [vmem:[%s1459 + $0x8] sm:$0xf]
    %v1462 = vld [vmem:[%s1 + $0x6] sm:$0x1]
    %v1463 = vlaneseq
    %v1464 = vshrl.u32 %v1463, 7
    %v1465 = vsub.s32 0, %v1464
    %v1466 = vrot.slane %v1462, %v1465
    %1468 = vbcast.lane.b32.xlu0 %v1466, 256
    %v1469 = vpop.permute.xlu0 %1468
    %1470 = vmatprep.subr.mxu0 %v299
    %1471 = vmatpush1.msra.mxu0 %v298
    %1472 = vmatprep.subr.mxu0 %v302
    %1473 = vmatpush1.msra.mxu0 %v301
    %1474 = vmatprep.subr.mxu0 %v305
    %1475 = vmatpush1.msra.mxu0 %v304
    %1476 = vmatprep.subr.mxu0 %v308
    %1477 = vmatpush1.msra.mxu0 %v307
    %1478 = vmatprep.subr.mxu0 %v311
    %1479 = vmatpush1.msra.mxu0 %v310
    %1480 = vmatprep.subr.mxu0 %v314
    %1481 = vmatpush1.msra.mxu0 %v313
    %1482 = vmatprep.subr.mxu0 %v317
    %1483 = vmatpush1.msra.mxu0 %v316
    %1484 = vmatprep.subr.mxu0 %v320
    %1485 = vmatpush1.msra.mxu0 %v319
    %1486 = vmatprep.subr.mxu0 %v323
    %1487 = vmatpush1.msra.mxu0 %v322
    %1488 = vmatprep.subr.mxu0 %v326
    %1489 = vmatpush1.msra.mxu0 %v325
    %1490 = vmatprep.subr.mxu0 %v329
    %1491 = vmatpush1.msra.mxu0 %v328
    %1492 = vmatprep.subr.mxu0 %v332
    %1493 = vmatpush1.msra.mxu0 %v331
    %1494 = vmatprep.subr.mxu0 %v335
    %1495 = vmatpush1.msra.mxu0 %v334
    %1496 = vmatprep.subr.mxu0 %v338
    %1497 = vmatpush1.msra.mxu0 %v337
    %1498 = vmatprep.subr.mxu0 %v341
    %1499 = vmatpush1.msra.mxu0 %v340
    %1500 = vmatprep.subr.mxu0 %v344
    %1501 = vmatpush1.msra.mxu0 %v343
    %1502 = vmatprep.subr.mxu0 0.0
    %1503 = vmatpush1.msra.mxu0 0.0
    %1504 = vmatprep.subr.mxu0 0.0
    %1505 = vmatpush1.msra.mxu0 0.0
    %1506 = vmatprep.subr.mxu0 0.0
    %1507 = vmatpush1.msra.mxu0 0.0
    %1508 = vmatprep.subr.mxu0 0.0
    %1509 = vmatpush1.msra.mxu0 0.0
    %1510 = vmatprep.subr.mxu0 0.0
    %1511 = vmatpush1.msra.mxu0 0.0
    %1512 = vmatprep.subr.mxu0 0.0
    %1513 = vmatpush1.msra.mxu0 0.0
    %1514 = vmatprep.subr.mxu0 0.0
    %1515 = vmatpush1.msra.mxu0 0.0
    %1516 = vmatprep.subr.mxu0 0.0
    %1517 = vmatpush1.msra.mxu0 0.0
    %1518 = vmatprep.subr.mxu0 0.0
    %1519 = vmatpush1.msra.mxu0 0.0
    %1520 = vmatprep.subr.mxu0 0.0
    %1521 = vmatpush1.msra.mxu0 0.0
    %1522 = vmatprep.subr.mxu0 0.0
    %1523 = vmatpush1.msra.mxu0 0.0
    %1524 = vmatprep.subr.mxu0 0.0
    %1525 = vmatpush1.msra.mxu0 0.0
    %1526 = vmatprep.subr.mxu0 0.0
    %1527 = vmatpush1.msra.mxu0 0.0
    %1528 = vmatprep.subr.mxu0 0.0
    %1529 = vmatpush1.msra.mxu0 0.0
    %1530 = vmatprep.subr.mxu0 0.0
    %1531 = vmatpush1.msra.mxu0 0.0
    %1532 = vmatprep.subr.mxu0 0.0
    %1533 = vmatpush1.msra.mxu0 0.0
    %1534 = vmatprep.mubr.f32.mxu0 0.0
    %1535 = vmatmul.mubr.f32.gmra.mrb[0].mxu0 %v1455
    %v1536 = vpop.f32.mrb[0].mxu0
    %v1537 = vadd.f32 %v361, %v1536
    %v1538 = vpop.f32.mrb[0].mxu0
    %v1539 = vadd.f32 %v365, %v1538
    %1540 = vdwg.mxu0
    %1541 = vmatprep.subr.mxu0 0.0
    %1542 = vmatpush1.msra.mxu0 %v300
    %1543 = vmatprep.subr.mxu0 0.0
    %1544 = vmatpush1.msra.mxu0 %v303
    %1545 = vmatprep.subr.mxu0 0.0
    %1546 = vmatpush1.msra.mxu0 %v306
    %1547 = vmatprep.subr.mxu0 0.0
    %1548 = vmatpush1.msra.mxu0 %v309
    %1549 = vmatprep.subr.mxu0 0.0
    %1550 = vmatpush1.msra.mxu0 %v312
    %1551 = vmatprep.subr.mxu0 0.0
    %1552 = vmatpush1.msra.mxu0 %v315
    %1553 = vmatprep.subr.mxu0 0.0
    %1554 = vmatpush1.msra.mxu0 %v318
    %1555 = vmatprep.subr.mxu0 0.0
    %1556 = vmatpush1.msra.mxu0 %v321
    %1557 = vmatprep.subr.mxu0 0.0
    %1558 = vmatpush1.msra.mxu0 %v324
    %1559 = vmatprep.subr.mxu0 0.0
    %1560 = vmatpush1.msra.mxu0 %v327
    %1561 = vmatprep.subr.mxu0 0.0
    %1562 = vmatpush1.msra.mxu0 %v330
    %1563 = vmatprep.subr.mxu0 0.0
    %1564 = vmatpush1.msra.mxu0 %v333
    %1565 = vmatprep.subr.mxu0 0.0
    %1566 = vmatpush1.msra.mxu0 %v336
    %1567 = vmatprep.subr.mxu0 0.0
    %1568 = vmatpush1.msra.mxu0 %v339
    %1569 = vmatprep.subr.mxu0 0.0
    %1570 = vmatpush1.msra.mxu0 %v342
    %1571 = vmatprep.subr.mxu0 0.0
    %1572 = vmatpush1.msra.mxu0 %v345
    %1573 = vmatprep.subr.mxu0 0.0
    %1574 = vmatpush1.msra.mxu0 0.0
    %1575 = vmatprep.subr.mxu0 0.0
    %1576 = vmatpush1.msra.mxu0 0.0
    %1577 = vmatprep.subr.mxu0 0.0
    %1578 = vmatpush1.msra.mxu0 0.0
    %1579 = vmatprep.subr.mxu0 0.0
    %1580 = vmatpush1.msra.mxu0 0.0
    %1581 = vmatprep.subr.mxu0 0.0
    %1582 = vmatpush1.msra.mxu0 0.0
    %1583 = vmatprep.subr.mxu0 0.0
    %1584 = vmatpush1.msra.mxu0 0.0
    %1585 = vmatprep.subr.mxu0 0.0
    %1586 = vmatpush1.msra.mxu0 0.0
    %1587 = vmatprep.subr.mxu0 0.0
    %1588 = vmatpush1.msra.mxu0 0.0
    %1589 = vmatprep.subr.mxu0 0.0
    %1590 = vmatpush1.msra.mxu0 0.0
    %1591 = vmatprep.subr.mxu0 0.0
    %1592 = vmatpush1.msra.mxu0 0.0
    %1593 = vmatprep.subr.mxu0 0.0
    %1594 = vmatpush1.msra.mxu0 0.0
    %1595 = vmatprep.subr.mxu0 0.0
    %1596 = vmatpush1.msra.mxu0 0.0
    %1597 = vmatprep.subr.mxu0 0.0
    %1598 = vmatpush1.msra.mxu0 0.0
    %1599 = vmatprep.subr.mxu0 0.0
    %1600 = vmatpush1.msra.mxu0 0.0
    %1601 = vmatprep.subr.mxu0 0.0
    %1602 = vmatpush1.msra.mxu0 0.0
    %1603 = vmatprep.subr.mxu0 0.0
    %1604 = vmatpush1.msra.mxu0 0.0
    %1605 = vmatprep.mubr.f32.mxu0 0.0
    %1606 = vmatmul.mubr.f32.gmra.mrb[0].mxu0 %v1455
    %v1607 = vpop.f32.mrb[0].mxu0
    %v1608 = vadd.f32 %v369, %v1607
    %v1609 = vpop.f32.mrb[0].mxu0
    %1610 = vdwg.mxu0
    %v1611 = vadd.f32 %v1460, %v1537
    %v1612 = vxor.u32 %v1611, 2147483648
    %v1613 = vmul.f32 %v1612, 1.442695
    %v1614 = vpow.pop %v1613
    %v1615 = vadd.f32 %v1614, 1.0
    %v1616 = vrcp.pop %v1615
    %v1617 = vmul.f32 1.0, %v1616
    %v1619 = vrot.slane %v1460, 4
    %v1621 = vadd.f32 %v1619, %v1539
    %v1622 = vxor.u32 %v1621, 2147483648
    %v1623 = vmul.f32 %v1622, 1.442695
    %v1624 = vpow.pop %v1623
    %v1625 = vadd.f32 %v1624, 1.0
    %v1626 = vrcp.pop %v1625
    %v1627 = vmul.f32 1.0, %v1626
    %v1628 = vmul.f32 %v1617, %v1608
    %v1629 = vadd.f32 %v1461, %v1628
    %v1630 = vtanh.pop %v1629
    %v1631 = vsub.f32 1.0, %v1627
    %v1632 = vmul.f32 %v1631, %v1630
    %v1633 = vmul.f32 %v1627, %v1455
    %v1634 = vadd.f32 %v1632, %v1633
    %v1635 = vmul.f32 %v1469, %v1634
    %v1636 = vsub.f32 1.0, %v1469
    %v1637 = vmul.f32 %v1636, %v1455
    %v1638 = vadd.f32 %v1635, %v1637
    %v1639 = vmul.f32 %v1638, %v1469
    %s1640 = scalar_lea.vmem %s6, 24
    %1641 = vst [vmem:[%s1640] sm:$0xf] %v1639
    %s1642 = scalar_lea.vmem [#allocation2], 84
    %v1643 = vld [vmem:[%s1642] sm:$0xff]
    %v1644 = vld [vmem:[%s1642 + $0x8] sm:$0xf]
    %v1645 = vld [vmem:[%s1 + $0x7] sm:$0x1]
    %v1646 = vlaneseq
    %v1647 = vshrl.u32 %v1646, 7
    %v1648 = vsub.s32 0, %v1647
    %v1649 = vrot.slane %v1645, %v1648
    %1651 = vbcast.lane.b32.xlu0 %v1649, 256
    %v1652 = vpop.permute.xlu0 %1651
    %1653 = vmatprep.subr.mxu0 %v299
    %1654 = vmatpush1.msra.mxu0 %v298
    %1655 = vmatprep.subr.mxu0 %v302
    %1656 = vmatpush1.msra.mxu0 %v301
    %1657 = vmatprep.subr.mxu0 %v305
    %1658 = vmatpush1.msra.mxu0 %v304
    %1659 = vmatprep.subr.mxu0 %v308
    %1660 = vmatpush1.msra.mxu0 %v307
    %1661 = vmatprep.subr.mxu0 %v311
    %1662 = vmatpush1.msra.mxu0 %v310
    %1663 = vmatprep.subr.mxu0 %v314
    %1664 = vmatpush1.msra.mxu0 %v313
    %1665 = vmatprep.subr.mxu0 %v317
    %1666 = vmatpush1.msra.mxu0 %v316
    %1667 = vmatprep.subr.mxu0 %v320
    %1668 = vmatpush1.msra.mxu0 %v319
    %1669 = vmatprep.subr.mxu0 %v323
    %1670 = vmatpush1.msra.mxu0 %v322
    %1671 = vmatprep.subr.mxu0 %v326
    %1672 = vmatpush1.msra.mxu0 %v325
    %1673 = vmatprep.subr.mxu0 %v329
    %1674 = vmatpush1.msra.mxu0 %v328
    %1675 = vmatprep.subr.mxu0 %v332
    %1676 = vmatpush1.msra.mxu0 %v331
    %1677 = vmatprep.subr.mxu0 %v335
    %1678 = vmatpush1.msra.mxu0 %v334
    %1679 = vmatprep.subr.mxu0 %v338
    %1680 = vmatpush1.msra.mxu0 %v337
    %1681 = vmatprep.subr.mxu0 %v341
    %1682 = vmatpush1.msra.mxu0 %v340
    %1683 = vmatprep.subr.mxu0 %v344
    %1684 = vmatpush1.msra.mxu0 %v343
    %1685 = vmatprep.subr.mxu0 0.0
    %1686 = vmatpush1.msra.mxu0 0.0
    %1687 = vmatprep.subr.mxu0 0.0
    %1688 = vmatpush1.msra.mxu0 0.0
    %1689 = vmatprep.subr.mxu0 0.0
    %1690 = vmatpush1.msra.mxu0 0.0
    %1691 = vmatprep.subr.mxu0 0.0
    %1692 = vmatpush1.msra.mxu0 0.0
    %1693 = vmatprep.subr.mxu0 0.0
    %1694 = vmatpush1.msra.mxu0 0.0
    %1695 = vmatprep.subr.mxu0 0.0
    %1696 = vmatpush1.msra.mxu0 0.0
    %1697 = vmatprep.subr.mxu0 0.0
    %1698 = vmatpush1.msra.mxu0 0.0
    %1699 = vmatprep.subr.mxu0 0.0
    %1700 = vmatpush1.msra.mxu0 0.0
    %1701 = vmatprep.subr.mxu0 0.0
    %1702 = vmatpush1.msra.mxu0 0.0
    %1703 = vmatprep.subr.mxu0 0.0
    %1704 = vmatpush1.msra.mxu0 0.0
    %1705 = vmatprep.subr.mxu0 0.0
    %1706 = vmatpush1.msra.mxu0 0.0
    %1707 = vmatprep.subr.mxu0 0.0
    %1708 = vmatpush1.msra.mxu0 0.0
    %1709 = vmatprep.subr.mxu0 0.0
    %1710 = vmatpush1.msra.mxu0 0.0
    %1711 = vmatprep.subr.mxu0 0.0
    %1712 = vmatpush1.msra.mxu0 0.0
    %1713 = vmatprep.subr.mxu0 0.0
    %1714 = vmatpush1.msra.mxu0 0.0
    %1715 = vmatprep.subr.mxu0 0.0
    %1716 = vmatpush1.msra.mxu0 0.0
    %1717 = vmatprep.mubr.f32.mxu0 0.0
    %1718 = vmatmul.mubr.f32.gmra.mrb[0].mxu0 %v1638
    %v1719 = vpop.f32.mrb[0].mxu0
    %v1720 = vadd.f32 %v361, %v1719
    %v1721 = vpop.f32.mrb[0].mxu0
    %v1722 = vadd.f32 %v365, %v1721
    %1723 = vdwg.mxu0
    %1724 = vmatprep.subr.mxu0 0.0
    %1725 = vmatpush1.msra.mxu0 %v300
    %1726 = vmatprep.subr.mxu0 0.0
    %1727 = vmatpush1.msra.mxu0 %v303
    %1728 = vmatprep.subr.mxu0 0.0
    %1729 = vmatpush1.msra.mxu0 %v306
    %1730 = vmatprep.subr.mxu0 0.0
    %1731 = vmatpush1.msra.mxu0 %v309
    %1732 = vmatprep.subr.mxu0 0.0
    %1733 = vmatpush1.msra.mxu0 %v312
    %1734 = vmatprep.subr.mxu0 0.0
    %1735 = vmatpush1.msra.mxu0 %v315
    %1736 = vmatprep.subr.mxu0 0.0
    %1737 = vmatpush1.msra.mxu0 %v318
    %1738 = vmatprep.subr.mxu0 0.0
    %1739 = vmatpush1.msra.mxu0 %v321
    %1740 = vmatprep.subr.mxu0 0.0
    %1741 = vmatpush1.msra.mxu0 %v324
    %1742 = vmatprep.subr.mxu0 0.0
    %1743 = vmatpush1.msra.mxu0 %v327
    %1744 = vmatprep.subr.mxu0 0.0
    %1745 = vmatpush1.msra.mxu0 %v330
    %1746 = vmatprep.subr.mxu0 0.0
    %1747 = vmatpush1.msra.mxu0 %v333
    %1748 = vmatprep.subr.mxu0 0.0
    %1749 = vmatpush1.msra.mxu0 %v336
    %1750 = vmatprep.subr.mxu0 0.0
    %1751 = vmatpush1.msra.mxu0 %v339
    %1752 = vmatprep.subr.mxu0 0.0
    %1753 = vmatpush1.msra.mxu0 %v342
    %1754 = vmatprep.subr.mxu0 0.0
    %1755 = vmatpush1.msra.mxu0 %v345
    %1756 = vmatprep.subr.mxu0 0.0
    %1757 = vmatpush1.msra.mxu0 0.0
    %1758 = vmatprep.subr.mxu0 0.0
    %1759 = vmatpush1.msra.mxu0 0.0
    %1760 = vmatprep.subr.mxu0 0.0
    %1761 = vmatpush1.msra.mxu0 0.0
    %1762 = vmatprep.subr.mxu0 0.0
    %1763 = vmatpush1.msra.mxu0 0.0
    %1764 = vmatprep.subr.mxu0 0.0
    %1765 = vmatpush1.msra.mxu0 0.0
    %1766 = vmatprep.subr.mxu0 0.0
    %1767 = vmatpush1.msra.mxu0 0.0
    %1768 = vmatprep.subr.mxu0 0.0
    %1769 = vmatpush1.msra.mxu0 0.0
    %1770 = vmatprep.subr.mxu0 0.0
    %1771 = vmatpush1.msra.mxu0 0.0
    %1772 = vmatprep.subr.mxu0 0.0
    %1773 = vmatpush1.msra.mxu0 0.0
    %1774 = vmatprep.subr.mxu0 0.0
    %1775 = vmatpush1.msra.mxu0 0.0
    %1776 = vmatprep.subr.mxu0 0.0
    %1777 = vmatpush1.msra.mxu0 0.0
    %1778 = vmatprep.subr.mxu0 0.0
    %1779 = vmatpush1.msra.mxu0 0.0
    %1780 = vmatprep.subr.mxu0 0.0
    %1781 = vmatpush1.msra.mxu0 0.0
    %1782 = vmatprep.subr.mxu0 0.0
    %1783 = vmatpush1.msra.mxu0 0.0
    %1784 = vmatprep.subr.mxu0 0.0
    %1785 = vmatpush1.msra.mxu0 0.0
    %1786 = vmatprep.subr.mxu0 0.0
    %1787 = vmatpush1.msra.mxu0 0.0
    %1788 = vmatprep.mubr.f32.mxu0 0.0
    %1789 = vmatmul.mubr.f32.gmra.mrb[0].mxu0 %v1638
    %v1790 = vpop.f32.mrb[0].mxu0
    %v1791 = vadd.f32 %v369, %v1790
    %v1792 = vpop.f32.mrb[0].mxu0
    %1793 = vdwg.mxu0
    %v1794 = vadd.f32 %v1643, %v1720
    %v1795 = vxor.u32 %v1794, 2147483648
    %v1796 = vmul.f32 %v1795, 1.442695
    %v1797 = vpow.pop %v1796
    %v1798 = vadd.f32 %v1797, 1.0
    %v1799 = vrcp.pop %v1798
    %v1800 = vmul.f32 1.0, %v1799
    %v1802 = vrot.slane %v1643, 4
    %v1804 = vadd.f32 %v1802, %v1722
    %v1805 = vxor.u32 %v1804, 2147483648
    %v1806 = vmul.f32 %v1805, 1.442695
    %v1807 = vpow.pop %v1806
    %v1808 = vadd.f32 %v1807, 1.0
    %v1809 = vrcp.pop %v1808
    %v1810 = vmul.f32 1.0, %v1809
    %v1811 = vmul.f32 %v1800, %v1791
    %v1812 = vadd.f32 %v1644, %v1811
    %v1813 = vtanh.pop %v1812
    %v1814 = vsub.f32 1.0, %v1810
    %v1815 = vmul.f32 %v1814, %v1813
    %v1816 = vmul.f32 %v1810, %v1638
    %v1817 = vadd.f32 %v1815, %v1816
    %v1818 = vmul.f32 %v1652, %v1817
    %v1819 = vsub.f32 1.0, %v1652
    %v1820 = vmul.f32 %v1819, %v1638
    %v1821 = vadd.f32 %v1818, %v1820
    %v1822 = vmul.f32 %v1821, %v1652
    %s1823 = scalar_lea.vmem %s6, 28
    %1824 = vst [vmem:[%s1823] sm:$0xf] %v1822
    %1825 = vst [vmem:[%s7] sm:$0xf] %v1821
    // Predicated region
    $region30: #{hms_forward.2} parent=1 // pred_check
      _
    $region31: #{hms_forward.2} parent=1 // pred_check_branch
      %1827 = sbr.rel (0) target = $region33
    $region32: #{hms_forward.2} parent=1 // pred_region
      _
    $region33: #{hms_forward.2} parent=1 // pred_fallthru
      _
    // Predicated region
    $region34: #{hms_forward.2} parent=1 // pred_check
      _
    $region35: #{hms_forward.2} parent=1 // pred_check_branch
      %1829 = sbr.rel (0) target = $region37
    $region36: #{hms_forward.2} parent=1 // pred_region
      _
    $region37: #{hms_forward.2} parent=1 // pred_fallthru
      _
    // Predicated region
    $region38: #{hms_forward.2} parent=1 // pred_check
      _
    $region39: #{hms_forward.2} parent=1 // pred_check_branch
      %1831 = sbr.rel (0) target = $region41
    $region40: #{hms_forward.2} parent=1 // pred_region
      _
    $region41: #{hms_forward.2} parent=1 // pred_fallthru
      _
    // Predicated region
    $region42: #{hms_forward.2} parent=1 // pred_check
      _
    $region43: #{hms_forward.2} parent=1 // pred_check_branch
      %1833 = sbr.rel (0) target = $region45
    $region44: #{hms_forward.2} parent=1 // pred_region
      _
    $region45: #{hms_forward.2} parent=1 // pred_fallthru
      _
    %1834 = vsyncpa [#allocation4], 1

// kernel: hms_forward.3
$region0: #{hms_forward.3}
  #allocation0 [shape = 'u32[]', space=smem, size = 0x4, offset = 0x4, fixed_abs, tag = 'smem constant byte address 0x4 - core index']
  #allocation1 [shape = 'u32[144,128]{1,0:T(1,128)}', space=vmem, size = 0x12000, scoped, tag = 'internal scratch']
  #allocation2 [shape = 'f32[6,2,384]{2,1,0:T(2,128)}', space=vmem, size = 0x4800, scoped, tag = 'scratch operand']
  #allocation3 [shape = 'f32[6,2,128]{2,1,0:T(2,128)}', space=vmem, size = 0x1800, scoped, tag = 'scratch operand']
  %s0 = inlined_call_operand.vmem [shape: f32[6,2,32], index: 0, kind: input, shape index: {}]
  %s1 = inlined_call_operand.vmem [shape: f32[2,16,128], index: 1, kind: input, shape index: {}]
  %s2 = inlined_call_operand.vmem [shape: f32[2,16], index: 2, kind: input, shape index: {}]
  %s3 = inlined_call_operand.vmem [shape: f32[2,128], index: 3, kind: input, shape index: {}]
  %s4 = inlined_call_operand.vmem [shape: f32[128,128], index: 4, kind: input, shape index: {}]
  %s5 = inlined_call_operand.hbm [shape: f32[128,128], index: 5, kind: input, shape index: {}]
  %s6 = inlined_call_operand.vmem [shape: f32[1,128], index: 6, kind: input, shape index: {}]
  %s7 = inlined_call_operand.hbm [shape: f32[32,384], index: 7, kind: input, shape index: {}]
  %s8 = inlined_call_operand.vmem [shape: f32[128,384], index: 8, kind: input, shape index: {}]
  %s9 = inlined_call_operand.vmem [shape: f32[128,384], index: 9, kind: input, shape index: {}]
  %s10 = inlined_call_operand.vmem [shape: f32[1,384], index: 10, kind: input, shape index: {}]
  %s11 = inlined_call_operand.vmem [shape: f32[1,384], index: 11, kind: input, shape index: {}]
  %s12 = inlined_call_operand.hbm [shape: f32[128,128], index: 12, kind: input, shape index: {}]
  %s13 = inlined_call_operand.vmem [shape: f32[1,128], index: 13, kind: input, shape index: {}]
  %s14 = inlined_call_operand.hbm [shape: f32[6,2,128], index: 14, kind: output, shape index: {}]
  %s15 = sld [smem:[#allocation0]]
  $region78: #{hms_forward.3} parent=0
    _
  %s17 = ssub.s32 1, %s15
  %s18 = scalar_select 0, %s17, %s15
  $region1: #{hms_forward.3} parent=0
    #allocation4 [shape = 'u8[65536]{0}', space=vmem, size = 0x10000, scoped, tag = 'input window, operand 5, single buffered']
    #allocation5 [shape = 's32[1]{0}', space=sflag, size = 0x4, scoped, tag = 'scoped memory for hms_forward.3']
    #allocation6 [shape = 's32[1]{0}', space=sflag, size = 0x4, scoped, tag = 'scoped memory for hms_forward.3']
    #allocation7 [shape = 'u8[49152]{0}', space=vmem, size = 0xc000, scoped, tag = 'input window, operand 7, single buffered']
    #allocation8 [shape = 's32[1]{0}', space=sflag, size = 0x4, scoped, tag = 'scoped memory for hms_forward.3']
    #allocation9 [shape = 'u8[65536]{0}', space=vmem, size = 0x10000, scoped, tag = 'input window, operand 12, single buffered']
    #allocation10 [shape = 'u8[6144]{0}', space=vmem, size = 0x1800, scoped, tag = 'output window, operand 0, single buffered']
    %19 = vsyncpa [#allocation5], 0
    %20 = vsyncpa [#allocation8], 0
    %21 = vsyncpa [#allocation6], 0
    // Predicated region
    $region2: #{hms_forward.3} parent=1 // pred_check
      _
    $region3: #{hms_forward.3} parent=1 // pred_check_branch
      %23 = sbr.rel (0) target = $region5
    $region4: #{hms_forward.3} parent=1 // pred_region
      _
    $region5: #{hms_forward.3} parent=1 // pred_fallthru
      _
    // Predicated region
    $region6: #{hms_forward.3} parent=1 // pred_check
      _
    $region7: #{hms_forward.3} parent=1 // pred_check_branch
      %25 = sbr.rel (0) target = $region9
    $region8: #{hms_forward.3} parent=1 // pred_region
      _
    $region9: #{hms_forward.3} parent=1 // pred_fallthru
      _
    // Predicated region
    $region10: #{hms_forward.3} parent=1 // pred_check
      _
    $region11: #{hms_forward.3} parent=1 // pred_check_branch
      %27 = sbr.rel (0) target = $region13
    $region12: #{hms_forward.3} parent=1 // pred_region
      _
    $region13: #{hms_forward.3} parent=1 // pred_fallthru
      _
    // Predicated region
    $region14: #{hms_forward.3} parent=1 // pred_check
      _
    $region15: #{hms_forward.3} parent=1 // pred_check_branch
      %29 = sbr.rel (0) target = $region17
    $region16: #{hms_forward.3} parent=1 // pred_region
      _
    $region17: #{hms_forward.3} parent=1 // pred_fallthru
      _
    // Predicated region
    $region18: #{hms_forward.3} parent=1 // pred_check
      _
    $region19: #{hms_forward.3} parent=1 // pred_check_branch
      %31 = sbr.rel (0) target = $region21
    $region20: #{hms_forward.3} parent=1 // pred_region
      _
    $region21: #{hms_forward.3} parent=1 // pred_fallthru
      _
    // Predicated region
    $region22: #{hms_forward.3} parent=1 // pred_check
      _
    $region23: #{hms_forward.3} parent=1 // pred_check_branch
      %33 = sbr.rel (0) target = $region25
    $region24: #{hms_forward.3} parent=1 // pred_region
      %s35 = ssub.s32 2048, 2048
      %36 = vsyncadd [#allocation5], %s35
      %s37 = sshll.u32 [#allocation4], 4
      %s38 = int_to_ptr.vmem [resolvable:$true] %s37
      %43 = dma.hbm_to_vmem [thread:$0]  %s5, 2048, %s38, [#allocation5], 128, 128, 8
    $region25: #{hms_forward.3} parent=1 // pred_fallthru
      _
    // Predicated region
    $region26: #{hms_forward.3} parent=1 // pred_check
      _
    $region27: #{hms_forward.3} parent=1 // pred_check_branch
      %45 = sbr.rel (0) target = $region29
    $region28: #{hms_forward.3} parent=1 // pred_region
      _
    $region29: #{hms_forward.3} parent=1 // pred_fallthru
      _
    // Predicated region
    $region30: #{hms_forward.3} parent=1 // pred_check
      _
    $region31: #{hms_forward.3} parent=1 // pred_check_branch
      %47 = sbr.rel (0) target = $region33
    $region32: #{hms_forward.3} parent=1 // pred_region
      %s49 = ssub.s32 1536, 1536
      %50 = vsyncadd [#allocation8], %s49
      %s51 = sshll.u32 [#allocation7], 4
      %s52 = int_to_ptr.vmem [resolvable:$true] %s51
      %57 = dma.hbm_to_vmem [thread:$0]  %s7, 1536, %s52, [#allocation8], 384, 384, 24
    $region33: #{hms_forward.3} parent=1 // pred_fallthru
      _
    // Predicated region
    $region34: #{hms_forward.3} parent=1 // pred_check
      _
    $region35: #{hms_forward.3} parent=1 // pred_check_branch
      %59 = sbr.rel (0) target = $region37
    $region36: #{hms_forward.3} parent=1 // pred_region
      _
    $region37: #{hms_forward.3} parent=1 // pred_fallthru
      _
    // Predicated region
    $region38: #{hms_forward.3} parent=1 // pred_check
      _
    $region39: #{hms_forward.3} parent=1 // pred_check_branch
      %61 = sbr.rel (0) target = $region41
    $region40: #{hms_forward.3} parent=1 // pred_region
      _
    $region41: #{hms_forward.3} parent=1 // pred_fallthru
      _
    // Predicated region
    $region42: #{hms_forward.3} parent=1 // pred_check
      _
    $region43: #{hms_forward.3} parent=1 // pred_check_branch
      %63 = sbr.rel (0) target = $region45
    $region44: #{hms_forward.3} parent=1 // pred_region
      _
    $region45: #{hms_forward.3} parent=1 // pred_fallthru
      _
    // Predicated region
    $region46: #{hms_forward.3} parent=1 // pred_check
      _
    $region47: #{hms_forward.3} parent=1 // pred_check_branch
      %65 = sbr.rel (0) target = $region49
    $region48: #{hms_forward.3} parent=1 // pred_region
      _
    $region49: #{hms_forward.3} parent=1 // pred_fallthru
      _
    // Predicated region
    $region50: #{hms_forward.3} parent=1 // pred_check
      _
    $region51: #{hms_forward.3} parent=1 // pred_check_branch
      %67 = sbr.rel (0) target = $region53
    $region52: #{hms_forward.3} parent=1 // pred_region
      %s69 = ssub.s32 2048, 2048
      %70 = vsyncadd [#allocation8], %s69
      %s71 = sshll.u32 [#allocation9], 4
      %s72 = int_to_ptr.vmem [resolvable:$true] %s71
      %77 = dma.hbm_to_vmem [thread:$0]  %s12, 2048, %s72, [#allocation8], 128, 128, 8
    $region53: #{hms_forward.3} parent=1 // pred_fallthru
      _
    // Predicated region
    $region54: #{hms_forward.3} parent=1 // pred_check
      _
    $region55: #{hms_forward.3} parent=1 // pred_check_branch
      %79 = sbr.rel (0) target = $region57
    $region56: #{hms_forward.3} parent=1 // pred_region
      _
    $region57: #{hms_forward.3} parent=1 // pred_fallthru
      _
    // Predicated region
    $region58: #{hms_forward.3} parent=1 // pred_check
      _
    $region59: #{hms_forward.3} parent=1 // pred_check_branch
      %81 = sbr.rel (0) target = $region61
    $region60: #{hms_forward.3} parent=1 // pred_region
      %82 = dma.done [#allocation5], 2048
    $region61: #{hms_forward.3} parent=1 // pred_fallthru
      _
    // Predicated region
    $region62: #{hms_forward.3} parent=1 // pred_check
      _
    $region63: #{hms_forward.3} parent=1 // pred_check_branch
      %84 = sbr.rel (0) target = $region65
    $region64: #{hms_forward.3} parent=1 // pred_region
      %85 = dma.done [#allocation8], 1536
    $region65: #{hms_forward.3} parent=1 // pred_fallthru
      _
    // Predicated region
    $region66: #{hms_forward.3} parent=1 // pred_check
      _
    $region67: #{hms_forward.3} parent=1 // pred_check_branch
      %87 = sbr.rel (0) target = $region69
    $region68: #{hms_forward.3} parent=1 // pred_region
      %88 = dma.done [#allocation8], 2048
    $region69: #{hms_forward.3} parent=1 // pred_fallthru
      _
    %v90 = vld [vmem:[%s1] sm:$0xff]
    %v91 = vld [vmem:[%s1 + $0x8] sm:$0xff]
    %v92 = vld [vmem:[%s1 + $0x10] sm:$0xff]
    %v93 = vld [vmem:[%s1 + $0x18] sm:$0xff]
    %v94 = vpack.c.bf16 %v91, %v90
    %v95 = vpack.c.bf16 %v93, %v92
    %v96 = vld [vmem:[#allocation4] sm:$0xff]
    %v97 = vld [vmem:[#allocation4 + $0x8] sm:$0xff]
    %v98 = vld [vmem:[#allocation4 + $0x10] sm:$0xff]
    %v99 = vld [vmem:[#allocation4 + $0x18] sm:$0xff]
    %v100 = vld [vmem:[#allocation4 + $0x20] sm:$0xff]
    %v101 = vld [vmem:[#allocation4 + $0x28] sm:$0xff]
    %v102 = vld [vmem:[#allocation4 + $0x30] sm:$0xff]
    %v103 = vld [vmem:[#allocation4 + $0x38] sm:$0xff]
    %v104 = vld [vmem:[#allocation4 + $0x40] sm:$0xff]
    %v105 = vld [vmem:[#allocation4 + $0x48] sm:$0xff]
    %v106 = vld [vmem:[#allocation4 + $0x50] sm:$0xff]
    %v107 = vld [vmem:[#allocation4 + $0x58] sm:$0xff]
    %v108 = vld [vmem:[#allocation4 + $0x60] sm:$0xff]
    %v109 = vld [vmem:[#allocation4 + $0x68] sm:$0xff]
    %v110 = vld [vmem:[#allocation4 + $0x70] sm:$0xff]
    %v111 = vld [vmem:[#allocation4 + $0x78] sm:$0xff]
    %v112 = vpack.c.bf16 %v97, %v96
    %v113 = vpack.c.bf16 %v99, %v98
    %v114 = vpack.c.bf16 %v101, %v100
    %v115 = vpack.c.bf16 %v103, %v102
    %v116 = vpack.c.bf16 %v105, %v104
    %v117 = vpack.c.bf16 %v107, %v106
    %v118 = vpack.c.bf16 %v109, %v108
    %v119 = vpack.c.bf16 %v111, %v110
    %120 = vmatprep.subr.bf16.mxu0 0
    %121 = vmatpush1.bf16.msra.mxu0 %v112
    %122 = vmatprep.subr.bf16.mxu0 0
    %123 = vmatpush1.bf16.msra.mxu0 %v113
    %124 = vmatprep.subr.bf16.mxu0 0
    %125 = vmatpush1.bf16.msra.mxu0 %v114
    %126 = vmatprep.subr.bf16.mxu0 0
    %127 = vmatpush1.bf16.msra.mxu0 %v115
    %128 = vmatprep.subr.bf16.mxu0 0
    %129 = vmatpush1.bf16.msra.mxu0 %v116
    %130 = vmatprep.subr.bf16.mxu0 0
    %131 = vmatpush1.bf16.msra.mxu0 %v117
    %132 = vmatprep.subr.bf16.mxu0 0
    %133 = vmatpush1.bf16.msra.mxu0 %v118
    %134 = vmatprep.subr.bf16.mxu0 0
    %135 = vmatpush1.bf16.msra.mxu0 %v119
    %136 = vmatprep.subr.bf16.mxu0 0
    %137 = vmatpush1.bf16.msra.mxu0 0
    %138 = vmatprep.subr.bf16.mxu0 0
    %139 = vmatpush1.bf16.msra.mxu0 0
    %140 = vmatprep.subr.bf16.mxu0 0
    %141 = vmatpush1.bf16.msra.mxu0 0
    %142 = vmatprep.subr.bf16.mxu0 0
    %143 = vmatpush1.bf16.msra.mxu0 0
    %144 = vmatprep.subr.bf16.mxu0 0
    %145 = vmatpush1.bf16.msra.mxu0 0
    %146 = vmatprep.subr.bf16.mxu0 0
    %147 = vmatpush1.bf16.msra.mxu0 0
    %148 = vmatprep.subr.bf16.mxu0 0
    %149 = vmatpush1.bf16.msra.mxu0 0
    %150 = vmatprep.subr.bf16.mxu0 0
    %151 = vmatpush1.bf16.msra.mxu0 0
    %152 = vmatprep.mubr.bf16.mxu0 0
    %153 = vmatmul.mubr.bf16.gmra.mrb[0].mxu0 %v94
    %v154 = vpop.f32.mrb[0].mxu0
    %v155 = vadd.f32 0.0, %v154
    %v156 = vpop.f32.mrb[0].mxu0
    %v157 = vpop.f32.mrb[0].mxu0
    %v158 = vadd.f32 0.0, %v157
    %v159 = vpop.f32.mrb[0].mxu0
    %160 = vmatprep.mubr.bf16.mxu0 0
    %161 = vmatmul.mubr.bf16.gmra.mrb[0].mxu0 %v95
    %v162 = vpop.f32.mrb[0].mxu0
    %v163 = vadd.f32 0.0, %v162
    %v164 = vpop.f32.mrb[0].mxu0
    %v165 = vpop.f32.mrb[0].mxu0
    %v166 = vadd.f32 0.0, %v165
    %v167 = vpop.f32.mrb[0].mxu0
    %168 = vdwg.mxu0
    %v169 = vld [vmem:[%s2] sm:$0x3]
    %v170 = vsub.f32 1.0, %v169
    %v171 = vmul.f32 %v170, -1e+09
    %v172 = vld [vmem:[%s6] sm:$0x1]
    %v173 = vld [vmem:[%s0] sm:$0x3]
    %v174 = vld [vmem:[%s0 + $0x2] sm:$0x3]
    %v175 = vld [vmem:[%s0 + $0x4] sm:$0x3]
    %v176 = vld [vmem:[%s0 + $0x6] sm:$0x3]
    %v177 = vld [vmem:[%s0 + $0x8] sm:$0x3]
    %v178 = vld [vmem:[%s0 + $0xa] sm:$0x3]
    %v179 = vpack.c.bf16 %v173, %v173
    %v180 = vpack.c.bf16 %v174, %v174
    %v181 = vpack.c.bf16 %v175, %v175
    %v182 = vpack.c.bf16 %v176, %v176
    %v183 = vpack.c.bf16 %v177, %v177
    %v184 = vpack.c.bf16 %v178, %v178
    %v185 = vld [vmem:[#allocation7] sm:$0xff]
    %v186 = vld [vmem:[#allocation7 + $0x8] sm:$0xff]
    %v187 = vld [vmem:[#allocation7 + $0x10] sm:$0xff]
    %v188 = vld [vmem:[#allocation7 + $0x18] sm:$0xff]
    %v189 = vld [vmem:[#allocation7 + $0x20] sm:$0xff]
    %v190 = vld [vmem:[#allocation7 + $0x28] sm:$0xff]
    %v191 = vld [vmem:[#allocation7 + $0x30] sm:$0xff]
    %v192 = vld [vmem:[#allocation7 + $0x38] sm:$0xff]
    %v193 = vld [vmem:[#allocation7 + $0x40] sm:$0xff]
    %v194 = vld [vmem:[#allocation7 + $0x48] sm:$0xff]
    %v195 = vld [vmem:[#allocation7 + $0x50] sm:$0xff]
    %v196 = vld [vmem:[#allocation7 + $0x58] sm:$0xff]
    %v197 = vpack.c.bf16 %v188, %v185
    %v198 = vpack.c.bf16 %v189, %v186
    %v199 = vpack.c.bf16 %v190, %v187
    %v200 = vpack.c.bf16 %v194, %v191
    %v201 = vpack.c.bf16 %v195, %v192
    %v202 = vpack.c.bf16 %v196, %v193
    %v203 = vld [vmem:[%s10] sm:$0x7]
    %v205 = vlaneseq
    %v206 = vshrl.u32 %v205, 7
    %v207 = vsub.s32 0, %v206
    %v208 = vrot.slane %v203, %v207
    %v209 = vlaneseq
    %v210 = vshrl.u32 %v209, 7
    %v211 = vsub.s32 1, %v210
    %v212 = vrot.slane %v203, %v211
    %v213 = vlaneseq
    %v214 = vshrl.u32 %v213, 7
    %v215 = vsub.s32 2, %v214
    %v216 = vrot.slane %v203, %v215
    %v217 = vcombine.low %v208, %v212
    %v219 = vunpack.c.l.s4 1983009808
    %v220 = vunpack.c.0.s8 %v219
    %v221 = vlaneseq
    %v222 = vshrl.u32 %v221, 7
    %v223 = vsub.s32 %v220, %v222
    %v224 = vrot.slane %v217, %v223
    %v226 = vunpack.c.l.s4 1983009808
    %v227 = vunpack.c.0.s8 %v226
    %v228 = vlaneseq
    %v229 = vshrl.u32 %v228, 7
    %v230 = vsub.s32 %v227, %v229
    %v231 = vrot.slane %v216, %v230
    %v232 = vcombine.low %v224, %v231
    %v239 = vcombine.low %v179, %v180
    %v240 = vcombine.low %v181, %v182
    %v241 = vcombine.low %v183, %v184
    %v243 = vunpack.c.l.s4 1966171168
    %v244 = vunpack.c.0.s8 %v243
    %v245 = vlaneseq
    %v246 = vshrl.u32 %v245, 7
    %v247 = vsub.s32 %v244, %v246
    %v248 = vrot.slane %v239, %v247
    %v250 = vunpack.c.l.s4 1966171168
    %v251 = vunpack.c.0.s8 %v250
    %v252 = vlaneseq
    %v253 = vshrl.u32 %v252, 7
    %v254 = vsub.s32 %v251, %v253
    %v255 = vrot.slane %v240, %v254
    %v257 = vunpack.c.l.s4 1966171168
    %v258 = vunpack.c.0.s8 %v257
    %v259 = vlaneseq
    %v260 = vshrl.u32 %v259, 7
    %v261 = vsub.s32 %v258, %v260
    %v262 = vrot.slane %v241, %v261
    %v263 = vcombine.low %v248, %v255
    %v265 = vunpack.c.l.s4 1966171168
    %v266 = vunpack.c.0.s8 %v265
    %v267 = vlaneseq
    %v268 = vshrl.u32 %v267, 7
    %v269 = vsub.s32 %v266, %v268
    %v270 = vrot.slane %v263, %v269
    %v272 = vunpack.c.l.s4 1966171168
    %v273 = vunpack.c.0.s8 %v272
    %v274 = vlaneseq
    %v275 = vshrl.u32 %v274, 7
    %v276 = vsub.s32 %v273, %v275
    %v277 = vrot.slane %v262, %v276
    %v278 = vcombine.low %v270, %v277
    %v279 = vcombine.low %v232, %v232
    %v280 = vcombine.high %v232, %v232
    %v282 = vunpack.c.l.s4 1983009808
    %v283 = vunpack.c.0.s8 %v282
    %v284 = vlaneseq
    %v285 = vshrl.u32 %v284, 7
    %v286 = vsub.s32 %v283, %v285
    %v287 = vrot.slane %v279, %v286
    %v289 = vunpack.c.l.s4 1983009808
    %v290 = vunpack.c.0.s8 %v289
    %v291 = vlaneseq
    %v292 = vshrl.u32 %v291, 7
    %v293 = vsub.s32 %v290, %v292
    %v294 = vrot.slane %v280, %v293
    %v295 = vcombine.low %v287, %v287
    %v296 = vcombine.high %v287, %v287
    %v297 = vcombine.low %v294, %v294
    %vm303 = vcmask 261120
    %v305 = vsel %vm303, %v278, 0
    %307 = vmatprep.subr.bf16.mxu0 %v198
    %308 = vmatpush1.bf16.msra.mxu0 %v197
    %309 = vmatprep.subr.bf16.mxu0 %v201
    %310 = vmatpush1.bf16.msra.mxu0 %v200
    %311 = vmatprep.subr.bf16.mxu0 0
    %312 = vmatpush1.bf16.msra.mxu0 0
    %313 = vmatprep.subr.bf16.mxu0 0
    %314 = vmatpush1.bf16.msra.mxu0 0
    %315 = vmatprep.subr.bf16.mxu0 0
    %316 = vmatpush1.bf16.msra.mxu0 0
    %317 = vmatprep.subr.bf16.mxu0 0
    %318 = vmatpush1.bf16.msra.mxu0 0
    %319 = vmatprep.subr.bf16.mxu0 0
    %320 = vmatpush1.bf16.msra.mxu0 0
    %321 = vmatprep.subr.bf16.mxu0 0
    %322 = vmatpush1.bf16.msra.mxu0 0
    %323 = vmatprep.subr.bf16.mxu0 0
    %324 = vmatpush1.bf16.msra.mxu0 0
    %325 = vmatprep.subr.bf16.mxu0 0
    %326 = vmatpush1.bf16.msra.mxu0 0
    %327 = vmatprep.subr.bf16.mxu0 0
    %328 = vmatpush1.bf16.msra.mxu0 0
    %329 = vmatprep.subr.bf16.mxu0 0
    %330 = vmatpush1.bf16.msra.mxu0 0
    %331 = vmatprep.subr.bf16.mxu0 0
    %332 = vmatpush1.bf16.msra.mxu0 0
    %333 = vmatprep.subr.bf16.mxu0 0
    %334 = vmatpush1.bf16.msra.mxu0 0
    %335 = vmatprep.subr.bf16.mxu0 0
    %336 = vmatpush1.bf16.msra.mxu0 0
    %337 = vmatprep.subr.bf16.mxu0 0
    %338 = vmatpush1.bf16.msra.mxu0 0
    %339 = vmatprep.mubr.bf16.mxu0 0
    %340 = vmatmul.mubr.bf16.gmra.mrb[0].mxu0 %v305
    %v341 = vpop.f32.mrb[0].mxu0
    %v342 = vadd.f32 %v295, %v341
    %v343 = vpop.f32.mrb[0].mxu0
    %v344 = vadd.f32 %v296, %v343
    %v345 = vpop.f32.mrb[0].mxu0
    %v346 = vadd.f32 %v287, %v345
    %v347 = vpop.f32.mrb[0].mxu0
    %v348 = vadd.f32 %v296, %v347
    %349 = vdwg.mxu0
    %350 = vmatprep.subr.bf16.mxu0 0
    %351 = vmatpush1.bf16.msra.mxu0 %v199
    %352 = vmatprep.subr.bf16.mxu0 0
    %353 = vmatpush1.bf16.msra.mxu0 %v202
    %354 = vmatprep.subr.bf16.mxu0 0
    %355 = vmatpush1.bf16.msra.mxu0 0
    %356 = vmatprep.subr.bf16.mxu0 0
    %357 = vmatpush1.bf16.msra.mxu0 0
    %358 = vmatprep.subr.bf16.mxu0 0
    %359 = vmatpush1.bf16.msra.mxu0 0
    %360 = vmatprep.subr.bf16.mxu0 0
    %361 = vmatpush1.bf16.msra.mxu0 0
    %362 = vmatprep.subr.bf16.mxu0 0
    %363 = vmatpush1.bf16.msra.mxu0 0
    %364 = vmatprep.subr.bf16.mxu0 0
    %365 = vmatpush1.bf16.msra.mxu0 0
    %366 = vmatprep.subr.bf16.mxu0 0
    %367 = vmatpush1.bf16.msra.mxu0 0
    %368 = vmatprep.subr.bf16.mxu0 0
    %369 = vmatpush1.bf16.msra.mxu0 0
    %370 = vmatprep.subr.bf16.mxu0 0
    %371 = vmatpush1.bf16.msra.mxu0 0
    %372 = vmatprep.subr.bf16.mxu0 0
    %373 = vmatpush1.bf16.msra.mxu0 0
    %374 = vmatprep.subr.bf16.mxu0 0
    %375 = vmatpush1.bf16.msra.mxu0 0
    %376 = vmatprep.subr.bf16.mxu0 0
    %377 = vmatpush1.bf16.msra.mxu0 0
    %378 = vmatprep.subr.bf16.mxu0 0
    %379 = vmatpush1.bf16.msra.mxu0 0
    %380 = vmatprep.subr.bf16.mxu0 0
    %381 = vmatpush1.bf16.msra.mxu0 0
    %382 = vmatprep.mubr.bf16.mxu0 0
    %383 = vmatmul.mubr.bf16.gmra.mrb[0].mxu0 %v305
    %v384 = vpop.f32.mrb[0].mxu0
    %v385 = vadd.f32 %v297, %v384
    %v386 = vpop.f32.mrb[0].mxu0
    %v387 = vpop.f32.mrb[0].mxu0
    %v388 = vadd.f32 %v294, %v387
    %v389 = vpop.f32.mrb[0].mxu0
    %390 = vdwg.mxu0
    %v397 = vcombine.low %v342, %v344
    %v398 = vcombine.high %v342, %v344
    %v399 = vcombine.high %v385, %v385
    %v401 = vunpack.c.l.s4 1983009808
    %v402 = vunpack.c.0.s8 %v401
    %v403 = vlaneseq
    %v404 = vshrl.u32 %v403, 7
    %v405 = vsub.s32 %v402, %v404
    %v406 = vrot.slane %v397, %v405
    %v408 = vunpack.c.l.s4 1983009808
    %v409 = vunpack.c.0.s8 %v408
    %v410 = vlaneseq
    %v411 = vshrl.u32 %v410, 7
    %v412 = vsub.s32 %v409, %v411
    %v413 = vrot.slane %v398, %v412
    %v415 = vunpack.c.l.s4 1983009808
    %v416 = vunpack.c.0.s8 %v415
    %v417 = vlaneseq
    %v418 = vshrl.u32 %v417, 7
    %v419 = vsub.s32 %v416, %v418
    %v420 = vrot.slane %v385, %v419
    %v422 = vunpack.c.l.s4 1983009808
    %v423 = vunpack.c.0.s8 %v422
    %v424 = vlaneseq
    %v425 = vshrl.u32 %v424, 7
    %v426 = vsub.s32 %v423, %v425
    %v427 = vrot.slane %v399, %v426
    %v428 = vcombine.low %v406, %v420
    %v429 = vcombine.high %v406, %v420
    %v430 = vcombine.low %v413, %v427
    %v431 = vcombine.high %v413, %v427
    %v432 = vcombine.low %v346, %v348
    %v434 = vunpack.c.l.s4 1983009808
    %v435 = vunpack.c.0.s8 %v434
    %v436 = vlaneseq
    %v437 = vshrl.u32 %v436, 7
    %v438 = vsub.s32 %v435, %v437
    %v439 = vrot.slane %v432, %v438
    %v441 = vunpack.c.l.s4 1983009808
    %v442 = vunpack.c.0.s8 %v441
    %v443 = vlaneseq
    %v444 = vshrl.u32 %v443, 7
    %v445 = vsub.s32 %v442, %v444
    %v446 = vrot.slane %v388, %v445
    %v447 = vcombine.low %v439, %v446
    %v448 = vcombine.high %v439, %v446
    %455 = vst [vmem:[#allocation2] sm:$0x3f] %v428
    %456 = vst [vmem:[#allocation2 + $0x6] sm:$0x3f] %v429
    %457 = vst [vmem:[#allocation2 + $0xc] sm:$0x3f] %v430
    %458 = vst [vmem:[#allocation2 + $0x12] sm:$0x3f] %v431
    %459 = vst [vmem:[#allocation2 + $0x18] sm:$0x3f] %v447
    %460 = vst [vmem:[#allocation2 + $0x1e] sm:$0x3f] %v448
    %v461 = vld [vmem:[%s4] sm:$0xff]
    %v462 = vld [vmem:[%s4 + $0x8] sm:$0xff]
    %v463 = vld [vmem:[%s4 + $0x10] sm:$0xff]
    %v464 = vld [vmem:[%s4 + $0x18] sm:$0xff]
    %v465 = vld [vmem:[%s4 + $0x20] sm:$0xff]
    %v466 = vld [vmem:[%s4 + $0x28] sm:$0xff]
    %v467 = vld [vmem:[%s4 + $0x30] sm:$0xff]
    %v468 = vld [vmem:[%s4 + $0x38] sm:$0xff]
    %v469 = vld [vmem:[%s4 + $0x40] sm:$0xff]
    %v470 = vld [vmem:[%s4 + $0x48] sm:$0xff]
    %v471 = vld [vmem:[%s4 + $0x50] sm:$0xff]
    %v472 = vld [vmem:[%s4 + $0x58] sm:$0xff]
    %v473 = vld [vmem:[%s4 + $0x60] sm:$0xff]
    %v474 = vld [vmem:[%s4 + $0x68] sm:$0xff]
    %v475 = vld [vmem:[%s4 + $0x70] sm:$0xff]
    %v476 = vld [vmem:[%s4 + $0x78] sm:$0xff]
    %v477 = vld [vmem:[%s8] sm:$0xff]
    %v478 = vld [vmem:[%s8 + $0x8] sm:$0xff]
    %v479 = vld [vmem:[%s8 + $0x10] sm:$0xff]
    %v480 = vld [vmem:[%s8 + $0x18] sm:$0xff]
    %v481 = vld [vmem:[%s8 + $0x20] sm:$0xff]
    %v482 = vld [vmem:[%s8 + $0x28] sm:$0xff]
    %v483 = vld [vmem:[%s8 + $0x30] sm:$0xff]
    %v484 = vld [vmem:[%s8 + $0x38] sm:$0xff]
    %v485 = vld [vmem:[%s8 + $0x40] sm:$0xff]
    %v486 = vld [vmem:[%s8 + $0x48] sm:$0xff]
    %v487 = vld [vmem:[%s8 + $0x50] sm:$0xff]
    %v488 = vld [vmem:[%s8 + $0x58] sm:$0xff]
    %v489 = vld [vmem:[%s8 + $0x60] sm:$0xff]
    %v490 = vld [vmem:[%s8 + $0x68] sm:$0xff]
    %v491 = vld [vmem:[%s8 + $0x70] sm:$0xff]
    %v492 = vld [vmem:[%s8 + $0x78] sm:$0xff]
    %v493 = vld [vmem:[%s8 + $0x80] sm:$0xff]
    %v494 = vld [vmem:[%s8 + $0x88] sm:$0xff]
    %v495 = vld [vmem:[%s8 + $0x90] sm:$0xff]
    %v496 = vld [vmem:[%s8 + $0x98] sm:$0xff]
    %v497 = vld [vmem:[%s8 + $0xa0] sm:$0xff]
    %v498 = vld [vmem:[%s8 + $0xa8] sm:$0xff]
    %v499 = vld [vmem:[%s8 + $0xb0] sm:$0xff]
    %v500 = vld [vmem:[%s8 + $0xb8] sm:$0xff]
    %v501 = vld [vmem:[%s8 + $0xc0] sm:$0xff]
    %v502 = vld [vmem:[%s8 + $0xc8] sm:$0xff]
    %v503 = vld [vmem:[%s8 + $0xd0] sm:$0xff]
    %v504 = vld [vmem:[%s8 + $0xd8] sm:$0xff]
    %v505 = vld [vmem:[%s8 + $0xe0] sm:$0xff]
    %v506 = vld [vmem:[%s8 + $0xe8] sm:$0xff]
    %v507 = vld [vmem:[%s8 + $0xf0] sm:$0xff]
    %v508 = vld [vmem:[%s8 + $0xf8] sm:$0xff]
    %v509 = vld [vmem:[%s8 + $0x100] sm:$0xff]
    %v510 = vld [vmem:[%s8 + $0x108] sm:$0xff]
    %v511 = vld [vmem:[%s8 + $0x110] sm:$0xff]
    %v512 = vld [vmem:[%s8 + $0x118] sm:$0xff]
    %v513 = vld [vmem:[%s8 + $0x120] sm:$0xff]
    %v514 = vld [vmem:[%s8 + $0x128] sm:$0xff]
    %v515 = vld [vmem:[%s8 + $0x130] sm:$0xff]
    %v516 = vld [vmem:[%s8 + $0x138] sm:$0xff]
    %v517 = vld [vmem:[%s8 + $0x140] sm:$0xff]
    %v518 = vld [vmem:[%s8 + $0x148] sm:$0xff]
    %v519 = vld [vmem:[%s8 + $0x150] sm:$0xff]
    %v520 = vld [vmem:[%s8 + $0x158] sm:$0xff]
    %v521 = vld [vmem:[%s8 + $0x160] sm:$0xff]
    %v522 = vld [vmem:[%s8 + $0x168] sm:$0xff]
    %v523 = vld [vmem:[%s8 + $0x170] sm:$0xff]
    %v524 = vld [vmem:[%s8 + $0x178] sm:$0xff]
    %v525 = vld [vmem:[%s9] sm:$0xff]
    %v526 = vld [vmem:[%s9 + $0x8] sm:$0xff]
    %v527 = vld [vmem:[%s9 + $0x10] sm:$0xff]
    %v528 = vld [vmem:[%s9 + $0x18] sm:$0xff]
    %v529 = vld [vmem:[%s9 + $0x20] sm:$0xff]
    %v530 = vld [vmem:[%s9 + $0x28] sm:$0xff]
    %v531 = vld [vmem:[%s9 + $0x30] sm:$0xff]
    %v532 = vld [vmem:[%s9 + $0x38] sm:$0xff]
    %v533 = vld [vmem:[%s9 + $0x40] sm:$0xff]
    %v534 = vld [vmem:[%s9 + $0x48] sm:$0xff]
    %v535 = vld [vmem:[%s9 + $0x50] sm:$0xff]
    %v536 = vld [vmem:[%s9 + $0x58] sm:$0xff]
    %v537 = vld [vmem:[%s9 + $0x60] sm:$0xff]
    %v538 = vld [vmem:[%s9 + $0x68] sm:$0xff]
    %v539 = vld [vmem:[%s9 + $0x70] sm:$0xff]
    %v540 = vld [vmem:[%s9 + $0x78] sm:$0xff]
    %v541 = vld [vmem:[%s9 + $0x80] sm:$0xff]
    %v542 = vld [vmem:[%s9 + $0x88] sm:$0xff]
    %v543 = vld [vmem:[%s9 + $0x90] sm:$0xff]
    %v544 = vld [vmem:[%s9 + $0x98] sm:$0xff]
    %v545 = vld [vmem:[%s9 + $0xa0] sm:$0xff]
    %v546 = vld [vmem:[%s9 + $0xa8] sm:$0xff]
    %v547 = vld [vmem:[%s9 + $0xb0] sm:$0xff]
    %v548 = vld [vmem:[%s9 + $0xb8] sm:$0xff]
    %v549 = vld [vmem:[%s9 + $0xc0] sm:$0xff]
    %v550 = vld [vmem:[%s9 + $0xc8] sm:$0xff]
    %v551 = vld [vmem:[%s9 + $0xd0] sm:$0xff]
    %v552 = vld [vmem:[%s9 + $0xd8] sm:$0xff]
    %v553 = vld [vmem:[%s9 + $0xe0] sm:$0xff]
    %v554 = vld [vmem:[%s9 + $0xe8] sm:$0xff]
    %v555 = vld [vmem:[%s9 + $0xf0] sm:$0xff]
    %v556 = vld [vmem:[%s9 + $0xf8] sm:$0xff]
    %v557 = vld [vmem:[%s9 + $0x100] sm:$0xff]
    %v558 = vld [vmem:[%s9 + $0x108] sm:$0xff]
    %v559 = vld [vmem:[%s9 + $0x110] sm:$0xff]
    %v560 = vld [vmem:[%s9 + $0x118] sm:$0xff]
    %v561 = vld [vmem:[%s9 + $0x120] sm:$0xff]
    %v562 = vld [vmem:[%s9 + $0x128] sm:$0xff]
    %v563 = vld [vmem:[%s9 + $0x130] sm:$0xff]
    %v564 = vld [vmem:[%s9 + $0x138] sm:$0xff]
    %v565 = vld [vmem:[%s9 + $0x140] sm:$0xff]
    %v566 = vld [vmem:[%s9 + $0x148] sm:$0xff]
    %v567 = vld [vmem:[%s9 + $0x150] sm:$0xff]
    %v568 = vld [vmem:[%s9 + $0x158] sm:$0xff]
    %v569 = vld [vmem:[%s9 + $0x160] sm:$0xff]
    %v570 = vld [vmem:[%s9 + $0x168] sm:$0xff]
    %v571 = vld [vmem:[%s9 + $0x170] sm:$0xff]
    %v572 = vld [vmem:[%s9 + $0x178] sm:$0xff]
    %v573 = vld [vmem:[%s11] sm:$0x7]
    %v574 = vld [vmem:[%s3] sm:$0x3]
    %575 = vmatprep.subr.mxu0 0.0
    %576 = vmatpush1.msra.mxu0 %v461
    %577 = vmatprep.subr.mxu0 0.0
    %578 = vmatpush1.msra.mxu0 %v462
    %579 = vmatprep.subr.mxu0 0.0
    %580 = vmatpush1.msra.mxu0 %v463
    %581 = vmatprep.subr.mxu0 0.0
    %582 = vmatpush1.msra.mxu0 %v464
    %583 = vmatprep.subr.mxu0 0.0
    %584 = vmatpush1.msra.mxu0 %v465
    %585 = vmatprep.subr.mxu0 0.0
    %586 = vmatpush1.msra.mxu0 %v466
    %587 = vmatprep.subr.mxu0 0.0
    %588 = vmatpush1.msra.mxu0 %v467
    %589 = vmatprep.subr.mxu0 0.0
    %590 = vmatpush1.msra.mxu0 %v468
    %591 = vmatprep.subr.mxu0 0.0
    %592 = vmatpush1.msra.mxu0 %v469
    %593 = vmatprep.subr.mxu0 0.0
    %594 = vmatpush1.msra.mxu0 %v470
    %595 = vmatprep.subr.mxu0 0.0
    %596 = vmatpush1.msra.mxu0 %v471
    %597 = vmatprep.subr.mxu0 0.0
    %598 = vmatpush1.msra.mxu0 %v472
    %599 = vmatprep.subr.mxu0 0.0
    %600 = vmatpush1.msra.mxu0 %v473
    %601 = vmatprep.subr.mxu0 0.0
    %602 = vmatpush1.msra.mxu0 %v474
    %603 = vmatprep.subr.mxu0 0.0
    %604 = vmatpush1.msra.mxu0 %v475
    %605 = vmatprep.subr.mxu0 0.0
    %606 = vmatpush1.msra.mxu0 %v476
    %607 = vmatprep.subr.mxu0 0.0
    %608 = vmatpush1.msra.mxu0 0.0
    %609 = vmatprep.subr.mxu0 0.0
    %610 = vmatpush1.msra.mxu0 0.0
    %611 = vmatprep.subr.mxu0 0.0
    %612 = vmatpush1.msra.mxu0 0.0
    %613 = vmatprep.subr.mxu0 0.0
    %614 = vmatpush1.msra.mxu0 0.0
    %615 = vmatprep.subr.mxu0 0.0
    %616 = vmatpush1.msra.mxu0 0.0
    %617 = vmatprep.subr.mxu0 0.0
    %618 = vmatpush1.msra.mxu0 0.0
    %619 = vmatprep.subr.mxu0 0.0
    %620 = vmatpush1.msra.mxu0 0.0
    %621 = vmatprep.subr.mxu0 0.0
    %622 = vmatpush1.msra.mxu0 0.0
    %623 = vmatprep.subr.mxu0 0.0
    %624 = vmatpush1.msra.mxu0 0.0
    %625 = vmatprep.subr.mxu0 0.0
    %626 = vmatpush1.msra.mxu0 0.0
    %627 = vmatprep.subr.mxu0 0.0
    %628 = vmatpush1.msra.mxu0 0.0
    %629 = vmatprep.subr.mxu0 0.0
    %630 = vmatpush1.msra.mxu0 0.0
    %631 = vmatprep.subr.mxu0 0.0
    %632 = vmatpush1.msra.mxu0 0.0
    %633 = vmatprep.subr.mxu0 0.0
    %634 = vmatpush1.msra.mxu0 0.0
    %635 = vmatprep.subr.mxu0 0.0
    %636 = vmatpush1.msra.mxu0 0.0
    %637 = vmatprep.subr.mxu0 0.0
    %638 = vmatpush1.msra.mxu0 0.0
    %639 = vmatprep.mubr.f32.mxu0 0.0
    %640 = vmatmul.mubr.f32.gmra.mrb[0].mxu0 %v574
    %v641 = vpop.f32.mrb[0].mxu0
    %v642 = vadd.f32 0.0, %v641
    %v643 = vpop.f32.mrb[0].mxu0
    %644 = vdwg.mxu0
    %v647 = vunpack.c.l.s4 1966171168
    %v648 = vunpack.c.0.s8 %v647
    %v649 = vlaneseq
    %v650 = vshrl.u32 %v649, 7
    %v651 = vsub.s32 %v648, %v650
    %v652 = vrot.slane %v642, %v651
    %v653 = vcombine.high %v652, %v652
    %v655 = vunpack.c.l.s4 1966171168
    %v656 = vunpack.c.0.s8 %v655
    %v657 = vlaneseq
    %v658 = vshrl.u32 %v657, 7
    %v659 = vsub.s32 %v656, %v658
    %v660 = vrot.slane %v652, %v659
    %v662 = vunpack.c.l.s4 1966171168
    %v663 = vunpack.c.0.s8 %v662
    %v664 = vlaneseq
    %v665 = vshrl.u32 %v664, 7
    %v666 = vsub.s32 %v663, %v665
    %v667 = vrot.slane %v653, %v666
    %v668 = vlaneseq
    %v669 = vshrl.u32 %v668, 7
    %v670 = vsub.s32 0, %v669
    %v671 = vrot.slane %v660, %v670
    %v672 = vlaneseq
    %v673 = vshrl.u32 %v672, 7
    %v674 = vsub.s32 0, %v673
    %v675 = vrot.slane %v667, %v674
    %v678 = vadd.f32 %v671, %v155
    %v679 = vadd.f32 %v671, %v158
    %v680 = vadd.f32 %v675, %v163
    %v681 = vadd.f32 %v675, %v166
    %v682 = vtanh.pop %v678
    %v683 = vtanh.pop %v679
    %v684 = vtanh.pop %v680
    %v685 = vtanh.pop %v681
    %v687 = vlaneseq
    %v688 = vshrl.u32 %v687, 7
    %v689 = vsub.s32 0, %v688
    %v690 = vrot.slane %v172, %v689
    %v692 = vmul.f32 %v682, %v690
    %v693 = vmul.f32 %v683, %v690
    %v694 = vmul.f32 %v684, %v690
    %v695 = vmul.f32 %v685, %v690
    %696 = vadd.xlane.f32.xlu0 %v692
    %v697 = vpop.xlane.xlu0 %696
    %698 = vadd.xlane.f32.xlu0 %v693
    %v699 = vpop.xlane.xlu0 %698
    %700 = vadd.xlane.f32.xlu0 %v694
    %v701 = vpop.xlane.xlu0 %700
    %702 = vadd.xlane.f32.xlu0 %v695
    %v703 = vpop.xlane.xlu0 %702
    %v705 = vlaneseq
    %v706 = vshrl.u32 %v705, 7
    %v707 = vsub.s32 0, %v706
    %v708 = vrot.slane %v171, %v707
    %710 = vbcast.lane.b32.xlu0 %v708, 256
    %v711 = vpop.permute.xlu0 %710
    %s713 = sor.u32 256, 8
    %714 = vbcast.lane.b32.xlu0 %v708, %s713
    %v715 = vpop.permute.xlu0 %714
    %v716 = vlaneseq
    %v717 = vshrl.u32 %v716, 7
    %v718 = vsub.s32 1, %v717
    %v719 = vrot.slane %v171, %v718
    %721 = vbcast.lane.b32.xlu0 %v719, 256
    %v722 = vpop.permute.xlu0 %721
    %s724 = sor.u32 256, 8
    %725 = vbcast.lane.b32.xlu0 %v719, %s724
    %v726 = vpop.permute.xlu0 %725
    %v731 = vadd.f32 %v697, %v711
    %v732 = vadd.f32 %v699, %v715
    %v733 = vadd.f32 %v701, %v722
    %v734 = vadd.f32 %v703, %v726
    %739 = vset.pattern.permute.xlu0 0
    %740 = vperm.xlu0 %739, %v731
    %v741 = vpop.permute.xlu0 %740
    %742 = vset.pattern.permute.xlu0 0
    %743 = vperm.xlu0 %742, %v732
    %v744 = vpop.permute.xlu0 %743
    %745 = vset.pattern.permute.xlu0 0
    %746 = vperm.xlu0 %745, %v733
    %v747 = vpop.permute.xlu0 %746
    %748 = vset.pattern.permute.xlu0 0
    %749 = vperm.xlu0 %748, %v734
    %v750 = vpop.permute.xlu0 %749
    %v751 = vlaneseq
    %v752 = vand.u32 %v751, 127
    %v753 = vlaneseq
    %v754 = vshrl.u32 %v753, 7
    %v755 = vsub.s32 %v752, %v754
    %v756 = vrot.slane %v741, %v755
    %v757 = vadd.s32 %v752, 4294967288
    %v758 = vlaneseq
    %v759 = vshrl.u32 %v758, 7
    %v760 = vsub.s32 %v757, %v759
    %v761 = vrot.slane %v744, %v760
    %vm762 = vcmask 130112
    %v763 = vsel %vm762, %v761, %v756
    %v764 = vlaneseq
    %v765 = vshrl.u32 %v764, 7
    %v766 = vsub.s32 %v752, %v765
    %v767 = vrot.slane %v747, %v766
    %v768 = vlaneseq
    %v769 = vshrl.u32 %v768, 7
    %v770 = vsub.s32 %v757, %v769
    %v771 = vrot.slane %v750, %v770
    %v772 = vsel %vm762, %v771, %v767
    %vm773 = vcmask 1041409
    %v774 = vsel %vm773, %v772, %v763
    %vm776 = vcmask 123904
    %v777 = vsel %vm776, %v774, -inf
    %778 = vmax.xlane.f32.xlu0 %v777
    %v779 = vpop.xlane.xlu0 %778
    %v781 = vlaneseq
    %v782 = vshrl.u32 %v781, 7
    %v783 = vsub.s32 0, %v782
    %v784 = vrot.slane %v779, %v783
    %v785 = vlaneseq
    %v786 = vshrl.u32 %v785, 7
    %v787 = vsub.s32 1, %v786
    %v788 = vrot.slane %v779, %v787
    %v791 = vsub.f32 %v731, %v784
    %v792 = vsub.f32 %v732, %v784
    %v793 = vsub.f32 %v733, %v788
    %v794 = vsub.f32 %v734, %v788
    %v795 = vmul.f32 %v791, 1.442695
    %v796 = vpow.pop %v795
    %v797 = vmul.f32 %v792, 1.442695
    %v798 = vpow.pop %v797
    %v799 = vmul.f32 %v793, 1.442695
    %v800 = vpow.pop %v799
    %v801 = vmul.f32 %v794, 1.442695
    %v802 = vpow.pop %v801
    %807 = vset.pattern.permute.xlu0 0
    %808 = vperm.xlu0 %807, %v796
    %v809 = vpop.permute.xlu0 %808
    %810 = vset.pattern.permute.xlu0 0
    %811 = vperm.xlu0 %810, %v798
    %v812 = vpop.permute.xlu0 %811
    %813 = vset.pattern.permute.xlu0 0
    %814 = vperm.xlu0 %813, %v800
    %v815 = vpop.permute.xlu0 %814
    %816 = vset.pattern.permute.xlu0 0
    %817 = vperm.xlu0 %816, %v802
    %v818 = vpop.permute.xlu0 %817
    %v819 = vlaneseq
    %v820 = vshrl.u32 %v819, 7
    %v821 = vsub.s32 %v752, %v820
    %v822 = vrot.slane %v809, %v821
    %v823 = vlaneseq
    %v824 = vshrl.u32 %v823, 7
    %v825 = vsub.s32 %v757, %v824
    %v826 = vrot.slane %v812, %v825
    %v827 = vsel %vm762, %v826, %v822
    %v828 = vlaneseq
    %v829 = vshrl.u32 %v828, 7
    %v830 = vsub.s32 %v752, %v829
    %v831 = vrot.slane %v815, %v830
    %v832 = vlaneseq
    %v833 = vshrl.u32 %v832, 7
    %v834 = vsub.s32 %v757, %v833
    %v835 = vrot.slane %v818, %v834
    %v836 = vsel %vm762, %v835, %v831
    %v837 = vsel %vm773, %v836, %v827
    %v839 = vsel %vm776, %v837, 0.0
    %840 = vadd.xlane.f32.xlu0 %v839
    %v841 = vpop.xlane.xlu0 %840
    %v842 = vrcp.pop %v841
    %v844 = vlaneseq
    %v845 = vshrl.u32 %v844, 7
    %v846 = vsub.s32 0, %v845
    %v847 = vrot.slane %v842, %v846
    %v848 = vlaneseq
    %v849 = vshrl.u32 %v848, 7
    %v850 = vsub.s32 1, %v849
    %v851 = vrot.slane %v842, %v850
    %v854 = vmul.f32 %v796, %v847
    %v855 = vmul.f32 %v798, %v847
    %v856 = vmul.f32 %v800, %v851
    %v857 = vmul.f32 %v802, %v851
    %v858 = vpack.c.bf16 %v855, %v854
    %v859 = vpack.c.bf16 %v857, %v856
    %v861 = vunpack.c.l.b16 %v858
    %v862 = vunpack.c.h.b16 %v858
    %863 = vset.pattern.permute.xlu0 0
    %864 = vperm.xlu0 %863, %v861
    %v865 = vpop.permute.xlu0 %864
    %866 = vset.pattern.permute.xlu0 0
    %867 = vperm.xlu0 %866, %v862
    %v868 = vpop.permute.xlu0 %867
    %v869 = vlaneseq
    %v870 = vshrl.u32 %v869, 7
    %v871 = vsub.s32 %v752, %v870
    %v872 = vrot.slane %v865, %v871
    %v873 = vlaneseq
    %v874 = vshrl.u32 %v873, 7
    %v875 = vsub.s32 %v757, %v874
    %v876 = vrot.slane %v868, %v875
    %v877 = vsel %vm762, %v876, %v872
    %v878 = vpack.c.b16 %v877, %v877
    %vm879 = vcmask 130048
    %v881 = vsel %vm879, %v878, 0
    %883 = vmatprep.subr.bf16.mxu0 0
    %884 = vmatpush1.bf16.msra.mxu0 %v94
    %885 = vmatprep.subr.bf16.mxu0 0
    %886 = vmatpush1.bf16.msra.mxu0 0
    %887 = vmatprep.subr.bf16.mxu0 0
    %888 = vmatpush1.bf16.msra.mxu0 0
    %889 = vmatprep.subr.bf16.mxu0 0
    %890 = vmatpush1.bf16.msra.mxu0 0
    %891 = vmatprep.subr.bf16.mxu0 0
    %892 = vmatpush1.bf16.msra.mxu0 0
    %893 = vmatprep.subr.bf16.mxu0 0
    %894 = vmatpush1.bf16.msra.mxu0 0
    %895 = vmatprep.subr.bf16.mxu0 0
    %896 = vmatpush1.bf16.msra.mxu0 0
    %897 = vmatprep.subr.bf16.mxu0 0
    %898 = vmatpush1.bf16.msra.mxu0 0
    %899 = vmatprep.subr.bf16.mxu0 0
    %900 = vmatpush1.bf16.msra.mxu0 0
    %901 = vmatprep.subr.bf16.mxu0 0
    %902 = vmatpush1.bf16.msra.mxu0 0
    %903 = vmatprep.subr.bf16.mxu0 0
    %904 = vmatpush1.bf16.msra.mxu0 0
    %905 = vmatprep.subr.bf16.mxu0 0
    %906 = vmatpush1.bf16.msra.mxu0 0
    %907 = vmatprep.subr.bf16.mxu0 0
    %908 = vmatpush1.bf16.msra.mxu0 0
    %909 = vmatprep.subr.bf16.mxu0 0
    %910 = vmatpush1.bf16.msra.mxu0 0
    %911 = vmatprep.subr.bf16.mxu0 0
    %912 = vmatpush1.bf16.msra.mxu0 0
    %913 = vmatprep.subr.bf16.mxu0 0
    %914 = vmatpush1.bf16.msra.mxu0 0
    %915 = vmatprep.mubr.bf16.mxu0 0
    %916 = vmatmul.mubr.bf16.gmra.mrb[0].mxu0 %v881
    %v917 = vpop.f32.mrb[0].mxu0
    %v918 = vadd.f32 0.0, %v917
    %v919 = vpop.f32.mrb[0].mxu0
    %v920 = vpop.f32.mrb[0].mxu0
    %v921 = vpop.f32.mrb[0].mxu0
    %922 = vdwg.mxu0
    %v924 = vunpack.c.l.b16 %v859
    %v925 = vunpack.c.h.b16 %v859
    %926 = vset.pattern.permute.xlu0 0
    %927 = vperm.xlu0 %926, %v924
    %v928 = vpop.permute.xlu0 %927
    %929 = vset.pattern.permute.xlu0 0
    %930 = vperm.xlu0 %929, %v925
    %v931 = vpop.permute.xlu0 %930
    %v932 = vlaneseq
    %v933 = vshrl.u32 %v932, 7
    %v934 = vsub.s32 %v752, %v933
    %v935 = vrot.slane %v928, %v934
    %v936 = vlaneseq
    %v937 = vshrl.u32 %v936, 7
    %v938 = vsub.s32 %v757, %v937
    %v939 = vrot.slane %v931, %v938
    %v940 = vsel %vm762, %v939, %v935
    %v941 = vpack.c.b16 %v940, %v940
    %v943 = vsel %vm879, %v941, 0
    %945 = vmatprep.subr.bf16.mxu0 0
    %946 = vmatpush1.bf16.msra.mxu0 %v95
    %947 = vmatprep.subr.bf16.mxu0 0
    %948 = vmatpush1.bf16.msra.mxu0 0
    %949 = vmatprep.subr.bf16.mxu0 0
    %950 = vmatpush1.bf16.msra.mxu0 0
    %951 = vmatprep.subr.bf16.mxu0 0
    %952 = vmatpush1.bf16.msra.mxu0 0
    %953 = vmatprep.subr.bf16.mxu0 0
    %954 = vmatpush1.bf16.msra.mxu0 0
    %955 = vmatprep.subr.bf16.mxu0 0
    %956 = vmatpush1.bf16.msra.mxu0 0
    %957 = vmatprep.subr.bf16.mxu0 0
    %958 = vmatpush1.bf16.msra.mxu0 0
    %959 = vmatprep.subr.bf16.mxu0 0
    %960 = vmatpush1.bf16.msra.mxu0 0
    %961 = vmatprep.subr.bf16.mxu0 0
    %962 = vmatpush1.bf16.msra.mxu0 0
    %963 = vmatprep.subr.bf16.mxu0 0
    %964 = vmatpush1.bf16.msra.mxu0 0
    %965 = vmatprep.subr.bf16.mxu0 0
    %966 = vmatpush1.bf16.msra.mxu0 0
    %967 = vmatprep.subr.bf16.mxu0 0
    %968 = vmatpush1.bf16.msra.mxu0 0
    %969 = vmatprep.subr.bf16.mxu0 0
    %970 = vmatpush1.bf16.msra.mxu0 0
    %971 = vmatprep.subr.bf16.mxu0 0
    %972 = vmatpush1.bf16.msra.mxu0 0
    %973 = vmatprep.subr.bf16.mxu0 0
    %974 = vmatpush1.bf16.msra.mxu0 0
    %975 = vmatprep.subr.bf16.mxu0 0
    %976 = vmatpush1.bf16.msra.mxu0 0
    %977 = vmatprep.mubr.bf16.mxu0 0
    %978 = vmatmul.mubr.bf16.gmra.mrb[0].mxu0 %v943
    %v979 = vpop.f32.mrb[0].mxu0
    %v980 = vadd.f32 0.0, %v979
    %v981 = vpop.f32.mrb[0].mxu0
    %v982 = vpop.f32.mrb[0].mxu0
    %v983 = vpop.f32.mrb[0].mxu0
    %984 = vdwg.mxu0
    %v985 = vld [vmem:[#allocation2] sm:$0x3f]
    %v988 = vrot.slane %v980, 7
    %v989 = vsel %vm773, %v988, %v918
    %991 = vmatprep.subr.mxu0 %v478
    %992 = vmatpush1.msra.mxu0 %v477
    %993 = vmatprep.subr.mxu0 %v481
    %994 = vmatpush1.msra.mxu0 %v480
    %995 = vmatprep.subr.mxu0 %v484
    %996 = vmatpush1.msra.mxu0 %v483
    %997 = vmatprep.subr.mxu0 %v487
    %998 = vmatpush1.msra.mxu0 %v486
    %999 = vmatprep.subr.mxu0 %v490
    %1000 = vmatpush1.msra.mxu0 %v489
    %1001 = vmatprep.subr.mxu0 %v493
    %1002 = vmatpush1.msra.mxu0 %v492
    %1003 = vmatprep.subr.mxu0 %v496
    %1004 = vmatpush1.msra.mxu0 %v495
    %1005 = vmatprep.subr.mxu0 %v499
    %1006 = vmatpush1.msra.mxu0 %v498
    %1007 = vmatprep.subr.mxu0 %v502
    %1008 = vmatpush1.msra.mxu0 %v501
    %1009 = vmatprep.subr.mxu0 %v505
    %1010 = vmatpush1.msra.mxu0 %v504
    %1011 = vmatprep.subr.mxu0 %v508
    %1012 = vmatpush1.msra.mxu0 %v507
    %1013 = vmatprep.subr.mxu0 %v511
    %1014 = vmatpush1.msra.mxu0 %v510
    %1015 = vmatprep.subr.mxu0 %v514
    %1016 = vmatpush1.msra.mxu0 %v513
    %1017 = vmatprep.subr.mxu0 %v517
    %1018 = vmatpush1.msra.mxu0 %v516
    %1019 = vmatprep.subr.mxu0 %v520
    %1020 = vmatpush1.msra.mxu0 %v519
    %1021 = vmatprep.subr.mxu0 %v523
    %1022 = vmatpush1.msra.mxu0 %v522
    %1023 = vmatprep.subr.mxu0 0.0
    %1024 = vmatpush1.msra.mxu0 0.0
    %1025 = vmatprep.subr.mxu0 0.0
    %1026 = vmatpush1.msra.mxu0 0.0
    %1027 = vmatprep.subr.mxu0 0.0
    %1028 = vmatpush1.msra.mxu0 0.0
    %1029 = vmatprep.subr.mxu0 0.0
    %1030 = vmatpush1.msra.mxu0 0.0
    %1031 = vmatprep.subr.mxu0 0.0
    %1032 = vmatpush1.msra.mxu0 0.0
    %1033 = vmatprep.subr.mxu0 0.0
    %1034 = vmatpush1.msra.mxu0 0.0
    %1035 = vmatprep.subr.mxu0 0.0
    %1036 = vmatpush1.msra.mxu0 0.0
    %1037 = vmatprep.subr.mxu0 0.0
    %1038 = vmatpush1.msra.mxu0 0.0
    %1039 = vmatprep.subr.mxu0 0.0
    %1040 = vmatpush1.msra.mxu0 0.0
    %1041 = vmatprep.subr.mxu0 0.0
    %1042 = vmatpush1.msra.mxu0 0.0
    %1043 = vmatprep.subr.mxu0 0.0
    %1044 = vmatpush1.msra.mxu0 0.0
    %1045 = vmatprep.subr.mxu0 0.0
    %1046 = vmatpush1.msra.mxu0 0.0
    %1047 = vmatprep.subr.mxu0 0.0
    %1048 = vmatpush1.msra.mxu0 0.0
    %1049 = vmatprep.subr.mxu0 0.0
    %1050 = vmatpush1.msra.mxu0 0.0
    %1051 = vmatprep.subr.mxu0 0.0
    %1052 = vmatpush1.msra.mxu0 0.0
    %1053 = vmatprep.subr.mxu0 0.0
    %1054 = vmatpush1.msra.mxu0 0.0
    %1055 = vmatprep.mubr.f32.mxu0 0.0
    %1056 = vmatmul.mubr.f32.gmra.mrb[0].mxu0 %v989
    %v1057 = vpop.f32.mrb[0].mxu0
    %v1058 = vadd.f32 0.0, %v1057
    %v1059 = vpop.f32.mrb[0].mxu0
    %v1060 = vadd.f32 0.0, %v1059
    %1061 = vdwg.mxu0
    %1062 = vmatprep.subr.mxu0 0.0
    %1063 = vmatpush1.msra.mxu0 %v479
    %1064 = vmatprep.subr.mxu0 0.0
    %1065 = vmatpush1.msra.mxu0 %v482
    %1066 = vmatprep.subr.mxu0 0.0
    %1067 = vmatpush1.msra.mxu0 %v485
    %1068 = vmatprep.subr.mxu0 0.0
    %1069 = vmatpush1.msra.mxu0 %v488
    %1070 = vmatprep.subr.mxu0 0.0
    %1071 = vmatpush1.msra.mxu0 %v491
    %1072 = vmatprep.subr.mxu0 0.0
    %1073 = vmatpush1.msra.mxu0 %v494
    %1074 = vmatprep.subr.mxu0 0.0
    %1075 = vmatpush1.msra.mxu0 %v497
    %1076 = vmatprep.subr.mxu0 0.0
    %1077 = vmatpush1.msra.mxu0 %v500
    %1078 = vmatprep.subr.mxu0 0.0
    %1079 = vmatpush1.msra.mxu0 %v503
    %1080 = vmatprep.subr.mxu0 0.0
    %1081 = vmatpush1.msra.mxu0 %v506
    %1082 = vmatprep.subr.mxu0 0.0
    %1083 = vmatpush1.msra.mxu0 %v509
    %1084 = vmatprep.subr.mxu0 0.0
    %1085 = vmatpush1.msra.mxu0 %v512
    %1086 = vmatprep.subr.mxu0 0.0
    %1087 = vmatpush1.msra.mxu0 %v515
    %1088 = vmatprep.subr.mxu0 0.0
    %1089 = vmatpush1.msra.mxu0 %v518
    %1090 = vmatprep.subr.mxu0 0.0
    %1091 = vmatpush1.msra.mxu0 %v521
    %1092 = vmatprep.subr.mxu0 0.0
    %1093 = vmatpush1.msra.mxu0 %v524
    %1094 = vmatprep.subr.mxu0 0.0
    %1095 = vmatpush1.msra.mxu0 0.0
    %1096 = vmatprep.subr.mxu0 0.0
    %1097 = vmatpush1.msra.mxu0 0.0
    %1098 = vmatprep.subr.mxu0 0.0
    %1099 = vmatpush1.msra.mxu0 0.0
    %1100 = vmatprep.subr.mxu0 0.0
    %1101 = vmatpush1.msra.mxu0 0.0
    %1102 = vmatprep.subr.mxu0 0.0
    %1103 = vmatpush1.msra.mxu0 0.0
    %1104 = vmatprep.subr.mxu0 0.0
    %1105 = vmatpush1.msra.mxu0 0.0
    %1106 = vmatprep.subr.mxu0 0.0
    %1107 = vmatpush1.msra.mxu0 0.0
    %1108 = vmatprep.subr.mxu0 0.0
    %1109 = vmatpush1.msra.mxu0 0.0
    %1110 = vmatprep.subr.mxu0 0.0
    %1111 = vmatpush1.msra.mxu0 0.0
    %1112 = vmatprep.subr.mxu0 0.0
    %1113 = vmatpush1.msra.mxu0 0.0
    %1114 = vmatprep.subr.mxu0 0.0
    %1115 = vmatpush1.msra.mxu0 0.0
    %1116 = vmatprep.subr.mxu0 0.0
    %1117 = vmatpush1.msra.mxu0 0.0
    %1118 = vmatprep.subr.mxu0 0.0
    %1119 = vmatpush1.msra.mxu0 0.0
    %1120 = vmatprep.subr.mxu0 0.0
    %1121 = vmatpush1.msra.mxu0 0.0
    %1122 = vmatprep.subr.mxu0 0.0
    %1123 = vmatpush1.msra.mxu0 0.0
    %1124 = vmatprep.subr.mxu0 0.0
    %1125 = vmatpush1.msra.mxu0 0.0
    %1126 = vmatprep.mubr.f32.mxu0 0.0
    %1127 = vmatmul.mubr.f32.gmra.mrb[0].mxu0 %v989
    %v1128 = vpop.f32.mrb[0].mxu0
    %v1129 = vadd.f32 0.0, %v1128
    %v1130 = vpop.f32.mrb[0].mxu0
    %1131 = vdwg.mxu0
    %v1135 = vcombine.low %v1058, %v1060
    %v1137 = vunpack.c.l.s4 1983009808
    %v1138 = vunpack.c.0.s8 %v1137
    %v1139 = vlaneseq
    %v1140 = vshrl.u32 %v1139, 7
    %v1141 = vsub.s32 %v1138, %v1140
    %v1142 = vrot.slane %v1135, %v1141
    %v1144 = vunpack.c.l.s4 1983009808
    %v1145 = vunpack.c.0.s8 %v1144
    %v1146 = vlaneseq
    %v1147 = vshrl.u32 %v1146, 7
    %v1148 = vsub.s32 %v1145, %v1147
    %v1149 = vrot.slane %v1129, %v1148
    %v1150 = vcombine.low %v1142, %v1149
    %v1152 = vadd.f32 %v985, %v1150
    %v1154 = vlaneseq
    %v1155 = vshrl.u32 %v1154, 7
    %v1156 = vsub.s32 0, %v1155
    %v1157 = vrot.slane %v573, %v1156
    %v1158 = vlaneseq
    %v1159 = vshrl.u32 %v1158, 7
    %v1160 = vsub.s32 1, %v1159
    %v1161 = vrot.slane %v573, %v1160
    %v1162 = vlaneseq
    %v1163 = vshrl.u32 %v1162, 7
    %v1164 = vsub.s32 2, %v1163
    %v1165 = vrot.slane %v573, %v1164
    %1169 = vmatprep.subr.mxu0 %v526
    %1170 = vmatpush1.msra.mxu0 %v525
    %1171 = vmatprep.subr.mxu0 %v529
    %1172 = vmatpush1.msra.mxu0 %v528
    %1173 = vmatprep.subr.mxu0 %v532
    %1174 = vmatpush1.msra.mxu0 %v531
    %1175 = vmatprep.subr.mxu0 %v535
    %1176 = vmatpush1.msra.mxu0 %v534
    %1177 = vmatprep.subr.mxu0 %v538
    %1178 = vmatpush1.msra.mxu0 %v537
    %1179 = vmatprep.subr.mxu0 %v541
    %1180 = vmatpush1.msra.mxu0 %v540
    %1181 = vmatprep.subr.mxu0 %v544
    %1182 = vmatpush1.msra.mxu0 %v543
    %1183 = vmatprep.subr.mxu0 %v547
    %1184 = vmatpush1.msra.mxu0 %v546
    %1185 = vmatprep.subr.mxu0 %v550
    %1186 = vmatpush1.msra.mxu0 %v549
    %1187 = vmatprep.subr.mxu0 %v553
    %1188 = vmatpush1.msra.mxu0 %v552
    %1189 = vmatprep.subr.mxu0 %v556
    %1190 = vmatpush1.msra.mxu0 %v555
    %1191 = vmatprep.subr.mxu0 %v559
    %1192 = vmatpush1.msra.mxu0 %v558
    %1193 = vmatprep.subr.mxu0 %v562
    %1194 = vmatpush1.msra.mxu0 %v561
    %1195 = vmatprep.subr.mxu0 %v565
    %1196 = vmatpush1.msra.mxu0 %v564
    %1197 = vmatprep.subr.mxu0 %v568
    %1198 = vmatpush1.msra.mxu0 %v567
    %1199 = vmatprep.subr.mxu0 %v571
    %1200 = vmatpush1.msra.mxu0 %v570
    %1201 = vmatprep.subr.mxu0 0.0
    %1202 = vmatpush1.msra.mxu0 0.0
    %1203 = vmatprep.subr.mxu0 0.0
    %1204 = vmatpush1.msra.mxu0 0.0
    %1205 = vmatprep.subr.mxu0 0.0
    %1206 = vmatpush1.msra.mxu0 0.0
    %1207 = vmatprep.subr.mxu0 0.0
    %1208 = vmatpush1.msra.mxu0 0.0
    %1209 = vmatprep.subr.mxu0 0.0
    %1210 = vmatpush1.msra.mxu0 0.0
    %1211 = vmatprep.subr.mxu0 0.0
    %1212 = vmatpush1.msra.mxu0 0.0
    %1213 = vmatprep.subr.mxu0 0.0
    %1214 = vmatpush1.msra.mxu0 0.0
    %1215 = vmatprep.subr.mxu0 0.0
    %1216 = vmatpush1.msra.mxu0 0.0
    %1217 = vmatprep.subr.mxu0 0.0
    %1218 = vmatpush1.msra.mxu0 0.0
    %1219 = vmatprep.subr.mxu0 0.0
    %1220 = vmatpush1.msra.mxu0 0.0
    %1221 = vmatprep.subr.mxu0 0.0
    %1222 = vmatpush1.msra.mxu0 0.0
    %1223 = vmatprep.subr.mxu0 0.0
    %1224 = vmatpush1.msra.mxu0 0.0
    %1225 = vmatprep.subr.mxu0 0.0
    %1226 = vmatpush1.msra.mxu0 0.0
    %1227 = vmatprep.subr.mxu0 0.0
    %1228 = vmatpush1.msra.mxu0 0.0
    %1229 = vmatprep.subr.mxu0 0.0
    %1230 = vmatpush1.msra.mxu0 0.0
    %1231 = vmatprep.subr.mxu0 0.0
    %1232 = vmatpush1.msra.mxu0 0.0
    %1233 = vmatprep.mubr.f32.mxu0 0.0
    %1234 = vmatmul.mubr.f32.gmra.mrb[0].mxu0 %v574
    %v1235 = vpop.f32.mrb[0].mxu0
    %v1236 = vadd.f32 %v1157, %v1235
    %v1237 = vpop.f32.mrb[0].mxu0
    %v1238 = vadd.f32 %v1161, %v1237
    %1239 = vdwg.mxu0
    %1240 = vmatprep.subr.mxu0 0.0
    %1241 = vmatpush1.msra.mxu0 %v527
    %1242 = vmatprep.subr.mxu0 0.0
    %1243 = vmatpush1.msra.mxu0 %v530
    %1244 = vmatprep.subr.mxu0 0.0
    %1245 = vmatpush1.msra.mxu0 %v533
    %1246 = vmatprep.subr.mxu0 0.0
    %1247 = vmatpush1.msra.mxu0 %v536
    %1248 = vmatprep.subr.mxu0 0.0
    %1249 = vmatpush1.msra.mxu0 %v539
    %1250 = vmatprep.subr.mxu0 0.0
    %1251 = vmatpush1.msra.mxu0 %v542
    %1252 = vmatprep.subr.mxu0 0.0
    %1253 = vmatpush1.msra.mxu0 %v545
    %1254 = vmatprep.subr.mxu0 0.0
    %1255 = vmatpush1.msra.mxu0 %v548
    %1256 = vmatprep.subr.mxu0 0.0
    %1257 = vmatpush1.msra.mxu0 %v551
    %1258 = vmatprep.subr.mxu0 0.0
    %1259 = vmatpush1.msra.mxu0 %v554
    %1260 = vmatprep.subr.mxu0 0.0
    %1261 = vmatpush1.msra.mxu0 %v557
    %1262 = vmatprep.subr.mxu0 0.0
    %1263 = vmatpush1.msra.mxu0 %v560
    %1264 = vmatprep.subr.mxu0 0.0
    %1265 = vmatpush1.msra.mxu0 %v563
    %1266 = vmatprep.subr.mxu0 0.0
    %1267 = vmatpush1.msra.mxu0 %v566
    %1268 = vmatprep.subr.mxu0 0.0
    %1269 = vmatpush1.msra.mxu0 %v569
    %1270 = vmatprep.subr.mxu0 0.0
    %1271 = vmatpush1.msra.mxu0 %v572
    %1272 = vmatprep.subr.mxu0 0.0
    %1273 = vmatpush1.msra.mxu0 0.0
    %1274 = vmatprep.subr.mxu0 0.0
    %1275 = vmatpush1.msra.mxu0 0.0
    %1276 = vmatprep.subr.mxu0 0.0
    %1277 = vmatpush1.msra.mxu0 0.0
    %1278 = vmatprep.subr.mxu0 0.0
    %1279 = vmatpush1.msra.mxu0 0.0
    %1280 = vmatprep.subr.mxu0 0.0
    %1281 = vmatpush1.msra.mxu0 0.0
    %1282 = vmatprep.subr.mxu0 0.0
    %1283 = vmatpush1.msra.mxu0 0.0
    %1284 = vmatprep.subr.mxu0 0.0
    %1285 = vmatpush1.msra.mxu0 0.0
    %1286 = vmatprep.subr.mxu0 0.0
    %1287 = vmatpush1.msra.mxu0 0.0
    %1288 = vmatprep.subr.mxu0 0.0
    %1289 = vmatpush1.msra.mxu0 0.0
    %1290 = vmatprep.subr.mxu0 0.0
    %1291 = vmatpush1.msra.mxu0 0.0
    %1292 = vmatprep.subr.mxu0 0.0
    %1293 = vmatpush1.msra.mxu0 0.0
    %1294 = vmatprep.subr.mxu0 0.0
    %1295 = vmatpush1.msra.mxu0 0.0
    %1296 = vmatprep.subr.mxu0 0.0
    %1297 = vmatpush1.msra.mxu0 0.0
    %1298 = vmatprep.subr.mxu0 0.0
    %1299 = vmatpush1.msra.mxu0 0.0
    %1300 = vmatprep.subr.mxu0 0.0
    %1301 = vmatpush1.msra.mxu0 0.0
    %1302 = vmatprep.subr.mxu0 0.0
    %1303 = vmatpush1.msra.mxu0 0.0
    %1304 = vmatprep.mubr.f32.mxu0 0.0
    %1305 = vmatmul.mubr.f32.gmra.mrb[0].mxu0 %v574
    %v1306 = vpop.f32.mrb[0].mxu0
    %v1307 = vadd.f32 %v1165, %v1306
    %v1308 = vpop.f32.mrb[0].mxu0
    %1309 = vdwg.mxu0
    %v1310 = vadd.f32 %v1152, %v1236
    %v1311 = vxor.u32 %v1310, 2147483648
    %v1312 = vmul.f32 %v1311, 1.442695
    %v1313 = vpow.pop %v1312
    %v1314 = vadd.f32 %v1313, 1.0
    %v1315 = vrcp.pop %v1314
    %v1316 = vmul.f32 1.0, %v1315
    %v1318 = vrot.slane %v1152, 2
    %v1320 = vadd.f32 %v1318, %v1238
    %v1321 = vxor.u32 %v1320, 2147483648
    %v1322 = vmul.f32 %v1321, 1.442695
    %v1323 = vpow.pop %v1322
    %v1324 = vadd.f32 %v1323, 1.0
    %v1325 = vrcp.pop %v1324
    %v1326 = vmul.f32 1.0, %v1325
    %v1327 = vmul.f32 %v1316, %v1307
    %v1328 = vrot.slane %v1152, 4
    %v1330 = vadd.f32 %v1328, %v1327
    %v1331 = vtanh.pop %v1330
    %v1332 = vsub.f32 1.0, %v1326
    %v1333 = vmul.f32 %v1332, %v1331
    %v1334 = vmul.f32 %v1326, %v574
    %v1335 = vadd.f32 %v1333, %v1334
    %1336 = vst [vmem:[#allocation3] sm:$0x3] %v1335
    %1337 = vmatprep.subr.mxu0 0.0
    %1338 = vmatpush1.msra.mxu0 %v461
    %1339 = vmatprep.subr.mxu0 0.0
    %1340 = vmatpush1.msra.mxu0 %v462
    %1341 = vmatprep.subr.mxu0 0.0
    %1342 = vmatpush1.msra.mxu0 %v463
    %1343 = vmatprep.subr.mxu0 0.0
    %1344 = vmatpush1.msra.mxu0 %v464
    %1345 = vmatprep.subr.mxu0 0.0
    %1346 = vmatpush1.msra.mxu0 %v465
    %1347 = vmatprep.subr.mxu0 0.0
    %1348 = vmatpush1.msra.mxu0 %v466
    %1349 = vmatprep.subr.mxu0 0.0
    %1350 = vmatpush1.msra.mxu0 %v467
    %1351 = vmatprep.subr.mxu0 0.0
    %1352 = vmatpush1.msra.mxu0 %v468
    %1353 = vmatprep.subr.mxu0 0.0
    %1354 = vmatpush1.msra.mxu0 %v469
    %1355 = vmatprep.subr.mxu0 0.0
    %1356 = vmatpush1.msra.mxu0 %v470
    %1357 = vmatprep.subr.mxu0 0.0
    %1358 = vmatpush1.msra.mxu0 %v471
    %1359 = vmatprep.subr.mxu0 0.0
    %1360 = vmatpush1.msra.mxu0 %v472
    %1361 = vmatprep.subr.mxu0 0.0
    %1362 = vmatpush1.msra.mxu0 %v473
    %1363 = vmatprep.subr.mxu0 0.0
    %1364 = vmatpush1.msra.mxu0 %v474
    %1365 = vmatprep.subr.mxu0 0.0
    %1366 = vmatpush1.msra.mxu0 %v475
    %1367 = vmatprep.subr.mxu0 0.0
    %1368 = vmatpush1.msra.mxu0 %v476
    %1369 = vmatprep.subr.mxu0 0.0
    %1370 = vmatpush1.msra.mxu0 0.0
    %1371 = vmatprep.subr.mxu0 0.0
    %1372 = vmatpush1.msra.mxu0 0.0
    %1373 = vmatprep.subr.mxu0 0.0
    %1374 = vmatpush1.msra.mxu0 0.0
    %1375 = vmatprep.subr.mxu0 0.0
    %1376 = vmatpush1.msra.mxu0 0.0
    %1377 = vmatprep.subr.mxu0 0.0
    %1378 = vmatpush1.msra.mxu0 0.0
    %1379 = vmatprep.subr.mxu0 0.0
    %1380 = vmatpush1.msra.mxu0 0.0
    %1381 = vmatprep.subr.mxu0 0.0
    %1382 = vmatpush1.msra.mxu0 0.0
    %1383 = vmatprep.subr.mxu0 0.0
    %1384 = vmatpush1.msra.mxu0 0.0
    %1385 = vmatprep.subr.mxu0 0.0
    %1386 = vmatpush1.msra.mxu0 0.0
    %1387 = vmatprep.subr.mxu0 0.0
    %1388 = vmatpush1.msra.mxu0 0.0
    %1389 = vmatprep.subr.mxu0 0.0
    %1390 = vmatpush1.msra.mxu0 0.0
    %1391 = vmatprep.subr.mxu0 0.0
    %1392 = vmatpush1.msra.mxu0 0.0
    %1393 = vmatprep.subr.mxu0 0.0
    %1394 = vmatpush1.msra.mxu0 0.0
    %1395 = vmatprep.subr.mxu0 0.0
    %1396 = vmatpush1.msra.mxu0 0.0
    %1397 = vmatprep.subr.mxu0 0.0
    %1398 = vmatpush1.msra.mxu0 0.0
    %1399 = vmatprep.subr.mxu0 0.0
    %1400 = vmatpush1.msra.mxu0 0.0
    %1401 = vmatprep.mubr.f32.mxu0 0.0
    %1402 = vmatmul.mubr.f32.gmra.mrb[0].mxu0 %v1335
    %v1403 = vpop.f32.mrb[0].mxu0
    %v1404 = vadd.f32 0.0, %v1403
    %v1405 = vpop.f32.mrb[0].mxu0
    %1406 = vdwg.mxu0
    %v1409 = vunpack.c.l.s4 1966171168
    %v1410 = vunpack.c.0.s8 %v1409
    %v1411 = vlaneseq
    %v1412 = vshrl.u32 %v1411, 7
    %v1413 = vsub.s32 %v1410, %v1412
    %v1414 = vrot.slane %v1404, %v1413
    %v1415 = vcombine.high %v1414, %v1414
    %v1417 = vunpack.c.l.s4 1966171168
    %v1418 = vunpack.c.0.s8 %v1417
    %v1419 = vlaneseq
    %v1420 = vshrl.u32 %v1419, 7
    %v1421 = vsub.s32 %v1418, %v1420
    %v1422 = vrot.slane %v1414, %v1421
    %v1424 = vunpack.c.l.s4 1966171168
    %v1425 = vunpack.c.0.s8 %v1424
    %v1426 = vlaneseq
    %v1427 = vshrl.u32 %v1426, 7
    %v1428 = vsub.s32 %v1425, %v1427
    %v1429 = vrot.slane %v1415, %v1428
    %v1430 = vlaneseq
    %v1431 = vshrl.u32 %v1430, 7
    %v1432 = vsub.s32 0, %v1431
    %v1433 = vrot.slane %v1422, %v1432
    %v1434 = vlaneseq
    %v1435 = vshrl.u32 %v1434, 7
    %v1436 = vsub.s32 0, %v1435
    %v1437 = vrot.slane %v1429, %v1436
    %v1440 = vadd.f32 %v1433, %v155
    %v1441 = vadd.f32 %v1433, %v158
    %v1442 = vadd.f32 %v1437, %v163
    %v1443 = vadd.f32 %v1437, %v166
    %v1444 = vtanh.pop %v1440
    %v1445 = vtanh.pop %v1441
    %v1446 = vtanh.pop %v1442
    %v1447 = vtanh.pop %v1443
    %v1448 = vmul.f32 %v1444, %v690
    %v1449 = vmul.f32 %v1445, %v690
    %v1450 = vmul.f32 %v1446, %v690
    %v1451 = vmul.f32 %v1447, %v690
    %1452 = vadd.xlane.f32.xlu0 %v1448
    %v1453 = vpop.xlane.xlu0 %1452
    %1454 = vadd.xlane.f32.xlu0 %v1449
    %v1455 = vpop.xlane.xlu0 %1454
    %1456 = vadd.xlane.f32.xlu0 %v1450
    %v1457 = vpop.xlane.xlu0 %1456
    %1458 = vadd.xlane.f32.xlu0 %v1451
    %v1459 = vpop.xlane.xlu0 %1458
    %v1460 = vadd.f32 %v1453, %v711
    %v1461 = vadd.f32 %v1455, %v715
    %v1462 = vadd.f32 %v1457, %v722
    %v1463 = vadd.f32 %v1459, %v726
    %1468 = vset.pattern.permute.xlu0 0
    %1469 = vperm.xlu0 %1468, %v1460
    %v1470 = vpop.permute.xlu0 %1469
    %1471 = vset.pattern.permute.xlu0 0
    %1472 = vperm.xlu0 %1471, %v1461
    %v1473 = vpop.permute.xlu0 %1472
    %1474 = vset.pattern.permute.xlu0 0
    %1475 = vperm.xlu0 %1474, %v1462
    %v1476 = vpop.permute.xlu0 %1475
    %1477 = vset.pattern.permute.xlu0 0
    %1478 = vperm.xlu0 %1477, %v1463
    %v1479 = vpop.permute.xlu0 %1478
    %v1480 = vlaneseq
    %v1481 = vshrl.u32 %v1480, 7
    %v1482 = vsub.s32 %v752, %v1481
    %v1483 = vrot.slane %v1470, %v1482
    %v1484 = vlaneseq
    %v1485 = vshrl.u32 %v1484, 7
    %v1486 = vsub.s32 %v757, %v1485
    %v1487 = vrot.slane %v1473, %v1486
    %v1488 = vsel %vm762, %v1487, %v1483
    %v1489 = vlaneseq
    %v1490 = vshrl.u32 %v1489, 7
    %v1491 = vsub.s32 %v752, %v1490
    %v1492 = vrot.slane %v1476, %v1491
    %v1493 = vlaneseq
    %v1494 = vshrl.u32 %v1493, 7
    %v1495 = vsub.s32 %v757, %v1494
    %v1496 = vrot.slane %v1479, %v1495
    %v1497 = vsel %vm762, %v1496, %v1492
    %v1498 = vsel %vm773, %v1497, %v1488
    %v1500 = vsel %vm776, %v1498, -inf
    %1501 = vmax.xlane.f32.xlu0 %v1500
    %v1502 = vpop.xlane.xlu0 %1501
    %v1504 = vlaneseq
    %v1505 = vshrl.u32 %v1504, 7
    %v1506 = vsub.s32 0, %v1505
    %v1507 = vrot.slane %v1502, %v1506
    %v1508 = vlaneseq
    %v1509 = vshrl.u32 %v1508, 7
    %v1510 = vsub.s32 1, %v1509
    %v1511 = vrot.slane %v1502, %v1510
    %v1514 = vsub.f32 %v1460, %v1507
    %v1515 = vsub.f32 %v1461, %v1507
    %v1516 = vsub.f32 %v1462, %v1511
    %v1517 = vsub.f32 %v1463, %v1511
    %v1518 = vmul.f32 %v1514, 1.442695
    %v1519 = vpow.pop %v1518
    %v1520 = vmul.f32 %v1515, 1.442695
    %v1521 = vpow.pop %v1520
    %v1522 = vmul.f32 %v1516, 1.442695
    %v1523 = vpow.pop %v1522
    %v1524 = vmul.f32 %v1517, 1.442695
    %v1525 = vpow.pop %v1524
    %1530 = vset.pattern.permute.xlu0 0
    %1531 = vperm.xlu0 %1530, %v1519
    %v1532 = vpop.permute.xlu0 %1531
    %1533 = vset.pattern.permute.xlu0 0
    %1534 = vperm.xlu0 %1533, %v1521
    %v1535 = vpop.permute.xlu0 %1534
    %1536 = vset.pattern.permute.xlu0 0
    %1537 = vperm.xlu0 %1536, %v1523
    %v1538 = vpop.permute.xlu0 %1537
    %1539 = vset.pattern.permute.xlu0 0
    %1540 = vperm.xlu0 %1539, %v1525
    %v1541 = vpop.permute.xlu0 %1540
    %v1542 = vlaneseq
    %v1543 = vshrl.u32 %v1542, 7
    %v1544 = vsub.s32 %v752, %v1543
    %v1545 = vrot.slane %v1532, %v1544
    %v1546 = vlaneseq
    %v1547 = vshrl.u32 %v1546, 7
    %v1548 = vsub.s32 %v757, %v1547
    %v1549 = vrot.slane %v1535, %v1548
    %v1550 = vsel %vm762, %v1549, %v1545
    %v1551 = vlaneseq
    %v1552 = vshrl.u32 %v1551, 7
    %v1553 = vsub.s32 %v752, %v1552
    %v1554 = vrot.slane %v1538, %v1553
    %v1555 = vlaneseq
    %v1556 = vshrl.u32 %v1555, 7
    %v1557 = vsub.s32 %v757, %v1556
    %v1558 = vrot.slane %v1541, %v1557
    %v1559 = vsel %vm762, %v1558, %v1554
    %v1560 = vsel %vm773, %v1559, %v1550
    %v1562 = vsel %vm776, %v1560, 0.0
    %1563 = vadd.xlane.f32.xlu0 %v1562
    %v1564 = vpop.xlane.xlu0 %1563
    %v1565 = vrcp.pop %v1564
    %v1567 = vlaneseq
    %v1568 = vshrl.u32 %v1567, 7
    %v1569 = vsub.s32 0, %v1568
    %v1570 = vrot.slane %v1565, %v1569
    %v1571 = vlaneseq
    %v1572 = vshrl.u32 %v1571, 7
    %v1573 = vsub.s32 1, %v1572
    %v1574 = vrot.slane %v1565, %v1573
    %v1577 = vmul.f32 %v1519, %v1570
    %v1578 = vmul.f32 %v1521, %v1570
    %v1579 = vmul.f32 %v1523, %v1574
    %v1580 = vmul.f32 %v1525, %v1574
    %v1581 = vpack.c.bf16 %v1578, %v1577
    %v1582 = vpack.c.bf16 %v1580, %v1579
    %v1584 = vunpack.c.l.b16 %v1581
    %v1585 = vunpack.c.h.b16 %v1581
    %1586 = vset.pattern.permute.xlu0 0
    %1587 = vperm.xlu0 %1586, %v1584
    %v1588 = vpop.permute.xlu0 %1587
    %1589 = vset.pattern.permute.xlu0 0
    %1590 = vperm.xlu0 %1589, %v1585
    %v1591 = vpop.permute.xlu0 %1590
    %v1592 = vlaneseq
    %v1593 = vshrl.u32 %v1592, 7
    %v1594 = vsub.s32 %v752, %v1593
    %v1595 = vrot.slane %v1588, %v1594
    %v1596 = vlaneseq
    %v1597 = vshrl.u32 %v1596, 7
    %v1598 = vsub.s32 %v757, %v1597
    %v1599 = vrot.slane %v1591, %v1598
    %v1600 = vsel %vm762, %v1599, %v1595
    %v1601 = vpack.c.b16 %v1600, %v1600
    %v1603 = vsel %vm879, %v1601, 0
    %1605 = vmatprep.subr.bf16.mxu0 0
    %1606 = vmatpush1.bf16.msra.mxu0 %v94
    %1607 = vmatprep.subr.bf16.mxu0 0
    %1608 = vmatpush1.bf16.msra.mxu0 0
    %1609 = vmatprep.subr.bf16.mxu0 0
    %1610 = vmatpush1.bf16.msra.mxu0 0
    %1611 = vmatprep.subr.bf16.mxu0 0
    %1612 = vmatpush1.bf16.msra.mxu0 0
    %1613 = vmatprep.subr.bf16.mxu0 0
    %1614 = vmatpush1.bf16.msra.mxu0 0
    %1615 = vmatprep.subr.bf16.mxu0 0
    %1616 = vmatpush1.bf16.msra.mxu0 0
    %1617 = vmatprep.subr.bf16.mxu0 0
    %1618 = vmatpush1.bf16.msra.mxu0 0
    %1619 = vmatprep.subr.bf16.mxu0 0
    %1620 = vmatpush1.bf16.msra.mxu0 0
    %1621 = vmatprep.subr.bf16.mxu0 0
    %1622 = vmatpush1.bf16.msra.mxu0 0
    %1623 = vmatprep.subr.bf16.mxu0 0
    %1624 = vmatpush1.bf16.msra.mxu0 0
    %1625 = vmatprep.subr.bf16.mxu0 0
    %1626 = vmatpush1.bf16.msra.mxu0 0
    %1627 = vmatprep.subr.bf16.mxu0 0
    %1628 = vmatpush1.bf16.msra.mxu0 0
    %1629 = vmatprep.subr.bf16.mxu0 0
    %1630 = vmatpush1.bf16.msra.mxu0 0
    %1631 = vmatprep.subr.bf16.mxu0 0
    %1632 = vmatpush1.bf16.msra.mxu0 0
    %1633 = vmatprep.subr.bf16.mxu0 0
    %1634 = vmatpush1.bf16.msra.mxu0 0
    %1635 = vmatprep.subr.bf16.mxu0 0
    %1636 = vmatpush1.bf16.msra.mxu0 0
    %1637 = vmatprep.mubr.bf16.mxu0 0
    %1638 = vmatmul.mubr.bf16.gmra.mrb[0].mxu0 %v1603
    %v1639 = vpop.f32.mrb[0].mxu0
    %v1640 = vadd.f32 0.0, %v1639
    %v1641 = vpop.f32.mrb[0].mxu0
    %v1642 = vpop.f32.mrb[0].mxu0
    %v1643 = vpop.f32.mrb[0].mxu0
    %1644 = vdwg.mxu0
    %v1646 = vunpack.c.l.b16 %v1582
    %v1647 = vunpack.c.h.b16 %v1582
    %1648 = vset.pattern.permute.xlu0 0
    %1649 = vperm.xlu0 %1648, %v1646
    %v1650 = vpop.permute.xlu0 %1649
    %1651 = vset.pattern.permute.xlu0 0
    %1652 = vperm.xlu0 %1651, %v1647
    %v1653 = vpop.permute.xlu0 %1652
    %v1654 = vlaneseq
    %v1655 = vshrl.u32 %v1654, 7
    %v1656 = vsub.s32 %v752, %v1655
    %v1657 = vrot.slane %v1650, %v1656
    %v1658 = vlaneseq
    %v1659 = vshrl.u32 %v1658, 7
    %v1660 = vsub.s32 %v757, %v1659
    %v1661 = vrot.slane %v1653, %v1660
    %v1662 = vsel %vm762, %v1661, %v1657
    %v1663 = vpack.c.b16 %v1662, %v1662
    %v1665 = vsel %vm879, %v1663, 0
    %1667 = vmatprep.subr.bf16.mxu0 0
    %1668 = vmatpush1.bf16.msra.mxu0 %v95
    %1669 = vmatprep.subr.bf16.mxu0 0
    %1670 = vmatpush1.bf16.msra.mxu0 0
    %1671 = vmatprep.subr.bf16.mxu0 0
    %1672 = vmatpush1.bf16.msra.mxu0 0
    %1673 = vmatprep.subr.bf16.mxu0 0
    %1674 = vmatpush1.bf16.msra.mxu0 0
    %1675 = vmatprep.subr.bf16.mxu0 0
    %1676 = vmatpush1.bf16.msra.mxu0 0
    %1677 = vmatprep.subr.bf16.mxu0 0
    %1678 = vmatpush1.bf16.msra.mxu0 0
    %1679 = vmatprep.subr.bf16.mxu0 0
    %1680 = vmatpush1.bf16.msra.mxu0 0
    %1681 = vmatprep.subr.bf16.mxu0 0
    %1682 = vmatpush1.bf16.msra.mxu0 0
    %1683 = vmatprep.subr.bf16.mxu0 0
    %1684 = vmatpush1.bf16.msra.mxu0 0
    %1685 = vmatprep.subr.bf16.mxu0 0
    %1686 = vmatpush1.bf16.msra.mxu0 0
    %1687 = vmatprep.subr.bf16.mxu0 0
    %1688 = vmatpush1.bf16.msra.mxu0 0
    %1689 = vmatprep.subr.bf16.mxu0 0
    %1690 = vmatpush1.bf16.msra.mxu0 0
    %1691 = vmatprep.subr.bf16.mxu0 0
    %1692 = vmatpush1.bf16.msra.mxu0 0
    %1693 = vmatprep.subr.bf16.mxu0 0
    %1694 = vmatpush1.bf16.msra.mxu0 0
    %1695 = vmatprep.subr.bf16.mxu0 0
    %1696 = vmatpush1.bf16.msra.mxu0 0
    %1697 = vmatprep.subr.bf16.mxu0 0
    %1698 = vmatpush1.bf16.msra.mxu0 0
    %1699 = vmatprep.mubr.bf16.mxu0 0
    %1700 = vmatmul.mubr.bf16.gmra.mrb[0].mxu0 %v1665
    %v1701 = vpop.f32.mrb[0].mxu0
    %v1702 = vadd.f32 0.0, %v1701
    %v1703 = vpop.f32.mrb[0].mxu0
    %v1704 = vpop.f32.mrb[0].mxu0
    %v1705 = vpop.f32.mrb[0].mxu0
    %1706 = vdwg.mxu0
    %s1707 = scalar_lea.vmem [#allocation2], 6
    %v1708 = vld [vmem:[%s1707] sm:$0x3f]
    %v1711 = vrot.slane %v1702, 7
    %v1712 = vsel %vm773, %v1711, %v1640
    %1714 = vmatprep.subr.mxu0 %v478
    %1715 = vmatpush1.msra.mxu0 %v477
    %1716 = vmatprep.subr.mxu0 %v481
    %1717 = vmatpush1.msra.mxu0 %v480
    %1718 = vmatprep.subr.mxu0 %v484
    %1719 = vmatpush1.msra.mxu0 %v483
    %1720 = vmatprep.subr.mxu0 %v487
    %1721 = vmatpush1.msra.mxu0 %v486
    %1722 = vmatprep.subr.mxu0 %v490
    %1723 = vmatpush1.msra.mxu0 %v489
    %1724 = vmatprep.subr.mxu0 %v493
    %1725 = vmatpush1.msra.mxu0 %v492
    %1726 = vmatprep.subr.mxu0 %v496
    %1727 = vmatpush1.msra.mxu0 %v495
    %1728 = vmatprep.subr.mxu0 %v499
    %1729 = vmatpush1.msra.mxu0 %v498
    %1730 = vmatprep.subr.mxu0 %v502
    %1731 = vmatpush1.msra.mxu0 %v501
    %1732 = vmatprep.subr.mxu0 %v505
    %1733 = vmatpush1.msra.mxu0 %v504
    %1734 = vmatprep.subr.mxu0 %v508
    %1735 = vmatpush1.msra.mxu0 %v507
    %1736 = vmatprep.subr.mxu0 %v511
    %1737 = vmatpush1.msra.mxu0 %v510
    %1738 = vmatprep.subr.mxu0 %v514
    %1739 = vmatpush1.msra.mxu0 %v513
    %1740 = vmatprep.subr.mxu0 %v517
    %1741 = vmatpush1.msra.mxu0 %v516
    %1742 = vmatprep.subr.mxu0 %v520
    %1743 = vmatpush1.msra.mxu0 %v519
    %1744 = vmatprep.subr.mxu0 %v523
    %1745 = vmatpush1.msra.mxu0 %v522
    %1746 = vmatprep.subr.mxu0 0.0
    %1747 = vmatpush1.msra.mxu0 0.0
    %1748 = vmatprep.subr.mxu0 0.0
    %1749 = vmatpush1.msra.mxu0 0.0
    %1750 = vmatprep.subr.mxu0 0.0
    %1751 = vmatpush1.msra.mxu0 0.0
    %1752 = vmatprep.subr.mxu0 0.0
    %1753 = vmatpush1.msra.mxu0 0.0
    %1754 = vmatprep.subr.mxu0 0.0
    %1755 = vmatpush1.msra.mxu0 0.0
    %1756 = vmatprep.subr.mxu0 0.0
    %1757 = vmatpush1.msra.mxu0 0.0
    %1758 = vmatprep.subr.mxu0 0.0
    %1759 = vmatpush1.msra.mxu0 0.0
    %1760 = vmatprep.subr.mxu0 0.0
    %1761 = vmatpush1.msra.mxu0 0.0
    %1762 = vmatprep.subr.mxu0 0.0
    %1763 = vmatpush1.msra.mxu0 0.0
    %1764 = vmatprep.subr.mxu0 0.0
    %1765 = vmatpush1.msra.mxu0 0.0
    %1766 = vmatprep.subr.mxu0 0.0
    %1767 = vmatpush1.msra.mxu0 0.0
    %1768 = vmatprep.subr.mxu0 0.0
    %1769 = vmatpush1.msra.mxu0 0.0
    %1770 = vmatprep.subr.mxu0 0.0
    %1771 = vmatpush1.msra.mxu0 0.0
    %1772 = vmatprep.subr.mxu0 0.0
    %1773 = vmatpush1.msra.mxu0 0.0
    %1774 = vmatprep.subr.mxu0 0.0
    %1775 = vmatpush1.msra.mxu0 0.0
    %1776 = vmatprep.subr.mxu0 0.0
    %1777 = vmatpush1.msra.mxu0 0.0
    %1778 = vmatprep.mubr.f32.mxu0 0.0
    %1779 = vmatmul.mubr.f32.gmra.mrb[0].mxu0 %v1712
    %v1780 = vpop.f32.mrb[0].mxu0
    %v1781 = vadd.f32 0.0, %v1780
    %v1782 = vpop.f32.mrb[0].mxu0
    %v1783 = vadd.f32 0.0, %v1782
    %1784 = vdwg.mxu0
    %1785 = vmatprep.subr.mxu0 0.0
    %1786 = vmatpush1.msra.mxu0 %v479
    %1787 = vmatprep.subr.mxu0 0.0
    %1788 = vmatpush1.msra.mxu0 %v482
    %1789 = vmatprep.subr.mxu0 0.0
    %1790 = vmatpush1.msra.mxu0 %v485
    %1791 = vmatprep.subr.mxu0 0.0
    %1792 = vmatpush1.msra.mxu0 %v488
    %1793 = vmatprep.subr.mxu0 0.0
    %1794 = vmatpush1.msra.mxu0 %v491
    %1795 = vmatprep.subr.mxu0 0.0
    %1796 = vmatpush1.msra.mxu0 %v494
    %1797 = vmatprep.subr.mxu0 0.0
    %1798 = vmatpush1.msra.mxu0 %v497
    %1799 = vmatprep.subr.mxu0 0.0
    %1800 = vmatpush1.msra.mxu0 %v500
    %1801 = vmatprep.subr.mxu0 0.0
    %1802 = vmatpush1.msra.mxu0 %v503
    %1803 = vmatprep.subr.mxu0 0.0
    %1804 = vmatpush1.msra.mxu0 %v506
    %1805 = vmatprep.subr.mxu0 0.0
    %1806 = vmatpush1.msra.mxu0 %v509
    %1807 = vmatprep.subr.mxu0 0.0
    %1808 = vmatpush1.msra.mxu0 %v512
    %1809 = vmatprep.subr.mxu0 0.0
    %1810 = vmatpush1.msra.mxu0 %v515
    %1811 = vmatprep.subr.mxu0 0.0
    %1812 = vmatpush1.msra.mxu0 %v518
    %1813 = vmatprep.subr.mxu0 0.0
    %1814 = vmatpush1.msra.mxu0 %v521
    %1815 = vmatprep.subr.mxu0 0.0
    %1816 = vmatpush1.msra.mxu0 %v524
    %1817 = vmatprep.subr.mxu0 0.0
    %1818 = vmatpush1.msra.mxu0 0.0
    %1819 = vmatprep.subr.mxu0 0.0
    %1820 = vmatpush1.msra.mxu0 0.0
    %1821 = vmatprep.subr.mxu0 0.0
    %1822 = vmatpush1.msra.mxu0 0.0
    %1823 = vmatprep.subr.mxu0 0.0
    %1824 = vmatpush1.msra.mxu0 0.0
    %1825 = vmatprep.subr.mxu0 0.0
    %1826 = vmatpush1.msra.mxu0 0.0
    %1827 = vmatprep.subr.mxu0 0.0
    %1828 = vmatpush1.msra.mxu0 0.0
    %1829 = vmatprep.subr.mxu0 0.0
    %1830 = vmatpush1.msra.mxu0 0.0
    %1831 = vmatprep.subr.mxu0 0.0
    %1832 = vmatpush1.msra.mxu0 0.0
    %1833 = vmatprep.subr.mxu0 0.0
    %1834 = vmatpush1.msra.mxu0 0.0
    %1835 = vmatprep.subr.mxu0 0.0
    %1836 = vmatpush1.msra.mxu0 0.0
    %1837 = vmatprep.subr.mxu0 0.0
    %1838 = vmatpush1.msra.mxu0 0.0
    %1839 = vmatprep.subr.mxu0 0.0
    %1840 = vmatpush1.msra.mxu0 0.0
    %1841 = vmatprep.subr.mxu0 0.0
    %1842 = vmatpush1.msra.mxu0 0.0
    %1843 = vmatprep.subr.mxu0 0.0
    %1844 = vmatpush1.msra.mxu0 0.0
    %1845 = vmatprep.subr.mxu0 0.0
    %1846 = vmatpush1.msra.mxu0 0.0
    %1847 = vmatprep.subr.mxu0 0.0
    %1848 = vmatpush1.msra.mxu0 0.0
    %1849 = vmatprep.mubr.f32.mxu0 0.0
    %1850 = vmatmul.mubr.f32.gmra.mrb[0].mxu0 %v1712
    %v1851 = vpop.f32.mrb[0].mxu0
    %v1852 = vadd.f32 0.0, %v1851
    %v1853 = vpop.f32.mrb[0].mxu0
    %1854 = vdwg.mxu0
    %v1858 = vcombine.low %v1781, %v1783
    %v1860 = vunpack.c.l.s4 1983009808
    %v1861 = vunpack.c.0.s8 %v1860
    %v1862 = vlaneseq
    %v1863 = vshrl.u32 %v1862, 7
    %v1864 = vsub.s32 %v1861, %v1863
    %v1865 = vrot.slane %v1858, %v1864
    %v1867 = vunpack.c.l.s4 1983009808
    %v1868 = vunpack.c.0.s8 %v1867
    %v1869 = vlaneseq
    %v1870 = vshrl.u32 %v1869, 7
    %v1871 = vsub.s32 %v1868, %v1870
    %v1872 = vrot.slane %v1852, %v1871
    %v1873 = vcombine.low %v1865, %v1872
    %v1875 = vadd.f32 %v1708, %v1873
    %1876 = vmatprep.subr.mxu0 %v526
    %1877 = vmatpush1.msra.mxu0 %v525
    %1878 = vmatprep.subr.mxu0 %v529
    %1879 = vmatpush1.msra.mxu0 %v528
    %1880 = vmatprep.subr.mxu0 %v532
    %1881 = vmatpush1.msra.mxu0 %v531
    %1882 = vmatprep.subr.mxu0 %v535
    %1883 = vmatpush1.msra.mxu0 %v534
    %1884 = vmatprep.subr.mxu0 %v538
    %1885 = vmatpush1.msra.mxu0 %v537
    %1886 = vmatprep.subr.mxu0 %v541
    %1887 = vmatpush1.msra.mxu0 %v540
    %1888 = vmatprep.subr.mxu0 %v544
    %1889 = vmatpush1.msra.mxu0 %v543
    %1890 = vmatprep.subr.mxu0 %v547
    %1891 = vmatpush1.msra.mxu0 %v546
    %1892 = vmatprep.subr.mxu0 %v550
    %1893 = vmatpush1.msra.mxu0 %v549
    %1894 = vmatprep.subr.mxu0 %v553
    %1895 = vmatpush1.msra.mxu0 %v552
    %1896 = vmatprep.subr.mxu0 %v556
    %1897 = vmatpush1.msra.mxu0 %v555
    %1898 = vmatprep.subr.mxu0 %v559
    %1899 = vmatpush1.msra.mxu0 %v558
    %1900 = vmatprep.subr.mxu0 %v562
    %1901 = vmatpush1.msra.mxu0 %v561
    %1902 = vmatprep.subr.mxu0 %v565
    %1903 = vmatpush1.msra.mxu0 %v564
    %1904 = vmatprep.subr.mxu0 %v568
    %1905 = vmatpush1.msra.mxu0 %v567
    %1906 = vmatprep.subr.mxu0 %v571
    %1907 = vmatpush1.msra.mxu0 %v570
    %1908 = vmatprep.subr.mxu0 0.0
    %1909 = vmatpush1.msra.mxu0 0.0
    %1910 = vmatprep.subr.mxu0 0.0
    %1911 = vmatpush1.msra.mxu0 0.0
    %1912 = vmatprep.subr.mxu0 0.0
    %1913 = vmatpush1.msra.mxu0 0.0
    %1914 = vmatprep.subr.mxu0 0.0
    %1915 = vmatpush1.msra.mxu0 0.0
    %1916 = vmatprep.subr.mxu0 0.0
    %1917 = vmatpush1.msra.mxu0 0.0
    %1918 = vmatprep.subr.mxu0 0.0
    %1919 = vmatpush1.msra.mxu0 0.0
    %1920 = vmatprep.subr.mxu0 0.0
    %1921 = vmatpush1.msra.mxu0 0.0
    %1922 = vmatprep.subr.mxu0 0.0
    %1923 = vmatpush1.msra.mxu0 0.0
    %1924 = vmatprep.subr.mxu0 0.0
    %1925 = vmatpush1.msra.mxu0 0.0
    %1926 = vmatprep.subr.mxu0 0.0
    %1927 = vmatpush1.msra.mxu0 0.0
    %1928 = vmatprep.subr.mxu0 0.0
    %1929 = vmatpush1.msra.mxu0 0.0
    %1930 = vmatprep.subr.mxu0 0.0
    %1931 = vmatpush1.msra.mxu0 0.0
    %1932 = vmatprep.subr.mxu0 0.0
    %1933 = vmatpush1.msra.mxu0 0.0
    %1934 = vmatprep.subr.mxu0 0.0
    %1935 = vmatpush1.msra.mxu0 0.0
    %1936 = vmatprep.subr.mxu0 0.0
    %1937 = vmatpush1.msra.mxu0 0.0
    %1938 = vmatprep.subr.mxu0 0.0
    %1939 = vmatpush1.msra.mxu0 0.0
    %1940 = vmatprep.mubr.f32.mxu0 0.0
    %1941 = vmatmul.mubr.f32.gmra.mrb[0].mxu0 %v1335
    %v1942 = vpop.f32.mrb[0].mxu0
    %v1943 = vadd.f32 %v1157, %v1942
    %v1944 = vpop.f32.mrb[0].mxu0
    %v1945 = vadd.f32 %v1161, %v1944
    %1946 = vdwg.mxu0
    %1947 = vmatprep.subr.mxu0 0.0
    %1948 = vmatpush1.msra.mxu0 %v527
    %1949 = vmatprep.subr.mxu0 0.0
    %1950 = vmatpush1.msra.mxu0 %v530
    %1951 = vmatprep.subr.mxu0 0.0
    %1952 = vmatpush1.msra.mxu0 %v533
    %1953 = vmatprep.subr.mxu0 0.0
    %1954 = vmatpush1.msra.mxu0 %v536
    %1955 = vmatprep.subr.mxu0 0.0
    %1956 = vmatpush1.msra.mxu0 %v539
    %1957 = vmatprep.subr.mxu0 0.0
    %1958 = vmatpush1.msra.mxu0 %v542
    %1959 = vmatprep.subr.mxu0 0.0
    %1960 = vmatpush1.msra.mxu0 %v545
    %1961 = vmatprep.subr.mxu0 0.0
    %1962 = vmatpush1.msra.mxu0 %v548
    %1963 = vmatprep.subr.mxu0 0.0
    %1964 = vmatpush1.msra.mxu0 %v551
    %1965 = vmatprep.subr.mxu0 0.0
    %1966 = vmatpush1.msra.mxu0 %v554
    %1967 = vmatprep.subr.mxu0 0.0
    %1968 = vmatpush1.msra.mxu0 %v557
    %1969 = vmatprep.subr.mxu0 0.0
    %1970 = vmatpush1.msra.mxu0 %v560
    %1971 = vmatprep.subr.mxu0 0.0
    %1972 = vmatpush1.msra.mxu0 %v563
    %1973 = vmatprep.subr.mxu0 0.0
    %1974 = vmatpush1.msra.mxu0 %v566
    %1975 = vmatprep.subr.mxu0 0.0
    %1976 = vmatpush1.msra.mxu0 %v569
    %1977 = vmatprep.subr.mxu0 0.0
    %1978 = vmatpush1.msra.mxu0 %v572
    %1979 = vmatprep.subr.mxu0 0.0
    %1980 = vmatpush1.msra.mxu0 0.0
    %1981 = vmatprep.subr.mxu0 0.0
    %1982 = vmatpush1.msra.mxu0 0.0
    %1983 = vmatprep.subr.mxu0 0.0
    %1984 = vmatpush1.msra.mxu0 0.0
    %1985 = vmatprep.subr.mxu0 0.0
    %1986 = vmatpush1.msra.mxu0 0.0
    %1987 = vmatprep.subr.mxu0 0.0
    %1988 = vmatpush1.msra.mxu0 0.0
    %1989 = vmatprep.subr.mxu0 0.0
    %1990 = vmatpush1.msra.mxu0 0.0
    %1991 = vmatprep.subr.mxu0 0.0
    %1992 = vmatpush1.msra.mxu0 0.0
    %1993 = vmatprep.subr.mxu0 0.0
    %1994 = vmatpush1.msra.mxu0 0.0
    %1995 = vmatprep.subr.mxu0 0.0
    %1996 = vmatpush1.msra.mxu0 0.0
    %1997 = vmatprep.subr.mxu0 0.0
    %1998 = vmatpush1.msra.mxu0 0.0
    %1999 = vmatprep.subr.mxu0 0.0
    %2000 = vmatpush1.msra.mxu0 0.0
    %2001 = vmatprep.subr.mxu0 0.0
    %2002 = vmatpush1.msra.mxu0 0.0
    %2003 = vmatprep.subr.mxu0 0.0
    %2004 = vmatpush1.msra.mxu0 0.0
    %2005 = vmatprep.subr.mxu0 0.0
    %2006 = vmatpush1.msra.mxu0 0.0
    %2007 = vmatprep.subr.mxu0 0.0
    %2008 = vmatpush1.msra.mxu0 0.0
    %2009 = vmatprep.subr.mxu0 0.0
    %2010 = vmatpush1.msra.mxu0 0.0
    %2011 = vmatprep.mubr.f32.mxu0 0.0
    %2012 = vmatmul.mubr.f32.gmra.mrb[0].mxu0 %v1335
    %v2013 = vpop.f32.mrb[0].mxu0
    %v2014 = vadd.f32 %v1165, %v2013
    %v2015 = vpop.f32.mrb[0].mxu0
    %2016 = vdwg.mxu0
    %v2017 = vadd.f32 %v1875, %v1943
    %v2018 = vxor.u32 %v2017, 2147483648
    %v2019 = vmul.f32 %v2018, 1.442695
    %v2020 = vpow.pop %v2019
    %v2021 = vadd.f32 %v2020, 1.0
    %v2022 = vrcp.pop %v2021
    %v2023 = vmul.f32 1.0, %v2022
    %v2025 = vrot.slane %v1875, 2
    %v2027 = vadd.f32 %v2025, %v1945
    %v2028 = vxor.u32 %v2027, 2147483648
    %v2029 = vmul.f32 %v2028, 1.442695
    %v2030 = vpow.pop %v2029
    %v2031 = vadd.f32 %v2030, 1.0
    %v2032 = vrcp.pop %v2031
    %v2033 = vmul.f32 1.0, %v2032
    %v2034 = vmul.f32 %v2023, %v2014
    %v2035 = vrot.slane %v1875, 4
    %v2037 = vadd.f32 %v2035, %v2034
    %v2038 = vtanh.pop %v2037
    %v2039 = vsub.f32 1.0, %v2033
    %v2040 = vmul.f32 %v2039, %v2038
    %v2041 = vmul.f32 %v2033, %v1335
    %v2042 = vadd.f32 %v2040, %v2041
    %s2043 = scalar_lea.vmem [#allocation3], 2
    %2044 = vst [vmem:[%s2043] sm:$0x3] %v2042
    %2045 = vmatprep.subr.mxu0 0.0
    %2046 = vmatpush1.msra.mxu0 %v461
    %2047 = vmatprep.subr.mxu0 0.0
    %2048 = vmatpush1.msra.mxu0 %v462
    %2049 = vmatprep.subr.mxu0 0.0
    %2050 = vmatpush1.msra.mxu0 %v463
    %2051 = vmatprep.subr.mxu0 0.0
    %2052 = vmatpush1.msra.mxu0 %v464
    %2053 = vmatprep.subr.mxu0 0.0
    %2054 = vmatpush1.msra.mxu0 %v465
    %2055 = vmatprep.subr.mxu0 0.0
    %2056 = vmatpush1.msra.mxu0 %v466
    %2057 = vmatprep.subr.mxu0 0.0
    %2058 = vmatpush1.msra.mxu0 %v467
    %2059 = vmatprep.subr.mxu0 0.0
    %2060 = vmatpush1.msra.mxu0 %v468
    %2061 = vmatprep.subr.mxu0 0.0
    %2062 = vmatpush1.msra.mxu0 %v469
    %2063 = vmatprep.subr.mxu0 0.0
    %2064 = vmatpush1.msra.mxu0 %v470
    %2065 = vmatprep.subr.mxu0 0.0
    %2066 = vmatpush1.msra.mxu0 %v471
    %2067 = vmatprep.subr.mxu0 0.0
    %2068 = vmatpush1.msra.mxu0 %v472
    %2069 = vmatprep.subr.mxu0 0.0
    %2070 = vmatpush1.msra.mxu0 %v473
    %2071 = vmatprep.subr.mxu0 0.0
    %2072 = vmatpush1.msra.mxu0 %v474
    %2073 = vmatprep.subr.mxu0 0.0
    %2074 = vmatpush1.msra.mxu0 %v475
    %2075 = vmatprep.subr.mxu0 0.0
    %2076 = vmatpush1.msra.mxu0 %v476
    %2077 = vmatprep.subr.mxu0 0.0
    %2078 = vmatpush1.msra.mxu0 0.0
    %2079 = vmatprep.subr.mxu0 0.0
    %2080 = vmatpush1.msra.mxu0 0.0
    %2081 = vmatprep.subr.mxu0 0.0
    %2082 = vmatpush1.msra.mxu0 0.0
    %2083 = vmatprep.subr.mxu0 0.0
    %2084 = vmatpush1.msra.mxu0 0.0
    %2085 = vmatprep.subr.mxu0 0.0
    %2086 = vmatpush1.msra.mxu0 0.0
    %2087 = vmatprep.subr.mxu0 0.0
    %2088 = vmatpush1.msra.mxu0 0.0
    %2089 = vmatprep.subr.mxu0 0.0
    %2090 = vmatpush1.msra.mxu0 0.0
    %2091 = vmatprep.subr.mxu0 0.0
    %2092 = vmatpush1.msra.mxu0 0.0
    %2093 = vmatprep.subr.mxu0 0.0
    %2094 = vmatpush1.msra.mxu0 0.0
    %2095 = vmatprep.subr.mxu0 0.0
    %2096 = vmatpush1.msra.mxu0 0.0
    %2097 = vmatprep.subr.mxu0 0.0
    %2098 = vmatpush1.msra.mxu0 0.0
    %2099 = vmatprep.subr.mxu0 0.0
    %2100 = vmatpush1.msra.mxu0 0.0
    %2101 = vmatprep.subr.mxu0 0.0
    %2102 = vmatpush1.msra.mxu0 0.0
    %2103 = vmatprep.subr.mxu0 0.0
    %2104 = vmatpush1.msra.mxu0 0.0
    %2105 = vmatprep.subr.mxu0 0.0
    %2106 = vmatpush1.msra.mxu0 0.0
    %2107 = vmatprep.subr.mxu0 0.0
    %2108 = vmatpush1.msra.mxu0 0.0
    %2109 = vmatprep.mubr.f32.mxu0 0.0
    %2110 = vmatmul.mubr.f32.gmra.mrb[0].mxu0 %v2042
    %v2111 = vpop.f32.mrb[0].mxu0
    %v2112 = vadd.f32 0.0, %v2111
    %v2113 = vpop.f32.mrb[0].mxu0
    %2114 = vdwg.mxu0
    %v2117 = vunpack.c.l.s4 1966171168
    %v2118 = vunpack.c.0.s8 %v2117
    %v2119 = vlaneseq
    %v2120 = vshrl.u32 %v2119, 7
    %v2121 = vsub.s32 %v2118, %v2120
    %v2122 = vrot.slane %v2112, %v2121
    %v2123 = vcombine.high %v2122, %v2122
    %v2125 = vunpack.c.l.s4 1966171168
    %v2126 = vunpack.c.0.s8 %v2125
    %v2127 = vlaneseq
    %v2128 = vshrl.u32 %v2127, 7
    %v2129 = vsub.s32 %v2126, %v2128
    %v2130 = vrot.slane %v2122, %v2129
    %v2132 = vunpack.c.l.s4 1966171168
    %v2133 = vunpack.c.0.s8 %v2132
    %v2134 = vlaneseq
    %v2135 = vshrl.u32 %v2134, 7
    %v2136 = vsub.s32 %v2133, %v2135
    %v2137 = vrot.slane %v2123, %v2136
    %v2138 = vlaneseq
    %v2139 = vshrl.u32 %v2138, 7
    %v2140 = vsub.s32 0, %v2139
    %v2141 = vrot.slane %v2130, %v2140
    %v2142 = vlaneseq
    %v2143 = vshrl.u32 %v2142, 7
    %v2144 = vsub.s32 0, %v2143
    %v2145 = vrot.slane %v2137, %v2144
    %v2148 = vadd.f32 %v2141, %v155
    %v2149 = vadd.f32 %v2141, %v158
    %v2150 = vadd.f32 %v2145, %v163
    %v2151 = vadd.f32 %v2145, %v166
    %v2152 = vtanh.pop %v2148
    %v2153 = vtanh.pop %v2149
    %v2154 = vtanh.pop %v2150
    %v2155 = vtanh.pop %v2151
    %v2156 = vmul.f32 %v2152, %v690
    %v2157 = vmul.f32 %v2153, %v690
    %v2158 = vmul.f32 %v2154, %v690
    %v2159 = vmul.f32 %v2155, %v690
    %2160 = vadd.xlane.f32.xlu0 %v2156
    %v2161 = vpop.xlane.xlu0 %2160
    %2162 = vadd.xlane.f32.xlu0 %v2157
    %v2163 = vpop.xlane.xlu0 %2162
    %2164 = vadd.xlane.f32.xlu0 %v2158
    %v2165 = vpop.xlane.xlu0 %2164
    %2166 = vadd.xlane.f32.xlu0 %v2159
    %v2167 = vpop.xlane.xlu0 %2166
    %v2168 = vadd.f32 %v2161, %v711
    %v2169 = vadd.f32 %v2163, %v715
    %v2170 = vadd.f32 %v2165, %v722
    %v2171 = vadd.f32 %v2167, %v726
    %2176 = vset.pattern.permute.xlu0 0
    %2177 = vperm.xlu0 %2176, %v2168
    %v2178 = vpop.permute.xlu0 %2177
    %2179 = vset.pattern.permute.xlu0 0
    %2180 = vperm.xlu0 %2179, %v2169
    %v2181 = vpop.permute.xlu0 %2180
    %2182 = vset.pattern.permute.xlu0 0
    %2183 = vperm.xlu0 %2182, %v2170
    %v2184 = vpop.permute.xlu0 %2183
    %2185 = vset.pattern.permute.xlu0 0
    %2186 = vperm.xlu0 %2185, %v2171
    %v2187 = vpop.permute.xlu0 %2186
    %v2188 = vlaneseq
    %v2189 = vshrl.u32 %v2188, 7
    %v2190 = vsub.s32 %v752, %v2189
    %v2191 = vrot.slane %v2178, %v2190
    %v2192 = vlaneseq
    %v2193 = vshrl.u32 %v2192, 7
    %v2194 = vsub.s32 %v757, %v2193
    %v2195 = vrot.slane %v2181, %v2194
    %v2196 = vsel %vm762, %v2195, %v2191
    %v2197 = vlaneseq
    %v2198 = vshrl.u32 %v2197, 7
    %v2199 = vsub.s32 %v752, %v2198
    %v2200 = vrot.slane %v2184, %v2199
    %v2201 = vlaneseq
    %v2202 = vshrl.u32 %v2201, 7
    %v2203 = vsub.s32 %v757, %v2202
    %v2204 = vrot.slane %v2187, %v2203
    %v2205 = vsel %vm762, %v2204, %v2200
    %v2206 = vsel %vm773, %v2205, %v2196
    %v2208 = vsel %vm776, %v2206, -inf
    %2209 = vmax.xlane.f32.xlu0 %v2208
    %v2210 = vpop.xlane.xlu0 %2209
    %v2212 = vlaneseq
    %v2213 = vshrl.u32 %v2212, 7
    %v2214 = vsub.s32 0, %v2213
    %v2215 = vrot.slane %v2210, %v2214
    %v2216 = vlaneseq
    %v2217 = vshrl.u32 %v2216, 7
    %v2218 = vsub.s32 1, %v2217
    %v2219 = vrot.slane %v2210, %v2218
    %v2222 = vsub.f32 %v2168, %v2215
    %v2223 = vsub.f32 %v2169, %v2215
    %v2224 = vsub.f32 %v2170, %v2219
    %v2225 = vsub.f32 %v2171, %v2219
    %v2226 = vmul.f32 %v2222, 1.442695
    %v2227 = vpow.pop %v2226
    %v2228 = vmul.f32 %v2223, 1.442695
    %v2229 = vpow.pop %v2228
    %v2230 = vmul.f32 %v2224, 1.442695
    %v2231 = vpow.pop %v2230
    %v2232 = vmul.f32 %v2225, 1.442695
    %v2233 = vpow.pop %v2232
    %2238 = vset.pattern.permute.xlu0 0
    %2239 = vperm.xlu0 %2238, %v2227
    %v2240 = vpop.permute.xlu0 %2239
    %2241 = vset.pattern.permute.xlu0 0
    %2242 = vperm.xlu0 %2241, %v2229
    %v2243 = vpop.permute.xlu0 %2242
    %2244 = vset.pattern.permute.xlu0 0
    %2245 = vperm.xlu0 %2244, %v2231
    %v2246 = vpop.permute.xlu0 %2245
    %2247 = vset.pattern.permute.xlu0 0
    %2248 = vperm.xlu0 %2247, %v2233
    %v2249 = vpop.permute.xlu0 %2248
    %v2250 = vlaneseq
    %v2251 = vshrl.u32 %v2250, 7
    %v2252 = vsub.s32 %v752, %v2251
    %v2253 = vrot.slane %v2240, %v2252
    %v2254 = vlaneseq
    %v2255 = vshrl.u32 %v2254, 7
    %v2256 = vsub.s32 %v757, %v2255
    %v2257 = vrot.slane %v2243, %v2256
    %v2258 = vsel %vm762, %v2257, %v2253
    %v2259 = vlaneseq
    %v2260 = vshrl.u32 %v2259, 7
    %v2261 = vsub.s32 %v752, %v2260
    %v2262 = vrot.slane %v2246, %v2261
    %v2263 = vlaneseq
    %v2264 = vshrl.u32 %v2263, 7
    %v2265 = vsub.s32 %v757, %v2264
    %v2266 = vrot.slane %v2249, %v2265
    %v2267 = vsel %vm762, %v2266, %v2262
    %v2268 = vsel %vm773, %v2267, %v2258
    %v2270 = vsel %vm776, %v2268, 0.0
    %2271 = vadd.xlane.f32.xlu0 %v2270
    %v2272 = vpop.xlane.xlu0 %2271
    %v2273 = vrcp.pop %v2272
    %v2275 = vlaneseq
    %v2276 = vshrl.u32 %v2275, 7
    %v2277 = vsub.s32 0, %v2276
    %v2278 = vrot.slane %v2273, %v2277
    %v2279 = vlaneseq
    %v2280 = vshrl.u32 %v2279, 7
    %v2281 = vsub.s32 1, %v2280
    %v2282 = vrot.slane %v2273, %v2281
    %v2285 = vmul.f32 %v2227, %v2278
    %v2286 = vmul.f32 %v2229, %v2278
    %v2287 = vmul.f32 %v2231, %v2282
    %v2288 = vmul.f32 %v2233, %v2282
    %v2289 = vpack.c.bf16 %v2286, %v2285
    %v2290 = vpack.c.bf16 %v2288, %v2287
    %v2292 = vunpack.c.l.b16 %v2289
    %v2293 = vunpack.c.h.b16 %v2289
    %2294 = vset.pattern.permute.xlu0 0
    %2295 = vperm.xlu0 %2294, %v2292
    %v2296 = vpop.permute.xlu0 %2295
    %2297 = vset.pattern.permute.xlu0 0
    %2298 = vperm.xlu0 %2297, %v2293
    %v2299 = vpop.permute.xlu0 %2298
    %v2300 = vlaneseq
    %v2301 = vshrl.u32 %v2300, 7
    %v2302 = vsub.s32 %v752, %v2301
    %v2303 = vrot.slane %v2296, %v2302
    %v2304 = vlaneseq
    %v2305 = vshrl.u32 %v2304, 7
    %v2306 = vsub.s32 %v757, %v2305
    %v2307 = vrot.slane %v2299, %v2306
    %v2308 = vsel %vm762, %v2307, %v2303
    %v2309 = vpack.c.b16 %v2308, %v2308
    %v2311 = vsel %vm879, %v2309, 0
    %2313 = vmatprep.subr.bf16.mxu0 0
    %2314 = vmatpush1.bf16.msra.mxu0 %v94
    %2315 = vmatprep.subr.bf16.mxu0 0
    %2316 = vmatpush1.bf16.msra.mxu0 0
    %2317 = vmatprep.subr.bf16.mxu0 0
    %2318 = vmatpush1.bf16.msra.mxu0 0
    %2319 = vmatprep.subr.bf16.mxu0 0
    %2320 = vmatpush1.bf16.msra.mxu0 0
    %2321 = vmatprep.subr.bf16.mxu0 0
    %2322 = vmatpush1.bf16.msra.mxu0 0
    %2323 = vmatprep.subr.bf16.mxu0 0
    %2324 = vmatpush1.bf16.msra.mxu0 0
    %2325 = vmatprep.subr.bf16.mxu0 0
    %2326 = vmatpush1.bf16.msra.mxu0 0
    %2327 = vmatprep.subr.bf16.mxu0 0
    %2328 = vmatpush1.bf16.msra.mxu0 0
    %2329 = vmatprep.subr.bf16.mxu0 0
    %2330 = vmatpush1.bf16.msra.mxu0 0
    %2331 = vmatprep.subr.bf16.mxu0 0
    %2332 = vmatpush1.bf16.msra.mxu0 0
    %2333 = vmatprep.subr.bf16.mxu0 0
    %2334 = vmatpush1.bf16.msra.mxu0 0
    %2335 = vmatprep.subr.bf16.mxu0 0
    %2336 = vmatpush1.bf16.msra.mxu0 0
    %2337 = vmatprep.subr.bf16.mxu0 0
    %2338 = vmatpush1.bf16.msra.mxu0 0
    %2339 = vmatprep.subr.bf16.mxu0 0
    %2340 = vmatpush1.bf16.msra.mxu0 0
    %2341 = vmatprep.subr.bf16.mxu0 0
    %2342 = vmatpush1.bf16.msra.mxu0 0
    %2343 = vmatprep.subr.bf16.mxu0 0
    %2344 = vmatpush1.bf16.msra.mxu0 0
    %2345 = vmatprep.mubr.bf16.mxu0 0
    %2346 = vmatmul.mubr.bf16.gmra.mrb[0].mxu0 %v2311
    %v2347 = vpop.f32.mrb[0].mxu0
    %v2348 = vadd.f32 0.0, %v2347
    %v2349 = vpop.f32.mrb[0].mxu0
    %v2350 = vpop.f32.mrb[0].mxu0
    %v2351 = vpop.f32.mrb[0].mxu0
    %2352 = vdwg.mxu0
    %v2354 = vunpack.c.l.b16 %v2290
    %v2355 = vunpack.c.h.b16 %v2290
    %2356 = vset.pattern.permute.xlu0 0
    %2357 = vperm.xlu0 %2356, %v2354
    %v2358 = vpop.permute.xlu0 %2357
    %2359 = vset.pattern.permute.xlu0 0
    %2360 = vperm.xlu0 %2359, %v2355
    %v2361 = vpop.permute.xlu0 %2360
    %v2362 = vlaneseq
    %v2363 = vshrl.u32 %v2362, 7
    %v2364 = vsub.s32 %v752, %v2363
    %v2365 = vrot.slane %v2358, %v2364
    %v2366 = vlaneseq
    %v2367 = vshrl.u32 %v2366, 7
    %v2368 = vsub.s32 %v757, %v2367
    %v2369 = vrot.slane %v2361, %v2368
    %v2370 = vsel %vm762, %v2369, %v2365
    %v2371 = vpack.c.b16 %v2370, %v2370
    %v2373 = vsel %vm879, %v2371, 0
    %2375 = vmatprep.subr.bf16.mxu0 0
    %2376 = vmatpush1.bf16.msra.mxu0 %v95
    %2377 = vmatprep.subr.bf16.mxu0 0
    %2378 = vmatpush1.bf16.msra.mxu0 0
    %2379 = vmatprep.subr.bf16.mxu0 0
    %2380 = vmatpush1.bf16.msra.mxu0 0
    %2381 = vmatprep.subr.bf16.mxu0 0
    %2382 = vmatpush1.bf16.msra.mxu0 0
    %2383 = vmatprep.subr.bf16.mxu0 0
    %2384 = vmatpush1.bf16.msra.mxu0 0
    %2385 = vmatprep.subr.bf16.mxu0 0
    %2386 = vmatpush1.bf16.msra.mxu0 0
    %2387 = vmatprep.subr.bf16.mxu0 0
    %2388 = vmatpush1.bf16.msra.mxu0 0
    %2389 = vmatprep.subr.bf16.mxu0 0
    %2390 = vmatpush1.bf16.msra.mxu0 0
    %2391 = vmatprep.subr.bf16.mxu0 0
    %2392 = vmatpush1.bf16.msra.mxu0 0
    %2393 = vmatprep.subr.bf16.mxu0 0
    %2394 = vmatpush1.bf16.msra.mxu0 0
    %2395 = vmatprep.subr.bf16.mxu0 0
    %2396 = vmatpush1.bf16.msra.mxu0 0
    %2397 = vmatprep.subr.bf16.mxu0 0
    %2398 = vmatpush1.bf16.msra.mxu0 0
    %2399 = vmatprep.subr.bf16.mxu0 0
    %2400 = vmatpush1.bf16.msra.mxu0 0
    %2401 = vmatprep.subr.bf16.mxu0 0
    %2402 = vmatpush1.bf16.msra.mxu0 0
    %2403 = vmatprep.subr.bf16.mxu0 0
    %2404 = vmatpush1.bf16.msra.mxu0 0
    %2405 = vmatprep.subr.bf16.mxu0 0
    %2406 = vmatpush1.bf16.msra.mxu0 0
    %2407 = vmatprep.mubr.bf16.mxu0 0
    %2408 = vmatmul.mubr.bf16.gmra.mrb[0].mxu0 %v2373
    %v2409 = vpop.f32.mrb[0].mxu0
    %v2410 = vadd.f32 0.0, %v2409
    %v2411 = vpop.f32.mrb[0].mxu0
    %v2412 = vpop.f32.mrb[0].mxu0
    %v2413 = vpop.f32.mrb[0].mxu0
    %2414 = vdwg.mxu0
    %s2415 = scalar_lea.vmem [#allocation2], 12
    %v2416 = vld [vmem:[%s2415] sm:$0x3f]
    %v2419 = vrot.slane %v2410, 7
    %v2420 = vsel %vm773, %v2419, %v2348
    %2422 = vmatprep.subr.mxu0 %v478
    %2423 = vmatpush1.msra.mxu0 %v477
    %2424 = vmatprep.subr.mxu0 %v481
    %2425 = vmatpush1.msra.mxu0 %v480
    %2426 = vmatprep.subr.mxu0 %v484
    %2427 = vmatpush1.msra.mxu0 %v483
    %2428 = vmatprep.subr.mxu0 %v487
    %2429 = vmatpush1.msra.mxu0 %v486
    %2430 = vmatprep.subr.mxu0 %v490
    %2431 = vmatpush1.msra.mxu0 %v489
    %2432 = vmatprep.subr.mxu0 %v493
    %2433 = vmatpush1.msra.mxu0 %v492
    %2434 = vmatprep.subr.mxu0 %v496
    %2435 = vmatpush1.msra.mxu0 %v495
    %2436 = vmatprep.subr.mxu0 %v499
    %2437 = vmatpush1.msra.mxu0 %v498
    %2438 = vmatprep.subr.mxu0 %v502
    %2439 = vmatpush1.msra.mxu0 %v501
    %2440 = vmatprep.subr.mxu0 %v505
    %2441 = vmatpush1.msra.mxu0 %v504
    %2442 = vmatprep.subr.mxu0 %v508
    %2443 = vmatpush1.msra.mxu0 %v507
    %2444 = vmatprep.subr.mxu0 %v511
    %2445 = vmatpush1.msra.mxu0 %v510
    %2446 = vmatprep.subr.mxu0 %v514
    %2447 = vmatpush1.msra.mxu0 %v513
    %2448 = vmatprep.subr.mxu0 %v517
    %2449 = vmatpush1.msra.mxu0 %v516
    %2450 = vmatprep.subr.mxu0 %v520
    %2451 = vmatpush1.msra.mxu0 %v519
    %2452 = vmatprep.subr.mxu0 %v523
    %2453 = vmatpush1.msra.mxu0 %v522
    %2454 = vmatprep.subr.mxu0 0.0
    %2455 = vmatpush1.msra.mxu0 0.0
    %2456 = vmatprep.subr.mxu0 0.0
    %2457 = vmatpush1.msra.mxu0 0.0
    %2458 = vmatprep.subr.mxu0 0.0
    %2459 = vmatpush1.msra.mxu0 0.0
    %2460 = vmatprep.subr.mxu0 0.0
    %2461 = vmatpush1.msra.mxu0 0.0
    %2462 = vmatprep.subr.mxu0 0.0
    %2463 = vmatpush1.msra.mxu0 0.0
    %2464 = vmatprep.subr.mxu0 0.0
    %2465 = vmatpush1.msra.mxu0 0.0
    %2466 = vmatprep.subr.mxu0 0.0
    %2467 = vmatpush1.msra.mxu0 0.0
    %2468 = vmatprep.subr.mxu0 0.0
    %2469 = vmatpush1.msra.mxu0 0.0
    %2470 = vmatprep.subr.mxu0 0.0
    %2471 = vmatpush1.msra.mxu0 0.0
    %2472 = vmatprep.subr.mxu0 0.0
    %2473 = vmatpush1.msra.mxu0 0.0
    %2474 = vmatprep.subr.mxu0 0.0
    %2475 = vmatpush1.msra.mxu0 0.0
    %2476 = vmatprep.subr.mxu0 0.0
    %2477 = vmatpush1.msra.mxu0 0.0
    %2478 = vmatprep.subr.mxu0 0.0
    %2479 = vmatpush1.msra.mxu0 0.0
    %2480 = vmatprep.subr.mxu0 0.0
    %2481 = vmatpush1.msra.mxu0 0.0
    %2482 = vmatprep.subr.mxu0 0.0
    %2483 = vmatpush1.msra.mxu0 0.0
    %2484 = vmatprep.subr.mxu0 0.0
    %2485 = vmatpush1.msra.mxu0 0.0
    %2486 = vmatprep.mubr.f32.mxu0 0.0
    %2487 = vmatmul.mubr.f32.gmra.mrb[0].mxu0 %v2420
    %v2488 = vpop.f32.mrb[0].mxu0
    %v2489 = vadd.f32 0.0, %v2488
    %v2490 = vpop.f32.mrb[0].mxu0
    %v2491 = vadd.f32 0.0, %v2490
    %2492 = vdwg.mxu0
    %2493 = vmatprep.subr.mxu0 0.0
    %2494 = vmatpush1.msra.mxu0 %v479
    %2495 = vmatprep.subr.mxu0 0.0
    %2496 = vmatpush1.msra.mxu0 %v482
    %2497 = vmatprep.subr.mxu0 0.0
    %2498 = vmatpush1.msra.mxu0 %v485
    %2499 = vmatprep.subr.mxu0 0.0
    %2500 = vmatpush1.msra.mxu0 %v488
    %2501 = vmatprep.subr.mxu0 0.0
    %2502 = vmatpush1.msra.mxu0 %v491
    %2503 = vmatprep.subr.mxu0 0.0
    %2504 = vmatpush1.msra.mxu0 %v494
    %2505 = vmatprep.subr.mxu0 0.0
    %2506 = vmatpush1.msra.mxu0 %v497
    %2507 = vmatprep.subr.mxu0 0.0
    %2508 = vmatpush1.msra.mxu0 %v500
    %2509 = vmatprep.subr.mxu0 0.0
    %2510 = vmatpush1.msra.mxu0 %v503
    %2511 = vmatprep.subr.mxu0 0.0
    %2512 = vmatpush1.msra.mxu0 %v506
    %2513 = vmatprep.subr.mxu0 0.0
    %2514 = vmatpush1.msra.mxu0 %v509
    %2515 = vmatprep.subr.mxu0 0.0
    %2516 = vmatpush1.msra.mxu0 %v512
    %2517 = vmatprep.subr.mxu0 0.0
    %2518 = vmatpush1.msra.mxu0 %v515
    %2519 = vmatprep.subr.mxu0 0.0
    %2520 = vmatpush1.msra.mxu0 %v518
    %2521 = vmatprep.subr.mxu0 0.0
    %2522 = vmatpush1.msra.mxu0 %v521
    %2523 = vmatprep.subr.mxu0 0.0
    %2524 = vmatpush1.msra.mxu0 %v524
    %2525 = vmatprep.subr.mxu0 0.0
    %2526 = vmatpush1.msra.mxu0 0.0
    %2527 = vmatprep.subr.mxu0 0.0
    %2528 = vmatpush1.msra.mxu0 0.0
    %2529 = vmatprep.subr.mxu0 0.0
    %2530 = vmatpush1.msra.mxu0 0.0
    %2531 = vmatprep.subr.mxu0 0.0
    %2532 = vmatpush1.msra.mxu0 0.0
    %2533 = vmatprep.subr.mxu0 0.0
    %2534 = vmatpush1.msra.mxu0 0.0
    %2535 = vmatprep.subr.mxu0 0.0
    %2536 = vmatpush1.msra.mxu0 0.0
    %2537 = vmatprep.subr.mxu0 0.0
    %2538 = vmatpush1.msra.mxu0 0.0
    %2539 = vmatprep.subr.mxu0 0.0
    %2540 = vmatpush1.msra.mxu0 0.0
    %2541 = vmatprep.subr.mxu0 0.0
    %2542 = vmatpush1.msra.mxu0 0.0
    %2543 = vmatprep.subr.mxu0 0.0
    %2544 = vmatpush1.msra.mxu0 0.0
    %2545 = vmatprep.subr.mxu0 0.0
    %2546 = vmatpush1.msra.mxu0 0.0
    %2547 = vmatprep.subr.mxu0 0.0
    %2548 = vmatpush1.msra.mxu0 0.0
    %2549 = vmatprep.subr.mxu0 0.0
    %2550 = vmatpush1.msra.mxu0 0.0
    %2551 = vmatprep.subr.mxu0 0.0
    %2552 = vmatpush1.msra.mxu0 0.0
    %2553 = vmatprep.subr.mxu0 0.0
    %2554 = vmatpush1.msra.mxu0 0.0
    %2555 = vmatprep.subr.mxu0 0.0
    %2556 = vmatpush1.msra.mxu0 0.0
    %2557 = vmatprep.mubr.f32.mxu0 0.0
    %2558 = vmatmul.mubr.f32.gmra.mrb[0].mxu0 %v2420
    %v2559 = vpop.f32.mrb[0].mxu0
    %v2560 = vadd.f32 0.0, %v2559
    %v2561 = vpop.f32.mrb[0].mxu0
    %2562 = vdwg.mxu0
    %v2566 = vcombine.low %v2489, %v2491
    %v2568 = vunpack.c.l.s4 1983009808
    %v2569 = vunpack.c.0.s8 %v2568
    %v2570 = vlaneseq
    %v2571 = vshrl.u32 %v2570, 7
    %v2572 = vsub.s32 %v2569, %v2571
    %v2573 = vrot.slane %v2566, %v2572
    %v2575 = vunpack.c.l.s4 1983009808
    %v2576 = vunpack.c.0.s8 %v2575
    %v2577 = vlaneseq
    %v2578 = vshrl.u32 %v2577, 7
    %v2579 = vsub.s32 %v2576, %v2578
    %v2580 = vrot.slane %v2560, %v2579
    %v2581 = vcombine.low %v2573, %v2580
    %v2583 = vadd.f32 %v2416, %v2581
    %2584 = vmatprep.subr.mxu0 %v526
    %2585 = vmatpush1.msra.mxu0 %v525
    %2586 = vmatprep.subr.mxu0 %v529
    %2587 = vmatpush1.msra.mxu0 %v528
    %2588 = vmatprep.subr.mxu0 %v532
    %2589 = vmatpush1.msra.mxu0 %v531
    %2590 = vmatprep.subr.mxu0 %v535
    %2591 = vmatpush1.msra.mxu0 %v534
    %2592 = vmatprep.subr.mxu0 %v538
    %2593 = vmatpush1.msra.mxu0 %v537
    %2594 = vmatprep.subr.mxu0 %v541
    %2595 = vmatpush1.msra.mxu0 %v540
    %2596 = vmatprep.subr.mxu0 %v544
    %2597 = vmatpush1.msra.mxu0 %v543
    %2598 = vmatprep.subr.mxu0 %v547
    %2599 = vmatpush1.msra.mxu0 %v546
    %2600 = vmatprep.subr.mxu0 %v550
    %2601 = vmatpush1.msra.mxu0 %v549
    %2602 = vmatprep.subr.mxu0 %v553
    %2603 = vmatpush1.msra.mxu0 %v552
    %2604 = vmatprep.subr.mxu0 %v556
    %2605 = vmatpush1.msra.mxu0 %v555
    %2606 = vmatprep.subr.mxu0 %v559
    %2607 = vmatpush1.msra.mxu0 %v558
    %2608 = vmatprep.subr.mxu0 %v562
    %2609 = vmatpush1.msra.mxu0 %v561
    %2610 = vmatprep.subr.mxu0 %v565
    %2611 = vmatpush1.msra.mxu0 %v564
    %2612 = vmatprep.subr.mxu0 %v568
    %2613 = vmatpush1.msra.mxu0 %v567
    %2614 = vmatprep.subr.mxu0 %v571
    %2615 = vmatpush1.msra.mxu0 %v570
    %2616 = vmatprep.subr.mxu0 0.0
    %2617 = vmatpush1.msra.mxu0 0.0
    %2618 = vmatprep.subr.mxu0 0.0
    %2619 = vmatpush1.msra.mxu0 0.0
    %2620 = vmatprep.subr.mxu0 0.0
    %2621 = vmatpush1.msra.mxu0 0.0
    %2622 = vmatprep.subr.mxu0 0.0
    %2623 = vmatpush1.msra.mxu0 0.0
    %2624 = vmatprep.subr.mxu0 0.0
    %2625 = vmatpush1.msra.mxu0 0.0
    %2626 = vmatprep.subr.mxu0 0.0
    %2627 = vmatpush1.msra.mxu0 0.0
    %2628 = vmatprep.subr.mxu0 0.0
    %2629 = vmatpush1.msra.mxu0 0.0
    %2630 = vmatprep.subr.mxu0 0.0
    %2631 = vmatpush1.msra.mxu0 0.0
    %2632 = vmatprep.subr.mxu0 0.0
    %2633 = vmatpush1.msra.mxu0 0.0
    %2634 = vmatprep.subr.mxu0 0.0
    %2635 = vmatpush1.msra.mxu0 0.0
    %2636 = vmatprep.subr.mxu0 0.0
    %2637 = vmatpush1.msra.mxu0 0.0
    %2638 = vmatprep.subr.mxu0 0.0
    %2639 = vmatpush1.msra.mxu0 0.0
    %2640 = vmatprep.subr.mxu0 0.0
    %2641 = vmatpush1.msra.mxu0 0.0
    %2642 = vmatprep.subr.mxu0 0.0
    %2643 = vmatpush1.msra.mxu0 0.0
    %2644 = vmatprep.subr.mxu0 0.0
    %2645 = vmatpush1.msra.mxu0 0.0
    %2646 = vmatprep.subr.mxu0 0.0
    %2647 = vmatpush1.msra.mxu0 0.0
    %2648 = vmatprep.mubr.f32.mxu0 0.0
    %2649 = vmatmul.mubr.f32.gmra.mrb[0].mxu0 %v2042
    %v2650 = vpop.f32.mrb[0].mxu0
    %v2651 = vadd.f32 %v1157, %v2650
    %v2652 = vpop.f32.mrb[0].mxu0
    %v2653 = vadd.f32 %v1161, %v2652
    %2654 = vdwg.mxu0
    %2655 = vmatprep.subr.mxu0 0.0
    %2656 = vmatpush1.msra.mxu0 %v527
    %2657 = vmatprep.subr.mxu0 0.0
    %2658 = vmatpush1.msra.mxu0 %v530
    %2659 = vmatprep.subr.mxu0 0.0
    %2660 = vmatpush1.msra.mxu0 %v533
    %2661 = vmatprep.subr.mxu0 0.0
    %2662 = vmatpush1.msra.mxu0 %v536
    %2663 = vmatprep.subr.mxu0 0.0
    %2664 = vmatpush1.msra.mxu0 %v539
    %2665 = vmatprep.subr.mxu0 0.0
    %2666 = vmatpush1.msra.mxu0 %v542
    %2667 = vmatprep.subr.mxu0 0.0
    %2668 = vmatpush1.msra.mxu0 %v545
    %2669 = vmatprep.subr.mxu0 0.0
    %2670 = vmatpush1.msra.mxu0 %v548
    %2671 = vmatprep.subr.mxu0 0.0
    %2672 = vmatpush1.msra.mxu0 %v551
    %2673 = vmatprep.subr.mxu0 0.0
    %2674 = vmatpush1.msra.mxu0 %v554
    %2675 = vmatprep.subr.mxu0 0.0
    %2676 = vmatpush1.msra.mxu0 %v557
    %2677 = vmatprep.subr.mxu0 0.0
    %2678 = vmatpush1.msra.mxu0 %v560
    %2679 = vmatprep.subr.mxu0 0.0
    %2680 = vmatpush1.msra.mxu0 %v563
    %2681 = vmatprep.subr.mxu0 0.0
    %2682 = vmatpush1.msra.mxu0 %v566
    %2683 = vmatprep.subr.mxu0 0.0
    %2684 = vmatpush1.msra.mxu0 %v569
    %2685 = vmatprep.subr.mxu0 0.0
    %2686 = vmatpush1.msra.mxu0 %v572
    %2687 = vmatprep.subr.mxu0 0.0
    %2688 = vmatpush1.msra.mxu0 0.0
    %2689 = vmatprep.subr.mxu0 0.0
    %2690 = vmatpush1.msra.mxu0 0.0
    %2691 = vmatprep.subr.mxu0 0.0
    %2692 = vmatpush1.msra.mxu0 0.0
    %2693 = vmatprep.subr.mxu0 0.0
    %2694 = vmatpush1.msra.mxu0 0.0
    %2695 = vmatprep.subr.mxu0 0.0
    %2696 = vmatpush1.msra.mxu0 0.0
    %2697 = vmatprep.subr.mxu0 0.0
    %2698 = vmatpush1.msra.mxu0 0.0
    %2699 = vmatprep.subr.mxu0 0.0
    %2700 = vmatpush1.msra.mxu0 0.0
    %2701 = vmatprep.subr.mxu0 0.0
    %2702 = vmatpush1.msra.mxu0 0.0
    %2703 = vmatprep.subr.mxu0 0.0
    %2704 = vmatpush1.msra.mxu0 0.0
    %2705 = vmatprep.subr.mxu0 0.0
    %2706 = vmatpush1.msra.mxu0 0.0
    %2707 = vmatprep.subr.mxu0 0.0
    %2708 = vmatpush1.msra.mxu0 0.0
    %2709 = vmatprep.subr.mxu0 0.0
    %2710 = vmatpush1.msra.mxu0 0.0
    %2711 = vmatprep.subr.mxu0 0.0
    %2712 = vmatpush1.msra.mxu0 0.0
    %2713 = vmatprep.subr.mxu0 0.0
    %2714 = vmatpush1.msra.mxu0 0.0
    %2715 = vmatprep.subr.mxu0 0.0
    %2716 = vmatpush1.msra.mxu0 0.0
    %2717 = vmatprep.subr.mxu0 0.0
    %2718 = vmatpush1.msra.mxu0 0.0
    %2719 = vmatprep.mubr.f32.mxu0 0.0
    %2720 = vmatmul.mubr.f32.gmra.mrb[0].mxu0 %v2042
    %v2721 = vpop.f32.mrb[0].mxu0
    %v2722 = vadd.f32 %v1165, %v2721
    %v2723 = vpop.f32.mrb[0].mxu0
    %2724 = vdwg.mxu0
    %v2725 = vadd.f32 %v2583, %v2651
    %v2726 = vxor.u32 %v2725, 2147483648
    %v2727 = vmul.f32 %v2726, 1.442695
    %v2728 = vpow.pop %v2727
    %v2729 = vadd.f32 %v2728, 1.0
    %v2730 = vrcp.pop %v2729
    %v2731 = vmul.f32 1.0, %v2730
    %v2733 = vrot.slane %v2583, 2
    %v2735 = vadd.f32 %v2733, %v2653
    %v2736 = vxor.u32 %v2735, 2147483648
    %v2737 = vmul.f32 %v2736, 1.442695
    %v2738 = vpow.pop %v2737
    %v2739 = vadd.f32 %v2738, 1.0
    %v2740 = vrcp.pop %v2739
    %v2741 = vmul.f32 1.0, %v2740
    %v2742 = vmul.f32 %v2731, %v2722
    %v2743 = vrot.slane %v2583, 4
    %v2745 = vadd.f32 %v2743, %v2742
    %v2746 = vtanh.pop %v2745
    %v2747 = vsub.f32 1.0, %v2741
    %v2748 = vmul.f32 %v2747, %v2746
    %v2749 = vmul.f32 %v2741, %v2042
    %v2750 = vadd.f32 %v2748, %v2749
    %s2751 = scalar_lea.vmem [#allocation3], 4
    %2752 = vst [vmem:[%s2751] sm:$0x3] %v2750
    %2753 = vmatprep.subr.mxu0 0.0
    %2754 = vmatpush1.msra.mxu0 %v461
    %2755 = vmatprep.subr.mxu0 0.0
    %2756 = vmatpush1.msra.mxu0 %v462
    %2757 = vmatprep.subr.mxu0 0.0
    %2758 = vmatpush1.msra.mxu0 %v463
    %2759 = vmatprep.subr.mxu0 0.0
    %2760 = vmatpush1.msra.mxu0 %v464
    %2761 = vmatprep.subr.mxu0 0.0
    %2762 = vmatpush1.msra.mxu0 %v465
    %2763 = vmatprep.subr.mxu0 0.0
    %2764 = vmatpush1.msra.mxu0 %v466
    %2765 = vmatprep.subr.mxu0 0.0
    %2766 = vmatpush1.msra.mxu0 %v467
    %2767 = vmatprep.subr.mxu0 0.0
    %2768 = vmatpush1.msra.mxu0 %v468
    %2769 = vmatprep.subr.mxu0 0.0
    %2770 = vmatpush1.msra.mxu0 %v469
    %2771 = vmatprep.subr.mxu0 0.0
    %2772 = vmatpush1.msra.mxu0 %v470
    %2773 = vmatprep.subr.mxu0 0.0
    %2774 = vmatpush1.msra.mxu0 %v471
    %2775 = vmatprep.subr.mxu0 0.0
    %2776 = vmatpush1.msra.mxu0 %v472
    %2777 = vmatprep.subr.mxu0 0.0
    %2778 = vmatpush1.msra.mxu0 %v473
    %2779 = vmatprep.subr.mxu0 0.0
    %2780 = vmatpush1.msra.mxu0 %v474
    %2781 = vmatprep.subr.mxu0 0.0
    %2782 = vmatpush1.msra.mxu0 %v475
    %2783 = vmatprep.subr.mxu0 0.0
    %2784 = vmatpush1.msra.mxu0 %v476
    %2785 = vmatprep.subr.mxu0 0.0
    %2786 = vmatpush1.msra.mxu0 0.0
    %2787 = vmatprep.subr.mxu0 0.0
    %2788 = vmatpush1.msra.mxu0 0.0
    %2789 = vmatprep.subr.mxu0 0.0
    %2790 = vmatpush1.msra.mxu0 0.0
    %2791 = vmatprep.subr.mxu0 0.0
    %2792 = vmatpush1.msra.mxu0 0.0
    %2793 = vmatprep.subr.mxu0 0.0
    %2794 = vmatpush1.msra.mxu0 0.0
    %2795 = vmatprep.subr.mxu0 0.0
    %2796 = vmatpush1.msra.mxu0 0.0
    %2797 = vmatprep.subr.mxu0 0.0
    %2798 = vmatpush1.msra.mxu0 0.0
    %2799 = vmatprep.subr.mxu0 0.0
    %2800 = vmatpush1.msra.mxu0 0.0
    %2801 = vmatprep.subr.mxu0 0.0
    %2802 = vmatpush1.msra.mxu0 0.0
    %2803 = vmatprep.subr.mxu0 0.0
    %2804 = vmatpush1.msra.mxu0 0.0
    %2805 = vmatprep.subr.mxu0 0.0
    %2806 = vmatpush1.msra.mxu0 0.0
    %2807 = vmatprep.subr.mxu0 0.0
    %2808 = vmatpush1.msra.mxu0 0.0
    %2809 = vmatprep.subr.mxu0 0.0
    %2810 = vmatpush1.msra.mxu0 0.0
    %2811 = vmatprep.subr.mxu0 0.0
    %2812 = vmatpush1.msra.mxu0 0.0
    %2813 = vmatprep.subr.mxu0 0.0
    %2814 = vmatpush1.msra.mxu0 0.0
    %2815 = vmatprep.subr.mxu0 0.0
    %2816 = vmatpush1.msra.mxu0 0.0
    %2817 = vmatprep.mubr.f32.mxu0 0.0
    %2818 = vmatmul.mubr.f32.gmra.mrb[0].mxu0 %v2750
    %v2819 = vpop.f32.mrb[0].mxu0
    %v2820 = vadd.f32 0.0, %v2819
    %v2821 = vpop.f32.mrb[0].mxu0
    %2822 = vdwg.mxu0
    %v2825 = vunpack.c.l.s4 1966171168
    %v2826 = vunpack.c.0.s8 %v2825
    %v2827 = vlaneseq
    %v2828 = vshrl.u32 %v2827, 7
    %v2829 = vsub.s32 %v2826, %v2828
    %v2830 = vrot.slane %v2820, %v2829
    %v2831 = vcombine.high %v2830, %v2830
    %v2833 = vunpack.c.l.s4 1966171168
    %v2834 = vunpack.c.0.s8 %v2833
    %v2835 = vlaneseq
    %v2836 = vshrl.u32 %v2835, 7
    %v2837 = vsub.s32 %v2834, %v2836
    %v2838 = vrot.slane %v2830, %v2837
    %v2840 = vunpack.c.l.s4 1966171168
    %v2841 = vunpack.c.0.s8 %v2840
    %v2842 = vlaneseq
    %v2843 = vshrl.u32 %v2842, 7
    %v2844 = vsub.s32 %v2841, %v2843
    %v2845 = vrot.slane %v2831, %v2844
    %v2846 = vlaneseq
    %v2847 = vshrl.u32 %v2846, 7
    %v2848 = vsub.s32 0, %v2847
    %v2849 = vrot.slane %v2838, %v2848
    %v2850 = vlaneseq
    %v2851 = vshrl.u32 %v2850, 7
    %v2852 = vsub.s32 0, %v2851
    %v2853 = vrot.slane %v2845, %v2852
    %v2856 = vadd.f32 %v2849, %v155
    %v2857 = vadd.f32 %v2849, %v158
    %v2858 = vadd.f32 %v2853, %v163
    %v2859 = vadd.f32 %v2853, %v166
    %v2860 = vtanh.pop %v2856
    %v2861 = vtanh.pop %v2857
    %v2862 = vtanh.pop %v2858
    %v2863 = vtanh.pop %v2859
    %v2864 = vmul.f32 %v2860, %v690
    %v2865 = vmul.f32 %v2861, %v690
    %v2866 = vmul.f32 %v2862, %v690
    %v2867 = vmul.f32 %v2863, %v690
    %2868 = vadd.xlane.f32.xlu0 %v2864
    %v2869 = vpop.xlane.xlu0 %2868
    %2870 = vadd.xlane.f32.xlu0 %v2865
    %v2871 = vpop.xlane.xlu0 %2870
    %2872 = vadd.xlane.f32.xlu0 %v2866
    %v2873 = vpop.xlane.xlu0 %2872
    %2874 = vadd.xlane.f32.xlu0 %v2867
    %v2875 = vpop.xlane.xlu0 %2874
    %v2876 = vadd.f32 %v2869, %v711
    %v2877 = vadd.f32 %v2871, %v715
    %v2878 = vadd.f32 %v2873, %v722
    %v2879 = vadd.f32 %v2875, %v726
    %2884 = vset.pattern.permute.xlu0 0
    %2885 = vperm.xlu0 %2884, %v2876
    %v2886 = vpop.permute.xlu0 %2885
    %2887 = vset.pattern.permute.xlu0 0
    %2888 = vperm.xlu0 %2887, %v2877
    %v2889 = vpop.permute.xlu0 %2888
    %2890 = vset.pattern.permute.xlu0 0
    %2891 = vperm.xlu0 %2890, %v2878
    %v2892 = vpop.permute.xlu0 %2891
    %2893 = vset.pattern.permute.xlu0 0
    %2894 = vperm.xlu0 %2893, %v2879
    %v2895 = vpop.permute.xlu0 %2894
    %v2896 = vlaneseq
    %v2897 = vshrl.u32 %v2896, 7
    %v2898 = vsub.s32 %v752, %v2897
    %v2899 = vrot.slane %v2886, %v2898
    %v2900 = vlaneseq
    %v2901 = vshrl.u32 %v2900, 7
    %v2902 = vsub.s32 %v757, %v2901
    %v2903 = vrot.slane %v2889, %v2902
    %v2904 = vsel %vm762, %v2903, %v2899
    %v2905 = vlaneseq
    %v2906 = vshrl.u32 %v2905, 7
    %v2907 = vsub.s32 %v752, %v2906
    %v2908 = vrot.slane %v2892, %v2907
    %v2909 = vlaneseq
    %v2910 = vshrl.u32 %v2909, 7
    %v2911 = vsub.s32 %v757, %v2910
    %v2912 = vrot.slane %v2895, %v2911
    %v2913 = vsel %vm762, %v2912, %v2908
    %v2914 = vsel %vm773, %v2913, %v2904
    %v2916 = vsel %vm776, %v2914, -inf
    %2917 = vmax.xlane.f32.xlu0 %v2916
    %v2918 = vpop.xlane.xlu0 %2917
    %v2920 = vlaneseq
    %v2921 = vshrl.u32 %v2920, 7
    %v2922 = vsub.s32 0, %v2921
    %v2923 = vrot.slane %v2918, %v2922
    %v2924 = vlaneseq
    %v2925 = vshrl.u32 %v2924, 7
    %v2926 = vsub.s32 1, %v2925
    %v2927 = vrot.slane %v2918, %v2926
    %v2930 = vsub.f32 %v2876, %v2923
    %v2931 = vsub.f32 %v2877, %v2923
    %v2932 = vsub.f32 %v2878, %v2927
    %v2933 = vsub.f32 %v2879, %v2927
    %v2934 = vmul.f32 %v2930, 1.442695
    %v2935 = vpow.pop %v2934
    %v2936 = vmul.f32 %v2931, 1.442695
    %v2937 = vpow.pop %v2936
    %v2938 = vmul.f32 %v2932, 1.442695
    %v2939 = vpow.pop %v2938
    %v2940 = vmul.f32 %v2933, 1.442695
    %v2941 = vpow.pop %v2940
    %2946 = vset.pattern.permute.xlu0 0
    %2947 = vperm.xlu0 %2946, %v2935
    %v2948 = vpop.permute.xlu0 %2947
    %2949 = vset.pattern.permute.xlu0 0
    %2950 = vperm.xlu0 %2949, %v2937
    %v2951 = vpop.permute.xlu0 %2950
    %2952 = vset.pattern.permute.xlu0 0
    %2953 = vperm.xlu0 %2952, %v2939
    %v2954 = vpop.permute.xlu0 %2953
    %2955 = vset.pattern.permute.xlu0 0
    %2956 = vperm.xlu0 %2955, %v2941
    %v2957 = vpop.permute.xlu0 %2956
    %v2958 = vlaneseq
    %v2959 = vshrl.u32 %v2958, 7
    %v2960 = vsub.s32 %v752, %v2959
    %v2961 = vrot.slane %v2948, %v2960
    %v2962 = vlaneseq
    %v2963 = vshrl.u32 %v2962, 7
    %v2964 = vsub.s32 %v757, %v2963
    %v2965 = vrot.slane %v2951, %v2964
    %v2966 = vsel %vm762, %v2965, %v2961
    %v2967 = vlaneseq
    %v2968 = vshrl.u32 %v2967, 7
    %v2969 = vsub.s32 %v752, %v2968
    %v2970 = vrot.slane %v2954, %v2969
    %v2971 = vlaneseq
    %v2972 = vshrl.u32 %v2971, 7
    %v2973 = vsub.s32 %v757, %v2972
    %v2974 = vrot.slane %v2957, %v2973
    %v2975 = vsel %vm762, %v2974, %v2970
    %v2976 = vsel %vm773, %v2975, %v2966
    %v2978 = vsel %vm776, %v2976, 0.0
    %2979 = vadd.xlane.f32.xlu0 %v2978
    %v2980 = vpop.xlane.xlu0 %2979
    %v2981 = vrcp.pop %v2980
    %v2983 = vlaneseq
    %v2984 = vshrl.u32 %v2983, 7
    %v2985 = vsub.s32 0, %v2984
    %v2986 = vrot.slane %v2981, %v2985
    %v2987 = vlaneseq
    %v2988 = vshrl.u32 %v2987, 7
    %v2989 = vsub.s32 1, %v2988
    %v2990 = vrot.slane %v2981, %v2989
    %v2993 = vmul.f32 %v2935, %v2986
    %v2994 = vmul.f32 %v2937, %v2986
    %v2995 = vmul.f32 %v2939, %v2990
    %v2996 = vmul.f32 %v2941, %v2990
    %v2997 = vpack.c.bf16 %v2994, %v2993
    %v2998 = vpack.c.bf16 %v2996, %v2995
    %v3000 = vunpack.c.l.b16 %v2997
    %v3001 = vunpack.c.h.b16 %v2997
    %3002 = vset.pattern.permute.xlu0 0
    %3003 = vperm.xlu0 %3002, %v3000
    %v3004 = vpop.permute.xlu0 %3003
    %3005 = vset.pattern.permute.xlu0 0
    %3006 = vperm.xlu0 %3005, %v3001
    %v3007 = vpop.permute.xlu0 %3006
    %v3008 = vlaneseq
    %v3009 = vshrl.u32 %v3008, 7
    %v3010 = vsub.s32 %v752, %v3009
    %v3011 = vrot.slane %v3004, %v3010
    %v3012 = vlaneseq
    %v3013 = vshrl.u32 %v3012, 7
    %v3014 = vsub.s32 %v757, %v3013
    %v3015 = vrot.slane %v3007, %v3014
    %v3016 = vsel %vm762, %v3015, %v3011
    %v3017 = vpack.c.b16 %v3016, %v3016
    %v3019 = vsel %vm879, %v3017, 0
    %3021 = vmatprep.subr.bf16.mxu0 0
    %3022 = vmatpush1.bf16.msra.mxu0 %v94
    %3023 = vmatprep.subr.bf16.mxu0 0
    %3024 = vmatpush1.bf16.msra.mxu0 0
    %3025 = vmatprep.subr.bf16.mxu0 0
    %3026 = vmatpush1.bf16.msra.mxu0 0
    %3027 = vmatprep.subr.bf16.mxu0 0
    %3028 = vmatpush1.bf16.msra.mxu0 0
    %3029 = vmatprep.subr.bf16.mxu0 0
    %3030 = vmatpush1.bf16.msra.mxu0 0
    %3031 = vmatprep.subr.bf16.mxu0 0
    %3032 = vmatpush1.bf16.msra.mxu0 0
    %3033 = vmatprep.subr.bf16.mxu0 0
    %3034 = vmatpush1.bf16.msra.mxu0 0
    %3035 = vmatprep.subr.bf16.mxu0 0
    %3036 = vmatpush1.bf16.msra.mxu0 0
    %3037 = vmatprep.subr.bf16.mxu0 0
    %3038 = vmatpush1.bf16.msra.mxu0 0
    %3039 = vmatprep.subr.bf16.mxu0 0
    %3040 = vmatpush1.bf16.msra.mxu0 0
    %3041 = vmatprep.subr.bf16.mxu0 0
    %3042 = vmatpush1.bf16.msra.mxu0 0
    %3043 = vmatprep.subr.bf16.mxu0 0
    %3044 = vmatpush1.bf16.msra.mxu0 0
    %3045 = vmatprep.subr.bf16.mxu0 0
    %3046 = vmatpush1.bf16.msra.mxu0 0
    %3047 = vmatprep.subr.bf16.mxu0 0
    %3048 = vmatpush1.bf16.msra.mxu0 0
    %3049 = vmatprep.subr.bf16.mxu0 0
    %3050 = vmatpush1.bf16.msra.mxu0 0
    %3051 = vmatprep.subr.bf16.mxu0 0
    %3052 = vmatpush1.bf16.msra.mxu0 0
    %3053 = vmatprep.mubr.bf16.mxu0 0
    %3054 = vmatmul.mubr.bf16.gmra.mrb[0].mxu0 %v3019
    %v3055 = vpop.f32.mrb[0].mxu0
    %v3056 = vadd.f32 0.0, %v3055
    %v3057 = vpop.f32.mrb[0].mxu0
    %v3058 = vpop.f32.mrb[0].mxu0
    %v3059 = vpop.f32.mrb[0].mxu0
    %3060 = vdwg.mxu0
    %v3062 = vunpack.c.l.b16 %v2998
    %v3063 = vunpack.c.h.b16 %v2998
    %3064 = vset.pattern.permute.xlu0 0
    %3065 = vperm.xlu0 %3064, %v3062
    %v3066 = vpop.permute.xlu0 %3065
    %3067 = vset.pattern.permute.xlu0 0
    %3068 = vperm.xlu0 %3067, %v3063
    %v3069 = vpop.permute.xlu0 %3068
    %v3070 = vlaneseq
    %v3071 = vshrl.u32 %v3070, 7
    %v3072 = vsub.s32 %v752, %v3071
    %v3073 = vrot.slane %v3066, %v3072
    %v3074 = vlaneseq
    %v3075 = vshrl.u32 %v3074, 7
    %v3076 = vsub.s32 %v757, %v3075
    %v3077 = vrot.slane %v3069, %v3076
    %v3078 = vsel %vm762, %v3077, %v3073
    %v3079 = vpack.c.b16 %v3078, %v3078
    %v3081 = vsel %vm879, %v3079, 0
    %3083 = vmatprep.subr.bf16.mxu0 0
    %3084 = vmatpush1.bf16.msra.mxu0 %v95
    %3085 = vmatprep.subr.bf16.mxu0 0
    %3086 = vmatpush1.bf16.msra.mxu0 0
    %3087 = vmatprep.subr.bf16.mxu0 0
    %3088 = vmatpush1.bf16.msra.mxu0 0
    %3089 = vmatprep.subr.bf16.mxu0 0
    %3090 = vmatpush1.bf16.msra.mxu0 0
    %3091 = vmatprep.subr.bf16.mxu0 0
    %3092 = vmatpush1.bf16.msra.mxu0 0
    %3093 = vmatprep.subr.bf16.mxu0 0
    %3094 = vmatpush1.bf16.msra.mxu0 0
    %3095 = vmatprep.subr.bf16.mxu0 0
    %3096 = vmatpush1.bf16.msra.mxu0 0
    %3097 = vmatprep.subr.bf16.mxu0 0
    %3098 = vmatpush1.bf16.msra.mxu0 0
    %3099 = vmatprep.subr.bf16.mxu0 0
    %3100 = vmatpush1.bf16.msra.mxu0 0
    %3101 = vmatprep.subr.bf16.mxu0 0
    %3102 = vmatpush1.bf16.msra.mxu0 0
    %3103 = vmatprep.subr.bf16.mxu0 0
    %3104 = vmatpush1.bf16.msra.mxu0 0
    %3105 = vmatprep.subr.bf16.mxu0 0
    %3106 = vmatpush1.bf16.msra.mxu0 0
    %3107 = vmatprep.subr.bf16.mxu0 0
    %3108 = vmatpush1.bf16.msra.mxu0 0
    %3109 = vmatprep.subr.bf16.mxu0 0
    %3110 = vmatpush1.bf16.msra.mxu0 0
    %3111 = vmatprep.subr.bf16.mxu0 0
    %3112 = vmatpush1.bf16.msra.mxu0 0
    %3113 = vmatprep.subr.bf16.mxu0 0
    %3114 = vmatpush1.bf16.msra.mxu0 0
    %3115 = vmatprep.mubr.bf16.mxu0 0
    %3116 = vmatmul.mubr.bf16.gmra.mrb[0].mxu0 %v3081
    %v3117 = vpop.f32.mrb[0].mxu0
    %v3118 = vadd.f32 0.0, %v3117
    %v3119 = vpop.f32.mrb[0].mxu0
    %v3120 = vpop.f32.mrb[0].mxu0
    %v3121 = vpop.f32.mrb[0].mxu0
    %3122 = vdwg.mxu0
    %s3123 = scalar_lea.vmem [#allocation2], 18
    %v3124 = vld [vmem:[%s3123] sm:$0x3f]
    %v3127 = vrot.slane %v3118, 7
    %v3128 = vsel %vm773, %v3127, %v3056
    %3130 = vmatprep.subr.mxu0 %v478
    %3131 = vmatpush1.msra.mxu0 %v477
    %3132 = vmatprep.subr.mxu0 %v481
    %3133 = vmatpush1.msra.mxu0 %v480
    %3134 = vmatprep.subr.mxu0 %v484
    %3135 = vmatpush1.msra.mxu0 %v483
    %3136 = vmatprep.subr.mxu0 %v487
    %3137 = vmatpush1.msra.mxu0 %v486
    %3138 = vmatprep.subr.mxu0 %v490
    %3139 = vmatpush1.msra.mxu0 %v489
    %3140 = vmatprep.subr.mxu0 %v493
    %3141 = vmatpush1.msra.mxu0 %v492
    %3142 = vmatprep.subr.mxu0 %v496
    %3143 = vmatpush1.msra.mxu0 %v495
    %3144 = vmatprep.subr.mxu0 %v499
    %3145 = vmatpush1.msra.mxu0 %v498
    %3146 = vmatprep.subr.mxu0 %v502
    %3147 = vmatpush1.msra.mxu0 %v501
    %3148 = vmatprep.subr.mxu0 %v505
    %3149 = vmatpush1.msra.mxu0 %v504
    %3150 = vmatprep.subr.mxu0 %v508
    %3151 = vmatpush1.msra.mxu0 %v507
    %3152 = vmatprep.subr.mxu0 %v511
    %3153 = vmatpush1.msra.mxu0 %v510
    %3154 = vmatprep.subr.mxu0 %v514
    %3155 = vmatpush1.msra.mxu0 %v513
    %3156 = vmatprep.subr.mxu0 %v517
    %3157 = vmatpush1.msra.mxu0 %v516
    %3158 = vmatprep.subr.mxu0 %v520
    %3159 = vmatpush1.msra.mxu0 %v519
    %3160 = vmatprep.subr.mxu0 %v523
    %3161 = vmatpush1.msra.mxu0 %v522
    %3162 = vmatprep.subr.mxu0 0.0
    %3163 = vmatpush1.msra.mxu0 0.0
    %3164 = vmatprep.subr.mxu0 0.0
    %3165 = vmatpush1.msra.mxu0 0.0
    %3166 = vmatprep.subr.mxu0 0.0
    %3167 = vmatpush1.msra.mxu0 0.0
    %3168 = vmatprep.subr.mxu0 0.0
    %3169 = vmatpush1.msra.mxu0 0.0
    %3170 = vmatprep.subr.mxu0 0.0
    %3171 = vmatpush1.msra.mxu0 0.0
    %3172 = vmatprep.subr.mxu0 0.0
    %3173 = vmatpush1.msra.mxu0 0.0
    %3174 = vmatprep.subr.mxu0 0.0
    %3175 = vmatpush1.msra.mxu0 0.0
    %3176 = vmatprep.subr.mxu0 0.0
    %3177 = vmatpush1.msra.mxu0 0.0
    %3178 = vmatprep.subr.mxu0 0.0
    %3179 = vmatpush1.msra.mxu0 0.0
    %3180 = vmatprep.subr.mxu0 0.0
    %3181 = vmatpush1.msra.mxu0 0.0
    %3182 = vmatprep.subr.mxu0 0.0
    %3183 = vmatpush1.msra.mxu0 0.0
    %3184 = vmatprep.subr.mxu0 0.0
    %3185 = vmatpush1.msra.mxu0 0.0
    %3186 = vmatprep.subr.mxu0 0.0
    %3187 = vmatpush1.msra.mxu0 0.0
    %3188 = vmatprep.subr.mxu0 0.0
    %3189 = vmatpush1.msra.mxu0 0.0
    %3190 = vmatprep.subr.mxu0 0.0
    %3191 = vmatpush1.msra.mxu0 0.0
    %3192 = vmatprep.subr.mxu0 0.0
    %3193 = vmatpush1.msra.mxu0 0.0
    %3194 = vmatprep.mubr.f32.mxu0 0.0
    %3195 = vmatmul.mubr.f32.gmra.mrb[0].mxu0 %v3128
    %v3196 = vpop.f32.mrb[0].mxu0
    %v3197 = vadd.f32 0.0, %v3196
    %v3198 = vpop.f32.mrb[0].mxu0
    %v3199 = vadd.f32 0.0, %v3198
    %3200 = vdwg.mxu0
    %3201 = vmatprep.subr.mxu0 0.0
    %3202 = vmatpush1.msra.mxu0 %v479
    %3203 = vmatprep.subr.mxu0 0.0
    %3204 = vmatpush1.msra.mxu0 %v482
    %3205 = vmatprep.subr.mxu0 0.0
    %3206 = vmatpush1.msra.mxu0 %v485
    %3207 = vmatprep.subr.mxu0 0.0
    %3208 = vmatpush1.msra.mxu0 %v488
    %3209 = vmatprep.subr.mxu0 0.0
    %3210 = vmatpush1.msra.mxu0 %v491
    %3211 = vmatprep.subr.mxu0 0.0
    %3212 = vmatpush1.msra.mxu0 %v494
    %3213 = vmatprep.subr.mxu0 0.0
    %3214 = vmatpush1.msra.mxu0 %v497
    %3215 = vmatprep.subr.mxu0 0.0
    %3216 = vmatpush1.msra.mxu0 %v500
    %3217 = vmatprep.subr.mxu0 0.0
    %3218 = vmatpush1.msra.mxu0 %v503
    %3219 = vmatprep.subr.mxu0 0.0
    %3220 = vmatpush1.msra.mxu0 %v506
    %3221 = vmatprep.subr.mxu0 0.0
    %3222 = vmatpush1.msra.mxu0 %v509
    %3223 = vmatprep.subr.mxu0 0.0
    %3224 = vmatpush1.msra.mxu0 %v512
    %3225 = vmatprep.subr.mxu0 0.0
    %3226 = vmatpush1.msra.mxu0 %v515
    %3227 = vmatprep.subr.mxu0 0.0
    %3228 = vmatpush1.msra.mxu0 %v518
    %3229 = vmatprep.subr.mxu0 0.0
    %3230 = vmatpush1.msra.mxu0 %v521
    %3231 = vmatprep.subr.mxu0 0.0
    %3232 = vmatpush1.msra.mxu0 %v524
    %3233 = vmatprep.subr.mxu0 0.0
    %3234 = vmatpush1.msra.mxu0 0.0
    %3235 = vmatprep.subr.mxu0 0.0
    %3236 = vmatpush1.msra.mxu0 0.0
    %3237 = vmatprep.subr.mxu0 0.0
    %3238 = vmatpush1.msra.mxu0 0.0
    %3239 = vmatprep.subr.mxu0 0.0
    %3240 = vmatpush1.msra.mxu0 0.0
    %3241 = vmatprep.subr.mxu0 0.0
    %3242 = vmatpush1.msra.mxu0 0.0
    %3243 = vmatprep.subr.mxu0 0.0
    %3244 = vmatpush1.msra.mxu0 0.0
    %3245 = vmatprep.subr.mxu0 0.0
    %3246 = vmatpush1.msra.mxu0 0.0
    %3247 = vmatprep.subr.mxu0 0.0
    %3248 = vmatpush1.msra.mxu0 0.0
    %3249 = vmatprep.subr.mxu0 0.0
    %3250 = vmatpush1.msra.mxu0 0.0
    %3251 = vmatprep.subr.mxu0 0.0
    %3252 = vmatpush1.msra.mxu0 0.0
    %3253 = vmatprep.subr.mxu0 0.0
    %3254 = vmatpush1.msra.mxu0 0.0
    %3255 = vmatprep.subr.mxu0 0.0
    %3256 = vmatpush1.msra.mxu0 0.0
    %3257 = vmatprep.subr.mxu0 0.0
    %3258 = vmatpush1.msra.mxu0 0.0
    %3259 = vmatprep.subr.mxu0 0.0
    %3260 = vmatpush1.msra.mxu0 0.0
    %3261 = vmatprep.subr.mxu0 0.0
    %3262 = vmatpush1.msra.mxu0 0.0
    %3263 = vmatprep.subr.mxu0 0.0
    %3264 = vmatpush1.msra.mxu0 0.0
    %3265 = vmatprep.mubr.f32.mxu0 0.0
    %3266 = vmatmul.mubr.f32.gmra.mrb[0].mxu0 %v3128
    %v3267 = vpop.f32.mrb[0].mxu0
    %v3268 = vadd.f32 0.0, %v3267
    %v3269 = vpop.f32.mrb[0].mxu0
    %3270 = vdwg.mxu0
    %v3274 = vcombine.low %v3197, %v3199
    %v3276 = vunpack.c.l.s4 1983009808
    %v3277 = vunpack.c.0.s8 %v3276
    %v3278 = vlaneseq
    %v3279 = vshrl.u32 %v3278, 7
    %v3280 = vsub.s32 %v3277, %v3279
    %v3281 = vrot.slane %v3274, %v3280
    %v3283 = vunpack.c.l.s4 1983009808
    %v3284 = vunpack.c.0.s8 %v3283
    %v3285 = vlaneseq
    %v3286 = vshrl.u32 %v3285, 7
    %v3287 = vsub.s32 %v3284, %v3286
    %v3288 = vrot.slane %v3268, %v3287
    %v3289 = vcombine.low %v3281, %v3288
    %v3291 = vadd.f32 %v3124, %v3289
    %3292 = vmatprep.subr.mxu0 %v526
    %3293 = vmatpush1.msra.mxu0 %v525
    %3294 = vmatprep.subr.mxu0 %v529
    %3295 = vmatpush1.msra.mxu0 %v528
    %3296 = vmatprep.subr.mxu0 %v532
    %3297 = vmatpush1.msra.mxu0 %v531
    %3298 = vmatprep.subr.mxu0 %v535
    %3299 = vmatpush1.msra.mxu0 %v534
    %3300 = vmatprep.subr.mxu0 %v538
    %3301 = vmatpush1.msra.mxu0 %v537
    %3302 = vmatprep.subr.mxu0 %v541
    %3303 = vmatpush1.msra.mxu0 %v540
    %3304 = vmatprep.subr.mxu0 %v544
    %3305 = vmatpush1.msra.mxu0 %v543
    %3306 = vmatprep.subr.mxu0 %v547
    %3307 = vmatpush1.msra.mxu0 %v546
    %3308 = vmatprep.subr.mxu0 %v550
    %3309 = vmatpush1.msra.mxu0 %v549
    %3310 = vmatprep.subr.mxu0 %v553
    %3311 = vmatpush1.msra.mxu0 %v552
    %3312 = vmatprep.subr.mxu0 %v556
    %3313 = vmatpush1.msra.mxu0 %v555
    %3314 = vmatprep.subr.mxu0 %v559
    %3315 = vmatpush1.msra.mxu0 %v558
    %3316 = vmatprep.subr.mxu0 %v562
    %3317 = vmatpush1.msra.mxu0 %v561
    %3318 = vmatprep.subr.mxu0 %v565
    %3319 = vmatpush1.msra.mxu0 %v564
    %3320 = vmatprep.subr.mxu0 %v568
    %3321 = vmatpush1.msra.mxu0 %v567
    %3322 = vmatprep.subr.mxu0 %v571
    %3323 = vmatpush1.msra.mxu0 %v570
    %3324 = vmatprep.subr.mxu0 0.0
    %3325 = vmatpush1.msra.mxu0 0.0
    %3326 = vmatprep.subr.mxu0 0.0
    %3327 = vmatpush1.msra.mxu0 0.0
    %3328 = vmatprep.subr.mxu0 0.0
    %3329 = vmatpush1.msra.mxu0 0.0
    %3330 = vmatprep.subr.mxu0 0.0
    %3331 = vmatpush1.msra.mxu0 0.0
    %3332 = vmatprep.subr.mxu0 0.0
    %3333 = vmatpush1.msra.mxu0 0.0
    %3334 = vmatprep.subr.mxu0 0.0
    %3335 = vmatpush1.msra.mxu0 0.0
    %3336 = vmatprep.subr.mxu0 0.0
    %3337 = vmatpush1.msra.mxu0 0.0
    %3338 = vmatprep.subr.mxu0 0.0
    %3339 = vmatpush1.msra.mxu0 0.0
    %3340 = vmatprep.subr.mxu0 0.0
    %3341 = vmatpush1.msra.mxu0 0.0
    %3342 = vmatprep.subr.mxu0 0.0
    %3343 = vmatpush1.msra.mxu0 0.0
    %3344 = vmatprep.subr.mxu0 0.0
    %3345 = vmatpush1.msra.mxu0 0.0
    %3346 = vmatprep.subr.mxu0 0.0
    %3347 = vmatpush1.msra.mxu0 0.0
    %3348 = vmatprep.subr.mxu0 0.0
    %3349 = vmatpush1.msra.mxu0 0.0
    %3350 = vmatprep.subr.mxu0 0.0
    %3351 = vmatpush1.msra.mxu0 0.0
    %3352 = vmatprep.subr.mxu0 0.0
    %3353 = vmatpush1.msra.mxu0 0.0
    %3354 = vmatprep.subr.mxu0 0.0
    %3355 = vmatpush1.msra.mxu0 0.0
    %3356 = vmatprep.mubr.f32.mxu0 0.0
    %3357 = vmatmul.mubr.f32.gmra.mrb[0].mxu0 %v2750
    %v3358 = vpop.f32.mrb[0].mxu0
    %v3359 = vadd.f32 %v1157, %v3358
    %v3360 = vpop.f32.mrb[0].mxu0
    %v3361 = vadd.f32 %v1161, %v3360
    %3362 = vdwg.mxu0
    %3363 = vmatprep.subr.mxu0 0.0
    %3364 = vmatpush1.msra.mxu0 %v527
    %3365 = vmatprep.subr.mxu0 0.0
    %3366 = vmatpush1.msra.mxu0 %v530
    %3367 = vmatprep.subr.mxu0 0.0
    %3368 = vmatpush1.msra.mxu0 %v533
    %3369 = vmatprep.subr.mxu0 0.0
    %3370 = vmatpush1.msra.mxu0 %v536
    %3371 = vmatprep.subr.mxu0 0.0
    %3372 = vmatpush1.msra.mxu0 %v539
    %3373 = vmatprep.subr.mxu0 0.0
    %3374 = vmatpush1.msra.mxu0 %v542
    %3375 = vmatprep.subr.mxu0 0.0
    %3376 = vmatpush1.msra.mxu0 %v545
    %3377 = vmatprep.subr.mxu0 0.0
    %3378 = vmatpush1.msra.mxu0 %v548
    %3379 = vmatprep.subr.mxu0 0.0
    %3380 = vmatpush1.msra.mxu0 %v551
    %3381 = vmatprep.subr.mxu0 0.0
    %3382 = vmatpush1.msra.mxu0 %v554
    %3383 = vmatprep.subr.mxu0 0.0
    %3384 = vmatpush1.msra.mxu0 %v557
    %3385 = vmatprep.subr.mxu0 0.0
    %3386 = vmatpush1.msra.mxu0 %v560
    %3387 = vmatprep.subr.mxu0 0.0
    %3388 = vmatpush1.msra.mxu0 %v563
    %3389 = vmatprep.subr.mxu0 0.0
    %3390 = vmatpush1.msra.mxu0 %v566
    %3391 = vmatprep.subr.mxu0 0.0
    %3392 = vmatpush1.msra.mxu0 %v569
    %3393 = vmatprep.subr.mxu0 0.0
    %3394 = vmatpush1.msra.mxu0 %v572
    %3395 = vmatprep.subr.mxu0 0.0
    %3396 = vmatpush1.msra.mxu0 0.0
    %3397 = vmatprep.subr.mxu0 0.0
    %3398 = vmatpush1.msra.mxu0 0.0
    %3399 = vmatprep.subr.mxu0 0.0
    %3400 = vmatpush1.msra.mxu0 0.0
    %3401 = vmatprep.subr.mxu0 0.0
    %3402 = vmatpush1.msra.mxu0 0.0
    %3403 = vmatprep.subr.mxu0 0.0
    %3404 = vmatpush1.msra.mxu0 0.0
    %3405 = vmatprep.subr.mxu0 0.0
    %3406 = vmatpush1.msra.mxu0 0.0
    %3407 = vmatprep.subr.mxu0 0.0
    %3408 = vmatpush1.msra.mxu0 0.0
    %3409 = vmatprep.subr.mxu0 0.0
    %3410 = vmatpush1.msra.mxu0 0.0
    %3411 = vmatprep.subr.mxu0 0.0
    %3412 = vmatpush1.msra.mxu0 0.0
    %3413 = vmatprep.subr.mxu0 0.0
    %3414 = vmatpush1.msra.mxu0 0.0
    %3415 = vmatprep.subr.mxu0 0.0
    %3416 = vmatpush1.msra.mxu0 0.0
    %3417 = vmatprep.subr.mxu0 0.0
    %3418 = vmatpush1.msra.mxu0 0.0
    %3419 = vmatprep.subr.mxu0 0.0
    %3420 = vmatpush1.msra.mxu0 0.0
    %3421 = vmatprep.subr.mxu0 0.0
    %3422 = vmatpush1.msra.mxu0 0.0
    %3423 = vmatprep.subr.mxu0 0.0
    %3424 = vmatpush1.msra.mxu0 0.0
    %3425 = vmatprep.subr.mxu0 0.0
    %3426 = vmatpush1.msra.mxu0 0.0
    %3427 = vmatprep.mubr.f32.mxu0 0.0
    %3428 = vmatmul.mubr.f32.gmra.mrb[0].mxu0 %v2750
    %v3429 = vpop.f32.mrb[0].mxu0
    %v3430 = vadd.f32 %v1165, %v3429
    %v3431 = vpop.f32.mrb[0].mxu0
    %3432 = vdwg.mxu0
    %v3433 = vadd.f32 %v3291, %v3359
    %v3434 = vxor.u32 %v3433, 2147483648
    %v3435 = vmul.f32 %v3434, 1.442695
    %v3436 = vpow.pop %v3435
    %v3437 = vadd.f32 %v3436, 1.0
    %v3438 = vrcp.pop %v3437
    %v3439 = vmul.f32 1.0, %v3438
    %v3441 = vrot.slane %v3291, 2
    %v3443 = vadd.f32 %v3441, %v3361
    %v3444 = vxor.u32 %v3443, 2147483648
    %v3445 = vmul.f32 %v3444, 1.442695
    %v3446 = vpow.pop %v3445
    %v3447 = vadd.f32 %v3446, 1.0
    %v3448 = vrcp.pop %v3447
    %v3449 = vmul.f32 1.0, %v3448
    %v3450 = vmul.f32 %v3439, %v3430
    %v3451 = vrot.slane %v3291, 4
    %v3453 = vadd.f32 %v3451, %v3450
    %v3454 = vtanh.pop %v3453
    %v3455 = vsub.f32 1.0, %v3449
    %v3456 = vmul.f32 %v3455, %v3454
    %v3457 = vmul.f32 %v3449, %v2750
    %v3458 = vadd.f32 %v3456, %v3457
    %s3459 = scalar_lea.vmem [#allocation3], 6
    %3460 = vst [vmem:[%s3459] sm:$0x3] %v3458
    %3461 = vmatprep.subr.mxu0 0.0
    %3462 = vmatpush1.msra.mxu0 %v461
    %3463 = vmatprep.subr.mxu0 0.0
    %3464 = vmatpush1.msra.mxu0 %v462
    %3465 = vmatprep.subr.mxu0 0.0
    %3466 = vmatpush1.msra.mxu0 %v463
    %3467 = vmatprep.subr.mxu0 0.0
    %3468 = vmatpush1.msra.mxu0 %v464
    %3469 = vmatprep.subr.mxu0 0.0
    %3470 = vmatpush1.msra.mxu0 %v465
    %3471 = vmatprep.subr.mxu0 0.0
    %3472 = vmatpush1.msra.mxu0 %v466
    %3473 = vmatprep.subr.mxu0 0.0
    %3474 = vmatpush1.msra.mxu0 %v467
    %3475 = vmatprep.subr.mxu0 0.0
    %3476 = vmatpush1.msra.mxu0 %v468
    %3477 = vmatprep.subr.mxu0 0.0
    %3478 = vmatpush1.msra.mxu0 %v469
    %3479 = vmatprep.subr.mxu0 0.0
    %3480 = vmatpush1.msra.mxu0 %v470
    %3481 = vmatprep.subr.mxu0 0.0
    %3482 = vmatpush1.msra.mxu0 %v471
    %3483 = vmatprep.subr.mxu0 0.0
    %3484 = vmatpush1.msra.mxu0 %v472
    %3485 = vmatprep.subr.mxu0 0.0
    %3486 = vmatpush1.msra.mxu0 %v473
    %3487 = vmatprep.subr.mxu0 0.0
    %3488 = vmatpush1.msra.mxu0 %v474
    %3489 = vmatprep.subr.mxu0 0.0
    %3490 = vmatpush1.msra.mxu0 %v475
    %3491 = vmatprep.subr.mxu0 0.0
    %3492 = vmatpush1.msra.mxu0 %v476
    %3493 = vmatprep.subr.mxu0 0.0
    %3494 = vmatpush1.msra.mxu0 0.0
    %3495 = vmatprep.subr.mxu0 0.0
    %3496 = vmatpush1.msra.mxu0 0.0
    %3497 = vmatprep.subr.mxu0 0.0
    %3498 = vmatpush1.msra.mxu0 0.0
    %3499 = vmatprep.subr.mxu0 0.0
    %3500 = vmatpush1.msra.mxu0 0.0
    %3501 = vmatprep.subr.mxu0 0.0
    %3502 = vmatpush1.msra.mxu0 0.0
    %3503 = vmatprep.subr.mxu0 0.0
    %3504 = vmatpush1.msra.mxu0 0.0
    %3505 = vmatprep.subr.mxu0 0.0
    %3506 = vmatpush1.msra.mxu0 0.0
    %3507 = vmatprep.subr.mxu0 0.0
    %3508 = vmatpush1.msra.mxu0 0.0
    %3509 = vmatprep.subr.mxu0 0.0
    %3510 = vmatpush1.msra.mxu0 0.0
    %3511 = vmatprep.subr.mxu0 0.0
    %3512 = vmatpush1.msra.mxu0 0.0
    %3513 = vmatprep.subr.mxu0 0.0
    %3514 = vmatpush1.msra.mxu0 0.0
    %3515 = vmatprep.subr.mxu0 0.0
    %3516 = vmatpush1.msra.mxu0 0.0
    %3517 = vmatprep.subr.mxu0 0.0
    %3518 = vmatpush1.msra.mxu0 0.0
    %3519 = vmatprep.subr.mxu0 0.0
    %3520 = vmatpush1.msra.mxu0 0.0
    %3521 = vmatprep.subr.mxu0 0.0
    %3522 = vmatpush1.msra.mxu0 0.0
    %3523 = vmatprep.subr.mxu0 0.0
    %3524 = vmatpush1.msra.mxu0 0.0
    %3525 = vmatprep.mubr.f32.mxu0 0.0
    %3526 = vmatmul.mubr.f32.gmra.mrb[0].mxu0 %v3458
    %v3527 = vpop.f32.mrb[0].mxu0
    %v3528 = vadd.f32 0.0, %v3527
    %v3529 = vpop.f32.mrb[0].mxu0
    %3530 = vdwg.mxu0
    %v3533 = vunpack.c.l.s4 1966171168
    %v3534 = vunpack.c.0.s8 %v3533
    %v3535 = vlaneseq
    %v3536 = vshrl.u32 %v3535, 7
    %v3537 = vsub.s32 %v3534, %v3536
    %v3538 = vrot.slane %v3528, %v3537
    %v3539 = vcombine.high %v3538, %v3538
    %v3541 = vunpack.c.l.s4 1966171168
    %v3542 = vunpack.c.0.s8 %v3541
    %v3543 = vlaneseq
    %v3544 = vshrl.u32 %v3543, 7
    %v3545 = vsub.s32 %v3542, %v3544
    %v3546 = vrot.slane %v3538, %v3545
    %v3548 = vunpack.c.l.s4 1966171168
    %v3549 = vunpack.c.0.s8 %v3548
    %v3550 = vlaneseq
    %v3551 = vshrl.u32 %v3550, 7
    %v3552 = vsub.s32 %v3549, %v3551
    %v3553 = vrot.slane %v3539, %v3552
    %v3554 = vlaneseq
    %v3555 = vshrl.u32 %v3554, 7
    %v3556 = vsub.s32 0, %v3555
    %v3557 = vrot.slane %v3546, %v3556
    %v3558 = vlaneseq
    %v3559 = vshrl.u32 %v3558, 7
    %v3560 = vsub.s32 0, %v3559
    %v3561 = vrot.slane %v3553, %v3560
    %v3564 = vadd.f32 %v3557, %v155
    %v3565 = vadd.f32 %v3557, %v158
    %v3566 = vadd.f32 %v3561, %v163
    %v3567 = vadd.f32 %v3561, %v166
    %v3568 = vtanh.pop %v3564
    %v3569 = vtanh.pop %v3565
    %v3570 = vtanh.pop %v3566
    %v3571 = vtanh.pop %v3567
    %v3572 = vmul.f32 %v3568, %v690
    %v3573 = vmul.f32 %v3569, %v690
    %v3574 = vmul.f32 %v3570, %v690
    %v3575 = vmul.f32 %v3571, %v690
    %3576 = vadd.xlane.f32.xlu0 %v3572
    %v3577 = vpop.xlane.xlu0 %3576
    %3578 = vadd.xlane.f32.xlu0 %v3573
    %v3579 = vpop.xlane.xlu0 %3578
    %3580 = vadd.xlane.f32.xlu0 %v3574
    %v3581 = vpop.xlane.xlu0 %3580
    %3582 = vadd.xlane.f32.xlu0 %v3575
    %v3583 = vpop.xlane.xlu0 %3582
    %v3584 = vadd.f32 %v3577, %v711
    %v3585 = vadd.f32 %v3579, %v715
    %v3586 = vadd.f32 %v3581, %v722
    %v3587 = vadd.f32 %v3583, %v726
    %3592 = vset.pattern.permute.xlu0 0
    %3593 = vperm.xlu0 %3592, %v3584
    %v3594 = vpop.permute.xlu0 %3593
    %3595 = vset.pattern.permute.xlu0 0
    %3596 = vperm.xlu0 %3595, %v3585
    %v3597 = vpop.permute.xlu0 %3596
    %3598 = vset.pattern.permute.xlu0 0
    %3599 = vperm.xlu0 %3598, %v3586
    %v3600 = vpop.permute.xlu0 %3599
    %3601 = vset.pattern.permute.xlu0 0
    %3602 = vperm.xlu0 %3601, %v3587
    %v3603 = vpop.permute.xlu0 %3602
    %v3604 = vlaneseq
    %v3605 = vshrl.u32 %v3604, 7
    %v3606 = vsub.s32 %v752, %v3605
    %v3607 = vrot.slane %v3594, %v3606
    %v3608 = vlaneseq
    %v3609 = vshrl.u32 %v3608, 7
    %v3610 = vsub.s32 %v757, %v3609
    %v3611 = vrot.slane %v3597, %v3610
    %v3612 = vsel %vm762, %v3611, %v3607
    %v3613 = vlaneseq
    %v3614 = vshrl.u32 %v3613, 7
    %v3615 = vsub.s32 %v752, %v3614
    %v3616 = vrot.slane %v3600, %v3615
    %v3617 = vlaneseq
    %v3618 = vshrl.u32 %v3617, 7
    %v3619 = vsub.s32 %v757, %v3618
    %v3620 = vrot.slane %v3603, %v3619
    %v3621 = vsel %vm762, %v3620, %v3616
    %v3622 = vsel %vm773, %v3621, %v3612
    %v3624 = vsel %vm776, %v3622, -inf
    %3625 = vmax.xlane.f32.xlu0 %v3624
    %v3626 = vpop.xlane.xlu0 %3625
    %v3628 = vlaneseq
    %v3629 = vshrl.u32 %v3628, 7
    %v3630 = vsub.s32 0, %v3629
    %v3631 = vrot.slane %v3626, %v3630
    %v3632 = vlaneseq
    %v3633 = vshrl.u32 %v3632, 7
    %v3634 = vsub.s32 1, %v3633
    %v3635 = vrot.slane %v3626, %v3634
    %v3638 = vsub.f32 %v3584, %v3631
    %v3639 = vsub.f32 %v3585, %v3631
    %v3640 = vsub.f32 %v3586, %v3635
    %v3641 = vsub.f32 %v3587, %v3635
    %v3642 = vmul.f32 %v3638, 1.442695
    %v3643 = vpow.pop %v3642
    %v3644 = vmul.f32 %v3639, 1.442695
    %v3645 = vpow.pop %v3644
    %v3646 = vmul.f32 %v3640, 1.442695
    %v3647 = vpow.pop %v3646
    %v3648 = vmul.f32 %v3641, 1.442695
    %v3649 = vpow.pop %v3648
    %3654 = vset.pattern.permute.xlu0 0
    %3655 = vperm.xlu0 %3654, %v3643
    %v3656 = vpop.permute.xlu0 %3655
    %3657 = vset.pattern.permute.xlu0 0
    %3658 = vperm.xlu0 %3657, %v3645
    %v3659 = vpop.permute.xlu0 %3658
    %3660 = vset.pattern.permute.xlu0 0
    %3661 = vperm.xlu0 %3660, %v3647
    %v3662 = vpop.permute.xlu0 %3661
    %3663 = vset.pattern.permute.xlu0 0
    %3664 = vperm.xlu0 %3663, %v3649
    %v3665 = vpop.permute.xlu0 %3664
    %v3666 = vlaneseq
    %v3667 = vshrl.u32 %v3666, 7
    %v3668 = vsub.s32 %v752, %v3667
    %v3669 = vrot.slane %v3656, %v3668
    %v3670 = vlaneseq
    %v3671 = vshrl.u32 %v3670, 7
    %v3672 = vsub.s32 %v757, %v3671
    %v3673 = vrot.slane %v3659, %v3672
    %v3674 = vsel %vm762, %v3673, %v3669
    %v3675 = vlaneseq
    %v3676 = vshrl.u32 %v3675, 7
    %v3677 = vsub.s32 %v752, %v3676
    %v3678 = vrot.slane %v3662, %v3677
    %v3679 = vlaneseq
    %v3680 = vshrl.u32 %v3679, 7
    %v3681 = vsub.s32 %v757, %v3680
    %v3682 = vrot.slane %v3665, %v3681
    %v3683 = vsel %vm762, %v3682, %v3678
    %v3684 = vsel %vm773, %v3683, %v3674
    %v3686 = vsel %vm776, %v3684, 0.0
    %3687 = vadd.xlane.f32.xlu0 %v3686
    %v3688 = vpop.xlane.xlu0 %3687
    %v3689 = vrcp.pop %v3688
    %v3691 = vlaneseq
    %v3692 = vshrl.u32 %v3691, 7
    %v3693 = vsub.s32 0, %v3692
    %v3694 = vrot.slane %v3689, %v3693
    %v3695 = vlaneseq
    %v3696 = vshrl.u32 %v3695, 7
    %v3697 = vsub.s32 1, %v3696
    %v3698 = vrot.slane %v3689, %v3697
    %v3701 = vmul.f32 %v3643, %v3694
    %v3702 = vmul.f32 %v3645, %v3694
    %v3703 = vmul.f32 %v3647, %v3698
    %v3704 = vmul.f32 %v3649, %v3698
    %v3705 = vpack.c.bf16 %v3702, %v3701
    %v3706 = vpack.c.bf16 %v3704, %v3703
    %v3708 = vunpack.c.l.b16 %v3705
    %v3709 = vunpack.c.h.b16 %v3705
    %3710 = vset.pattern.permute.xlu0 0
    %3711 = vperm.xlu0 %3710, %v3708
    %v3712 = vpop.permute.xlu0 %3711
    %3713 = vset.pattern.permute.xlu0 0
    %3714 = vperm.xlu0 %3713, %v3709
    %v3715 = vpop.permute.xlu0 %3714
    %v3716 = vlaneseq
    %v3717 = vshrl.u32 %v3716, 7
    %v3718 = vsub.s32 %v752, %v3717
    %v3719 = vrot.slane %v3712, %v3718
    %v3720 = vlaneseq
    %v3721 = vshrl.u32 %v3720, 7
    %v3722 = vsub.s32 %v757, %v3721
    %v3723 = vrot.slane %v3715, %v3722
    %v3724 = vsel %vm762, %v3723, %v3719
    %v3725 = vpack.c.b16 %v3724, %v3724
    %v3727 = vsel %vm879, %v3725, 0
    %3729 = vmatprep.subr.bf16.mxu0 0
    %3730 = vmatpush1.bf16.msra.mxu0 %v94
    %3731 = vmatprep.subr.bf16.mxu0 0
    %3732 = vmatpush1.bf16.msra.mxu0 0
    %3733 = vmatprep.subr.bf16.mxu0 0
    %3734 = vmatpush1.bf16.msra.mxu0 0
    %3735 = vmatprep.subr.bf16.mxu0 0
    %3736 = vmatpush1.bf16.msra.mxu0 0
    %3737 = vmatprep.subr.bf16.mxu0 0
    %3738 = vmatpush1.bf16.msra.mxu0 0
    %3739 = vmatprep.subr.bf16.mxu0 0
    %3740 = vmatpush1.bf16.msra.mxu0 0
    %3741 = vmatprep.subr.bf16.mxu0 0
    %3742 = vmatpush1.bf16.msra.mxu0 0
    %3743 = vmatprep.subr.bf16.mxu0 0
    %3744 = vmatpush1.bf16.msra.mxu0 0
    %3745 = vmatprep.subr.bf16.mxu0 0
    %3746 = vmatpush1.bf16.msra.mxu0 0
    %3747 = vmatprep.subr.bf16.mxu0 0
    %3748 = vmatpush1.bf16.msra.mxu0 0
    %3749 = vmatprep.subr.bf16.mxu0 0
    %3750 = vmatpush1.bf16.msra.mxu0 0
    %3751 = vmatprep.subr.bf16.mxu0 0
    %3752 = vmatpush1.bf16.msra.mxu0 0
    %3753 = vmatprep.subr.bf16.mxu0 0
    %3754 = vmatpush1.bf16.msra.mxu0 0
    %3755 = vmatprep.subr.bf16.mxu0 0
    %3756 = vmatpush1.bf16.msra.mxu0 0
    %3757 = vmatprep.subr.bf16.mxu0 0
    %3758 = vmatpush1.bf16.msra.mxu0 0
    %3759 = vmatprep.subr.bf16.mxu0 0
    %3760 = vmatpush1.bf16.msra.mxu0 0
    %3761 = vmatprep.mubr.bf16.mxu0 0
    %3762 = vmatmul.mubr.bf16.gmra.mrb[0].mxu0 %v3727
    %v3763 = vpop.f32.mrb[0].mxu0
    %v3764 = vadd.f32 0.0, %v3763
    %v3765 = vpop.f32.mrb[0].mxu0
    %v3766 = vpop.f32.mrb[0].mxu0
    %v3767 = vpop.f32.mrb[0].mxu0
    %3768 = vdwg.mxu0
    %v3770 = vunpack.c.l.b16 %v3706
    %v3771 = vunpack.c.h.b16 %v3706
    %3772 = vset.pattern.permute.xlu0 0
    %3773 = vperm.xlu0 %3772, %v3770
    %v3774 = vpop.permute.xlu0 %3773
    %3775 = vset.pattern.permute.xlu0 0
    %3776 = vperm.xlu0 %3775, %v3771
    %v3777 = vpop.permute.xlu0 %3776
    %v3778 = vlaneseq
    %v3779 = vshrl.u32 %v3778, 7
    %v3780 = vsub.s32 %v752, %v3779
    %v3781 = vrot.slane %v3774, %v3780
    %v3782 = vlaneseq
    %v3783 = vshrl.u32 %v3782, 7
    %v3784 = vsub.s32 %v757, %v3783
    %v3785 = vrot.slane %v3777, %v3784
    %v3786 = vsel %vm762, %v3785, %v3781
    %v3787 = vpack.c.b16 %v3786, %v3786
    %v3789 = vsel %vm879, %v3787, 0
    %3791 = vmatprep.subr.bf16.mxu0 0
    %3792 = vmatpush1.bf16.msra.mxu0 %v95
    %3793 = vmatprep.subr.bf16.mxu0 0
    %3794 = vmatpush1.bf16.msra.mxu0 0
    %3795 = vmatprep.subr.bf16.mxu0 0
    %3796 = vmatpush1.bf16.msra.mxu0 0
    %3797 = vmatprep.subr.bf16.mxu0 0
    %3798 = vmatpush1.bf16.msra.mxu0 0
    %3799 = vmatprep.subr.bf16.mxu0 0
    %3800 = vmatpush1.bf16.msra.mxu0 0
    %3801 = vmatprep.subr.bf16.mxu0 0
    %3802 = vmatpush1.bf16.msra.mxu0 0
    %3803 = vmatprep.subr.bf16.mxu0 0
    %3804 = vmatpush1.bf16.msra.mxu0 0
    %3805 = vmatprep.subr.bf16.mxu0 0
    %3806 = vmatpush1.bf16.msra.mxu0 0
    %3807 = vmatprep.subr.bf16.mxu0 0
    %3808 = vmatpush1.bf16.msra.mxu0 0
    %3809 = vmatprep.subr.bf16.mxu0 0
    %3810 = vmatpush1.bf16.msra.mxu0 0
    %3811 = vmatprep.subr.bf16.mxu0 0
    %3812 = vmatpush1.bf16.msra.mxu0 0
    %3813 = vmatprep.subr.bf16.mxu0 0
    %3814 = vmatpush1.bf16.msra.mxu0 0
    %3815 = vmatprep.subr.bf16.mxu0 0
    %3816 = vmatpush1.bf16.msra.mxu0 0
    %3817 = vmatprep.subr.bf16.mxu0 0
    %3818 = vmatpush1.bf16.msra.mxu0 0
    %3819 = vmatprep.subr.bf16.mxu0 0
    %3820 = vmatpush1.bf16.msra.mxu0 0
    %3821 = vmatprep.subr.bf16.mxu0 0
    %3822 = vmatpush1.bf16.msra.mxu0 0
    %3823 = vmatprep.mubr.bf16.mxu0 0
    %3824 = vmatmul.mubr.bf16.gmra.mrb[0].mxu0 %v3789
    %v3825 = vpop.f32.mrb[0].mxu0
    %v3826 = vadd.f32 0.0, %v3825
    %v3827 = vpop.f32.mrb[0].mxu0
    %v3828 = vpop.f32.mrb[0].mxu0
    %v3829 = vpop.f32.mrb[0].mxu0
    %3830 = vdwg.mxu0
    %s3831 = scalar_lea.vmem [#allocation2], 24
    %v3832 = vld [vmem:[%s3831] sm:$0x3f]
    %v3835 = vrot.slane %v3826, 7
    %v3836 = vsel %vm773, %v3835, %v3764
    %3838 = vmatprep.subr.mxu0 %v478
    %3839 = vmatpush1.msra.mxu0 %v477
    %3840 = vmatprep.subr.mxu0 %v481
    %3841 = vmatpush1.msra.mxu0 %v480
    %3842 = vmatprep.subr.mxu0 %v484
    %3843 = vmatpush1.msra.mxu0 %v483
    %3844 = vmatprep.subr.mxu0 %v487
    %3845 = vmatpush1.msra.mxu0 %v486
    %3846 = vmatprep.subr.mxu0 %v490
    %3847 = vmatpush1.msra.mxu0 %v489
    %3848 = vmatprep.subr.mxu0 %v493
    %3849 = vmatpush1.msra.mxu0 %v492
    %3850 = vmatprep.subr.mxu0 %v496
    %3851 = vmatpush1.msra.mxu0 %v495
    %3852 = vmatprep.subr.mxu0 %v499
    %3853 = vmatpush1.msra.mxu0 %v498
    %3854 = vmatprep.subr.mxu0 %v502
    %3855 = vmatpush1.msra.mxu0 %v501
    %3856 = vmatprep.subr.mxu0 %v505
    %3857 = vmatpush1.msra.mxu0 %v504
    %3858 = vmatprep.subr.mxu0 %v508
    %3859 = vmatpush1.msra.mxu0 %v507
    %3860 = vmatprep.subr.mxu0 %v511
    %3861 = vmatpush1.msra.mxu0 %v510
    %3862 = vmatprep.subr.mxu0 %v514
    %3863 = vmatpush1.msra.mxu0 %v513
    %3864 = vmatprep.subr.mxu0 %v517
    %3865 = vmatpush1.msra.mxu0 %v516
    %3866 = vmatprep.subr.mxu0 %v520
    %3867 = vmatpush1.msra.mxu0 %v519
    %3868 = vmatprep.subr.mxu0 %v523
    %3869 = vmatpush1.msra.mxu0 %v522
    %3870 = vmatprep.subr.mxu0 0.0
    %3871 = vmatpush1.msra.mxu0 0.0
    %3872 = vmatprep.subr.mxu0 0.0
    %3873 = vmatpush1.msra.mxu0 0.0
    %3874 = vmatprep.subr.mxu0 0.0
    %3875 = vmatpush1.msra.mxu0 0.0
    %3876 = vmatprep.subr.mxu0 0.0
    %3877 = vmatpush1.msra.mxu0 0.0
    %3878 = vmatprep.subr.mxu0 0.0
    %3879 = vmatpush1.msra.mxu0 0.0
    %3880 = vmatprep.subr.mxu0 0.0
    %3881 = vmatpush1.msra.mxu0 0.0
    %3882 = vmatprep.subr.mxu0 0.0
    %3883 = vmatpush1.msra.mxu0 0.0
    %3884 = vmatprep.subr.mxu0 0.0
    %3885 = vmatpush1.msra.mxu0 0.0
    %3886 = vmatprep.subr.mxu0 0.0
    %3887 = vmatpush1.msra.mxu0 0.0
    %3888 = vmatprep.subr.mxu0 0.0
    %3889 = vmatpush1.msra.mxu0 0.0
    %3890 = vmatprep.subr.mxu0 0.0
    %3891 = vmatpush1.msra.mxu0 0.0
    %3892 = vmatprep.subr.mxu0 0.0
    %3893 = vmatpush1.msra.mxu0 0.0
    %3894 = vmatprep.subr.mxu0 0.0
    %3895 = vmatpush1.msra.mxu0 0.0
    %3896 = vmatprep.subr.mxu0 0.0
    %3897 = vmatpush1.msra.mxu0 0.0
    %3898 = vmatprep.subr.mxu0 0.0
    %3899 = vmatpush1.msra.mxu0 0.0
    %3900 = vmatprep.subr.mxu0 0.0
    %3901 = vmatpush1.msra.mxu0 0.0
    %3902 = vmatprep.mubr.f32.mxu0 0.0
    %3903 = vmatmul.mubr.f32.gmra.mrb[0].mxu0 %v3836
    %v3904 = vpop.f32.mrb[0].mxu0
    %v3905 = vadd.f32 0.0, %v3904
    %v3906 = vpop.f32.mrb[0].mxu0
    %v3907 = vadd.f32 0.0, %v3906
    %3908 = vdwg.mxu0
    %3909 = vmatprep.subr.mxu0 0.0
    %3910 = vmatpush1.msra.mxu0 %v479
    %3911 = vmatprep.subr.mxu0 0.0
    %3912 = vmatpush1.msra.mxu0 %v482
    %3913 = vmatprep.subr.mxu0 0.0
    %3914 = vmatpush1.msra.mxu0 %v485
    %3915 = vmatprep.subr.mxu0 0.0
    %3916 = vmatpush1.msra.mxu0 %v488
    %3917 = vmatprep.subr.mxu0 0.0
    %3918 = vmatpush1.msra.mxu0 %v491
    %3919 = vmatprep.subr.mxu0 0.0
    %3920 = vmatpush1.msra.mxu0 %v494
    %3921 = vmatprep.subr.mxu0 0.0
    %3922 = vmatpush1.msra.mxu0 %v497
    %3923 = vmatprep.subr.mxu0 0.0
    %3924 = vmatpush1.msra.mxu0 %v500
    %3925 = vmatprep.subr.mxu0 0.0
    %3926 = vmatpush1.msra.mxu0 %v503
    %3927 = vmatprep.subr.mxu0 0.0
    %3928 = vmatpush1.msra.mxu0 %v506
    %3929 = vmatprep.subr.mxu0 0.0
    %3930 = vmatpush1.msra.mxu0 %v509
    %3931 = vmatprep.subr.mxu0 0.0
    %3932 = vmatpush1.msra.mxu0 %v512
    %3933 = vmatprep.subr.mxu0 0.0
    %3934 = vmatpush1.msra.mxu0 %v515
    %3935 = vmatprep.subr.mxu0 0.0
    %3936 = vmatpush1.msra.mxu0 %v518
    %3937 = vmatprep.subr.mxu0 0.0
    %3938 = vmatpush1.msra.mxu0 %v521
    %3939 = vmatprep.subr.mxu0 0.0
    %3940 = vmatpush1.msra.mxu0 %v524
    %3941 = vmatprep.subr.mxu0 0.0
    %3942 = vmatpush1.msra.mxu0 0.0
    %3943 = vmatprep.subr.mxu0 0.0
    %3944 = vmatpush1.msra.mxu0 0.0
    %3945 = vmatprep.subr.mxu0 0.0
    %3946 = vmatpush1.msra.mxu0 0.0
    %3947 = vmatprep.subr.mxu0 0.0
    %3948 = vmatpush1.msra.mxu0 0.0
    %3949 = vmatprep.subr.mxu0 0.0
    %3950 = vmatpush1.msra.mxu0 0.0
    %3951 = vmatprep.subr.mxu0 0.0
    %3952 = vmatpush1.msra.mxu0 0.0
    %3953 = vmatprep.subr.mxu0 0.0
    %3954 = vmatpush1.msra.mxu0 0.0
    %3955 = vmatprep.subr.mxu0 0.0
    %3956 = vmatpush1.msra.mxu0 0.0
    %3957 = vmatprep.subr.mxu0 0.0
    %3958 = vmatpush1.msra.mxu0 0.0
    %3959 = vmatprep.subr.mxu0 0.0
    %3960 = vmatpush1.msra.mxu0 0.0
    %3961 = vmatprep.subr.mxu0 0.0
    %3962 = vmatpush1.msra.mxu0 0.0
    %3963 = vmatprep.subr.mxu0 0.0
    %3964 = vmatpush1.msra.mxu0 0.0
    %3965 = vmatprep.subr.mxu0 0.0
    %3966 = vmatpush1.msra.mxu0 0.0
    %3967 = vmatprep.subr.mxu0 0.0
    %3968 = vmatpush1.msra.mxu0 0.0
    %3969 = vmatprep.subr.mxu0 0.0
    %3970 = vmatpush1.msra.mxu0 0.0
    %3971 = vmatprep.subr.mxu0 0.0
    %3972 = vmatpush1.msra.mxu0 0.0
    %3973 = vmatprep.mubr.f32.mxu0 0.0
    %3974 = vmatmul.mubr.f32.gmra.mrb[0].mxu0 %v3836
    %v3975 = vpop.f32.mrb[0].mxu0
    %v3976 = vadd.f32 0.0, %v3975
    %v3977 = vpop.f32.mrb[0].mxu0
    %3978 = vdwg.mxu0
    %v3982 = vcombine.low %v3905, %v3907
    %v3984 = vunpack.c.l.s4 1983009808
    %v3985 = vunpack.c.0.s8 %v3984
    %v3986 = vlaneseq
    %v3987 = vshrl.u32 %v3986, 7
    %v3988 = vsub.s32 %v3985, %v3987
    %v3989 = vrot.slane %v3982, %v3988
    %v3991 = vunpack.c.l.s4 1983009808
    %v3992 = vunpack.c.0.s8 %v3991
    %v3993 = vlaneseq
    %v3994 = vshrl.u32 %v3993, 7
    %v3995 = vsub.s32 %v3992, %v3994
    %v3996 = vrot.slane %v3976, %v3995
    %v3997 = vcombine.low %v3989, %v3996
    %v3999 = vadd.f32 %v3832, %v3997
    %4000 = vmatprep.subr.mxu0 %v526
    %4001 = vmatpush1.msra.mxu0 %v525
    %4002 = vmatprep.subr.mxu0 %v529
    %4003 = vmatpush1.msra.mxu0 %v528
    %4004 = vmatprep.subr.mxu0 %v532
    %4005 = vmatpush1.msra.mxu0 %v531
    %4006 = vmatprep.subr.mxu0 %v535
    %4007 = vmatpush1.msra.mxu0 %v534
    %4008 = vmatprep.subr.mxu0 %v538
    %4009 = vmatpush1.msra.mxu0 %v537
    %4010 = vmatprep.subr.mxu0 %v541
    %4011 = vmatpush1.msra.mxu0 %v540
    %4012 = vmatprep.subr.mxu0 %v544
    %4013 = vmatpush1.msra.mxu0 %v543
    %4014 = vmatprep.subr.mxu0 %v547
    %4015 = vmatpush1.msra.mxu0 %v546
    %4016 = vmatprep.subr.mxu0 %v550
    %4017 = vmatpush1.msra.mxu0 %v549
    %4018 = vmatprep.subr.mxu0 %v553
    %4019 = vmatpush1.msra.mxu0 %v552
    %4020 = vmatprep.subr.mxu0 %v556
    %4021 = vmatpush1.msra.mxu0 %v555
    %4022 = vmatprep.subr.mxu0 %v559
    %4023 = vmatpush1.msra.mxu0 %v558
    %4024 = vmatprep.subr.mxu0 %v562
    %4025 = vmatpush1.msra.mxu0 %v561
    %4026 = vmatprep.subr.mxu0 %v565
    %4027 = vmatpush1.msra.mxu0 %v564
    %4028 = vmatprep.subr.mxu0 %v568
    %4029 = vmatpush1.msra.mxu0 %v567
    %4030 = vmatprep.subr.mxu0 %v571
    %4031 = vmatpush1.msra.mxu0 %v570
    %4032 = vmatprep.subr.mxu0 0.0
    %4033 = vmatpush1.msra.mxu0 0.0
    %4034 = vmatprep.subr.mxu0 0.0
    %4035 = vmatpush1.msra.mxu0 0.0
    %4036 = vmatprep.subr.mxu0 0.0
    %4037 = vmatpush1.msra.mxu0 0.0
    %4038 = vmatprep.subr.mxu0 0.0
    %4039 = vmatpush1.msra.mxu0 0.0
    %4040 = vmatprep.subr.mxu0 0.0
    %4041 = vmatpush1.msra.mxu0 0.0
    %4042 = vmatprep.subr.mxu0 0.0
    %4043 = vmatpush1.msra.mxu0 0.0
    %4044 = vmatprep.subr.mxu0 0.0
    %4045 = vmatpush1.msra.mxu0 0.0
    %4046 = vmatprep.subr.mxu0 0.0
    %4047 = vmatpush1.msra.mxu0 0.0
    %4048 = vmatprep.subr.mxu0 0.0
    %4049 = vmatpush1.msra.mxu0 0.0
    %4050 = vmatprep.subr.mxu0 0.0
    %4051 = vmatpush1.msra.mxu0 0.0
    %4052 = vmatprep.subr.mxu0 0.0
    %4053 = vmatpush1.msra.mxu0 0.0
    %4054 = vmatprep.subr.mxu0 0.0
    %4055 = vmatpush1.msra.mxu0 0.0
    %4056 = vmatprep.subr.mxu0 0.0
    %4057 = vmatpush1.msra.mxu0 0.0
    %4058 = vmatprep.subr.mxu0 0.0
    %4059 = vmatpush1.msra.mxu0 0.0
    %4060 = vmatprep.subr.mxu0 0.0
    %4061 = vmatpush1.msra.mxu0 0.0
    %4062 = vmatprep.subr.mxu0 0.0
    %4063 = vmatpush1.msra.mxu0 0.0
    %4064 = vmatprep.mubr.f32.mxu0 0.0
    %4065 = vmatmul.mubr.f32.gmra.mrb[0].mxu0 %v3458
    %v4066 = vpop.f32.mrb[0].mxu0
    %v4067 = vadd.f32 %v1157, %v4066
    %v4068 = vpop.f32.mrb[0].mxu0
    %v4069 = vadd.f32 %v1161, %v4068
    %4070 = vdwg.mxu0
    %4071 = vmatprep.subr.mxu0 0.0
    %4072 = vmatpush1.msra.mxu0 %v527
    %4073 = vmatprep.subr.mxu0 0.0
    %4074 = vmatpush1.msra.mxu0 %v530
    %4075 = vmatprep.subr.mxu0 0.0
    %4076 = vmatpush1.msra.mxu0 %v533
    %4077 = vmatprep.subr.mxu0 0.0
    %4078 = vmatpush1.msra.mxu0 %v536
    %4079 = vmatprep.subr.mxu0 0.0
    %4080 = vmatpush1.msra.mxu0 %v539
    %4081 = vmatprep.subr.mxu0 0.0
    %4082 = vmatpush1.msra.mxu0 %v542
    %4083 = vmatprep.subr.mxu0 0.0
    %4084 = vmatpush1.msra.mxu0 %v545
    %4085 = vmatprep.subr.mxu0 0.0
    %4086 = vmatpush1.msra.mxu0 %v548
    %4087 = vmatprep.subr.mxu0 0.0
    %4088 = vmatpush1.msra.mxu0 %v551
    %4089 = vmatprep.subr.mxu0 0.0
    %4090 = vmatpush1.msra.mxu0 %v554
    %4091 = vmatprep.subr.mxu0 0.0
    %4092 = vmatpush1.msra.mxu0 %v557
    %4093 = vmatprep.subr.mxu0 0.0
    %4094 = vmatpush1.msra.mxu0 %v560
    %4095 = vmatprep.subr.mxu0 0.0
    %4096 = vmatpush1.msra.mxu0 %v563
    %4097 = vmatprep.subr.mxu0 0.0
    %4098 = vmatpush1.msra.mxu0 %v566
    %4099 = vmatprep.subr.mxu0 0.0
    %4100 = vmatpush1.msra.mxu0 %v569
    %4101 = vmatprep.subr.mxu0 0.0
    %4102 = vmatpush1.msra.mxu0 %v572
    %4103 = vmatprep.subr.mxu0 0.0
    %4104 = vmatpush1.msra.mxu0 0.0
    %4105 = vmatprep.subr.mxu0 0.0
    %4106 = vmatpush1.msra.mxu0 0.0
    %4107 = vmatprep.subr.mxu0 0.0
    %4108 = vmatpush1.msra.mxu0 0.0
    %4109 = vmatprep.subr.mxu0 0.0
    %4110 = vmatpush1.msra.mxu0 0.0
    %4111 = vmatprep.subr.mxu0 0.0
    %4112 = vmatpush1.msra.mxu0 0.0
    %4113 = vmatprep.subr.mxu0 0.0
    %4114 = vmatpush1.msra.mxu0 0.0
    %4115 = vmatprep.subr.mxu0 0.0
    %4116 = vmatpush1.msra.mxu0 0.0
    %4117 = vmatprep.subr.mxu0 0.0
    %4118 = vmatpush1.msra.mxu0 0.0
    %4119 = vmatprep.subr.mxu0 0.0
    %4120 = vmatpush1.msra.mxu0 0.0
    %4121 = vmatprep.subr.mxu0 0.0
    %4122 = vmatpush1.msra.mxu0 0.0
    %4123 = vmatprep.subr.mxu0 0.0
    %4124 = vmatpush1.msra.mxu0 0.0
    %4125 = vmatprep.subr.mxu0 0.0
    %4126 = vmatpush1.msra.mxu0 0.0
    %4127 = vmatprep.subr.mxu0 0.0
    %4128 = vmatpush1.msra.mxu0 0.0
    %4129 = vmatprep.subr.mxu0 0.0
    %4130 = vmatpush1.msra.mxu0 0.0
    %4131 = vmatprep.subr.mxu0 0.0
    %4132 = vmatpush1.msra.mxu0 0.0
    %4133 = vmatprep.subr.mxu0 0.0
    %4134 = vmatpush1.msra.mxu0 0.0
    %4135 = vmatprep.mubr.f32.mxu0 0.0
    %4136 = vmatmul.mubr.f32.gmra.mrb[0].mxu0 %v3458
    %v4137 = vpop.f32.mrb[0].mxu0
    %v4138 = vadd.f32 %v1165, %v4137
    %v4139 = vpop.f32.mrb[0].mxu0
    %4140 = vdwg.mxu0
    %v4141 = vadd.f32 %v3999, %v4067
    %v4142 = vxor.u32 %v4141, 2147483648
    %v4143 = vmul.f32 %v4142, 1.442695
    %v4144 = vpow.pop %v4143
    %v4145 = vadd.f32 %v4144, 1.0
    %v4146 = vrcp.pop %v4145
    %v4147 = vmul.f32 1.0, %v4146
    %v4149 = vrot.slane %v3999, 2
    %v4151 = vadd.f32 %v4149, %v4069
    %v4152 = vxor.u32 %v4151, 2147483648
    %v4153 = vmul.f32 %v4152, 1.442695
    %v4154 = vpow.pop %v4153
    %v4155 = vadd.f32 %v4154, 1.0
    %v4156 = vrcp.pop %v4155
    %v4157 = vmul.f32 1.0, %v4156
    %v4158 = vmul.f32 %v4147, %v4138
    %v4159 = vrot.slane %v3999, 4
    %v4161 = vadd.f32 %v4159, %v4158
    %v4162 = vtanh.pop %v4161
    %v4163 = vsub.f32 1.0, %v4157
    %v4164 = vmul.f32 %v4163, %v4162
    %v4165 = vmul.f32 %v4157, %v3458
    %v4166 = vadd.f32 %v4164, %v4165
    %s4167 = scalar_lea.vmem [#allocation3], 8
    %4168 = vst [vmem:[%s4167] sm:$0x3] %v4166
    %4169 = vmatprep.subr.mxu0 0.0
    %4170 = vmatpush1.msra.mxu0 %v461
    %4171 = vmatprep.subr.mxu0 0.0
    %4172 = vmatpush1.msra.mxu0 %v462
    %4173 = vmatprep.subr.mxu0 0.0
    %4174 = vmatpush1.msra.mxu0 %v463
    %4175 = vmatprep.subr.mxu0 0.0
    %4176 = vmatpush1.msra.mxu0 %v464
    %4177 = vmatprep.subr.mxu0 0.0
    %4178 = vmatpush1.msra.mxu0 %v465
    %4179 = vmatprep.subr.mxu0 0.0
    %4180 = vmatpush1.msra.mxu0 %v466
    %4181 = vmatprep.subr.mxu0 0.0
    %4182 = vmatpush1.msra.mxu0 %v467
    %4183 = vmatprep.subr.mxu0 0.0
    %4184 = vmatpush1.msra.mxu0 %v468
    %4185 = vmatprep.subr.mxu0 0.0
    %4186 = vmatpush1.msra.mxu0 %v469
    %4187 = vmatprep.subr.mxu0 0.0
    %4188 = vmatpush1.msra.mxu0 %v470
    %4189 = vmatprep.subr.mxu0 0.0
    %4190 = vmatpush1.msra.mxu0 %v471
    %4191 = vmatprep.subr.mxu0 0.0
    %4192 = vmatpush1.msra.mxu0 %v472
    %4193 = vmatprep.subr.mxu0 0.0
    %4194 = vmatpush1.msra.mxu0 %v473
    %4195 = vmatprep.subr.mxu0 0.0
    %4196 = vmatpush1.msra.mxu0 %v474
    %4197 = vmatprep.subr.mxu0 0.0
    %4198 = vmatpush1.msra.mxu0 %v475
    %4199 = vmatprep.subr.mxu0 0.0
    %4200 = vmatpush1.msra.mxu0 %v476
    %4201 = vmatprep.subr.mxu0 0.0
    %4202 = vmatpush1.msra.mxu0 0.0
    %4203 = vmatprep.subr.mxu0 0.0
    %4204 = vmatpush1.msra.mxu0 0.0
    %4205 = vmatprep.subr.mxu0 0.0
    %4206 = vmatpush1.msra.mxu0 0.0
    %4207 = vmatprep.subr.mxu0 0.0
    %4208 = vmatpush1.msra.mxu0 0.0
    %4209 = vmatprep.subr.mxu0 0.0
    %4210 = vmatpush1.msra.mxu0 0.0
    %4211 = vmatprep.subr.mxu0 0.0
    %4212 = vmatpush1.msra.mxu0 0.0
    %4213 = vmatprep.subr.mxu0 0.0
    %4214 = vmatpush1.msra.mxu0 0.0
    %4215 = vmatprep.subr.mxu0 0.0
    %4216 = vmatpush1.msra.mxu0 0.0
    %4217 = vmatprep.subr.mxu0 0.0
    %4218 = vmatpush1.msra.mxu0 0.0
    %4219 = vmatprep.subr.mxu0 0.0
    %4220 = vmatpush1.msra.mxu0 0.0
    %4221 = vmatprep.subr.mxu0 0.0
    %4222 = vmatpush1.msra.mxu0 0.0
    %4223 = vmatprep.subr.mxu0 0.0
    %4224 = vmatpush1.msra.mxu0 0.0
    %4225 = vmatprep.subr.mxu0 0.0
    %4226 = vmatpush1.msra.mxu0 0.0
    %4227 = vmatprep.subr.mxu0 0.0
    %4228 = vmatpush1.msra.mxu0 0.0
    %4229 = vmatprep.subr.mxu0 0.0
    %4230 = vmatpush1.msra.mxu0 0.0
    %4231 = vmatprep.subr.mxu0 0.0
    %4232 = vmatpush1.msra.mxu0 0.0
    %4233 = vmatprep.mubr.f32.mxu0 0.0
    %4234 = vmatmul.mubr.f32.gmra.mrb[0].mxu0 %v4166
    %v4235 = vpop.f32.mrb[0].mxu0
    %v4236 = vadd.f32 0.0, %v4235
    %v4237 = vpop.f32.mrb[0].mxu0
    %4238 = vdwg.mxu0
    %v4241 = vunpack.c.l.s4 1966171168
    %v4242 = vunpack.c.0.s8 %v4241
    %v4243 = vlaneseq
    %v4244 = vshrl.u32 %v4243, 7
    %v4245 = vsub.s32 %v4242, %v4244
    %v4246 = vrot.slane %v4236, %v4245
    %v4247 = vcombine.high %v4246, %v4246
    %v4249 = vunpack.c.l.s4 1966171168
    %v4250 = vunpack.c.0.s8 %v4249
    %v4251 = vlaneseq
    %v4252 = vshrl.u32 %v4251, 7
    %v4253 = vsub.s32 %v4250, %v4252
    %v4254 = vrot.slane %v4246, %v4253
    %v4256 = vunpack.c.l.s4 1966171168
    %v4257 = vunpack.c.0.s8 %v4256
    %v4258 = vlaneseq
    %v4259 = vshrl.u32 %v4258, 7
    %v4260 = vsub.s32 %v4257, %v4259
    %v4261 = vrot.slane %v4247, %v4260
    %v4262 = vlaneseq
    %v4263 = vshrl.u32 %v4262, 7
    %v4264 = vsub.s32 0, %v4263
    %v4265 = vrot.slane %v4254, %v4264
    %v4266 = vlaneseq
    %v4267 = vshrl.u32 %v4266, 7
    %v4268 = vsub.s32 0, %v4267
    %v4269 = vrot.slane %v4261, %v4268
    %v4272 = vadd.f32 %v4265, %v155
    %v4273 = vadd.f32 %v4265, %v158
    %v4274 = vadd.f32 %v4269, %v163
    %v4275 = vadd.f32 %v4269, %v166
    %v4276 = vtanh.pop %v4272
    %v4277 = vtanh.pop %v4273
    %v4278 = vtanh.pop %v4274
    %v4279 = vtanh.pop %v4275
    %v4280 = vmul.f32 %v4276, %v690
    %v4281 = vmul.f32 %v4277, %v690
    %v4282 = vmul.f32 %v4278, %v690
    %v4283 = vmul.f32 %v4279, %v690
    %4284 = vadd.xlane.f32.xlu0 %v4280
    %v4285 = vpop.xlane.xlu0 %4284
    %4286 = vadd.xlane.f32.xlu0 %v4281
    %v4287 = vpop.xlane.xlu0 %4286
    %4288 = vadd.xlane.f32.xlu0 %v4282
    %v4289 = vpop.xlane.xlu0 %4288
    %4290 = vadd.xlane.f32.xlu0 %v4283
    %v4291 = vpop.xlane.xlu0 %4290
    %v4292 = vadd.f32 %v4285, %v711
    %v4293 = vadd.f32 %v4287, %v715
    %v4294 = vadd.f32 %v4289, %v722
    %v4295 = vadd.f32 %v4291, %v726
    %4300 = vset.pattern.permute.xlu0 0
    %4301 = vperm.xlu0 %4300, %v4292
    %v4302 = vpop.permute.xlu0 %4301
    %4303 = vset.pattern.permute.xlu0 0
    %4304 = vperm.xlu0 %4303, %v4293
    %v4305 = vpop.permute.xlu0 %4304
    %4306 = vset.pattern.permute.xlu0 0
    %4307 = vperm.xlu0 %4306, %v4294
    %v4308 = vpop.permute.xlu0 %4307
    %4309 = vset.pattern.permute.xlu0 0
    %4310 = vperm.xlu0 %4309, %v4295
    %v4311 = vpop.permute.xlu0 %4310
    %v4312 = vlaneseq
    %v4313 = vshrl.u32 %v4312, 7
    %v4314 = vsub.s32 %v752, %v4313
    %v4315 = vrot.slane %v4302, %v4314
    %v4316 = vlaneseq
    %v4317 = vshrl.u32 %v4316, 7
    %v4318 = vsub.s32 %v757, %v4317
    %v4319 = vrot.slane %v4305, %v4318
    %v4320 = vsel %vm762, %v4319, %v4315
    %v4321 = vlaneseq
    %v4322 = vshrl.u32 %v4321, 7
    %v4323 = vsub.s32 %v752, %v4322
    %v4324 = vrot.slane %v4308, %v4323
    %v4325 = vlaneseq
    %v4326 = vshrl.u32 %v4325, 7
    %v4327 = vsub.s32 %v757, %v4326
    %v4328 = vrot.slane %v4311, %v4327
    %v4329 = vsel %vm762, %v4328, %v4324
    %v4330 = vsel %vm773, %v4329, %v4320
    %v4332 = vsel %vm776, %v4330, -inf
    %4333 = vmax.xlane.f32.xlu0 %v4332
    %v4334 = vpop.xlane.xlu0 %4333
    %v4336 = vlaneseq
    %v4337 = vshrl.u32 %v4336, 7
    %v4338 = vsub.s32 0, %v4337
    %v4339 = vrot.slane %v4334, %v4338
    %v4340 = vlaneseq
    %v4341 = vshrl.u32 %v4340, 7
    %v4342 = vsub.s32 1, %v4341
    %v4343 = vrot.slane %v4334, %v4342
    %v4346 = vsub.f32 %v4292, %v4339
    %v4347 = vsub.f32 %v4293, %v4339
    %v4348 = vsub.f32 %v4294, %v4343
    %v4349 = vsub.f32 %v4295, %v4343
    %v4350 = vmul.f32 %v4346, 1.442695
    %v4351 = vpow.pop %v4350
    %v4352 = vmul.f32 %v4347, 1.442695
    %v4353 = vpow.pop %v4352
    %v4354 = vmul.f32 %v4348, 1.442695
    %v4355 = vpow.pop %v4354
    %v4356 = vmul.f32 %v4349, 1.442695
    %v4357 = vpow.pop %v4356
    %4362 = vset.pattern.permute.xlu0 0
    %4363 = vperm.xlu0 %4362, %v4351
    %v4364 = vpop.permute.xlu0 %4363
    %4365 = vset.pattern.permute.xlu0 0
    %4366 = vperm.xlu0 %4365, %v4353
    %v4367 = vpop.permute.xlu0 %4366
    %4368 = vset.pattern.permute.xlu0 0
    %4369 = vperm.xlu0 %4368, %v4355
    %v4370 = vpop.permute.xlu0 %4369
    %4371 = vset.pattern.permute.xlu0 0
    %4372 = vperm.xlu0 %4371, %v4357
    %v4373 = vpop.permute.xlu0 %4372
    %v4374 = vlaneseq
    %v4375 = vshrl.u32 %v4374, 7
    %v4376 = vsub.s32 %v752, %v4375
    %v4377 = vrot.slane %v4364, %v4376
    %v4378 = vlaneseq
    %v4379 = vshrl.u32 %v4378, 7
    %v4380 = vsub.s32 %v757, %v4379
    %v4381 = vrot.slane %v4367, %v4380
    %v4382 = vsel %vm762, %v4381, %v4377
    %v4383 = vlaneseq
    %v4384 = vshrl.u32 %v4383, 7
    %v4385 = vsub.s32 %v752, %v4384
    %v4386 = vrot.slane %v4370, %v4385
    %v4387 = vlaneseq
    %v4388 = vshrl.u32 %v4387, 7
    %v4389 = vsub.s32 %v757, %v4388
    %v4390 = vrot.slane %v4373, %v4389
    %v4391 = vsel %vm762, %v4390, %v4386
    %v4392 = vsel %vm773, %v4391, %v4382
    %v4394 = vsel %vm776, %v4392, 0.0
    %4395 = vadd.xlane.f32.xlu0 %v4394
    %v4396 = vpop.xlane.xlu0 %4395
    %v4397 = vrcp.pop %v4396
    %v4399 = vlaneseq
    %v4400 = vshrl.u32 %v4399, 7
    %v4401 = vsub.s32 0, %v4400
    %v4402 = vrot.slane %v4397, %v4401
    %v4403 = vlaneseq
    %v4404 = vshrl.u32 %v4403, 7
    %v4405 = vsub.s32 1, %v4404
    %v4406 = vrot.slane %v4397, %v4405
    %v4409 = vmul.f32 %v4351, %v4402
    %v4410 = vmul.f32 %v4353, %v4402
    %v4411 = vmul.f32 %v4355, %v4406
    %v4412 = vmul.f32 %v4357, %v4406
    %v4413 = vpack.c.bf16 %v4410, %v4409
    %v4414 = vpack.c.bf16 %v4412, %v4411
    %v4416 = vunpack.c.l.b16 %v4413
    %v4417 = vunpack.c.h.b16 %v4413
    %4418 = vset.pattern.permute.xlu0 0
    %4419 = vperm.xlu0 %4418, %v4416
    %v4420 = vpop.permute.xlu0 %4419
    %4421 = vset.pattern.permute.xlu0 0
    %4422 = vperm.xlu0 %4421, %v4417
    %v4423 = vpop.permute.xlu0 %4422
    %v4424 = vlaneseq
    %v4425 = vshrl.u32 %v4424, 7
    %v4426 = vsub.s32 %v752, %v4425
    %v4427 = vrot.slane %v4420, %v4426
    %v4428 = vlaneseq
    %v4429 = vshrl.u32 %v4428, 7
    %v4430 = vsub.s32 %v757, %v4429
    %v4431 = vrot.slane %v4423, %v4430
    %v4432 = vsel %vm762, %v4431, %v4427
    %v4433 = vpack.c.b16 %v4432, %v4432
    %v4435 = vsel %vm879, %v4433, 0
    %4437 = vmatprep.subr.bf16.mxu0 0
    %4438 = vmatpush1.bf16.msra.mxu0 %v94
    %4439 = vmatprep.subr.bf16.mxu0 0
    %4440 = vmatpush1.bf16.msra.mxu0 0
    %4441 = vmatprep.subr.bf16.mxu0 0
    %4442 = vmatpush1.bf16.msra.mxu0 0
    %4443 = vmatprep.subr.bf16.mxu0 0
    %4444 = vmatpush1.bf16.msra.mxu0 0
    %4445 = vmatprep.subr.bf16.mxu0 0
    %4446 = vmatpush1.bf16.msra.mxu0 0
    %4447 = vmatprep.subr.bf16.mxu0 0
    %4448 = vmatpush1.bf16.msra.mxu0 0
    %4449 = vmatprep.subr.bf16.mxu0 0
    %4450 = vmatpush1.bf16.msra.mxu0 0
    %4451 = vmatprep.subr.bf16.mxu0 0
    %4452 = vmatpush1.bf16.msra.mxu0 0
    %4453 = vmatprep.subr.bf16.mxu0 0
    %4454 = vmatpush1.bf16.msra.mxu0 0
    %4455 = vmatprep.subr.bf16.mxu0 0
    %4456 = vmatpush1.bf16.msra.mxu0 0
    %4457 = vmatprep.subr.bf16.mxu0 0
    %4458 = vmatpush1.bf16.msra.mxu0 0
    %4459 = vmatprep.subr.bf16.mxu0 0
    %4460 = vmatpush1.bf16.msra.mxu0 0
    %4461 = vmatprep.subr.bf16.mxu0 0
    %4462 = vmatpush1.bf16.msra.mxu0 0
    %4463 = vmatprep.subr.bf16.mxu0 0
    %4464 = vmatpush1.bf16.msra.mxu0 0
    %4465 = vmatprep.subr.bf16.mxu0 0
    %4466 = vmatpush1.bf16.msra.mxu0 0
    %4467 = vmatprep.subr.bf16.mxu0 0
    %4468 = vmatpush1.bf16.msra.mxu0 0
    %4469 = vmatprep.mubr.bf16.mxu0 0
    %4470 = vmatmul.mubr.bf16.gmra.mrb[0].mxu0 %v4435
    %v4471 = vpop.f32.mrb[0].mxu0
    %v4472 = vadd.f32 0.0, %v4471
    %v4473 = vpop.f32.mrb[0].mxu0
    %v4474 = vpop.f32.mrb[0].mxu0
    %v4475 = vpop.f32.mrb[0].mxu0
    %4476 = vdwg.mxu0
    %v4478 = vunpack.c.l.b16 %v4414
    %v4479 = vunpack.c.h.b16 %v4414
    %4480 = vset.pattern.permute.xlu0 0
    %4481 = vperm.xlu0 %4480, %v4478
    %v4482 = vpop.permute.xlu0 %4481
    %4483 = vset.pattern.permute.xlu0 0
    %4484 = vperm.xlu0 %4483, %v4479
    %v4485 = vpop.permute.xlu0 %4484
    %v4486 = vlaneseq
    %v4487 = vshrl.u32 %v4486, 7
    %v4488 = vsub.s32 %v752, %v4487
    %v4489 = vrot.slane %v4482, %v4488
    %v4490 = vlaneseq
    %v4491 = vshrl.u32 %v4490, 7
    %v4492 = vsub.s32 %v757, %v4491
    %v4493 = vrot.slane %v4485, %v4492
    %v4494 = vsel %vm762, %v4493, %v4489
    %v4495 = vpack.c.b16 %v4494, %v4494
    %v4497 = vsel %vm879, %v4495, 0
    %4499 = vmatprep.subr.bf16.mxu0 0
    %4500 = vmatpush1.bf16.msra.mxu0 %v95
    %4501 = vmatprep.subr.bf16.mxu0 0
    %4502 = vmatpush1.bf16.msra.mxu0 0
    %4503 = vmatprep.subr.bf16.mxu0 0
    %4504 = vmatpush1.bf16.msra.mxu0 0
    %4505 = vmatprep.subr.bf16.mxu0 0
    %4506 = vmatpush1.bf16.msra.mxu0 0
    %4507 = vmatprep.subr.bf16.mxu0 0
    %4508 = vmatpush1.bf16.msra.mxu0 0
    %4509 = vmatprep.subr.bf16.mxu0 0
    %4510 = vmatpush1.bf16.msra.mxu0 0
    %4511 = vmatprep.subr.bf16.mxu0 0
    %4512 = vmatpush1.bf16.msra.mxu0 0
    %4513 = vmatprep.subr.bf16.mxu0 0
    %4514 = vmatpush1.bf16.msra.mxu0 0
    %4515 = vmatprep.subr.bf16.mxu0 0
    %4516 = vmatpush1.bf16.msra.mxu0 0
    %4517 = vmatprep.subr.bf16.mxu0 0
    %4518 = vmatpush1.bf16.msra.mxu0 0
    %4519 = vmatprep.subr.bf16.mxu0 0
    %4520 = vmatpush1.bf16.msra.mxu0 0
    %4521 = vmatprep.subr.bf16.mxu0 0
    %4522 = vmatpush1.bf16.msra.mxu0 0
    %4523 = vmatprep.subr.bf16.mxu0 0
    %4524 = vmatpush1.bf16.msra.mxu0 0
    %4525 = vmatprep.subr.bf16.mxu0 0
    %4526 = vmatpush1.bf16.msra.mxu0 0
    %4527 = vmatprep.subr.bf16.mxu0 0
    %4528 = vmatpush1.bf16.msra.mxu0 0
    %4529 = vmatprep.subr.bf16.mxu0 0
    %4530 = vmatpush1.bf16.msra.mxu0 0
    %4531 = vmatprep.mubr.bf16.mxu0 0
    %4532 = vmatmul.mubr.bf16.gmra.mrb[0].mxu0 %v4497
    %v4533 = vpop.f32.mrb[0].mxu0
    %v4534 = vadd.f32 0.0, %v4533
    %v4535 = vpop.f32.mrb[0].mxu0
    %v4536 = vpop.f32.mrb[0].mxu0
    %v4537 = vpop.f32.mrb[0].mxu0
    %4538 = vdwg.mxu0
    %s4539 = scalar_lea.vmem [#allocation2], 30
    %v4540 = vld [vmem:[%s4539] sm:$0x3f]
    %v4543 = vrot.slane %v4534, 7
    %v4544 = vsel %vm773, %v4543, %v4472
    %4546 = vmatprep.subr.mxu0 %v478
    %4547 = vmatpush1.msra.mxu0 %v477
    %4548 = vmatprep.subr.mxu0 %v481
    %4549 = vmatpush1.msra.mxu0 %v480
    %4550 = vmatprep.subr.mxu0 %v484
    %4551 = vmatpush1.msra.mxu0 %v483
    %4552 = vmatprep.subr.mxu0 %v487
    %4553 = vmatpush1.msra.mxu0 %v486
    %4554 = vmatprep.subr.mxu0 %v490
    %4555 = vmatpush1.msra.mxu0 %v489
    %4556 = vmatprep.subr.mxu0 %v493
    %4557 = vmatpush1.msra.mxu0 %v492
    %4558 = vmatprep.subr.mxu0 %v496
    %4559 = vmatpush1.msra.mxu0 %v495
    %4560 = vmatprep.subr.mxu0 %v499
    %4561 = vmatpush1.msra.mxu0 %v498
    %4562 = vmatprep.subr.mxu0 %v502
    %4563 = vmatpush1.msra.mxu0 %v501
    %4564 = vmatprep.subr.mxu0 %v505
    %4565 = vmatpush1.msra.mxu0 %v504
    %4566 = vmatprep.subr.mxu0 %v508
    %4567 = vmatpush1.msra.mxu0 %v507
    %4568 = vmatprep.subr.mxu0 %v511
    %4569 = vmatpush1.msra.mxu0 %v510
    %4570 = vmatprep.subr.mxu0 %v514
    %4571 = vmatpush1.msra.mxu0 %v513
    %4572 = vmatprep.subr.mxu0 %v517
    %4573 = vmatpush1.msra.mxu0 %v516
    %4574 = vmatprep.subr.mxu0 %v520
    %4575 = vmatpush1.msra.mxu0 %v519
    %4576 = vmatprep.subr.mxu0 %v523
    %4577 = vmatpush1.msra.mxu0 %v522
    %4578 = vmatprep.subr.mxu0 0.0
    %4579 = vmatpush1.msra.mxu0 0.0
    %4580 = vmatprep.subr.mxu0 0.0
    %4581 = vmatpush1.msra.mxu0 0.0
    %4582 = vmatprep.subr.mxu0 0.0
    %4583 = vmatpush1.msra.mxu0 0.0
    %4584 = vmatprep.subr.mxu0 0.0
    %4585 = vmatpush1.msra.mxu0 0.0
    %4586 = vmatprep.subr.mxu0 0.0
    %4587 = vmatpush1.msra.mxu0 0.0
    %4588 = vmatprep.subr.mxu0 0.0
    %4589 = vmatpush1.msra.mxu0 0.0
    %4590 = vmatprep.subr.mxu0 0.0
    %4591 = vmatpush1.msra.mxu0 0.0
    %4592 = vmatprep.subr.mxu0 0.0
    %4593 = vmatpush1.msra.mxu0 0.0
    %4594 = vmatprep.subr.mxu0 0.0
    %4595 = vmatpush1.msra.mxu0 0.0
    %4596 = vmatprep.subr.mxu0 0.0
    %4597 = vmatpush1.msra.mxu0 0.0
    %4598 = vmatprep.subr.mxu0 0.0
    %4599 = vmatpush1.msra.mxu0 0.0
    %4600 = vmatprep.subr.mxu0 0.0
    %4601 = vmatpush1.msra.mxu0 0.0
    %4602 = vmatprep.subr.mxu0 0.0
    %4603 = vmatpush1.msra.mxu0 0.0
    %4604 = vmatprep.subr.mxu0 0.0
    %4605 = vmatpush1.msra.mxu0 0.0
    %4606 = vmatprep.subr.mxu0 0.0
    %4607 = vmatpush1.msra.mxu0 0.0
    %4608 = vmatprep.subr.mxu0 0.0
    %4609 = vmatpush1.msra.mxu0 0.0
    %4610 = vmatprep.mubr.f32.mxu0 0.0
    %4611 = vmatmul.mubr.f32.gmra.mrb[0].mxu0 %v4544
    %v4612 = vpop.f32.mrb[0].mxu0
    %v4613 = vadd.f32 0.0, %v4612
    %v4614 = vpop.f32.mrb[0].mxu0
    %v4615 = vadd.f32 0.0, %v4614
    %4616 = vdwg.mxu0
    %4617 = vmatprep.subr.mxu0 0.0
    %4618 = vmatpush1.msra.mxu0 %v479
    %4619 = vmatprep.subr.mxu0 0.0
    %4620 = vmatpush1.msra.mxu0 %v482
    %4621 = vmatprep.subr.mxu0 0.0
    %4622 = vmatpush1.msra.mxu0 %v485
    %4623 = vmatprep.subr.mxu0 0.0
    %4624 = vmatpush1.msra.mxu0 %v488
    %4625 = vmatprep.subr.mxu0 0.0
    %4626 = vmatpush1.msra.mxu0 %v491
    %4627 = vmatprep.subr.mxu0 0.0
    %4628 = vmatpush1.msra.mxu0 %v494
    %4629 = vmatprep.subr.mxu0 0.0
    %4630 = vmatpush1.msra.mxu0 %v497
    %4631 = vmatprep.subr.mxu0 0.0
    %4632 = vmatpush1.msra.mxu0 %v500
    %4633 = vmatprep.subr.mxu0 0.0
    %4634 = vmatpush1.msra.mxu0 %v503
    %4635 = vmatprep.subr.mxu0 0.0
    %4636 = vmatpush1.msra.mxu0 %v506
    %4637 = vmatprep.subr.mxu0 0.0
    %4638 = vmatpush1.msra.mxu0 %v509
    %4639 = vmatprep.subr.mxu0 0.0
    %4640 = vmatpush1.msra.mxu0 %v512
    %4641 = vmatprep.subr.mxu0 0.0
    %4642 = vmatpush1.msra.mxu0 %v515
    %4643 = vmatprep.subr.mxu0 0.0
    %4644 = vmatpush1.msra.mxu0 %v518
    %4645 = vmatprep.subr.mxu0 0.0
    %4646 = vmatpush1.msra.mxu0 %v521
    %4647 = vmatprep.subr.mxu0 0.0
    %4648 = vmatpush1.msra.mxu0 %v524
    %4649 = vmatprep.subr.mxu0 0.0
    %4650 = vmatpush1.msra.mxu0 0.0
    %4651 = vmatprep.subr.mxu0 0.0
    %4652 = vmatpush1.msra.mxu0 0.0
    %4653 = vmatprep.subr.mxu0 0.0
    %4654 = vmatpush1.msra.mxu0 0.0
    %4655 = vmatprep.subr.mxu0 0.0
    %4656 = vmatpush1.msra.mxu0 0.0
    %4657 = vmatprep.subr.mxu0 0.0
    %4658 = vmatpush1.msra.mxu0 0.0
    %4659 = vmatprep.subr.mxu0 0.0
    %4660 = vmatpush1.msra.mxu0 0.0
    %4661 = vmatprep.subr.mxu0 0.0
    %4662 = vmatpush1.msra.mxu0 0.0
    %4663 = vmatprep.subr.mxu0 0.0
    %4664 = vmatpush1.msra.mxu0 0.0
    %4665 = vmatprep.subr.mxu0 0.0
    %4666 = vmatpush1.msra.mxu0 0.0
    %4667 = vmatprep.subr.mxu0 0.0
    %4668 = vmatpush1.msra.mxu0 0.0
    %4669 = vmatprep.subr.mxu0 0.0
    %4670 = vmatpush1.msra.mxu0 0.0
    %4671 = vmatprep.subr.mxu0 0.0
    %4672 = vmatpush1.msra.mxu0 0.0
    %4673 = vmatprep.subr.mxu0 0.0
    %4674 = vmatpush1.msra.mxu0 0.0
    %4675 = vmatprep.subr.mxu0 0.0
    %4676 = vmatpush1.msra.mxu0 0.0
    %4677 = vmatprep.subr.mxu0 0.0
    %4678 = vmatpush1.msra.mxu0 0.0
    %4679 = vmatprep.subr.mxu0 0.0
    %4680 = vmatpush1.msra.mxu0 0.0
    %4681 = vmatprep.mubr.f32.mxu0 0.0
    %4682 = vmatmul.mubr.f32.gmra.mrb[0].mxu0 %v4544
    %v4683 = vpop.f32.mrb[0].mxu0
    %v4684 = vadd.f32 0.0, %v4683
    %v4685 = vpop.f32.mrb[0].mxu0
    %4686 = vdwg.mxu0
    %v4690 = vcombine.low %v4613, %v4615
    %v4692 = vunpack.c.l.s4 1983009808
    %v4693 = vunpack.c.0.s8 %v4692
    %v4694 = vlaneseq
    %v4695 = vshrl.u32 %v4694, 7
    %v4696 = vsub.s32 %v4693, %v4695
    %v4697 = vrot.slane %v4690, %v4696
    %v4699 = vunpack.c.l.s4 1983009808
    %v4700 = vunpack.c.0.s8 %v4699
    %v4701 = vlaneseq
    %v4702 = vshrl.u32 %v4701, 7
    %v4703 = vsub.s32 %v4700, %v4702
    %v4704 = vrot.slane %v4684, %v4703
    %v4705 = vcombine.low %v4697, %v4704
    %v4707 = vadd.f32 %v4540, %v4705
    %4708 = vmatprep.subr.mxu0 %v526
    %4709 = vmatpush1.msra.mxu0 %v525
    %4710 = vmatprep.subr.mxu0 %v529
    %4711 = vmatpush1.msra.mxu0 %v528
    %4712 = vmatprep.subr.mxu0 %v532
    %4713 = vmatpush1.msra.mxu0 %v531
    %4714 = vmatprep.subr.mxu0 %v535
    %4715 = vmatpush1.msra.mxu0 %v534
    %4716 = vmatprep.subr.mxu0 %v538
    %4717 = vmatpush1.msra.mxu0 %v537
    %4718 = vmatprep.subr.mxu0 %v541
    %4719 = vmatpush1.msra.mxu0 %v540
    %4720 = vmatprep.subr.mxu0 %v544
    %4721 = vmatpush1.msra.mxu0 %v543
    %4722 = vmatprep.subr.mxu0 %v547
    %4723 = vmatpush1.msra.mxu0 %v546
    %4724 = vmatprep.subr.mxu0 %v550
    %4725 = vmatpush1.msra.mxu0 %v549
    %4726 = vmatprep.subr.mxu0 %v553
    %4727 = vmatpush1.msra.mxu0 %v552
    %4728 = vmatprep.subr.mxu0 %v556
    %4729 = vmatpush1.msra.mxu0 %v555
    %4730 = vmatprep.subr.mxu0 %v559
    %4731 = vmatpush1.msra.mxu0 %v558
    %4732 = vmatprep.subr.mxu0 %v562
    %4733 = vmatpush1.msra.mxu0 %v561
    %4734 = vmatprep.subr.mxu0 %v565
    %4735 = vmatpush1.msra.mxu0 %v564
    %4736 = vmatprep.subr.mxu0 %v568
    %4737 = vmatpush1.msra.mxu0 %v567
    %4738 = vmatprep.subr.mxu0 %v571
    %4739 = vmatpush1.msra.mxu0 %v570
    %4740 = vmatprep.subr.mxu0 0.0
    %4741 = vmatpush1.msra.mxu0 0.0
    %4742 = vmatprep.subr.mxu0 0.0
    %4743 = vmatpush1.msra.mxu0 0.0
    %4744 = vmatprep.subr.mxu0 0.0
    %4745 = vmatpush1.msra.mxu0 0.0
    %4746 = vmatprep.subr.mxu0 0.0
    %4747 = vmatpush1.msra.mxu0 0.0
    %4748 = vmatprep.subr.mxu0 0.0
    %4749 = vmatpush1.msra.mxu0 0.0
    %4750 = vmatprep.subr.mxu0 0.0
    %4751 = vmatpush1.msra.mxu0 0.0
    %4752 = vmatprep.subr.mxu0 0.0
    %4753 = vmatpush1.msra.mxu0 0.0
    %4754 = vmatprep.subr.mxu0 0.0
    %4755 = vmatpush1.msra.mxu0 0.0
    %4756 = vmatprep.subr.mxu0 0.0
    %4757 = vmatpush1.msra.mxu0 0.0
    %4758 = vmatprep.subr.mxu0 0.0
    %4759 = vmatpush1.msra.mxu0 0.0
    %4760 = vmatprep.subr.mxu0 0.0
    %4761 = vmatpush1.msra.mxu0 0.0
    %4762 = vmatprep.subr.mxu0 0.0
    %4763 = vmatpush1.msra.mxu0 0.0
    %4764 = vmatprep.subr.mxu0 0.0
    %4765 = vmatpush1.msra.mxu0 0.0
    %4766 = vmatprep.subr.mxu0 0.0
    %4767 = vmatpush1.msra.mxu0 0.0
    %4768 = vmatprep.subr.mxu0 0.0
    %4769 = vmatpush1.msra.mxu0 0.0
    %4770 = vmatprep.subr.mxu0 0.0
    %4771 = vmatpush1.msra.mxu0 0.0
    %4772 = vmatprep.mubr.f32.mxu0 0.0
    %4773 = vmatmul.mubr.f32.gmra.mrb[0].mxu0 %v4166
    %v4774 = vpop.f32.mrb[0].mxu0
    %v4775 = vadd.f32 %v1157, %v4774
    %v4776 = vpop.f32.mrb[0].mxu0
    %v4777 = vadd.f32 %v1161, %v4776
    %4778 = vdwg.mxu0
    %4779 = vmatprep.subr.mxu0 0.0
    %4780 = vmatpush1.msra.mxu0 %v527
    %4781 = vmatprep.subr.mxu0 0.0
    %4782 = vmatpush1.msra.mxu0 %v530
    %4783 = vmatprep.subr.mxu0 0.0
    %4784 = vmatpush1.msra.mxu0 %v533
    %4785 = vmatprep.subr.mxu0 0.0
    %4786 = vmatpush1.msra.mxu0 %v536
    %4787 = vmatprep.subr.mxu0 0.0
    %4788 = vmatpush1.msra.mxu0 %v539
    %4789 = vmatprep.subr.mxu0 0.0
    %4790 = vmatpush1.msra.mxu0 %v542
    %4791 = vmatprep.subr.mxu0 0.0
    %4792 = vmatpush1.msra.mxu0 %v545
    %4793 = vmatprep.subr.mxu0 0.0
    %4794 = vmatpush1.msra.mxu0 %v548
    %4795 = vmatprep.subr.mxu0 0.0
    %4796 = vmatpush1.msra.mxu0 %v551
    %4797 = vmatprep.subr.mxu0 0.0
    %4798 = vmatpush1.msra.mxu0 %v554
    %4799 = vmatprep.subr.mxu0 0.0
    %4800 = vmatpush1.msra.mxu0 %v557
    %4801 = vmatprep.subr.mxu0 0.0
    %4802 = vmatpush1.msra.mxu0 %v560
    %4803 = vmatprep.subr.mxu0 0.0
    %4804 = vmatpush1.msra.mxu0 %v563
    %4805 = vmatprep.subr.mxu0 0.0
    %4806 = vmatpush1.msra.mxu0 %v566
    %4807 = vmatprep.subr.mxu0 0.0
    %4808 = vmatpush1.msra.mxu0 %v569
    %4809 = vmatprep.subr.mxu0 0.0
    %4810 = vmatpush1.msra.mxu0 %v572
    %4811 = vmatprep.subr.mxu0 0.0
    %4812 = vmatpush1.msra.mxu0 0.0
    %4813 = vmatprep.subr.mxu0 0.0
    %4814 = vmatpush1.msra.mxu0 0.0
    %4815 = vmatprep.subr.mxu0 0.0
    %4816 = vmatpush1.msra.mxu0 0.0
    %4817 = vmatprep.subr.mxu0 0.0
    %4818 = vmatpush1.msra.mxu0 0.0
    %4819 = vmatprep.subr.mxu0 0.0
    %4820 = vmatpush1.msra.mxu0 0.0
    %4821 = vmatprep.subr.mxu0 0.0
    %4822 = vmatpush1.msra.mxu0 0.0
    %4823 = vmatprep.subr.mxu0 0.0
    %4824 = vmatpush1.msra.mxu0 0.0
    %4825 = vmatprep.subr.mxu0 0.0
    %4826 = vmatpush1.msra.mxu0 0.0
    %4827 = vmatprep.subr.mxu0 0.0
    %4828 = vmatpush1.msra.mxu0 0.0
    %4829 = vmatprep.subr.mxu0 0.0
    %4830 = vmatpush1.msra.mxu0 0.0
    %4831 = vmatprep.subr.mxu0 0.0
    %4832 = vmatpush1.msra.mxu0 0.0
    %4833 = vmatprep.subr.mxu0 0.0
    %4834 = vmatpush1.msra.mxu0 0.0
    %4835 = vmatprep.subr.mxu0 0.0
    %4836 = vmatpush1.msra.mxu0 0.0
    %4837 = vmatprep.subr.mxu0 0.0
    %4838 = vmatpush1.msra.mxu0 0.0
    %4839 = vmatprep.subr.mxu0 0.0
    %4840 = vmatpush1.msra.mxu0 0.0
    %4841 = vmatprep.subr.mxu0 0.0
    %4842 = vmatpush1.msra.mxu0 0.0
    %4843 = vmatprep.mubr.f32.mxu0 0.0
    %4844 = vmatmul.mubr.f32.gmra.mrb[0].mxu0 %v4166
    %v4845 = vpop.f32.mrb[0].mxu0
    %v4846 = vadd.f32 %v1165, %v4845
    %v4847 = vpop.f32.mrb[0].mxu0
    %4848 = vdwg.mxu0
    %v4849 = vadd.f32 %v4707, %v4775
    %v4850 = vxor.u32 %v4849, 2147483648
    %v4851 = vmul.f32 %v4850, 1.442695
    %v4852 = vpow.pop %v4851
    %v4853 = vadd.f32 %v4852, 1.0
    %v4854 = vrcp.pop %v4853
    %v4855 = vmul.f32 1.0, %v4854
    %v4857 = vrot.slane %v4707, 2
    %v4859 = vadd.f32 %v4857, %v4777
    %v4860 = vxor.u32 %v4859, 2147483648
    %v4861 = vmul.f32 %v4860, 1.442695
    %v4862 = vpow.pop %v4861
    %v4863 = vadd.f32 %v4862, 1.0
    %v4864 = vrcp.pop %v4863
    %v4865 = vmul.f32 1.0, %v4864
    %v4866 = vmul.f32 %v4855, %v4846
    %v4867 = vrot.slane %v4707, 4
    %v4869 = vadd.f32 %v4867, %v4866
    %v4870 = vtanh.pop %v4869
    %v4871 = vsub.f32 1.0, %v4865
    %v4872 = vmul.f32 %v4871, %v4870
    %v4873 = vmul.f32 %v4865, %v4166
    %v4874 = vadd.f32 %v4872, %v4873
    %s4875 = scalar_lea.vmem [#allocation3], 10
    %4876 = vst [vmem:[%s4875] sm:$0x3] %v4874
    %v4877 = vld [vmem:[#allocation3] sm:$0x3]
    %v4878 = vld [vmem:[#allocation3 + $0x2] sm:$0x3]
    %v4879 = vld [vmem:[#allocation3 + $0x4] sm:$0x3]
    %v4880 = vld [vmem:[#allocation3 + $0x6] sm:$0x3]
    %v4881 = vld [vmem:[#allocation3 + $0x8] sm:$0x3]
    %v4882 = vld [vmem:[#allocation3 + $0xa] sm:$0x3]
    %v4883 = vpack.c.bf16 %v4877, %v4877
    %v4884 = vpack.c.bf16 %v4878, %v4878
    %v4885 = vpack.c.bf16 %v4879, %v4879
    %v4886 = vpack.c.bf16 %v4880, %v4880
    %v4887 = vpack.c.bf16 %v4881, %v4881
    %v4888 = vpack.c.bf16 %v4882, %v4882
    %v4889 = vld [vmem:[#allocation9] sm:$0xff]
    %v4890 = vld [vmem:[#allocation9 + $0x8] sm:$0xff]
    %v4891 = vld [vmem:[#allocation9 + $0x10] sm:$0xff]
    %v4892 = vld [vmem:[#allocation9 + $0x18] sm:$0xff]
    %v4893 = vld [vmem:[#allocation9 + $0x20] sm:$0xff]
    %v4894 = vld [vmem:[#allocation9 + $0x28] sm:$0xff]
    %v4895 = vld [vmem:[#allocation9 + $0x30] sm:$0xff]
    %v4896 = vld [vmem:[#allocation9 + $0x38] sm:$0xff]
    %v4897 = vld [vmem:[#allocation9 + $0x40] sm:$0xff]
    %v4898 = vld [vmem:[#allocation9 + $0x48] sm:$0xff]
    %v4899 = vld [vmem:[#allocation9 + $0x50] sm:$0xff]
    %v4900 = vld [vmem:[#allocation9 + $0x58] sm:$0xff]
    %v4901 = vld [vmem:[#allocation9 + $0x60] sm:$0xff]
    %v4902 = vld [vmem:[#allocation9 + $0x68] sm:$0xff]
    %v4903 = vld [vmem:[#allocation9 + $0x70] sm:$0xff]
    %v4904 = vld [vmem:[#allocation9 + $0x78] sm:$0xff]
    %v4905 = vpack.c.bf16 %v4890, %v4889
    %v4906 = vpack.c.bf16 %v4892, %v4891
    %v4907 = vpack.c.bf16 %v4894, %v4893
    %v4908 = vpack.c.bf16 %v4896, %v4895
    %v4909 = vpack.c.bf16 %v4898, %v4897
    %v4910 = vpack.c.bf16 %v4900, %v4899
    %v4911 = vpack.c.bf16 %v4902, %v4901
    %v4912 = vpack.c.bf16 %v4904, %v4903
    %v4913 = vld [vmem:[%s13] sm:$0x1]
    %v4915 = vlaneseq
    %v4916 = vshrl.u32 %v4915, 7
    %v4917 = vsub.s32 0, %v4916
    %v4918 = vrot.slane %v4913, %v4917
    %v4925 = vcombine.low %v4883, %v4884
    %v4926 = vcombine.low %v4885, %v4886
    %v4927 = vcombine.low %v4887, %v4888
    %v4929 = vunpack.c.l.s4 1966171168
    %v4930 = vunpack.c.0.s8 %v4929
    %v4931 = vlaneseq
    %v4932 = vshrl.u32 %v4931, 7
    %v4933 = vsub.s32 %v4930, %v4932
    %v4934 = vrot.slane %v4925, %v4933
    %v4936 = vunpack.c.l.s4 1966171168
    %v4937 = vunpack.c.0.s8 %v4936
    %v4938 = vlaneseq
    %v4939 = vshrl.u32 %v4938, 7
    %v4940 = vsub.s32 %v4937, %v4939
    %v4941 = vrot.slane %v4926, %v4940
    %v4943 = vunpack.c.l.s4 1966171168
    %v4944 = vunpack.c.0.s8 %v4943
    %v4945 = vlaneseq
    %v4946 = vshrl.u32 %v4945, 7
    %v4947 = vsub.s32 %v4944, %v4946
    %v4948 = vrot.slane %v4927, %v4947
    %v4949 = vcombine.low %v4934, %v4941
    %v4951 = vunpack.c.l.s4 1966171168
    %v4952 = vunpack.c.0.s8 %v4951
    %v4953 = vlaneseq
    %v4954 = vshrl.u32 %v4953, 7
    %v4955 = vsub.s32 %v4952, %v4954
    %v4956 = vrot.slane %v4949, %v4955
    %v4958 = vunpack.c.l.s4 1966171168
    %v4959 = vunpack.c.0.s8 %v4958
    %v4960 = vlaneseq
    %v4961 = vshrl.u32 %v4960, 7
    %v4962 = vsub.s32 %v4959, %v4961
    %v4963 = vrot.slane %v4948, %v4962
    %v4964 = vcombine.low %v4956, %v4963
    %v4966 = vcombine.low %v4918, %v4918
    %v4968 = vunpack.c.l.s4 1983009808
    %v4969 = vunpack.c.0.s8 %v4968
    %v4970 = vlaneseq
    %v4971 = vshrl.u32 %v4970, 7
    %v4972 = vsub.s32 %v4969, %v4971
    %v4973 = vrot.slane %v4966, %v4972
    %v4974 = vcombine.low %v4973, %v4973
    %4977 = vmatprep.subr.bf16.mxu0 0
    %4978 = vmatpush1.bf16.msra.mxu0 %v4905
    %4979 = vmatprep.subr.bf16.mxu0 0
    %4980 = vmatpush1.bf16.msra.mxu0 %v4906
    %4981 = vmatprep.subr.bf16.mxu0 0
    %4982 = vmatpush1.bf16.msra.mxu0 %v4907
    %4983 = vmatprep.subr.bf16.mxu0 0
    %4984 = vmatpush1.bf16.msra.mxu0 %v4908
    %4985 = vmatprep.subr.bf16.mxu0 0
    %4986 = vmatpush1.bf16.msra.mxu0 %v4909
    %4987 = vmatprep.subr.bf16.mxu0 0
    %4988 = vmatpush1.bf16.msra.mxu0 %v4910
    %4989 = vmatprep.subr.bf16.mxu0 0
    %4990 = vmatpush1.bf16.msra.mxu0 %v4911
    %4991 = vmatprep.subr.bf16.mxu0 0
    %4992 = vmatpush1.bf16.msra.mxu0 %v4912
    %4993 = vmatprep.subr.bf16.mxu0 0
    %4994 = vmatpush1.bf16.msra.mxu0 0
    %4995 = vmatprep.subr.bf16.mxu0 0
    %4996 = vmatpush1.bf16.msra.mxu0 0
    %4997 = vmatprep.subr.bf16.mxu0 0
    %4998 = vmatpush1.bf16.msra.mxu0 0
    %4999 = vmatprep.subr.bf16.mxu0 0
    %5000 = vmatpush1.bf16.msra.mxu0 0
    %5001 = vmatprep.subr.bf16.mxu0 0
    %5002 = vmatpush1.bf16.msra.mxu0 0
    %5003 = vmatprep.subr.bf16.mxu0 0
    %5004 = vmatpush1.bf16.msra.mxu0 0
    %5005 = vmatprep.subr.bf16.mxu0 0
    %5006 = vmatpush1.bf16.msra.mxu0 0
    %5007 = vmatprep.subr.bf16.mxu0 0
    %5008 = vmatpush1.bf16.msra.mxu0 0
    %5009 = vmatprep.mubr.bf16.mxu0 0
    %5010 = vmatmul.mubr.bf16.gmra.mrb[0].mxu0 %v4964
    %v5011 = vpop.f32.mrb[0].mxu0
    %v5012 = vadd.f32 %v4974, %v5011
    %v5013 = vpop.f32.mrb[0].mxu0
    %v5014 = vpop.f32.mrb[0].mxu0
    %v5015 = vadd.f32 %v4973, %v5014
    %v5016 = vpop.f32.mrb[0].mxu0
    %5017 = vdwg.mxu0
    %v5020 = vcombine.high %v5012, %v5012
    %v5022 = vunpack.c.l.s4 1983009808
    %v5023 = vunpack.c.0.s8 %v5022
    %v5024 = vlaneseq
    %v5025 = vshrl.u32 %v5024, 7
    %v5026 = vsub.s32 %v5023, %v5025
    %v5027 = vrot.slane %v5012, %v5026
    %v5029 = vunpack.c.l.s4 1983009808
    %v5030 = vunpack.c.0.s8 %v5029
    %v5031 = vlaneseq
    %v5032 = vshrl.u32 %v5031, 7
    %v5033 = vsub.s32 %v5030, %v5032
    %v5034 = vrot.slane %v5020, %v5033
    %v5035 = vcombine.high %v5027, %v5027
    %v5036 = vcombine.high %v5034, %v5034
    %v5038 = vunpack.c.l.s4 1983009808
    %v5039 = vunpack.c.0.s8 %v5038
    %v5040 = vlaneseq
    %v5041 = vshrl.u32 %v5040, 7
    %v5042 = vsub.s32 %v5039, %v5041
    %v5043 = vrot.slane %v5015, %v5042
    %v5044 = vcombine.high %v5043, %v5043
    %vm5051 = vcmask 1041408
    %v5052 = vsel %vm5051, %v5027, -inf
    %5053 = vmax.xlane.f32.xlu0 %v5052
    %v5054 = vpop.xlane.xlu0 %5053
    %v5055 = vsel %vm5051, %v5035, -inf
    %5056 = vmax.xlane.f32.xlu0 %v5055
    %v5057 = vpop.xlane.xlu0 %5056
    %v5058 = vsel %vm5051, %v5034, -inf
    %5059 = vmax.xlane.f32.xlu0 %v5058
    %v5060 = vpop.xlane.xlu0 %5059
    %v5061 = vsel %vm5051, %v5036, -inf
    %5062 = vmax.xlane.f32.xlu0 %v5061
    %v5063 = vpop.xlane.xlu0 %5062
    %v5064 = vsel %vm5051, %v5043, -inf
    %5065 = vmax.xlane.f32.xlu0 %v5064
    %v5066 = vpop.xlane.xlu0 %5065
    %v5067 = vsel %vm5051, %v5044, -inf
    %5068 = vmax.xlane.f32.xlu0 %v5067
    %v5069 = vpop.xlane.xlu0 %5068
    %v5070 = vsub.f32 %v5027, %v5054
    %v5071 = vsub.f32 %v5035, %v5057
    %v5072 = vsub.f32 %v5034, %v5060
    %v5073 = vsub.f32 %v5036, %v5063
    %v5074 = vsub.f32 %v5043, %v5066
    %v5075 = vsub.f32 %v5044, %v5069
    %v5076 = vmul.f32 %v5070, 1.442695
    %v5077 = vpow.pop %v5076
    %v5078 = vmul.f32 %v5071, 1.442695
    %v5079 = vpow.pop %v5078
    %v5080 = vmul.f32 %v5072, 1.442695
    %v5081 = vpow.pop %v5080
    %v5082 = vmul.f32 %v5073, 1.442695
    %v5083 = vpow.pop %v5082
    %v5084 = vmul.f32 %v5074, 1.442695
    %v5085 = vpow.pop %v5084
    %v5086 = vmul.f32 %v5075, 1.442695
    %v5087 = vpow.pop %v5086
    %v5088 = vsel %vm5051, %v5077, 0.0
    %5089 = vadd.xlane.f32.xlu0 %v5088
    %v5090 = vpop.xlane.xlu0 %5089
    %v5091 = vsel %vm5051, %v5079, 0.0
    %5092 = vadd.xlane.f32.xlu0 %v5091
    %v5093 = vpop.xlane.xlu0 %5092
    %v5094 = vsel %vm5051, %v5081, 0.0
    %5095 = vadd.xlane.f32.xlu0 %v5094
    %v5096 = vpop.xlane.xlu0 %5095
    %v5097 = vsel %vm5051, %v5083, 0.0
    %5098 = vadd.xlane.f32.xlu0 %v5097
    %v5099 = vpop.xlane.xlu0 %5098
    %v5100 = vsel %vm5051, %v5085, 0.0
    %5101 = vadd.xlane.f32.xlu0 %v5100
    %v5102 = vpop.xlane.xlu0 %5101
    %v5103 = vsel %vm5051, %v5087, 0.0
    %5104 = vadd.xlane.f32.xlu0 %v5103
    %v5105 = vpop.xlane.xlu0 %5104
    %v5106 = vlog2.pop %v5090
    %v5107 = vmul.f32 %v5106, 0.6931472
    %v5108 = vlog2.pop %v5093
    %v5109 = vmul.f32 %v5108, 0.6931472
    %v5110 = vlog2.pop %v5096
    %v5111 = vmul.f32 %v5110, 0.6931472
    %v5112 = vlog2.pop %v5099
    %v5113 = vmul.f32 %v5112, 0.6931472
    %v5114 = vlog2.pop %v5102
    %v5115 = vmul.f32 %v5114, 0.6931472
    %v5116 = vlog2.pop %v5105
    %v5117 = vmul.f32 %v5116, 0.6931472
    %v5118 = vadd.f32 %v5054, %v5107
    %v5119 = vadd.f32 %v5057, %v5109
    %v5120 = vadd.f32 %v5060, %v5111
    %v5121 = vadd.f32 %v5063, %v5113
    %v5122 = vadd.f32 %v5066, %v5115
    %v5123 = vadd.f32 %v5069, %v5117
    %v5124 = vsub.f32 %v5027, %v5118
    %v5125 = vsub.f32 %v5035, %v5119
    %v5126 = vsub.f32 %v5034, %v5120
    %v5127 = vsub.f32 %v5036, %v5121
    %v5128 = vsub.f32 %v5043, %v5122
    %v5129 = vsub.f32 %v5044, %v5123
    %5130 = vst [vmem:[#allocation10] sm:$0x3] %v5124
    %5131 = vst [vmem:[#allocation10 + $0x2] sm:$0x3] %v5125
    %5132 = vst [vmem:[#allocation10 + $0x4] sm:$0x3] %v5126
    %5133 = vst [vmem:[#allocation10 + $0x6] sm:$0x3] %v5127
    %5134 = vst [vmem:[#allocation10 + $0x8] sm:$0x3] %v5128
    %5135 = vst [vmem:[#allocation10 + $0xa] sm:$0x3] %v5129
    // Predicated region
    $region70: #{hms_forward.3} parent=1 // pred_check
      _
    $region71: #{hms_forward.3} parent=1 // pred_check_branch
      %5137 = sbr.rel (0) target = $region73
    $region72: #{hms_forward.3} parent=1 // pred_region
      %s5139 = ssub.s32 192, 192
      %5140 = vsyncadd [#allocation6], %s5139
      %s5141 = sshll.u32 [#allocation10], 4
      %s5142 = int_to_ptr.vmem [resolvable:$true] %s5141
      %5147 = dma.vmem_to_hbm [thread:$0]  %s5142, 192, %s14, [#allocation6], 32, 32, 2
    $region73: #{hms_forward.3} parent=1 // pred_fallthru
      _
    // Predicated region
    $region74: #{hms_forward.3} parent=1 // pred_check
      _
    $region75: #{hms_forward.3} parent=1 // pred_check_branch
      %5149 = sbr.rel (0) target = $region77
    $region76: #{hms_forward.3} parent=1 // pred_region
      %5150 = dma.done [#allocation6], 192
    $region77: #{hms_forward.3} parent=1 // pred_fallthru
      _
    %5151 = vsyncpa [#allocation5], 1
    %5152 = vsyncpa [#allocation8], 1
    %5153 = vsyncpa [#allocation6], 1

</llo_original>
